<compile_context>
chip_gen: v5e
topology: v5e:2x2
jax: 0.10.0
libtpu: 0.0.40
codegen_flags: <defaults>
</compile_context>

<pallas_src>
from functools import partial

import jax
import jax.numpy as jnp
from jax.experimental import pallas as pl
from jax.experimental.pallas import tpu as pltpu


def _round_up(n, m):
    return (n + m - 1) // m * m


def _inception_kernel(x_ref, wb_ref, wf_ref, shift_ref, out_ref, u_ref, *, L, Kmax):
    M, Cin = x_ref.shape               # M = Bt * L (batch-major, time-minor rows)
    F = wb_ref.shape[1]
    W = u_ref.shape[1]                 # Kmax*F + Cin rounded up to a multiple of 128
    P = (Kmax - 1) // 2

    x = x_ref[...]                                             # (M, Cin) f32
    # time index of every flattened row (each block starts at a multiple of L)
    t = jax.lax.broadcasted_iota(jnp.int32, (M, 1), 0) % L

    def shift_rows(a, delta):
        # row m of the result = a[m + delta] (circular).  Wrapped rows are
        # always masked by the callers, so the wrap never leaks across
        # sequences.  Uses the XLU rotate slot instead of vld/vst copies.
        if delta == 0:
            return a
        return pltpu.roll(a, shift=(-delta) % M, axis=0)

    # bottleneck 1x1 conv: bf16 operands on the MXU, f32 accumulate.
    # TODO(synk): at tiny Cin (first InceptionTime layer) this underfills the
    # MXU contraction; a VPU broadcast-FMA path would be marginally cheaper.
    h = jnp.dot(x.astype(jnp.bfloat16), wb_ref[...],
                preferred_element_type=jnp.float32)            # (M, F) f32

    # MaxPool1d(kernel=3, stride=1, padding=1): PyTorch pads with -inf, i.e.
    # boundary windows simply drop the out-of-range neighbour.
    x_prev = jnp.where(t == 0, x, shift_rows(x, -1))
    x_next = jnp.where(t == L - 1, x, shift_rows(x, +1))
    xm = jnp.maximum(jnp.maximum(x_prev, x), x_next)           # (M, Cin) f32

    # im2col of h along time.  Out-of-range taps are masked to zero, which both
    # implements the "same" zero padding and prevents cross-sequence leakage
    # (every block holds whole sequences, so the circular wrap only touches
    # rows the mask already zeroes).
    def tap(k):
        s = k - P                                              # time shift of tap k
        valid = jnp.logical_and(t + s >= 0, t + s < L)
        return jnp.where(valid, shift_rows(h, s), 0.0)

    pieces = [tap(k) for k in range(Kmax)] + [xm]
    pad = W - (Kmax * F + Cin)
    if pad:
        pieces.append(jnp.zeros((M, pad), jnp.float32))

    # Write the fused operand [im2col(h) | maxpool(x) | 0-pad] into the bf16
    # VMEM scratch in 128-lane aligned groups: every store is a full-lane
    # (unmasked) vst and no second full-size concatenate copy is materialised.
    col, group, gw = 0, [], 0
    for p in pieces:
        off, pw = 0, p.shape[1]
        while off < pw:
            take = min(128 - gw, pw - off)
            group.append(p if (off == 0 and take == pw) else p[:, off:off + take])
            gw += take
            off += take
            if gw == 128:
                blk = group[0] if len(group) == 1 else jnp.concatenate(group, axis=-1)
                u_ref[:, col:col + 128] = blk.astype(jnp.bfloat16)
                col += 128
                group, gw = [], 0
    assert gw == 0 and col == W        # static (trace-time) sanity check

    # single fused MXU pass: all three "same" conv branches + the pool 1x1
    # (inference BatchNorm scale pre-folded into the weight columns).
    y = jnp.dot(u_ref[...], wf_ref[...], preferred_element_type=jnp.float32)

    # BatchNorm shift + ReLU; single lane-dense store of the full 4F-wide block.
    out_ref[...] = jnp.maximum(y + shift_ref[...], 0.0).astype(out_ref.dtype)


def inception_module_pallas(x_ncl, wb, w0, w1, w2, wpc,
                            gamma, beta, running_mean, running_var,
                            eps=1e-5, batch_tile=None):
    """x_ncl: (B, Cin, L) float32.  Conv weights in PyTorch (O, I, K) layout."""
    B, Cin, L = x_ncl.shape
    F = wb.shape[0]
    C4 = 4 * F

    Bt = B if batch_tile is None else batch_tile
    assert B % Bt == 0, "batch must be divisible by batch_tile"
    M = Bt * L
    assert M % 16 == 0, "Bt*L must be a multiple of 16 (bf16 sublane tiling)"
    # Sizing guidance: aim for Bt*L >= 512 rows (fills the MXU M dimension and
    # amortises per-step overhead) while keeping B // Bt >= 2 so the 'parallel'
    # batch axis can shard across both TensorCores on v7x.

    # activations: (B, Cin, L) -> (B*L, Cin), rows = (batch-major, time-minor)
    x_flat = jnp.transpose(x_ncl, (0, 2, 1)).reshape(B * L, Cin).astype(jnp.float32)

    # Inference BatchNorm folded: per-channel scale into conv weights, shift kept.
    inv_std = 1.0 / jnp.sqrt(running_var.astype(jnp.float32) + eps)
    scale = gamma.astype(jnp.float32) * inv_std                        # (4F,)
    shift = (beta.astype(jnp.float32)
             - running_mean.astype(jnp.float32) * scale).reshape(1, C4)

    # bottleneck 1x1: (F, Cin, 1) -> (Cin, F)   (feeds all 3 branches, no scale)
    wb_k = jnp.transpose(wb[:, :, 0], (1, 0)).astype(jnp.bfloat16)

    Ks = [int(w.shape[2]) for w in (w0, w1, w2)]
    assert all(k % 2 == 1 for k in Ks), \
        "branch kernel widths must be odd (module kernel_size even)"
    Kmax = max(Ks)
    P = (Kmax - 1) // 2
    W = _round_up(Kmax * F + Cin, 128)      # fused-operand width (lane-dense)

    def branch_taps(w, sc):
        # (O, I, K) -> (K, I, O), fold BN scale into output channels,
        # zero-pad taps so every branch shares the Kmax-tap im2col.
        K = int(w.shape[2])
        pb = (K - 1) // 2
        wk = jnp.transpose(w, (2, 1, 0)).astype(jnp.float32) * sc
        return jnp.pad(wk, ((P - pb, P - pb), (0, 0), (0, 0)))         # (Kmax, F, F)

    w_br = jnp.concatenate(
        [branch_taps(w0, scale[0:F]),
         branch_taps(w1, scale[F:2 * F]),
         branch_taps(w2, scale[2 * F:3 * F])], axis=-1)                # (Kmax, F, 3F)
    w_br = w_br.reshape(Kmax * F, 3 * F)
    wpc_k = jnp.transpose(wpc[:, :, 0], (1, 0)).astype(jnp.float32) * scale[3 * F:]

    # Fused weight: [ im2col(h) | maxpool(x) | 0-pad ] @ w_full -> all 4F chans.
    # The zero blocks waste some MACs; worth splitting only once MXU-bound.
    w_full = jnp.zeros((W, C4), jnp.float32)
    w_full = w_full.at[:Kmax * F, :3 * F].set(w_br)
    w_full = w_full.at[Kmax * F:Kmax * F + Cin, 3 * F:].set(wpc_k)
    w_full = w_full.astype(jnp.bfloat16)

    out_flat = pl.pallas_call(
        partial(_inception_kernel, L=L, Kmax=Kmax),
        out_shape=jax.ShapeDtypeStruct((B * L, C4), jnp.float32),
        grid=(B // Bt,),
        in_specs=[
            pl.BlockSpec((M, Cin), lambda i: (i, 0)),     # per-step batch tile
            # Constant-index blocks: the pipeline only re-issues a DMA when the
            # block index changes, so weights/shift stay VMEM-resident.
            pl.BlockSpec(wb_k.shape, lambda i: (0, 0)),
            pl.BlockSpec(w_full.shape, lambda i: (0, 0)),
            pl.BlockSpec(shift.shape, lambda i: (0, 0)),
        ],
        out_specs=pl.BlockSpec((M, C4), lambda i: (i, 0)),
        scratch_shapes=[pltpu.VMEM((M, W), jnp.bfloat16)],   # fused im2col operand
        compiler_params=pltpu.CompilerParams(
            dimension_semantics=("parallel",),               # batch tiles -> both TCs
            vmem_limit_bytes=32 * 1024 * 1024),              # valid on v5e/v6e/v7x
    )(x_flat, wb_k, w_full, shift)

    # (B*L, 4F) -> (B, 4F, L)  (PyTorch NCL)
    return jnp.transpose(out_flat.reshape(B, L, C4), (0, 2, 1))


def inception_module_ref(x_ncl, wb, w0, w1, w2, wpc,
                         gamma, beta, mean, var, eps=1e-5):
    """Pure-JAX f32 reference (XLA convs) for verification."""
    def conv1d(x, w, pad):
        return jax.lax.conv_general_dilated(
            x, w, window_strides=(1,), padding=[(pad, pad)],
            dimension_numbers=('NCH', 'OIH', 'NCH'))

    h = conv1d(x_ncl, wb, 0)
    feats = [conv1d(h, w, (w.shape[2] - 1) // 2) for w in (w0, w1, w2)]
    xm = jax.lax.reduce_window(x_ncl, -jnp.inf, jax.lax.max,
                               (1, 1, 3), (1, 1, 1),
                               [(0, 0), (0, 0), (1, 1)])
    feats.append(conv1d(xm, wpc, 0))
    f = jnp.concatenate(feats, axis=1)
    g = gamma.reshape(1, -1, 1)
    b = beta.reshape(1, -1, 1)
    m = mean.reshape(1, -1, 1)
    v = var.reshape(1, -1, 1)
    f = (f - m) / jnp.sqrt(v + eps) * g + b
    return jnp.maximum(f, 0.0)


if __name__ == "__main__":
    # InceptionModule(input_dim=8, kernel_size=8, num_filters=32)
    # -> branch conv kernels 9, 5, 3; concat width 4*32 = 128 (lane-dense).
    B, Cin, L = 64, 8, 16
    F = 32
    kernel_size = 8
    kss = [kernel_size // (2 ** i) for i in range(3)]   # [8, 4, 2] -> convs 9, 5, 3

    key = jax.random.PRNGKey(0)
    keys = jax.random.split(key, 10)
    x = jax.random.normal(keys[0], (B, Cin, L), jnp.float32)
    wb = jax.random.normal(keys[1], (F, Cin, 1), jnp.float32) * 0.2
    w0 = jax.random.normal(keys[2], (F, F, kss[0] + 1), jnp.float32) * 0.1
    w1 = jax.random.normal(keys[3], (F, F, kss[1] + 1), jnp.float32) * 0.1
    w2 = jax.random.normal(keys[4], (F, F, kss[2] + 1), jnp.float32) * 0.1
    wpc = jax.random.normal(keys[5], (F, Cin, 1), jnp.float32) * 0.2
    gamma = 1.0 + 0.1 * jax.random.normal(keys[6], (4 * F,), jnp.float32)
    beta = 0.1 * jax.random.normal(keys[7], (4 * F,), jnp.float32)
    mean = 0.1 * jax.random.normal(keys[8], (4 * F,), jnp.float32)
    var = 1.0 + 0.1 * jnp.abs(jax.random.normal(keys[9], (4 * F,), jnp.float32))

    # Bt*L = 512 rows per grid step (fills the MXU M dim); grid = 2 (both TCs).
    out = inception_module_pallas(x, wb, w0, w1, w2, wpc,
                                  gamma, beta, mean, var, batch_tile=32)
    out = jax.block_until_ready(out)

    ref = inception_module_ref(x, wb, w0, w1, w2, wpc, gamma, beta, mean, var)
    assert out.shape == (B, 4 * F, L), out.shape
    max_err = float(jnp.max(jnp.abs(out - ref)))
    # bf16 MXU operands (f32 accumulate) vs an f32 reference: loose tolerance.
    assert jnp.allclose(out, ref, rtol=5e-2, atol=8e-2), max_err
    print("KERNEL_OK")
</pallas_src>

<mosaic_0001>
module attributes {stable_mosaic.version = 11 : i64} {
  func.func @_inception_kernel(%arg0: i32, %arg1: memref<512x8xf32, #tpu.memory_space<vmem>>, %arg2: memref<8x32xbf16, #tpu.memory_space<vmem>>, %arg3: memref<384x128xbf16, #tpu.memory_space<vmem>>, %arg4: memref<1x128xf32, #tpu.memory_space<vmem>>, %arg5: memref<512x128xf32, #tpu.memory_space<vmem>>, %arg6: memref<512x384xbf16, #tpu.memory_space<vmem>>) attributes {dimension_semantics = [#tpu.dimension_semantics<parallel>], iteration_bounds = array<i64: 2>, scalar_prefetch = 0 : i64, scratch_operands = 1 : i64, tpu.core_type = #tpu.core_type<tc>, window_params = [{transform_indices = @transform_0, window_bounds = array<i64: 512, 8>}, {pipeline_mode = #tpu.pipeline_mode<synchronous>, transform_indices = @transform_1, window_bounds = array<i64: 8, 32>}, {pipeline_mode = #tpu.pipeline_mode<synchronous>, transform_indices = @transform_2, window_bounds = array<i64: 384, 128>}, {pipeline_mode = #tpu.pipeline_mode<synchronous>, transform_indices = @transform_3, window_bounds = array<i64: 1, 128>}, {transform_indices = @transform_4, window_bounds = array<i64: 512, 128>}]} {
    %c0 = arith.constant 0 : index
    %c0_0 = arith.constant 0 : index
    %0 = vector.load %arg1[%c0, %c0_0] : memref<512x8xf32, #tpu.memory_space<vmem>>, vector<512x8xf32>
    %1 = tpu.iota {dimensions = array<i32: 0>} : vector<512x1xi32>
    %c16_i32 = arith.constant 16 : i32
    %c0_i32 = arith.constant 0 : i32
    %2 = arith.cmpi eq, %c16_i32, %c0_i32 : i32
    %c1_i32 = arith.constant 1 : i32
    %3 = arith.select %2, %c1_i32, %c16_i32 : i32
    %4 = vector.broadcast %3 : i32 to vector<512x1xi32>
    %5 = arith.remsi %1, %4 : vector<512x1xi32>
    %c0_i32_1 = arith.constant 0 : i32
    %6 = vector.broadcast %c0_i32_1 : i32 to vector<512x1xi32>
    %7 = arith.cmpi ne, %5, %6 : vector<512x1xi32>
    %c0_i32_2 = arith.constant 0 : i32
    %8 = vector.broadcast %c0_i32_2 : i32 to vector<512x1xi32>
    %9 = arith.cmpi slt, %5, %8 : vector<512x1xi32>
    %c0_i32_3 = arith.constant 0 : i32
    %10 = arith.cmpi slt, %3, %c0_i32_3 : i32
    %11 = vector.broadcast %10 : i1 to vector<512x1xi1>
    %12 = vector.broadcast %11 : vector<512x1xi1> to vector<512x1xi1>
    %13 = arith.xori %9, %12 : vector<512x1xi1>
    %14 = arith.andi %13, %7 : vector<512x1xi1>
    %15 = vector.broadcast %3 : i32 to vector<512x1xi32>
    %16 = arith.addi %5, %15 : vector<512x1xi32>
    %17 = arith.select %14, %16, %5 : vector<512x1xi1>, vector<512x1xi32>
    %18 = arith.truncf %0 : vector<512x8xf32> to vector<512x8xbf16>
    %c0_4 = arith.constant 0 : index
    %c0_5 = arith.constant 0 : index
    %19 = vector.load %arg2[%c0_4, %c0_5] : memref<8x32xbf16, #tpu.memory_space<vmem>>, vector<8x32xbf16>
    %cst = arith.constant dense<0.000000e+00> : vector<512x32xf32>
    %20 = tpu.matmul %18, %19, %cst {dimension_numbers = #tpu.dot_dimension_numbers<[1], [0], [0], [1], [0, 0, 1, 1], [], []>} : vector<512x8xbf16>, vector<8x32xbf16>, vector<512x32xf32> -> vector<512x32xf32>
    %c0_i32_6 = arith.constant 0 : i32
    %21 = vector.broadcast %c0_i32_6 : i32 to vector<512x1xi32>
    %22 = arith.cmpi eq, %17, %21 : vector<512x1xi32>
    %c1_i32_7 = arith.constant 1 : i32
    %23 = tpu.dynamic_rotate %0 by %c1_i32_7 dim 0 : vector<512x8xf32>, i32 -> vector<512x8xf32>
    %24 = vector.shape_cast %22 : vector<512x1xi1> to vector<512x1xi1>
    %25 = vector.broadcast %24 : vector<512x1xi1> to vector<512x8xi1>
    %26 = arith.select %25, %0, %23 : vector<512x8xi1>, vector<512x8xf32>
    %c15_i32 = arith.constant 15 : i32
    %27 = vector.broadcast %c15_i32 : i32 to vector<512x1xi32>
    %28 = arith.cmpi eq, %17, %27 : vector<512x1xi32>
    %c511_i32 = arith.constant 511 : i32
    %29 = tpu.dynamic_rotate %0 by %c511_i32 dim 0 : vector<512x8xf32>, i32 -> vector<512x8xf32>
    %30 = vector.shape_cast %28 : vector<512x1xi1> to vector<512x1xi1>
    %31 = vector.broadcast %30 : vector<512x1xi1> to vector<512x8xi1>
    %32 = arith.select %31, %0, %29 : vector<512x8xi1>, vector<512x8xf32>
    %33 = arith.maximumf %26, %0 : vector<512x8xf32>
    %34 = arith.maximumf %33, %32 : vector<512x8xf32>
    %c-4_i32 = arith.constant -4 : i32
    %35 = vector.broadcast %c-4_i32 : i32 to vector<512x1xi32>
    %36 = arith.addi %17, %35 : vector<512x1xi32>
    %c0_i32_8 = arith.constant 0 : i32
    %37 = vector.broadcast %c0_i32_8 : i32 to vector<512x1xi32>
    %38 = arith.cmpi sge, %36, %37 : vector<512x1xi32>
    %c-4_i32_9 = arith.constant -4 : i32
    %39 = vector.broadcast %c-4_i32_9 : i32 to vector<512x1xi32>
    %40 = arith.addi %17, %39 : vector<512x1xi32>
    %c16_i32_10 = arith.constant 16 : i32
    %41 = vector.broadcast %c16_i32_10 : i32 to vector<512x1xi32>
    %42 = arith.cmpi slt, %40, %41 : vector<512x1xi32>
    %43 = arith.andi %38, %42 : vector<512x1xi1>
    %c4_i32 = arith.constant 4 : i32
    %44 = tpu.dynamic_rotate %20 by %c4_i32 dim 0 : vector<512x32xf32>, i32 -> vector<512x32xf32>
    %cst_11 = arith.constant 0.000000e+00 : f32
    %45 = vector.shape_cast %43 : vector<512x1xi1> to vector<512x1xi1>
    %46 = vector.broadcast %45 : vector<512x1xi1> to vector<512x32xi1>
    %47 = vector.broadcast %cst_11 : f32 to vector<512x32xf32>
    %48 = arith.select %46, %44, %47 : vector<512x32xi1>, vector<512x32xf32>
    %c-3_i32 = arith.constant -3 : i32
    %49 = vector.broadcast %c-3_i32 : i32 to vector<512x1xi32>
    %50 = arith.addi %17, %49 : vector<512x1xi32>
    %c0_i32_12 = arith.constant 0 : i32
    %51 = vector.broadcast %c0_i32_12 : i32 to vector<512x1xi32>
    %52 = arith.cmpi sge, %50, %51 : vector<512x1xi32>
    %c-3_i32_13 = arith.constant -3 : i32
    %53 = vector.broadcast %c-3_i32_13 : i32 to vector<512x1xi32>
    %54 = arith.addi %17, %53 : vector<512x1xi32>
    %c16_i32_14 = arith.constant 16 : i32
    %55 = vector.broadcast %c16_i32_14 : i32 to vector<512x1xi32>
    %56 = arith.cmpi slt, %54, %55 : vector<512x1xi32>
    %57 = arith.andi %52, %56 : vector<512x1xi1>
    %c3_i32 = arith.constant 3 : i32
    %58 = tpu.dynamic_rotate %20 by %c3_i32 dim 0 : vector<512x32xf32>, i32 -> vector<512x32xf32>
    %cst_15 = arith.constant 0.000000e+00 : f32
    %59 = vector.shape_cast %57 : vector<512x1xi1> to vector<512x1xi1>
    %60 = vector.broadcast %59 : vector<512x1xi1> to vector<512x32xi1>
    %61 = vector.broadcast %cst_15 : f32 to vector<512x32xf32>
    %62 = arith.select %60, %58, %61 : vector<512x32xi1>, vector<512x32xf32>
    %c-2_i32 = arith.constant -2 : i32
    %63 = vector.broadcast %c-2_i32 : i32 to vector<512x1xi32>
    %64 = arith.addi %17, %63 : vector<512x1xi32>
    %c0_i32_16 = arith.constant 0 : i32
    %65 = vector.broadcast %c0_i32_16 : i32 to vector<512x1xi32>
    %66 = arith.cmpi sge, %64, %65 : vector<512x1xi32>
    %c-2_i32_17 = arith.constant -2 : i32
    %67 = vector.broadcast %c-2_i32_17 : i32 to vector<512x1xi32>
    %68 = arith.addi %17, %67 : vector<512x1xi32>
    %c16_i32_18 = arith.constant 16 : i32
    %69 = vector.broadcast %c16_i32_18 : i32 to vector<512x1xi32>
    %70 = arith.cmpi slt, %68, %69 : vector<512x1xi32>
    %71 = arith.andi %66, %70 : vector<512x1xi1>
    %c2_i32 = arith.constant 2 : i32
    %72 = tpu.dynamic_rotate %20 by %c2_i32 dim 0 : vector<512x32xf32>, i32 -> vector<512x32xf32>
    %cst_19 = arith.constant 0.000000e+00 : f32
    %73 = vector.shape_cast %71 : vector<512x1xi1> to vector<512x1xi1>
    %74 = vector.broadcast %73 : vector<512x1xi1> to vector<512x32xi1>
    %75 = vector.broadcast %cst_19 : f32 to vector<512x32xf32>
    %76 = arith.select %74, %72, %75 : vector<512x32xi1>, vector<512x32xf32>
    %c-1_i32 = arith.constant -1 : i32
    %77 = vector.broadcast %c-1_i32 : i32 to vector<512x1xi32>
    %78 = arith.addi %17, %77 : vector<512x1xi32>
    %c0_i32_20 = arith.constant 0 : i32
    %79 = vector.broadcast %c0_i32_20 : i32 to vector<512x1xi32>
    %80 = arith.cmpi sge, %78, %79 : vector<512x1xi32>
    %c-1_i32_21 = arith.constant -1 : i32
    %81 = vector.broadcast %c-1_i32_21 : i32 to vector<512x1xi32>
    %82 = arith.addi %17, %81 : vector<512x1xi32>
    %c16_i32_22 = arith.constant 16 : i32
    %83 = vector.broadcast %c16_i32_22 : i32 to vector<512x1xi32>
    %84 = arith.cmpi slt, %82, %83 : vector<512x1xi32>
    %85 = arith.andi %80, %84 : vector<512x1xi1>
    %c1_i32_23 = arith.constant 1 : i32
    %86 = tpu.dynamic_rotate %20 by %c1_i32_23 dim 0 : vector<512x32xf32>, i32 -> vector<512x32xf32>
    %cst_24 = arith.constant 0.000000e+00 : f32
    %87 = vector.shape_cast %85 : vector<512x1xi1> to vector<512x1xi1>
    %88 = vector.broadcast %87 : vector<512x1xi1> to vector<512x32xi1>
    %89 = vector.broadcast %cst_24 : f32 to vector<512x32xf32>
    %90 = arith.select %88, %86, %89 : vector<512x32xi1>, vector<512x32xf32>
    %c0_i32_25 = arith.constant 0 : i32
    %91 = vector.broadcast %c0_i32_25 : i32 to vector<512x1xi32>
    %92 = arith.addi %17, %91 : vector<512x1xi32>
    %c0_i32_26 = arith.constant 0 : i32
    %93 = vector.broadcast %c0_i32_26 : i32 to vector<512x1xi32>
    %94 = arith.cmpi sge, %92, %93 : vector<512x1xi32>
    %c0_i32_27 = arith.constant 0 : i32
    %95 = vector.broadcast %c0_i32_27 : i32 to vector<512x1xi32>
    %96 = arith.addi %17, %95 : vector<512x1xi32>
    %c16_i32_28 = arith.constant 16 : i32
    %97 = vector.broadcast %c16_i32_28 : i32 to vector<512x1xi32>
    %98 = arith.cmpi slt, %96, %97 : vector<512x1xi32>
    %99 = arith.andi %94, %98 : vector<512x1xi1>
    %cst_29 = arith.constant 0.000000e+00 : f32
    %100 = vector.shape_cast %99 : vector<512x1xi1> to vector<512x1xi1>
    %101 = vector.broadcast %100 : vector<512x1xi1> to vector<512x32xi1>
    %102 = vector.broadcast %cst_29 : f32 to vector<512x32xf32>
    %103 = arith.select %101, %20, %102 : vector<512x32xi1>, vector<512x32xf32>
    %c1_i32_30 = arith.constant 1 : i32
    %104 = vector.broadcast %c1_i32_30 : i32 to vector<512x1xi32>
    %105 = arith.addi %17, %104 : vector<512x1xi32>
    %c0_i32_31 = arith.constant 0 : i32
    %106 = vector.broadcast %c0_i32_31 : i32 to vector<512x1xi32>
    %107 = arith.cmpi sge, %105, %106 : vector<512x1xi32>
    %c1_i32_32 = arith.constant 1 : i32
    %108 = vector.broadcast %c1_i32_32 : i32 to vector<512x1xi32>
    %109 = arith.addi %17, %108 : vector<512x1xi32>
    %c16_i32_33 = arith.constant 16 : i32
    %110 = vector.broadcast %c16_i32_33 : i32 to vector<512x1xi32>
    %111 = arith.cmpi slt, %109, %110 : vector<512x1xi32>
    %112 = arith.andi %107, %111 : vector<512x1xi1>
    %c511_i32_34 = arith.constant 511 : i32
    %113 = tpu.dynamic_rotate %20 by %c511_i32_34 dim 0 : vector<512x32xf32>, i32 -> vector<512x32xf32>
    %cst_35 = arith.constant 0.000000e+00 : f32
    %114 = vector.shape_cast %112 : vector<512x1xi1> to vector<512x1xi1>
    %115 = vector.broadcast %114 : vector<512x1xi1> to vector<512x32xi1>
    %116 = vector.broadcast %cst_35 : f32 to vector<512x32xf32>
    %117 = arith.select %115, %113, %116 : vector<512x32xi1>, vector<512x32xf32>
    %c2_i32_36 = arith.constant 2 : i32
    %118 = vector.broadcast %c2_i32_36 : i32 to vector<512x1xi32>
    %119 = arith.addi %17, %118 : vector<512x1xi32>
    %c0_i32_37 = arith.constant 0 : i32
    %120 = vector.broadcast %c0_i32_37 : i32 to vector<512x1xi32>
    %121 = arith.cmpi sge, %119, %120 : vector<512x1xi32>
    %c2_i32_38 = arith.constant 2 : i32
    %122 = vector.broadcast %c2_i32_38 : i32 to vector<512x1xi32>
    %123 = arith.addi %17, %122 : vector<512x1xi32>
    %c16_i32_39 = arith.constant 16 : i32
    %124 = vector.broadcast %c16_i32_39 : i32 to vector<512x1xi32>
    %125 = arith.cmpi slt, %123, %124 : vector<512x1xi32>
    %126 = arith.andi %121, %125 : vector<512x1xi1>
    %c510_i32 = arith.constant 510 : i32
    %127 = tpu.dynamic_rotate %20 by %c510_i32 dim 0 : vector<512x32xf32>, i32 -> vector<512x32xf32>
    %cst_40 = arith.constant 0.000000e+00 : f32
    %128 = vector.shape_cast %126 : vector<512x1xi1> to vector<512x1xi1>
    %129 = vector.broadcast %128 : vector<512x1xi1> to vector<512x32xi1>
    %130 = vector.broadcast %cst_40 : f32 to vector<512x32xf32>
    %131 = arith.select %129, %127, %130 : vector<512x32xi1>, vector<512x32xf32>
    %c3_i32_41 = arith.constant 3 : i32
    %132 = vector.broadcast %c3_i32_41 : i32 to vector<512x1xi32>
    %133 = arith.addi %17, %132 : vector<512x1xi32>
    %c0_i32_42 = arith.constant 0 : i32
    %134 = vector.broadcast %c0_i32_42 : i32 to vector<512x1xi32>
    %135 = arith.cmpi sge, %133, %134 : vector<512x1xi32>
    %c3_i32_43 = arith.constant 3 : i32
    %136 = vector.broadcast %c3_i32_43 : i32 to vector<512x1xi32>
    %137 = arith.addi %17, %136 : vector<512x1xi32>
    %c16_i32_44 = arith.constant 16 : i32
    %138 = vector.broadcast %c16_i32_44 : i32 to vector<512x1xi32>
    %139 = arith.cmpi slt, %137, %138 : vector<512x1xi32>
    %140 = arith.andi %135, %139 : vector<512x1xi1>
    %c509_i32 = arith.constant 509 : i32
    %141 = tpu.dynamic_rotate %20 by %c509_i32 dim 0 : vector<512x32xf32>, i32 -> vector<512x32xf32>
    %cst_45 = arith.constant 0.000000e+00 : f32
    %142 = vector.shape_cast %140 : vector<512x1xi1> to vector<512x1xi1>
    %143 = vector.broadcast %142 : vector<512x1xi1> to vector<512x32xi1>
    %144 = vector.broadcast %cst_45 : f32 to vector<512x32xf32>
    %145 = arith.select %143, %141, %144 : vector<512x32xi1>, vector<512x32xf32>
    %c4_i32_46 = arith.constant 4 : i32
    %146 = vector.broadcast %c4_i32_46 : i32 to vector<512x1xi32>
    %147 = arith.addi %17, %146 : vector<512x1xi32>
    %c0_i32_47 = arith.constant 0 : i32
    %148 = vector.broadcast %c0_i32_47 : i32 to vector<512x1xi32>
    %149 = arith.cmpi sge, %147, %148 : vector<512x1xi32>
    %c4_i32_48 = arith.constant 4 : i32
    %150 = vector.broadcast %c4_i32_48 : i32 to vector<512x1xi32>
    %151 = arith.addi %17, %150 : vector<512x1xi32>
    %c16_i32_49 = arith.constant 16 : i32
    %152 = vector.broadcast %c16_i32_49 : i32 to vector<512x1xi32>
    %153 = arith.cmpi slt, %151, %152 : vector<512x1xi32>
    %154 = arith.andi %149, %153 : vector<512x1xi1>
    %c508_i32 = arith.constant 508 : i32
    %155 = tpu.dynamic_rotate %20 by %c508_i32 dim 0 : vector<512x32xf32>, i32 -> vector<512x32xf32>
    %cst_50 = arith.constant 0.000000e+00 : f32
    %156 = vector.shape_cast %154 : vector<512x1xi1> to vector<512x1xi1>
    %157 = vector.broadcast %156 : vector<512x1xi1> to vector<512x32xi1>
    %158 = vector.broadcast %cst_50 : f32 to vector<512x32xf32>
    %159 = arith.select %157, %155, %158 : vector<512x32xi1>, vector<512x32xf32>
    %cst_51 = arith.constant 0.000000e+00 : f32
    %160 = vector.broadcast %cst_51 : f32 to vector<512x88xf32>
    %161 = tpu.concatenate %48, %62, %76, %90 in 1 : vector<512x32xf32>, vector<512x32xf32>, vector<512x32xf32>, vector<512x32xf32> -> vector<512x128xf32>
    %162 = arith.truncf %161 : vector<512x128xf32> to vector<512x128xbf16>
    %c0_52 = arith.constant 0 : index
    %c0_53 = arith.constant 0 : index
    %163 = vector.load %arg6[%c0_52, %c0_53] : memref<512x384xbf16, #tpu.memory_space<vmem>>, vector<512x128xbf16>
    tpu.vector_store %arg6[%c0_52, %c0_53], %162 {strides = array<i32>} : memref<512x384xbf16, #tpu.memory_space<vmem>>, vector<512x128xbf16>,
    %164 = tpu.concatenate %103, %117, %131, %145 in 1 : vector<512x32xf32>, vector<512x32xf32>, vector<512x32xf32>, vector<512x32xf32> -> vector<512x128xf32>
    %165 = arith.truncf %164 : vector<512x128xf32> to vector<512x128xbf16>
    %c0_54 = arith.constant 0 : index
    %c128 = arith.constant 128 : index
    %166 = vector.load %arg6[%c0_54, %c128] : memref<512x384xbf16, #tpu.memory_space<vmem>>, vector<512x128xbf16>
    tpu.vector_store %arg6[%c0_54, %c128], %165 {strides = array<i32>} : memref<512x384xbf16, #tpu.memory_space<vmem>>, vector<512x128xbf16>,
    %167 = tpu.concatenate %159, %34, %160 in 1 : vector<512x32xf32>, vector<512x8xf32>, vector<512x88xf32> -> vector<512x128xf32>
    %168 = arith.truncf %167 : vector<512x128xf32> to vector<512x128xbf16>
    %c0_55 = arith.constant 0 : index
    %c256 = arith.constant 256 : index
    %169 = vector.load %arg6[%c0_55, %c256] : memref<512x384xbf16, #tpu.memory_space<vmem>>, vector<512x128xbf16>
    tpu.vector_store %arg6[%c0_55, %c256], %168 {strides = array<i32>} : memref<512x384xbf16, #tpu.memory_space<vmem>>, vector<512x128xbf16>,
    %c0_56 = arith.constant 0 : index
    %c0_57 = arith.constant 0 : index
    %170 = vector.load %arg6[%c0_56, %c0_57] : memref<512x384xbf16, #tpu.memory_space<vmem>>, vector<512x384xbf16>
    %c0_58 = arith.constant 0 : index
    %c0_59 = arith.constant 0 : index
    %171 = vector.load %arg3[%c0_58, %c0_59] : memref<384x128xbf16, #tpu.memory_space<vmem>>, vector<384x128xbf16>
    %cst_60 = arith.constant dense<0.000000e+00> : vector<512x128xf32>
    %172 = tpu.matmul %170, %171, %cst_60 {dimension_numbers = #tpu.dot_dimension_numbers<[1], [0], [0], [1], [0, 0, 1, 1], [], []>} : vector<512x384xbf16>, vector<384x128xbf16>, vector<512x128xf32> -> vector<512x128xf32>
    %c0_61 = arith.constant 0 : index
    %c0_62 = arith.constant 0 : index
    %173 = vector.load %arg4[%c0_61, %c0_62] : memref<1x128xf32, #tpu.memory_space<vmem>>, vector<1x128xf32>
    %174 = vector.broadcast %173 : vector<1x128xf32> to vector<512x128xf32>
    %175 = arith.addf %172, %174 : vector<512x128xf32>
    %cst_63 = arith.constant 0.000000e+00 : f32
    %176 = vector.broadcast %cst_63 : f32 to vector<512x128xf32>
    %177 = arith.maximumf %175, %176 : vector<512x128xf32>
    %c0_64 = arith.constant 0 : index
    %c0_65 = arith.constant 0 : index
    %178 = vector.load %arg5[%c0_64, %c0_65] : memref<512x128xf32, #tpu.memory_space<vmem>>, vector<512x128xf32>
    tpu.vector_store %arg5[%c0_64, %c0_65], %177 {strides = array<i32>} : memref<512x128xf32, #tpu.memory_space<vmem>>, vector<512x128xf32>,
    return
  }
  func.func @transform_0(%arg0: i32) -> (i32, i32) {
    %c0_i32 = arith.constant 0 : i32
    %c0_i32_0 = arith.constant 0 : i32
    return %arg0, %c0_i32 : i32, i32
  }
  func.func @transform_1(%arg0: i32) -> (i32, i32) {
    %c0_i32 = arith.constant 0 : i32
    %c0_i32_0 = arith.constant 0 : i32
    %c0_i32_1 = arith.constant 0 : i32
    return %c0_i32, %c0_i32_0 : i32, i32
  }
  func.func @transform_2(%arg0: i32) -> (i32, i32) {
    %c0_i32 = arith.constant 0 : i32
    %c0_i32_0 = arith.constant 0 : i32
    %c0_i32_1 = arith.constant 0 : i32
    return %c0_i32, %c0_i32_0 : i32, i32
  }
  func.func @transform_3(%arg0: i32) -> (i32, i32) {
    %c0_i32 = arith.constant 0 : i32
    %c0_i32_0 = arith.constant 0 : i32
    %c0_i32_1 = arith.constant 0 : i32
    return %c0_i32, %c0_i32_0 : i32, i32
  }
  func.func @transform_4(%arg0: i32) -> (i32, i32) {
    %c0_i32 = arith.constant 0 : i32
    %c0_i32_0 = arith.constant 0 : i32
    return %arg0, %c0_i32 : i32, i32
  }
}

</mosaic_0001>

<llo_original>
// kernel: tpu_custom_call.1
$region0: #{tpu_custom_call.1}
  #allocation0 [shape = 'u32[]', space=smem, size = 0x4, offset = 0x4, fixed_abs, tag = 'smem constant byte address 0x4 - core index']
  #allocation1 [shape = 'u32[72,128]{1,0:T(1,128)}', space=vmem, size = 0x9000, scoped, tag = 'internal scratch']
  #allocation2 [shape = 'bf16[512,384]{1,0:T(8,128)(2,1)}', space=vmem, size = 0x60000, scoped, tag = 'scratch operand']
  %s0 = inlined_call_operand.vmem [shape: f32[1024,8], index: 0, kind: input, shape index: {}]
  %s1 = inlined_call_operand.vmem [shape: bf16[8,32], index: 1, kind: input, shape index: {}]
  %s2 = inlined_call_operand.vmem [shape: bf16[384,128], index: 2, kind: input, shape index: {}]
  %s3 = inlined_call_operand.vmem [shape: f32[1,128], index: 3, kind: input, shape index: {}]
  %s4 = inlined_call_operand.hbm [shape: f32[1024,128], index: 4, kind: output, shape index: {}]
  %s5 = sld [smem:[#allocation0]]
  $region49: #{tpu_custom_call.1} parent=0
    _
  %s7 = ssub.s32 1, %s5
  %s8 = scalar_select 0, %s7, %s5
  $region1: #{tpu_custom_call.1} parent=0
    #allocation3 [shape = 'u8[524288]{0}', space=vmem, size = 0x80000, scoped, tag = 'output window, operand 0']
    #allocation4 [shape = 's32[2]{0}', space=sflag, size = 0x8, scoped, tag = 'scoped memory for tpu_custom_call.1']
    %9 = vsyncpa [#allocation4], 0
    %s10 = scalar_lea.sflag [#allocation4], 1
    %11 = vsyncpa %s10, 0
    loop: start=0, step=1, limit=4
    $region2: #{tpu_custom_call.1} parent=1 // loop_pre_header
      _
    $region3: #{tpu_custom_call.1} parent=1 // loop_header
      %s13 = sphi 0, %s17
      %p14 = scmp.ge.s32.totalorder %s13, 4
      %s23 = sphi 0, %s25
      %s26 = sphi 0, %s23
      %s27 = sphi 0, %s26
      %s43 = sphi 0, %s27
      %s47 = sphi 0, %s47
      %s49 = sphi 0, %s47
      %s50 = sphi 0, %s49
      %s64 = sphi 0, %s50
      %s68 = sphi 0, %s68
      %s70 = sphi 0, %s68
      %s71 = sphi 0, %s70
      %s85 = sphi 0, %s71
      %s89 = sphi 0, %s89
      %s91 = sphi 0, %s89
      %s92 = sphi 0, %s91
      %s106 = sphi 0, %s92
      %s112 = sphi 0, %s114
      %s115 = sphi 0, %s112
      %s116 = sphi 0, %s115
      %s132 = sphi 0, %s116
    $region4: #{tpu_custom_call.1} parent=1 // loop_header_branch
      %16 = sbr.rel (%p14) target = $region8
    $region5: #{tpu_custom_call.1} parent=1 // loop_body
      %s18 = ssub.s32 %s13, 1
      %s19 = ssub.s32 %s13, 2
      %s20 = sadd.s32 %s13, 1
      %s21 = ssub.s32 %s13, %s20
      %p22 = scmp.eq.s32.totalorder %s21, 0
      %s24 = sadd.s32 %s23, 1
      %s25 = scalar_select %p22, %s23, %s24
      %p28 = pneg %p22
      %p29 = scmp.eq.s32.totalorder %s13, 1
      %p30 = por %p28, %p29
      %p31 = scmp.ne.s32.totalorder %s23, %s26
      %p32 = scmp.eq.s32.totalorder %s13, 0
      %p33 = por %p31, %p32
      %p34 = scmp.ne.s32.totalorder %s23, %s26
      %p35 = scmp.eq.s32.totalorder %s18, 1
      %p36 = por %p34, %p35
      %p37 = scmp.ne.s32.totalorder %s26, %s27
      %p38 = scmp.eq.s32.totalorder %s18, 0
      %p39 = por %p37, %p38
      %p40 = scmp.ne.s32.totalorder %s26, %s27
      %p41 = scmp.eq.s32.totalorder %s19, 1
      %p42 = por %p40, %p41
      %p44 = scmp.ne.s32.totalorder %s27, %s43
      %p45 = scmp.eq.s32.totalorder %s19, 0
      %p46 = por %p44, %p45
      %s48 = sadd.s32 %s47, 1
      %p51 = scmp.eq.s32.totalorder %s13, 1
      %p52 = scmp.ne.s32.totalorder %s47, %s49
      %p53 = scmp.eq.s32.totalorder %s13, 0
      %p54 = por %p52, %p53
      %p55 = scmp.ne.s32.totalorder %s47, %s49
      %p56 = scmp.eq.s32.totalorder %s18, 1
      %p57 = por %p55, %p56
      %p58 = scmp.ne.s32.totalorder %s49, %s50
      %p59 = scmp.eq.s32.totalorder %s18, 0
      %p60 = por %p58, %p59
      %p61 = scmp.ne.s32.totalorder %s49, %s50
      %p62 = scmp.eq.s32.totalorder %s19, 1
      %p63 = por %p61, %p62
      %p65 = scmp.ne.s32.totalorder %s50, %s64
      %p66 = scmp.eq.s32.totalorder %s19, 0
      %p67 = por %p65, %p66
      %s69 = sadd.s32 %s68, 1
      %p72 = scmp.eq.s32.totalorder %s13, 1
      %p73 = scmp.ne.s32.totalorder %s68, %s70
      %p74 = scmp.eq.s32.totalorder %s13, 0
      %p75 = por %p73, %p74
      %p76 = scmp.ne.s32.totalorder %s68, %s70
      %p77 = scmp.eq.s32.totalorder %s18, 1
      %p78 = por %p76, %p77
      %p79 = scmp.ne.s32.totalorder %s70, %s71
      %p80 = scmp.eq.s32.totalorder %s18, 0
      %p81 = por %p79, %p80
      %p82 = scmp.ne.s32.totalorder %s70, %s71
      %p83 = scmp.eq.s32.totalorder %s19, 1
      %p84 = por %p82, %p83
      %p86 = scmp.ne.s32.totalorder %s71, %s85
      %p87 = scmp.eq.s32.totalorder %s19, 0
      %p88 = por %p86, %p87
      %s90 = sadd.s32 %s89, 1
      %p93 = scmp.eq.s32.totalorder %s13, 1
      %p94 = scmp.ne.s32.totalorder %s89, %s91
      %p95 = scmp.eq.s32.totalorder %s13, 0
      %p96 = por %p94, %p95
      %p97 = scmp.ne.s32.totalorder %s89, %s91
      %p98 = scmp.eq.s32.totalorder %s18, 1
      %p99 = por %p97, %p98
      %p100 = scmp.ne.s32.totalorder %s91, %s92
      %p101 = scmp.eq.s32.totalorder %s18, 0
      %p102 = por %p100, %p101
      %p103 = scmp.ne.s32.totalorder %s91, %s92
      %p104 = scmp.eq.s32.totalorder %s19, 1
      %p105 = por %p103, %p104
      %p107 = scmp.ne.s32.totalorder %s92, %s106
      %p108 = scmp.eq.s32.totalorder %s19, 0
      %p109 = por %p107, %p108
      %s110 = ssub.s32 %s13, %s20
      %p111 = scmp.eq.s32.totalorder %s110, 0
      %s113 = sadd.s32 %s112, 1
      %s114 = scalar_select %p111, %s112, %s113
      %p117 = pneg %p111
      %p118 = scmp.eq.s32.totalorder %s13, 1
      %p119 = por %p117, %p118
      %p120 = scmp.ne.s32.totalorder %s112, %s115
      %p121 = scmp.eq.s32.totalorder %s13, 0
      %p122 = por %p120, %p121
      %p123 = scmp.ne.s32.totalorder %s112, %s115
      %p124 = scmp.eq.s32.totalorder %s18, 1
      %p125 = por %p123, %p124
      %p126 = scmp.ne.s32.totalorder %s115, %s116
      %p127 = scmp.eq.s32.totalorder %s18, 0
      %p128 = por %p126, %p127
      %p129 = scmp.ne.s32.totalorder %s115, %s116
      %p130 = scmp.eq.s32.totalorder %s19, 1
      %p131 = por %p129, %p130
      %p133 = scmp.ne.s32.totalorder %s116, %s132
      %p134 = scmp.eq.s32.totalorder %s19, 0
      %p135 = por %p133, %p134
      %p136 = scmp.le.s32.totalorder 1, %s13
      %p137 = scmp.lt.s32.totalorder %s13, 3
      %p138 = pnand %p136, %p137
      %p139 = pneg %p138
      // Predicated region
      $region9: #{tpu_custom_call.1} parent=5 // pred_check
        _
      $region10: #{tpu_custom_call.1} parent=5 // pred_check_branch
        %141 = sbr.rel (%p138) target = $region12
      $region11: #{tpu_custom_call.1} parent=5 // pred_region
        %s142 = ssub.s32 %s13, 1
        // Predicated region
        $region13: #{tpu_custom_call.1} parent=11 // pred_check
          %p143 = pneg %p60
        $region14: #{tpu_custom_call.1} parent=11 // pred_check_branch
          %145 = sbr.rel (%p143) target = $region16
        $region15: #{tpu_custom_call.1} parent=11 // pred_region
          _
        $region16: #{tpu_custom_call.1} parent=11 // pred_fallthru
          _
        // Predicated region
        $region17: #{tpu_custom_call.1} parent=11 // pred_check
          %p146 = pneg %p81
        $region18: #{tpu_custom_call.1} parent=11 // pred_check_branch
          %148 = sbr.rel (%p146) target = $region20
        $region19: #{tpu_custom_call.1} parent=11 // pred_region
          _
        $region20: #{tpu_custom_call.1} parent=11 // pred_fallthru
          _
        // Predicated region
        $region21: #{tpu_custom_call.1} parent=11 // pred_check
          %p149 = pneg %p102
        $region22: #{tpu_custom_call.1} parent=11 // pred_check_branch
          %151 = sbr.rel (%p149) target = $region24
        $region23: #{tpu_custom_call.1} parent=11 // pred_region
          _
        $region24: #{tpu_custom_call.1} parent=11 // pred_fallthru
          _
      $region12: #{tpu_custom_call.1} parent=5 // pred_fallthru
        _
      %p152 = scmp.lt.s32.totalorder %s13, 2
      // Predicated region
      $region25: #{tpu_custom_call.1} parent=5 // pred_check
        %p153 = pneg %p152
      $region26: #{tpu_custom_call.1} parent=5 // pred_check_branch
        %155 = sbr.rel (%p153) target = $region28
      $region27: #{tpu_custom_call.1} parent=5 // pred_region
        // Predicated region
        $region29: #{tpu_custom_call.1} parent=27 // pred_check
          %p156 = pneg %p33
        $region30: #{tpu_custom_call.1} parent=27 // pred_check_branch
          %158 = sbr.rel (%p156) target = $region32
        $region31: #{tpu_custom_call.1} parent=27 // pred_region
          %s159 = smul.u32 64, %s13
          %p160 = scmp.lt.s32.totalorder %s159, 127
          %s161 = scalar_select %p160, %s159, 127
          %s162 = smul.addr %s161, 8
          %s163 = scalar_lea.vmem %s0, %s162
          %s164 = smul.u32 64, %s13
        $region32: #{tpu_custom_call.1} parent=27 // pred_fallthru
          _
      $region28: #{tpu_custom_call.1} parent=5 // pred_fallthru
        _
      %p165 = scmp.le.s32.totalorder 1, %s13
      %p166 = scmp.lt.s32.totalorder %s13, 3
      %p167 = pnand %p165, %p166
      %p168 = pneg %p167
      // Predicated region
      $region33: #{tpu_custom_call.1} parent=5 // pred_check
        _
      $region34: #{tpu_custom_call.1} parent=5 // pred_check_branch
        %170 = sbr.rel (%p167) target = $region36
      $region35: #{tpu_custom_call.1} parent=5 // pred_region
        %s171 = ssub.s32 %s13, 1
        %s172 = smul.u32 64, %s18
        %p173 = scmp.lt.s32.totalorder %s172, 127
        %s174 = scalar_select %p173, %s172, 127
        %s175 = smul.addr %s174, 8
        %s176 = scalar_lea.vmem %s0, %s175
        %p177 = pneg %p39
        %p178 = pneg %p36
        %p179 = pneg %p60
        %p180 = pneg %p57
        %p181 = pneg %p81
        %p182 = pneg %p78
        %p183 = pneg %p102
        %p184 = pneg %p99
        %p185 = pneg %p128
        %p186 = pneg %p125
        %s187 = sand.u32 %s115, 1
        %s188 = scalar_lea.sflag [#allocation4], %s187
        %s189 = sand.u32 %s115, 1
        %s190 = smul.addr %s189, 512
        %s191 = scalar_lea.vmem [#allocation3], %s190
        %s192 = smul.u32 64, %s18
        %p193 = scmp.lt.s32.totalorder %s192, 127
        %s194 = scalar_select %p193, %s192, 127
        %s195 = smul.addr %s194, 8
        %s196 = scalar_lea.vmem %s0, %s195
        %s197 = smul.u32 64, %s18
        %s198 = smul.u32 64, %s18
        %v200 = vld [vmem:[%s196] sm:$0xff]
        %v201 = vld [vmem:[%s196 + $0x8] sm:$0xff]
        %v202 = vld [vmem:[%s196 + $0x10] sm:$0xff]
        %v203 = vld [vmem:[%s196 + $0x18] sm:$0xff]
        %v204 = vld [vmem:[%s196 + $0x20] sm:$0xff]
        %v205 = vld [vmem:[%s196 + $0x28] sm:$0xff]
        %v206 = vld [vmem:[%s196 + $0x30] sm:$0xff]
        %v207 = vld [vmem:[%s196 + $0x38] sm:$0xff]
        %v208 = vld [vmem:[%s196 + $0x40] sm:$0xff]
        %v209 = vld [vmem:[%s196 + $0x48] sm:$0xff]
        %v210 = vld [vmem:[%s196 + $0x50] sm:$0xff]
        %v211 = vld [vmem:[%s196 + $0x58] sm:$0xff]
        %v212 = vld [vmem:[%s196 + $0x60] sm:$0xff]
        %v213 = vld [vmem:[%s196 + $0x68] sm:$0xff]
        %v214 = vld [vmem:[%s196 + $0x70] sm:$0xff]
        %v215 = vld [vmem:[%s196 + $0x78] sm:$0xff]
        %v216 = vld [vmem:[%s196 + $0x80] sm:$0xff]
        %v217 = vld [vmem:[%s196 + $0x88] sm:$0xff]
        %v218 = vld [vmem:[%s196 + $0x90] sm:$0xff]
        %v219 = vld [vmem:[%s196 + $0x98] sm:$0xff]
        %v220 = vld [vmem:[%s196 + $0xa0] sm:$0xff]
        %v221 = vld [vmem:[%s196 + $0xa8] sm:$0xff]
        %v222 = vld [vmem:[%s196 + $0xb0] sm:$0xff]
        %v223 = vld [vmem:[%s196 + $0xb8] sm:$0xff]
        %v224 = vld [vmem:[%s196 + $0xc0] sm:$0xff]
        %v225 = vld [vmem:[%s196 + $0xc8] sm:$0xff]
        %v226 = vld [vmem:[%s196 + $0xd0] sm:$0xff]
        %v227 = vld [vmem:[%s196 + $0xd8] sm:$0xff]
        %v228 = vld [vmem:[%s196 + $0xe0] sm:$0xff]
        %v229 = vld [vmem:[%s196 + $0xe8] sm:$0xff]
        %v230 = vld [vmem:[%s196 + $0xf0] sm:$0xff]
        %v231 = vld [vmem:[%s196 + $0xf8] sm:$0xff]
        %v232 = vld [vmem:[%s196 + $0x100] sm:$0xff]
        %v233 = vld [vmem:[%s196 + $0x108] sm:$0xff]
        %v234 = vld [vmem:[%s196 + $0x110] sm:$0xff]
        %v235 = vld [vmem:[%s196 + $0x118] sm:$0xff]
        %v236 = vld [vmem:[%s196 + $0x120] sm:$0xff]
        %v237 = vld [vmem:[%s196 + $0x128] sm:$0xff]
        %v238 = vld [vmem:[%s196 + $0x130] sm:$0xff]
        %v239 = vld [vmem:[%s196 + $0x138] sm:$0xff]
        %v240 = vld [vmem:[%s196 + $0x140] sm:$0xff]
        %v241 = vld [vmem:[%s196 + $0x148] sm:$0xff]
        %v242 = vld [vmem:[%s196 + $0x150] sm:$0xff]
        %v243 = vld [vmem:[%s196 + $0x158] sm:$0xff]
        %v244 = vld [vmem:[%s196 + $0x160] sm:$0xff]
        %v245 = vld [vmem:[%s196 + $0x168] sm:$0xff]
        %v246 = vld [vmem:[%s196 + $0x170] sm:$0xff]
        %v247 = vld [vmem:[%s196 + $0x178] sm:$0xff]
        %v248 = vld [vmem:[%s196 + $0x180] sm:$0xff]
        %v249 = vld [vmem:[%s196 + $0x188] sm:$0xff]
        %v250 = vld [vmem:[%s196 + $0x190] sm:$0xff]
        %v251 = vld [vmem:[%s196 + $0x198] sm:$0xff]
        %v252 = vld [vmem:[%s196 + $0x1a0] sm:$0xff]
        %v253 = vld [vmem:[%s196 + $0x1a8] sm:$0xff]
        %v254 = vld [vmem:[%s196 + $0x1b0] sm:$0xff]
        %v255 = vld [vmem:[%s196 + $0x1b8] sm:$0xff]
        %v256 = vld [vmem:[%s196 + $0x1c0] sm:$0xff]
        %v257 = vld [vmem:[%s196 + $0x1c8] sm:$0xff]
        %v258 = vld [vmem:[%s196 + $0x1d0] sm:$0xff]
        %v259 = vld [vmem:[%s196 + $0x1d8] sm:$0xff]
        %v260 = vld [vmem:[%s196 + $0x1e0] sm:$0xff]
        %v261 = vld [vmem:[%s196 + $0x1e8] sm:$0xff]
        %v262 = vld [vmem:[%s196 + $0x1f0] sm:$0xff]
        %v263 = vld [vmem:[%s196 + $0x1f8] sm:$0xff]
        %v264 = vlaneseq
        %v265 = vshrl.u32 %v264, 7
        %v266 = vadd.s32 %v265, 8
        %v267 = vadd.s32 %v265, 16
        %v268 = vadd.s32 %v265, 24
        %v269 = vadd.s32 %v265, 32
        %v270 = vadd.s32 %v265, 40
        %v271 = vadd.s32 %v265, 48
        %v272 = vadd.s32 %v265, 56
        %v273 = vadd.s32 %v265, 64
        %v274 = vadd.s32 %v265, 72
        %v275 = vadd.s32 %v265, 80
        %v276 = vadd.s32 %v265, 88
        %v277 = vadd.s32 %v265, 96
        %v278 = vadd.s32 %v265, 104
        %v279 = vadd.s32 %v265, 112
        %v280 = vadd.s32 %v265, 120
        %v281 = vadd.s32 %v265, 128
        %v282 = vadd.s32 %v265, 136
        %v283 = vadd.s32 %v265, 144
        %v284 = vadd.s32 %v265, 152
        %v285 = vadd.s32 %v265, 160
        %v286 = vadd.s32 %v265, 168
        %v287 = vadd.s32 %v265, 176
        %v288 = vadd.s32 %v265, 184
        %v289 = vadd.s32 %v265, 192
        %v290 = vadd.s32 %v265, 200
        %v291 = vadd.s32 %v265, 208
        %v292 = vadd.s32 %v265, 216
        %v293 = vadd.s32 %v265, 224
        %v294 = vadd.s32 %v265, 232
        %v295 = vadd.s32 %v265, 240
        %v296 = vadd.s32 %v265, 248
        %v297 = vadd.s32 %v265, 256
        %v298 = vadd.s32 %v265, 264
        %v299 = vadd.s32 %v265, 272
        %v300 = vadd.s32 %v265, 280
        %v301 = vadd.s32 %v265, 288
        %v302 = vadd.s32 %v265, 296
        %v303 = vadd.s32 %v265, 304
        %v304 = vadd.s32 %v265, 312
        %v305 = vadd.s32 %v265, 320
        %v306 = vadd.s32 %v265, 328
        %v307 = vadd.s32 %v265, 336
        %v308 = vadd.s32 %v265, 344
        %v309 = vadd.s32 %v265, 352
        %v310 = vadd.s32 %v265, 360
        %v311 = vadd.s32 %v265, 368
        %v312 = vadd.s32 %v265, 376
        %v313 = vadd.s32 %v265, 384
        %v314 = vadd.s32 %v265, 392
        %v315 = vadd.s32 %v265, 400
        %v316 = vadd.s32 %v265, 408
        %v317 = vadd.s32 %v265, 416
        %v318 = vadd.s32 %v265, 424
        %v319 = vadd.s32 %v265, 432
        %v320 = vadd.s32 %v265, 440
        %v321 = vadd.s32 %v265, 448
        %v322 = vadd.s32 %v265, 456
        %v323 = vadd.s32 %v265, 464
        %v324 = vadd.s32 %v265, 472
        %v325 = vadd.s32 %v265, 480
        %v326 = vadd.s32 %v265, 488
        %v327 = vadd.s32 %v265, 496
        %v328 = vadd.s32 %v265, 504
        %vm329 = vcmp.lt.s32.totalorder %v265, 0
        %v330 = vsub.s32 0, %v265
        %v331 = vsel %vm329, %v330, %v265
        %v332 = vshrl.u32 %v331, 4
        %v333 = vand.u32 %v331, 15
        %v334 = vsub.s32 0, %v333
        %v335 = vsel %vm329, %v334, %v333
        %vm336 = vcmp.lt.s32.totalorder %v266, 0
        %v337 = vsub.s32 0, %v266
        %v338 = vsel %vm336, %v337, %v266
        %v339 = vshrl.u32 %v338, 4
        %v340 = vand.u32 %v338, 15
        %v341 = vsub.s32 0, %v340
        %v342 = vsel %vm336, %v341, %v340
        %vm343 = vcmp.lt.s32.totalorder %v267, 0
        %v344 = vsub.s32 0, %v267
        %v345 = vsel %vm343, %v344, %v267
        %v346 = vshrl.u32 %v345, 4
        %v347 = vand.u32 %v345, 15
        %v348 = vsub.s32 0, %v347
        %v349 = vsel %vm343, %v348, %v347
        %vm350 = vcmp.lt.s32.totalorder %v268, 0
        %v351 = vsub.s32 0, %v268
        %v352 = vsel %vm350, %v351, %v268
        %v353 = vshrl.u32 %v352, 4
        %v354 = vand.u32 %v352, 15
        %v355 = vsub.s32 0, %v354
        %v356 = vsel %vm350, %v355, %v354
        %vm357 = vcmp.lt.s32.totalorder %v269, 0
        %v358 = vsub.s32 0, %v269
        %v359 = vsel %vm357, %v358, %v269
        %v360 = vshrl.u32 %v359, 4
        %v361 = vand.u32 %v359, 15
        %v362 = vsub.s32 0, %v361
        %v363 = vsel %vm357, %v362, %v361
        %vm364 = vcmp.lt.s32.totalorder %v270, 0
        %v365 = vsub.s32 0, %v270
        %v366 = vsel %vm364, %v365, %v270
        %v367 = vshrl.u32 %v366, 4
        %v368 = vand.u32 %v366, 15
        %v369 = vsub.s32 0, %v368
        %v370 = vsel %vm364, %v369, %v368
        %vm371 = vcmp.lt.s32.totalorder %v271, 0
        %v372 = vsub.s32 0, %v271
        %v373 = vsel %vm371, %v372, %v271
        %v374 = vshrl.u32 %v373, 4
        %v375 = vand.u32 %v373, 15
        %v376 = vsub.s32 0, %v375
        %v377 = vsel %vm371, %v376, %v375
        %vm378 = vcmp.lt.s32.totalorder %v272, 0
        %v379 = vsub.s32 0, %v272
        %v380 = vsel %vm378, %v379, %v272
        %v381 = vshrl.u32 %v380, 4
        %v382 = vand.u32 %v380, 15
        %v383 = vsub.s32 0, %v382
        %v384 = vsel %vm378, %v383, %v382
        %vm385 = vcmp.lt.s32.totalorder %v273, 0
        %v386 = vsub.s32 0, %v273
        %v387 = vsel %vm385, %v386, %v273
        %v388 = vshrl.u32 %v387, 4
        %v389 = vand.u32 %v387, 15
        %v390 = vsub.s32 0, %v389
        %v391 = vsel %vm385, %v390, %v389
        %vm392 = vcmp.lt.s32.totalorder %v274, 0
        %v393 = vsub.s32 0, %v274
        %v394 = vsel %vm392, %v393, %v274
        %v395 = vshrl.u32 %v394, 4
        %v396 = vand.u32 %v394, 15
        %v397 = vsub.s32 0, %v396
        %v398 = vsel %vm392, %v397, %v396
        %vm399 = vcmp.lt.s32.totalorder %v275, 0
        %v400 = vsub.s32 0, %v275
        %v401 = vsel %vm399, %v400, %v275
        %v402 = vshrl.u32 %v401, 4
        %v403 = vand.u32 %v401, 15
        %v404 = vsub.s32 0, %v403
        %v405 = vsel %vm399, %v404, %v403
        %vm406 = vcmp.lt.s32.totalorder %v276, 0
        %v407 = vsub.s32 0, %v276
        %v408 = vsel %vm406, %v407, %v276
        %v409 = vshrl.u32 %v408, 4
        %v410 = vand.u32 %v408, 15
        %v411 = vsub.s32 0, %v410
        %v412 = vsel %vm406, %v411, %v410
        %vm413 = vcmp.lt.s32.totalorder %v277, 0
        %v414 = vsub.s32 0, %v277
        %v415 = vsel %vm413, %v414, %v277
        %v416 = vshrl.u32 %v415, 4
        %v417 = vand.u32 %v415, 15
        %v418 = vsub.s32 0, %v417
        %v419 = vsel %vm413, %v418, %v417
        %vm420 = vcmp.lt.s32.totalorder %v278, 0
        %v421 = vsub.s32 0, %v278
        %v422 = vsel %vm420, %v421, %v278
        %v423 = vshrl.u32 %v422, 4
        %v424 = vand.u32 %v422, 15
        %v425 = vsub.s32 0, %v424
        %v426 = vsel %vm420, %v425, %v424
        %vm427 = vcmp.lt.s32.totalorder %v279, 0
        %v428 = vsub.s32 0, %v279
        %v429 = vsel %vm427, %v428, %v279
        %v430 = vshrl.u32 %v429, 4
        %v431 = vand.u32 %v429, 15
        %v432 = vsub.s32 0, %v431
        %v433 = vsel %vm427, %v432, %v431
        %vm434 = vcmp.lt.s32.totalorder %v280, 0
        %v435 = vsub.s32 0, %v280
        %v436 = vsel %vm434, %v435, %v280
        %v437 = vshrl.u32 %v436, 4
        %v438 = vand.u32 %v436, 15
        %v439 = vsub.s32 0, %v438
        %v440 = vsel %vm434, %v439, %v438
        %vm441 = vcmp.lt.s32.totalorder %v281, 0
        %v442 = vsub.s32 0, %v281
        %v443 = vsel %vm441, %v442, %v281
        %v444 = vshrl.u32 %v443, 4
        %v445 = vand.u32 %v443, 15
        %v446 = vsub.s32 0, %v445
        %v447 = vsel %vm441, %v446, %v445
        %vm448 = vcmp.lt.s32.totalorder %v282, 0
        %v449 = vsub.s32 0, %v282
        %v450 = vsel %vm448, %v449, %v282
        %v451 = vshrl.u32 %v450, 4
        %v452 = vand.u32 %v450, 15
        %v453 = vsub.s32 0, %v452
        %v454 = vsel %vm448, %v453, %v452
        %vm455 = vcmp.lt.s32.totalorder %v283, 0
        %v456 = vsub.s32 0, %v283
        %v457 = vsel %vm455, %v456, %v283
        %v458 = vshrl.u32 %v457, 4
        %v459 = vand.u32 %v457, 15
        %v460 = vsub.s32 0, %v459
        %v461 = vsel %vm455, %v460, %v459
        %vm462 = vcmp.lt.s32.totalorder %v284, 0
        %v463 = vsub.s32 0, %v284
        %v464 = vsel %vm462, %v463, %v284
        %v465 = vshrl.u32 %v464, 4
        %v466 = vand.u32 %v464, 15
        %v467 = vsub.s32 0, %v466
        %v468 = vsel %vm462, %v467, %v466
        %vm469 = vcmp.lt.s32.totalorder %v285, 0
        %v470 = vsub.s32 0, %v285
        %v471 = vsel %vm469, %v470, %v285
        %v472 = vshrl.u32 %v471, 4
        %v473 = vand.u32 %v471, 15
        %v474 = vsub.s32 0, %v473
        %v475 = vsel %vm469, %v474, %v473
        %vm476 = vcmp.lt.s32.totalorder %v286, 0
        %v477 = vsub.s32 0, %v286
        %v478 = vsel %vm476, %v477, %v286
        %v479 = vshrl.u32 %v478, 4
        %v480 = vand.u32 %v478, 15
        %v481 = vsub.s32 0, %v480
        %v482 = vsel %vm476, %v481, %v480
        %vm483 = vcmp.lt.s32.totalorder %v287, 0
        %v484 = vsub.s32 0, %v287
        %v485 = vsel %vm483, %v484, %v287
        %v486 = vshrl.u32 %v485, 4
        %v487 = vand.u32 %v485, 15
        %v488 = vsub.s32 0, %v487
        %v489 = vsel %vm483, %v488, %v487
        %vm490 = vcmp.lt.s32.totalorder %v288, 0
        %v491 = vsub.s32 0, %v288
        %v492 = vsel %vm490, %v491, %v288
        %v493 = vshrl.u32 %v492, 4
        %v494 = vand.u32 %v492, 15
        %v495 = vsub.s32 0, %v494
        %v496 = vsel %vm490, %v495, %v494
        %vm497 = vcmp.lt.s32.totalorder %v289, 0
        %v498 = vsub.s32 0, %v289
        %v499 = vsel %vm497, %v498, %v289
        %v500 = vshrl.u32 %v499, 4
        %v501 = vand.u32 %v499, 15
        %v502 = vsub.s32 0, %v501
        %v503 = vsel %vm497, %v502, %v501
        %vm504 = vcmp.lt.s32.totalorder %v290, 0
        %v505 = vsub.s32 0, %v290
        %v506 = vsel %vm504, %v505, %v290
        %v507 = vshrl.u32 %v506, 4
        %v508 = vand.u32 %v506, 15
        %v509 = vsub.s32 0, %v508
        %v510 = vsel %vm504, %v509, %v508
        %vm511 = vcmp.lt.s32.totalorder %v291, 0
        %v512 = vsub.s32 0, %v291
        %v513 = vsel %vm511, %v512, %v291
        %v514 = vshrl.u32 %v513, 4
        %v515 = vand.u32 %v513, 15
        %v516 = vsub.s32 0, %v515
        %v517 = vsel %vm511, %v516, %v515
        %vm518 = vcmp.lt.s32.totalorder %v292, 0
        %v519 = vsub.s32 0, %v292
        %v520 = vsel %vm518, %v519, %v292
        %v521 = vshrl.u32 %v520, 4
        %v522 = vand.u32 %v520, 15
        %v523 = vsub.s32 0, %v522
        %v524 = vsel %vm518, %v523, %v522
        %vm525 = vcmp.lt.s32.totalorder %v293, 0
        %v526 = vsub.s32 0, %v293
        %v527 = vsel %vm525, %v526, %v293
        %v528 = vshrl.u32 %v527, 4
        %v529 = vand.u32 %v527, 15
        %v530 = vsub.s32 0, %v529
        %v531 = vsel %vm525, %v530, %v529
        %vm532 = vcmp.lt.s32.totalorder %v294, 0
        %v533 = vsub.s32 0, %v294
        %v534 = vsel %vm532, %v533, %v294
        %v535 = vshrl.u32 %v534, 4
        %v536 = vand.u32 %v534, 15
        %v537 = vsub.s32 0, %v536
        %v538 = vsel %vm532, %v537, %v536
        %vm539 = vcmp.lt.s32.totalorder %v295, 0
        %v540 = vsub.s32 0, %v295
        %v541 = vsel %vm539, %v540, %v295
        %v542 = vshrl.u32 %v541, 4
        %v543 = vand.u32 %v541, 15
        %v544 = vsub.s32 0, %v543
        %v545 = vsel %vm539, %v544, %v543
        %vm546 = vcmp.lt.s32.totalorder %v296, 0
        %v547 = vsub.s32 0, %v296
        %v548 = vsel %vm546, %v547, %v296
        %v549 = vshrl.u32 %v548, 4
        %v550 = vand.u32 %v548, 15
        %v551 = vsub.s32 0, %v550
        %v552 = vsel %vm546, %v551, %v550
        %vm553 = vcmp.lt.s32.totalorder %v297, 0
        %v554 = vsub.s32 0, %v297
        %v555 = vsel %vm553, %v554, %v297
        %v556 = vshrl.u32 %v555, 4
        %v557 = vand.u32 %v555, 15
        %v558 = vsub.s32 0, %v557
        %v559 = vsel %vm553, %v558, %v557
        %vm560 = vcmp.lt.s32.totalorder %v298, 0
        %v561 = vsub.s32 0, %v298
        %v562 = vsel %vm560, %v561, %v298
        %v563 = vshrl.u32 %v562, 4
        %v564 = vand.u32 %v562, 15
        %v565 = vsub.s32 0, %v564
        %v566 = vsel %vm560, %v565, %v564
        %vm567 = vcmp.lt.s32.totalorder %v299, 0
        %v568 = vsub.s32 0, %v299
        %v569 = vsel %vm567, %v568, %v299
        %v570 = vshrl.u32 %v569, 4
        %v571 = vand.u32 %v569, 15
        %v572 = vsub.s32 0, %v571
        %v573 = vsel %vm567, %v572, %v571
        %vm574 = vcmp.lt.s32.totalorder %v300, 0
        %v575 = vsub.s32 0, %v300
        %v576 = vsel %vm574, %v575, %v300
        %v577 = vshrl.u32 %v576, 4
        %v578 = vand.u32 %v576, 15
        %v579 = vsub.s32 0, %v578
        %v580 = vsel %vm574, %v579, %v578
        %vm581 = vcmp.lt.s32.totalorder %v301, 0
        %v582 = vsub.s32 0, %v301
        %v583 = vsel %vm581, %v582, %v301
        %v584 = vshrl.u32 %v583, 4
        %v585 = vand.u32 %v583, 15
        %v586 = vsub.s32 0, %v585
        %v587 = vsel %vm581, %v586, %v585
        %vm588 = vcmp.lt.s32.totalorder %v302, 0
        %v589 = vsub.s32 0, %v302
        %v590 = vsel %vm588, %v589, %v302
        %v591 = vshrl.u32 %v590, 4
        %v592 = vand.u32 %v590, 15
        %v593 = vsub.s32 0, %v592
        %v594 = vsel %vm588, %v593, %v592
        %vm595 = vcmp.lt.s32.totalorder %v303, 0
        %v596 = vsub.s32 0, %v303
        %v597 = vsel %vm595, %v596, %v303
        %v598 = vshrl.u32 %v597, 4
        %v599 = vand.u32 %v597, 15
        %v600 = vsub.s32 0, %v599
        %v601 = vsel %vm595, %v600, %v599
        %vm602 = vcmp.lt.s32.totalorder %v304, 0
        %v603 = vsub.s32 0, %v304
        %v604 = vsel %vm602, %v603, %v304
        %v605 = vshrl.u32 %v604, 4
        %v606 = vand.u32 %v604, 15
        %v607 = vsub.s32 0, %v606
        %v608 = vsel %vm602, %v607, %v606
        %vm609 = vcmp.lt.s32.totalorder %v305, 0
        %v610 = vsub.s32 0, %v305
        %v611 = vsel %vm609, %v610, %v305
        %v612 = vshrl.u32 %v611, 4
        %v613 = vand.u32 %v611, 15
        %v614 = vsub.s32 0, %v613
        %v615 = vsel %vm609, %v614, %v613
        %vm616 = vcmp.lt.s32.totalorder %v306, 0
        %v617 = vsub.s32 0, %v306
        %v618 = vsel %vm616, %v617, %v306
        %v619 = vshrl.u32 %v618, 4
        %v620 = vand.u32 %v618, 15
        %v621 = vsub.s32 0, %v620
        %v622 = vsel %vm616, %v621, %v620
        %vm623 = vcmp.lt.s32.totalorder %v307, 0
        %v624 = vsub.s32 0, %v307
        %v625 = vsel %vm623, %v624, %v307
        %v626 = vshrl.u32 %v625, 4
        %v627 = vand.u32 %v625, 15
        %v628 = vsub.s32 0, %v627
        %v629 = vsel %vm623, %v628, %v627
        %vm630 = vcmp.lt.s32.totalorder %v308, 0
        %v631 = vsub.s32 0, %v308
        %v632 = vsel %vm630, %v631, %v308
        %v633 = vshrl.u32 %v632, 4
        %v634 = vand.u32 %v632, 15
        %v635 = vsub.s32 0, %v634
        %v636 = vsel %vm630, %v635, %v634
        %vm637 = vcmp.lt.s32.totalorder %v309, 0
        %v638 = vsub.s32 0, %v309
        %v639 = vsel %vm637, %v638, %v309
        %v640 = vshrl.u32 %v639, 4
        %v641 = vand.u32 %v639, 15
        %v642 = vsub.s32 0, %v641
        %v643 = vsel %vm637, %v642, %v641
        %vm644 = vcmp.lt.s32.totalorder %v310, 0
        %v645 = vsub.s32 0, %v310
        %v646 = vsel %vm644, %v645, %v310
        %v647 = vshrl.u32 %v646, 4
        %v648 = vand.u32 %v646, 15
        %v649 = vsub.s32 0, %v648
        %v650 = vsel %vm644, %v649, %v648
        %vm651 = vcmp.lt.s32.totalorder %v311, 0
        %v652 = vsub.s32 0, %v311
        %v653 = vsel %vm651, %v652, %v311
        %v654 = vshrl.u32 %v653, 4
        %v655 = vand.u32 %v653, 15
        %v656 = vsub.s32 0, %v655
        %v657 = vsel %vm651, %v656, %v655
        %vm658 = vcmp.lt.s32.totalorder %v312, 0
        %v659 = vsub.s32 0, %v312
        %v660 = vsel %vm658, %v659, %v312
        %v661 = vshrl.u32 %v660, 4
        %v662 = vand.u32 %v660, 15
        %v663 = vsub.s32 0, %v662
        %v664 = vsel %vm658, %v663, %v662
        %vm665 = vcmp.lt.s32.totalorder %v313, 0
        %v666 = vsub.s32 0, %v313
        %v667 = vsel %vm665, %v666, %v313
        %v668 = vshrl.u32 %v667, 4
        %v669 = vand.u32 %v667, 15
        %v670 = vsub.s32 0, %v669
        %v671 = vsel %vm665, %v670, %v669
        %vm672 = vcmp.lt.s32.totalorder %v314, 0
        %v673 = vsub.s32 0, %v314
        %v674 = vsel %vm672, %v673, %v314
        %v675 = vshrl.u32 %v674, 4
        %v676 = vand.u32 %v674, 15
        %v677 = vsub.s32 0, %v676
        %v678 = vsel %vm672, %v677, %v676
        %vm679 = vcmp.lt.s32.totalorder %v315, 0
        %v680 = vsub.s32 0, %v315
        %v681 = vsel %vm679, %v680, %v315
        %v682 = vshrl.u32 %v681, 4
        %v683 = vand.u32 %v681, 15
        %v684 = vsub.s32 0, %v683
        %v685 = vsel %vm679, %v684, %v683
        %vm686 = vcmp.lt.s32.totalorder %v316, 0
        %v687 = vsub.s32 0, %v316
        %v688 = vsel %vm686, %v687, %v316
        %v689 = vshrl.u32 %v688, 4
        %v690 = vand.u32 %v688, 15
        %v691 = vsub.s32 0, %v690
        %v692 = vsel %vm686, %v691, %v690
        %vm693 = vcmp.lt.s32.totalorder %v317, 0
        %v694 = vsub.s32 0, %v317
        %v695 = vsel %vm693, %v694, %v317
        %v696 = vshrl.u32 %v695, 4
        %v697 = vand.u32 %v695, 15
        %v698 = vsub.s32 0, %v697
        %v699 = vsel %vm693, %v698, %v697
        %vm700 = vcmp.lt.s32.totalorder %v318, 0
        %v701 = vsub.s32 0, %v318
        %v702 = vsel %vm700, %v701, %v318
        %v703 = vshrl.u32 %v702, 4
        %v704 = vand.u32 %v702, 15
        %v705 = vsub.s32 0, %v704
        %v706 = vsel %vm700, %v705, %v704
        %vm707 = vcmp.lt.s32.totalorder %v319, 0
        %v708 = vsub.s32 0, %v319
        %v709 = vsel %vm707, %v708, %v319
        %v710 = vshrl.u32 %v709, 4
        %v711 = vand.u32 %v709, 15
        %v712 = vsub.s32 0, %v711
        %v713 = vsel %vm707, %v712, %v711
        %vm714 = vcmp.lt.s32.totalorder %v320, 0
        %v715 = vsub.s32 0, %v320
        %v716 = vsel %vm714, %v715, %v320
        %v717 = vshrl.u32 %v716, 4
        %v718 = vand.u32 %v716, 15
        %v719 = vsub.s32 0, %v718
        %v720 = vsel %vm714, %v719, %v718
        %vm721 = vcmp.lt.s32.totalorder %v321, 0
        %v722 = vsub.s32 0, %v321
        %v723 = vsel %vm721, %v722, %v321
        %v724 = vshrl.u32 %v723, 4
        %v725 = vand.u32 %v723, 15
        %v726 = vsub.s32 0, %v725
        %v727 = vsel %vm721, %v726, %v725
        %vm728 = vcmp.lt.s32.totalorder %v322, 0
        %v729 = vsub.s32 0, %v322
        %v730 = vsel %vm728, %v729, %v322
        %v731 = vshrl.u32 %v730, 4
        %v732 = vand.u32 %v730, 15
        %v733 = vsub.s32 0, %v732
        %v734 = vsel %vm728, %v733, %v732
        %vm735 = vcmp.lt.s32.totalorder %v323, 0
        %v736 = vsub.s32 0, %v323
        %v737 = vsel %vm735, %v736, %v323
        %v738 = vshrl.u32 %v737, 4
        %v739 = vand.u32 %v737, 15
        %v740 = vsub.s32 0, %v739
        %v741 = vsel %vm735, %v740, %v739
        %vm742 = vcmp.lt.s32.totalorder %v324, 0
        %v743 = vsub.s32 0, %v324
        %v744 = vsel %vm742, %v743, %v324
        %v745 = vshrl.u32 %v744, 4
        %v746 = vand.u32 %v744, 15
        %v747 = vsub.s32 0, %v746
        %v748 = vsel %vm742, %v747, %v746
        %vm749 = vcmp.lt.s32.totalorder %v325, 0
        %v750 = vsub.s32 0, %v325
        %v751 = vsel %vm749, %v750, %v325
        %v752 = vshrl.u32 %v751, 4
        %v753 = vand.u32 %v751, 15
        %v754 = vsub.s32 0, %v753
        %v755 = vsel %vm749, %v754, %v753
        %vm756 = vcmp.lt.s32.totalorder %v326, 0
        %v757 = vsub.s32 0, %v326
        %v758 = vsel %vm756, %v757, %v326
        %v759 = vshrl.u32 %v758, 4
        %v760 = vand.u32 %v758, 15
        %v761 = vsub.s32 0, %v760
        %v762 = vsel %vm756, %v761, %v760
        %vm763 = vcmp.lt.s32.totalorder %v327, 0
        %v764 = vsub.s32 0, %v327
        %v765 = vsel %vm763, %v764, %v327
        %v766 = vshrl.u32 %v765, 4
        %v767 = vand.u32 %v765, 15
        %v768 = vsub.s32 0, %v767
        %v769 = vsel %vm763, %v768, %v767
        %vm770 = vcmp.lt.s32.totalorder %v328, 0
        %v771 = vsub.s32 0, %v328
        %v772 = vsel %vm770, %v771, %v328
        %v773 = vshrl.u32 %v772, 4
        %v774 = vand.u32 %v772, 15
        %v775 = vsub.s32 0, %v774
        %v776 = vsel %vm770, %v775, %v774
        %vm777 = vcmp.ne.s32.totalorder %v335, 0
        %vm778 = vcmp.ne.s32.totalorder %v342, 0
        %vm779 = vcmp.ne.s32.totalorder %v349, 0
        %vm780 = vcmp.ne.s32.totalorder %v356, 0
        %vm781 = vcmp.ne.s32.totalorder %v363, 0
        %vm782 = vcmp.ne.s32.totalorder %v370, 0
        %vm783 = vcmp.ne.s32.totalorder %v377, 0
        %vm784 = vcmp.ne.s32.totalorder %v384, 0
        %vm785 = vcmp.ne.s32.totalorder %v391, 0
        %vm786 = vcmp.ne.s32.totalorder %v398, 0
        %vm787 = vcmp.ne.s32.totalorder %v405, 0
        %vm788 = vcmp.ne.s32.totalorder %v412, 0
        %vm789 = vcmp.ne.s32.totalorder %v419, 0
        %vm790 = vcmp.ne.s32.totalorder %v426, 0
        %vm791 = vcmp.ne.s32.totalorder %v433, 0
        %vm792 = vcmp.ne.s32.totalorder %v440, 0
        %vm793 = vcmp.ne.s32.totalorder %v447, 0
        %vm794 = vcmp.ne.s32.totalorder %v454, 0
        %vm795 = vcmp.ne.s32.totalorder %v461, 0
        %vm796 = vcmp.ne.s32.totalorder %v468, 0
        %vm797 = vcmp.ne.s32.totalorder %v475, 0
        %vm798 = vcmp.ne.s32.totalorder %v482, 0
        %vm799 = vcmp.ne.s32.totalorder %v489, 0
        %vm800 = vcmp.ne.s32.totalorder %v496, 0
        %vm801 = vcmp.ne.s32.totalorder %v503, 0
        %vm802 = vcmp.ne.s32.totalorder %v510, 0
        %vm803 = vcmp.ne.s32.totalorder %v517, 0
        %vm804 = vcmp.ne.s32.totalorder %v524, 0
        %vm805 = vcmp.ne.s32.totalorder %v531, 0
        %vm806 = vcmp.ne.s32.totalorder %v538, 0
        %vm807 = vcmp.ne.s32.totalorder %v545, 0
        %vm808 = vcmp.ne.s32.totalorder %v552, 0
        %vm809 = vcmp.ne.s32.totalorder %v559, 0
        %vm810 = vcmp.ne.s32.totalorder %v566, 0
        %vm811 = vcmp.ne.s32.totalorder %v573, 0
        %vm812 = vcmp.ne.s32.totalorder %v580, 0
        %vm813 = vcmp.ne.s32.totalorder %v587, 0
        %vm814 = vcmp.ne.s32.totalorder %v594, 0
        %vm815 = vcmp.ne.s32.totalorder %v601, 0
        %vm816 = vcmp.ne.s32.totalorder %v608, 0
        %vm817 = vcmp.ne.s32.totalorder %v615, 0
        %vm818 = vcmp.ne.s32.totalorder %v622, 0
        %vm819 = vcmp.ne.s32.totalorder %v629, 0
        %vm820 = vcmp.ne.s32.totalorder %v636, 0
        %vm821 = vcmp.ne.s32.totalorder %v643, 0
        %vm822 = vcmp.ne.s32.totalorder %v650, 0
        %vm823 = vcmp.ne.s32.totalorder %v657, 0
        %vm824 = vcmp.ne.s32.totalorder %v664, 0
        %vm825 = vcmp.ne.s32.totalorder %v671, 0
        %vm826 = vcmp.ne.s32.totalorder %v678, 0
        %vm827 = vcmp.ne.s32.totalorder %v685, 0
        %vm828 = vcmp.ne.s32.totalorder %v692, 0
        %vm829 = vcmp.ne.s32.totalorder %v699, 0
        %vm830 = vcmp.ne.s32.totalorder %v706, 0
        %vm831 = vcmp.ne.s32.totalorder %v713, 0
        %vm832 = vcmp.ne.s32.totalorder %v720, 0
        %vm833 = vcmp.ne.s32.totalorder %v727, 0
        %vm834 = vcmp.ne.s32.totalorder %v734, 0
        %vm835 = vcmp.ne.s32.totalorder %v741, 0
        %vm836 = vcmp.ne.s32.totalorder %v748, 0
        %vm837 = vcmp.ne.s32.totalorder %v755, 0
        %vm838 = vcmp.ne.s32.totalorder %v762, 0
        %vm839 = vcmp.ne.s32.totalorder %v769, 0
        %vm840 = vcmp.ne.s32.totalorder %v776, 0
        %vm841 = vcmp.lt.s32.totalorder %v335, 0
        %vm842 = vcmp.lt.s32.totalorder %v342, 0
        %vm843 = vcmp.lt.s32.totalorder %v349, 0
        %vm844 = vcmp.lt.s32.totalorder %v356, 0
        %vm845 = vcmp.lt.s32.totalorder %v363, 0
        %vm846 = vcmp.lt.s32.totalorder %v370, 0
        %vm847 = vcmp.lt.s32.totalorder %v377, 0
        %vm848 = vcmp.lt.s32.totalorder %v384, 0
        %vm849 = vcmp.lt.s32.totalorder %v391, 0
        %vm850 = vcmp.lt.s32.totalorder %v398, 0
        %vm851 = vcmp.lt.s32.totalorder %v405, 0
        %vm852 = vcmp.lt.s32.totalorder %v412, 0
        %vm853 = vcmp.lt.s32.totalorder %v419, 0
        %vm854 = vcmp.lt.s32.totalorder %v426, 0
        %vm855 = vcmp.lt.s32.totalorder %v433, 0
        %vm856 = vcmp.lt.s32.totalorder %v440, 0
        %vm857 = vcmp.lt.s32.totalorder %v447, 0
        %vm858 = vcmp.lt.s32.totalorder %v454, 0
        %vm859 = vcmp.lt.s32.totalorder %v461, 0
        %vm860 = vcmp.lt.s32.totalorder %v468, 0
        %vm861 = vcmp.lt.s32.totalorder %v475, 0
        %vm862 = vcmp.lt.s32.totalorder %v482, 0
        %vm863 = vcmp.lt.s32.totalorder %v489, 0
        %vm864 = vcmp.lt.s32.totalorder %v496, 0
        %vm865 = vcmp.lt.s32.totalorder %v503, 0
        %vm866 = vcmp.lt.s32.totalorder %v510, 0
        %vm867 = vcmp.lt.s32.totalorder %v517, 0
        %vm868 = vcmp.lt.s32.totalorder %v524, 0
        %vm869 = vcmp.lt.s32.totalorder %v531, 0
        %vm870 = vcmp.lt.s32.totalorder %v538, 0
        %vm871 = vcmp.lt.s32.totalorder %v545, 0
        %vm872 = vcmp.lt.s32.totalorder %v552, 0
        %vm873 = vcmp.lt.s32.totalorder %v559, 0
        %vm874 = vcmp.lt.s32.totalorder %v566, 0
        %vm875 = vcmp.lt.s32.totalorder %v573, 0
        %vm876 = vcmp.lt.s32.totalorder %v580, 0
        %vm877 = vcmp.lt.s32.totalorder %v587, 0
        %vm878 = vcmp.lt.s32.totalorder %v594, 0
        %vm879 = vcmp.lt.s32.totalorder %v601, 0
        %vm880 = vcmp.lt.s32.totalorder %v608, 0
        %vm881 = vcmp.lt.s32.totalorder %v615, 0
        %vm882 = vcmp.lt.s32.totalorder %v622, 0
        %vm883 = vcmp.lt.s32.totalorder %v629, 0
        %vm884 = vcmp.lt.s32.totalorder %v636, 0
        %vm885 = vcmp.lt.s32.totalorder %v643, 0
        %vm886 = vcmp.lt.s32.totalorder %v650, 0
        %vm887 = vcmp.lt.s32.totalorder %v657, 0
        %vm888 = vcmp.lt.s32.totalorder %v664, 0
        %vm889 = vcmp.lt.s32.totalorder %v671, 0
        %vm890 = vcmp.lt.s32.totalorder %v678, 0
        %vm891 = vcmp.lt.s32.totalorder %v685, 0
        %vm892 = vcmp.lt.s32.totalorder %v692, 0
        %vm893 = vcmp.lt.s32.totalorder %v699, 0
        %vm894 = vcmp.lt.s32.totalorder %v706, 0
        %vm895 = vcmp.lt.s32.totalorder %v713, 0
        %vm896 = vcmp.lt.s32.totalorder %v720, 0
        %vm897 = vcmp.lt.s32.totalorder %v727, 0
        %vm898 = vcmp.lt.s32.totalorder %v734, 0
        %vm899 = vcmp.lt.s32.totalorder %v741, 0
        %vm900 = vcmp.lt.s32.totalorder %v748, 0
        %vm901 = vcmp.lt.s32.totalorder %v755, 0
        %vm902 = vcmp.lt.s32.totalorder %v762, 0
        %vm903 = vcmp.lt.s32.totalorder %v769, 0
        %vm904 = vcmp.lt.s32.totalorder %v776, 0
        %vm905 = vmand %vm841, %vm777
        %vm906 = vmand %vm842, %vm778
        %vm907 = vmand %vm843, %vm779
        %vm908 = vmand %vm844, %vm780
        %vm909 = vmand %vm845, %vm781
        %vm910 = vmand %vm846, %vm782
        %vm911 = vmand %vm847, %vm783
        %vm912 = vmand %vm848, %vm784
        %vm913 = vmand %vm849, %vm785
        %vm914 = vmand %vm850, %vm786
        %vm915 = vmand %vm851, %vm787
        %vm916 = vmand %vm852, %vm788
        %vm917 = vmand %vm853, %vm789
        %vm918 = vmand %vm854, %vm790
        %vm919 = vmand %vm855, %vm791
        %vm920 = vmand %vm856, %vm792
        %vm921 = vmand %vm857, %vm793
        %vm922 = vmand %vm858, %vm794
        %vm923 = vmand %vm859, %vm795
        %vm924 = vmand %vm860, %vm796
        %vm925 = vmand %vm861, %vm797
        %vm926 = vmand %vm862, %vm798
        %vm927 = vmand %vm863, %vm799
        %vm928 = vmand %vm864, %vm800
        %vm929 = vmand %vm865, %vm801
        %vm930 = vmand %vm866, %vm802
        %vm931 = vmand %vm867, %vm803
        %vm932 = vmand %vm868, %vm804
        %vm933 = vmand %vm869, %vm805
        %vm934 = vmand %vm870, %vm806
        %vm935 = vmand %vm871, %vm807
        %vm936 = vmand %vm872, %vm808
        %vm937 = vmand %vm873, %vm809
        %vm938 = vmand %vm874, %vm810
        %vm939 = vmand %vm875, %vm811
        %vm940 = vmand %vm876, %vm812
        %vm941 = vmand %vm877, %vm813
        %vm942 = vmand %vm878, %vm814
        %vm943 = vmand %vm879, %vm815
        %vm944 = vmand %vm880, %vm816
        %vm945 = vmand %vm881, %vm817
        %vm946 = vmand %vm882, %vm818
        %vm947 = vmand %vm883, %vm819
        %vm948 = vmand %vm884, %vm820
        %vm949 = vmand %vm885, %vm821
        %vm950 = vmand %vm886, %vm822
        %vm951 = vmand %vm887, %vm823
        %vm952 = vmand %vm888, %vm824
        %vm953 = vmand %vm889, %vm825
        %vm954 = vmand %vm890, %vm826
        %vm955 = vmand %vm891, %vm827
        %vm956 = vmand %vm892, %vm828
        %vm957 = vmand %vm893, %vm829
        %vm958 = vmand %vm894, %vm830
        %vm959 = vmand %vm895, %vm831
        %vm960 = vmand %vm896, %vm832
        %vm961 = vmand %vm897, %vm833
        %vm962 = vmand %vm898, %vm834
        %vm963 = vmand %vm899, %vm835
        %vm964 = vmand %vm900, %vm836
        %vm965 = vmand %vm901, %vm837
        %vm966 = vmand %vm902, %vm838
        %vm967 = vmand %vm903, %vm839
        %vm968 = vmand %vm904, %vm840
        %v969 = vadd.s32 %v335, 16
        %v970 = vadd.s32 %v342, 16
        %v971 = vadd.s32 %v349, 16
        %v972 = vadd.s32 %v356, 16
        %v973 = vadd.s32 %v363, 16
        %v974 = vadd.s32 %v370, 16
        %v975 = vadd.s32 %v377, 16
        %v976 = vadd.s32 %v384, 16
        %v977 = vadd.s32 %v391, 16
        %v978 = vadd.s32 %v398, 16
        %v979 = vadd.s32 %v405, 16
        %v980 = vadd.s32 %v412, 16
        %v981 = vadd.s32 %v419, 16
        %v982 = vadd.s32 %v426, 16
        %v983 = vadd.s32 %v433, 16
        %v984 = vadd.s32 %v440, 16
        %v985 = vadd.s32 %v447, 16
        %v986 = vadd.s32 %v454, 16
        %v987 = vadd.s32 %v461, 16
        %v988 = vadd.s32 %v468, 16
        %v989 = vadd.s32 %v475, 16
        %v990 = vadd.s32 %v482, 16
        %v991 = vadd.s32 %v489, 16
        %v992 = vadd.s32 %v496, 16
        %v993 = vadd.s32 %v503, 16
        %v994 = vadd.s32 %v510, 16
        %v995 = vadd.s32 %v517, 16
        %v996 = vadd.s32 %v524, 16
        %v997 = vadd.s32 %v531, 16
        %v998 = vadd.s32 %v538, 16
        %v999 = vadd.s32 %v545, 16
        %v1000 = vadd.s32 %v552, 16
        %v1001 = vadd.s32 %v559, 16
        %v1002 = vadd.s32 %v566, 16
        %v1003 = vadd.s32 %v573, 16
        %v1004 = vadd.s32 %v580, 16
        %v1005 = vadd.s32 %v587, 16
        %v1006 = vadd.s32 %v594, 16
        %v1007 = vadd.s32 %v601, 16
        %v1008 = vadd.s32 %v608, 16
        %v1009 = vadd.s32 %v615, 16
        %v1010 = vadd.s32 %v622, 16
        %v1011 = vadd.s32 %v629, 16
        %v1012 = vadd.s32 %v636, 16
        %v1013 = vadd.s32 %v643, 16
        %v1014 = vadd.s32 %v650, 16
        %v1015 = vadd.s32 %v657, 16
        %v1016 = vadd.s32 %v664, 16
        %v1017 = vadd.s32 %v671, 16
        %v1018 = vadd.s32 %v678, 16
        %v1019 = vadd.s32 %v685, 16
        %v1020 = vadd.s32 %v692, 16
        %v1021 = vadd.s32 %v699, 16
        %v1022 = vadd.s32 %v706, 16
        %v1023 = vadd.s32 %v713, 16
        %v1024 = vadd.s32 %v720, 16
        %v1025 = vadd.s32 %v727, 16
        %v1026 = vadd.s32 %v734, 16
        %v1027 = vadd.s32 %v741, 16
        %v1028 = vadd.s32 %v748, 16
        %v1029 = vadd.s32 %v755, 16
        %v1030 = vadd.s32 %v762, 16
        %v1031 = vadd.s32 %v769, 16
        %v1032 = vadd.s32 %v776, 16
        %v1033 = vsel %vm905, %v969, %v335
        %v1034 = vsel %vm906, %v970, %v342
        %v1035 = vsel %vm907, %v971, %v349
        %v1036 = vsel %vm908, %v972, %v356
        %v1037 = vsel %vm909, %v973, %v363
        %v1038 = vsel %vm910, %v974, %v370
        %v1039 = vsel %vm911, %v975, %v377
        %v1040 = vsel %vm912, %v976, %v384
        %v1041 = vsel %vm913, %v977, %v391
        %v1042 = vsel %vm914, %v978, %v398
        %v1043 = vsel %vm915, %v979, %v405
        %v1044 = vsel %vm916, %v980, %v412
        %v1045 = vsel %vm917, %v981, %v419
        %v1046 = vsel %vm918, %v982, %v426
        %v1047 = vsel %vm919, %v983, %v433
        %v1048 = vsel %vm920, %v984, %v440
        %v1049 = vsel %vm921, %v985, %v447
        %v1050 = vsel %vm922, %v986, %v454
        %v1051 = vsel %vm923, %v987, %v461
        %v1052 = vsel %vm924, %v988, %v468
        %v1053 = vsel %vm925, %v989, %v475
        %v1054 = vsel %vm926, %v990, %v482
        %v1055 = vsel %vm927, %v991, %v489
        %v1056 = vsel %vm928, %v992, %v496
        %v1057 = vsel %vm929, %v993, %v503
        %v1058 = vsel %vm930, %v994, %v510
        %v1059 = vsel %vm931, %v995, %v517
        %v1060 = vsel %vm932, %v996, %v524
        %v1061 = vsel %vm933, %v997, %v531
        %v1062 = vsel %vm934, %v998, %v538
        %v1063 = vsel %vm935, %v999, %v545
        %v1064 = vsel %vm936, %v1000, %v552
        %v1065 = vsel %vm937, %v1001, %v559
        %v1066 = vsel %vm938, %v1002, %v566
        %v1067 = vsel %vm939, %v1003, %v573
        %v1068 = vsel %vm940, %v1004, %v580
        %v1069 = vsel %vm941, %v1005, %v587
        %v1070 = vsel %vm942, %v1006, %v594
        %v1071 = vsel %vm943, %v1007, %v601
        %v1072 = vsel %vm944, %v1008, %v608
        %v1073 = vsel %vm945, %v1009, %v615
        %v1074 = vsel %vm946, %v1010, %v622
        %v1075 = vsel %vm947, %v1011, %v629
        %v1076 = vsel %vm948, %v1012, %v636
        %v1077 = vsel %vm949, %v1013, %v643
        %v1078 = vsel %vm950, %v1014, %v650
        %v1079 = vsel %vm951, %v1015, %v657
        %v1080 = vsel %vm952, %v1016, %v664
        %v1081 = vsel %vm953, %v1017, %v671
        %v1082 = vsel %vm954, %v1018, %v678
        %v1083 = vsel %vm955, %v1019, %v685
        %v1084 = vsel %vm956, %v1020, %v692
        %v1085 = vsel %vm957, %v1021, %v699
        %v1086 = vsel %vm958, %v1022, %v706
        %v1087 = vsel %vm959, %v1023, %v713
        %v1088 = vsel %vm960, %v1024, %v720
        %v1089 = vsel %vm961, %v1025, %v727
        %v1090 = vsel %vm962, %v1026, %v734
        %v1091 = vsel %vm963, %v1027, %v741
        %v1092 = vsel %vm964, %v1028, %v748
        %v1093 = vsel %vm965, %v1029, %v755
        %v1094 = vsel %vm966, %v1030, %v762
        %v1095 = vsel %vm967, %v1031, %v769
        %v1096 = vsel %vm968, %v1032, %v776
        %v1097 = vpack.c.bf16 %v201, %v200
        %v1098 = vpack.c.bf16 %v203, %v202
        %v1099 = vpack.c.bf16 %v205, %v204
        %v1100 = vpack.c.bf16 %v207, %v206
        %v1101 = vpack.c.bf16 %v209, %v208
        %v1102 = vpack.c.bf16 %v211, %v210
        %v1103 = vpack.c.bf16 %v213, %v212
        %v1104 = vpack.c.bf16 %v215, %v214
        %v1105 = vpack.c.bf16 %v217, %v216
        %v1106 = vpack.c.bf16 %v219, %v218
        %v1107 = vpack.c.bf16 %v221, %v220
        %v1108 = vpack.c.bf16 %v223, %v222
        %v1109 = vpack.c.bf16 %v225, %v224
        %v1110 = vpack.c.bf16 %v227, %v226
        %v1111 = vpack.c.bf16 %v229, %v228
        %v1112 = vpack.c.bf16 %v231, %v230
        %v1113 = vpack.c.bf16 %v233, %v232
        %v1114 = vpack.c.bf16 %v235, %v234
        %v1115 = vpack.c.bf16 %v237, %v236
        %v1116 = vpack.c.bf16 %v239, %v238
        %v1117 = vpack.c.bf16 %v241, %v240
        %v1118 = vpack.c.bf16 %v243, %v242
        %v1119 = vpack.c.bf16 %v245, %v244
        %v1120 = vpack.c.bf16 %v247, %v246
        %v1121 = vpack.c.bf16 %v249, %v248
        %v1122 = vpack.c.bf16 %v251, %v250
        %v1123 = vpack.c.bf16 %v253, %v252
        %v1124 = vpack.c.bf16 %v255, %v254
        %v1125 = vpack.c.bf16 %v257, %v256
        %v1126 = vpack.c.bf16 %v259, %v258
        %v1127 = vpack.c.bf16 %v261, %v260
        %v1128 = vpack.c.bf16 %v263, %v262
        %v1129 = vld [vmem:[%s1] sm:$0xf]
        %vm1130 = vcmask 64512
        %v1132 = vsel %vm1130, %v1097, 0
        %v1135 = vsel %vm1130, %v1098, 0
        %v1138 = vsel %vm1130, %v1099, 0
        %v1141 = vsel %vm1130, %v1100, 0
        %v1144 = vsel %vm1130, %v1101, 0
        %v1147 = vsel %vm1130, %v1102, 0
        %v1150 = vsel %vm1130, %v1103, 0
        %v1153 = vsel %vm1130, %v1104, 0
        %v1156 = vsel %vm1130, %v1105, 0
        %v1159 = vsel %vm1130, %v1106, 0
        %v1162 = vsel %vm1130, %v1107, 0
        %v1165 = vsel %vm1130, %v1108, 0
        %v1168 = vsel %vm1130, %v1109, 0
        %v1171 = vsel %vm1130, %v1110, 0
        %v1174 = vsel %vm1130, %v1111, 0
        %v1177 = vsel %vm1130, %v1112, 0
        %v1180 = vsel %vm1130, %v1113, 0
        %v1183 = vsel %vm1130, %v1114, 0
        %v1186 = vsel %vm1130, %v1115, 0
        %v1189 = vsel %vm1130, %v1116, 0
        %v1192 = vsel %vm1130, %v1117, 0
        %v1195 = vsel %vm1130, %v1118, 0
        %v1198 = vsel %vm1130, %v1119, 0
        %v1201 = vsel %vm1130, %v1120, 0
        %v1204 = vsel %vm1130, %v1121, 0
        %v1207 = vsel %vm1130, %v1122, 0
        %v1210 = vsel %vm1130, %v1123, 0
        %v1213 = vsel %vm1130, %v1124, 0
        %v1216 = vsel %vm1130, %v1125, 0
        %v1219 = vsel %vm1130, %v1126, 0
        %v1222 = vsel %vm1130, %v1127, 0
        %v1225 = vsel %vm1130, %v1128, 0
        %vm1227 = vcmask 1043456
        %v1229 = vsel %vm1227, %v1129, 0
        %1231 = vmatpush.bf16.msra.mxu0 0
        %1232 = vmatpush.bf16.msra.mxu0 0
        %1233 = vmatpush.bf16.msra.mxu0 0
        %1234 = vmatpush.bf16.msra.mxu0 0
        %1235 = vmatpush.bf16.msra.mxu0 0
        %1236 = vmatpush.bf16.msra.mxu0 0
        %1237 = vmatpush.bf16.msra.mxu0 0
        %1238 = vmatpush.bf16.msra.mxu0 %v1229
        %1239 = vmatmul.bf16.gmra.mxu0 %v1132
        %v1240 = vpop.f32.mrf.mxu0
        %v1241 = vadd.f32 0.0, %v1240
        %v1242 = vpop.f32.mrf.mxu0
        %v1243 = vadd.f32 0.0, %v1242
        %1244 = vmatmul.bf16.gmra.mxu0 %v1135
        %v1245 = vpop.f32.mrf.mxu0
        %v1246 = vadd.f32 0.0, %v1245
        %v1247 = vpop.f32.mrf.mxu0
        %v1248 = vadd.f32 0.0, %v1247
        %1249 = vmatmul.bf16.gmra.mxu0 %v1138
        %v1250 = vpop.f32.mrf.mxu0
        %v1251 = vadd.f32 0.0, %v1250
        %v1252 = vpop.f32.mrf.mxu0
        %v1253 = vadd.f32 0.0, %v1252
        %1254 = vmatmul.bf16.gmra.mxu0 %v1141
        %v1255 = vpop.f32.mrf.mxu0
        %v1256 = vadd.f32 0.0, %v1255
        %v1257 = vpop.f32.mrf.mxu0
        %v1258 = vadd.f32 0.0, %v1257
        %1259 = vmatmul.bf16.gmra.mxu0 %v1144
        %v1260 = vpop.f32.mrf.mxu0
        %v1261 = vadd.f32 0.0, %v1260
        %v1262 = vpop.f32.mrf.mxu0
        %v1263 = vadd.f32 0.0, %v1262
        %1264 = vmatmul.bf16.gmra.mxu0 %v1147
        %v1265 = vpop.f32.mrf.mxu0
        %v1266 = vadd.f32 0.0, %v1265
        %v1267 = vpop.f32.mrf.mxu0
        %v1268 = vadd.f32 0.0, %v1267
        %1269 = vmatmul.bf16.gmra.mxu0 %v1150
        %v1270 = vpop.f32.mrf.mxu0
        %v1271 = vadd.f32 0.0, %v1270
        %v1272 = vpop.f32.mrf.mxu0
        %v1273 = vadd.f32 0.0, %v1272
        %1274 = vmatmul.bf16.gmra.mxu0 %v1153
        %v1275 = vpop.f32.mrf.mxu0
        %v1276 = vadd.f32 0.0, %v1275
        %v1277 = vpop.f32.mrf.mxu0
        %v1278 = vadd.f32 0.0, %v1277
        %1279 = vmatmul.bf16.gmra.mxu0 %v1156
        %v1280 = vpop.f32.mrf.mxu0
        %v1281 = vadd.f32 0.0, %v1280
        %v1282 = vpop.f32.mrf.mxu0
        %v1283 = vadd.f32 0.0, %v1282
        %1284 = vmatmul.bf16.gmra.mxu0 %v1159
        %v1285 = vpop.f32.mrf.mxu0
        %v1286 = vadd.f32 0.0, %v1285
        %v1287 = vpop.f32.mrf.mxu0
        %v1288 = vadd.f32 0.0, %v1287
        %1289 = vmatmul.bf16.gmra.mxu0 %v1162
        %v1290 = vpop.f32.mrf.mxu0
        %v1291 = vadd.f32 0.0, %v1290
        %v1292 = vpop.f32.mrf.mxu0
        %v1293 = vadd.f32 0.0, %v1292
        %1294 = vmatmul.bf16.gmra.mxu0 %v1165
        %v1295 = vpop.f32.mrf.mxu0
        %v1296 = vadd.f32 0.0, %v1295
        %v1297 = vpop.f32.mrf.mxu0
        %v1298 = vadd.f32 0.0, %v1297
        %1299 = vmatmul.bf16.gmra.mxu0 %v1168
        %v1300 = vpop.f32.mrf.mxu0
        %v1301 = vadd.f32 0.0, %v1300
        %v1302 = vpop.f32.mrf.mxu0
        %v1303 = vadd.f32 0.0, %v1302
        %1304 = vmatmul.bf16.gmra.mxu0 %v1171
        %v1305 = vpop.f32.mrf.mxu0
        %v1306 = vadd.f32 0.0, %v1305
        %v1307 = vpop.f32.mrf.mxu0
        %v1308 = vadd.f32 0.0, %v1307
        %1309 = vmatmul.bf16.gmra.mxu0 %v1174
        %v1310 = vpop.f32.mrf.mxu0
        %v1311 = vadd.f32 0.0, %v1310
        %v1312 = vpop.f32.mrf.mxu0
        %v1313 = vadd.f32 0.0, %v1312
        %1314 = vmatmul.bf16.gmra.mxu0 %v1177
        %v1315 = vpop.f32.mrf.mxu0
        %v1316 = vadd.f32 0.0, %v1315
        %v1317 = vpop.f32.mrf.mxu0
        %v1318 = vadd.f32 0.0, %v1317
        %1319 = vmatmul.bf16.gmra.mxu0 %v1180
        %v1320 = vpop.f32.mrf.mxu0
        %v1321 = vadd.f32 0.0, %v1320
        %v1322 = vpop.f32.mrf.mxu0
        %v1323 = vadd.f32 0.0, %v1322
        %1324 = vmatmul.bf16.gmra.mxu0 %v1183
        %v1325 = vpop.f32.mrf.mxu0
        %v1326 = vadd.f32 0.0, %v1325
        %v1327 = vpop.f32.mrf.mxu0
        %v1328 = vadd.f32 0.0, %v1327
        %1329 = vmatmul.bf16.gmra.mxu0 %v1186
        %v1330 = vpop.f32.mrf.mxu0
        %v1331 = vadd.f32 0.0, %v1330
        %v1332 = vpop.f32.mrf.mxu0
        %v1333 = vadd.f32 0.0, %v1332
        %1334 = vmatmul.bf16.gmra.mxu0 %v1189
        %v1335 = vpop.f32.mrf.mxu0
        %v1336 = vadd.f32 0.0, %v1335
        %v1337 = vpop.f32.mrf.mxu0
        %v1338 = vadd.f32 0.0, %v1337
        %1339 = vmatmul.bf16.gmra.mxu0 %v1192
        %v1340 = vpop.f32.mrf.mxu0
        %v1341 = vadd.f32 0.0, %v1340
        %v1342 = vpop.f32.mrf.mxu0
        %v1343 = vadd.f32 0.0, %v1342
        %1344 = vmatmul.bf16.gmra.mxu0 %v1195
        %v1345 = vpop.f32.mrf.mxu0
        %v1346 = vadd.f32 0.0, %v1345
        %v1347 = vpop.f32.mrf.mxu0
        %v1348 = vadd.f32 0.0, %v1347
        %1349 = vmatmul.bf16.gmra.mxu0 %v1198
        %v1350 = vpop.f32.mrf.mxu0
        %v1351 = vadd.f32 0.0, %v1350
        %v1352 = vpop.f32.mrf.mxu0
        %v1353 = vadd.f32 0.0, %v1352
        %1354 = vmatmul.bf16.gmra.mxu0 %v1201
        %v1355 = vpop.f32.mrf.mxu0
        %v1356 = vadd.f32 0.0, %v1355
        %v1357 = vpop.f32.mrf.mxu0
        %v1358 = vadd.f32 0.0, %v1357
        %1359 = vmatmul.bf16.gmra.mxu0 %v1204
        %v1360 = vpop.f32.mrf.mxu0
        %v1361 = vadd.f32 0.0, %v1360
        %v1362 = vpop.f32.mrf.mxu0
        %v1363 = vadd.f32 0.0, %v1362
        %1364 = vmatmul.bf16.gmra.mxu0 %v1207
        %v1365 = vpop.f32.mrf.mxu0
        %v1366 = vadd.f32 0.0, %v1365
        %v1367 = vpop.f32.mrf.mxu0
        %v1368 = vadd.f32 0.0, %v1367
        %1369 = vmatmul.bf16.gmra.mxu0 %v1210
        %v1370 = vpop.f32.mrf.mxu0
        %v1371 = vadd.f32 0.0, %v1370
        %v1372 = vpop.f32.mrf.mxu0
        %v1373 = vadd.f32 0.0, %v1372
        %1374 = vmatmul.bf16.gmra.mxu0 %v1213
        %v1375 = vpop.f32.mrf.mxu0
        %v1376 = vadd.f32 0.0, %v1375
        %v1377 = vpop.f32.mrf.mxu0
        %v1378 = vadd.f32 0.0, %v1377
        %1379 = vmatmul.bf16.gmra.mxu0 %v1216
        %v1380 = vpop.f32.mrf.mxu0
        %v1381 = vadd.f32 0.0, %v1380
        %v1382 = vpop.f32.mrf.mxu0
        %v1383 = vadd.f32 0.0, %v1382
        %1384 = vmatmul.bf16.gmra.mxu0 %v1219
        %v1385 = vpop.f32.mrf.mxu0
        %v1386 = vadd.f32 0.0, %v1385
        %v1387 = vpop.f32.mrf.mxu0
        %v1388 = vadd.f32 0.0, %v1387
        %1389 = vmatmul.bf16.gmra.mxu0 %v1222
        %v1390 = vpop.f32.mrf.mxu0
        %v1391 = vadd.f32 0.0, %v1390
        %v1392 = vpop.f32.mrf.mxu0
        %v1393 = vadd.f32 0.0, %v1392
        %1394 = vmatmul.bf16.gmra.mxu0 %v1225
        %v1395 = vpop.f32.mrf.mxu0
        %v1396 = vadd.f32 0.0, %v1395
        %v1397 = vpop.f32.mrf.mxu0
        %v1398 = vadd.f32 0.0, %v1397
        %1399 = vdwg.mxu0
        %vm1400 = vcmp.eq.s32.totalorder %v1033, 0
        %vm1401 = vcmp.eq.s32.totalorder %v1034, 0
        %vm1402 = vcmp.eq.s32.totalorder %v1035, 0
        %vm1403 = vcmp.eq.s32.totalorder %v1036, 0
        %vm1404 = vcmp.eq.s32.totalorder %v1037, 0
        %vm1405 = vcmp.eq.s32.totalorder %v1038, 0
        %vm1406 = vcmp.eq.s32.totalorder %v1039, 0
        %vm1407 = vcmp.eq.s32.totalorder %v1040, 0
        %vm1408 = vcmp.eq.s32.totalorder %v1041, 0
        %vm1409 = vcmp.eq.s32.totalorder %v1042, 0
        %vm1410 = vcmp.eq.s32.totalorder %v1043, 0
        %vm1411 = vcmp.eq.s32.totalorder %v1044, 0
        %vm1412 = vcmp.eq.s32.totalorder %v1045, 0
        %vm1413 = vcmp.eq.s32.totalorder %v1046, 0
        %vm1414 = vcmp.eq.s32.totalorder %v1047, 0
        %vm1415 = vcmp.eq.s32.totalorder %v1048, 0
        %vm1416 = vcmp.eq.s32.totalorder %v1049, 0
        %vm1417 = vcmp.eq.s32.totalorder %v1050, 0
        %vm1418 = vcmp.eq.s32.totalorder %v1051, 0
        %vm1419 = vcmp.eq.s32.totalorder %v1052, 0
        %vm1420 = vcmp.eq.s32.totalorder %v1053, 0
        %vm1421 = vcmp.eq.s32.totalorder %v1054, 0
        %vm1422 = vcmp.eq.s32.totalorder %v1055, 0
        %vm1423 = vcmp.eq.s32.totalorder %v1056, 0
        %vm1424 = vcmp.eq.s32.totalorder %v1057, 0
        %vm1425 = vcmp.eq.s32.totalorder %v1058, 0
        %vm1426 = vcmp.eq.s32.totalorder %v1059, 0
        %vm1427 = vcmp.eq.s32.totalorder %v1060, 0
        %vm1428 = vcmp.eq.s32.totalorder %v1061, 0
        %vm1429 = vcmp.eq.s32.totalorder %v1062, 0
        %vm1430 = vcmp.eq.s32.totalorder %v1063, 0
        %vm1431 = vcmp.eq.s32.totalorder %v1064, 0
        %vm1432 = vcmp.eq.s32.totalorder %v1065, 0
        %vm1433 = vcmp.eq.s32.totalorder %v1066, 0
        %vm1434 = vcmp.eq.s32.totalorder %v1067, 0
        %vm1435 = vcmp.eq.s32.totalorder %v1068, 0
        %vm1436 = vcmp.eq.s32.totalorder %v1069, 0
        %vm1437 = vcmp.eq.s32.totalorder %v1070, 0
        %vm1438 = vcmp.eq.s32.totalorder %v1071, 0
        %vm1439 = vcmp.eq.s32.totalorder %v1072, 0
        %vm1440 = vcmp.eq.s32.totalorder %v1073, 0
        %vm1441 = vcmp.eq.s32.totalorder %v1074, 0
        %vm1442 = vcmp.eq.s32.totalorder %v1075, 0
        %vm1443 = vcmp.eq.s32.totalorder %v1076, 0
        %vm1444 = vcmp.eq.s32.totalorder %v1077, 0
        %vm1445 = vcmp.eq.s32.totalorder %v1078, 0
        %vm1446 = vcmp.eq.s32.totalorder %v1079, 0
        %vm1447 = vcmp.eq.s32.totalorder %v1080, 0
        %vm1448 = vcmp.eq.s32.totalorder %v1081, 0
        %vm1449 = vcmp.eq.s32.totalorder %v1082, 0
        %vm1450 = vcmp.eq.s32.totalorder %v1083, 0
        %vm1451 = vcmp.eq.s32.totalorder %v1084, 0
        %vm1452 = vcmp.eq.s32.totalorder %v1085, 0
        %vm1453 = vcmp.eq.s32.totalorder %v1086, 0
        %vm1454 = vcmp.eq.s32.totalorder %v1087, 0
        %vm1455 = vcmp.eq.s32.totalorder %v1088, 0
        %vm1456 = vcmp.eq.s32.totalorder %v1089, 0
        %vm1457 = vcmp.eq.s32.totalorder %v1090, 0
        %vm1458 = vcmp.eq.s32.totalorder %v1091, 0
        %vm1459 = vcmp.eq.s32.totalorder %v1092, 0
        %vm1460 = vcmp.eq.s32.totalorder %v1093, 0
        %vm1461 = vcmp.eq.s32.totalorder %v1094, 0
        %vm1462 = vcmp.eq.s32.totalorder %v1095, 0
        %vm1463 = vcmp.eq.s32.totalorder %v1096, 0
        %v1464 = vrot.slane %v200, 7
        %v1465 = vrot.slane %v201, 7
        %v1466 = vrot.slane %v202, 7
        %v1467 = vrot.slane %v203, 7
        %v1468 = vrot.slane %v204, 7
        %v1469 = vrot.slane %v205, 7
        %v1470 = vrot.slane %v206, 7
        %v1471 = vrot.slane %v207, 7
        %v1472 = vrot.slane %v208, 7
        %v1473 = vrot.slane %v209, 7
        %v1474 = vrot.slane %v210, 7
        %v1475 = vrot.slane %v211, 7
        %v1476 = vrot.slane %v212, 7
        %v1477 = vrot.slane %v213, 7
        %v1478 = vrot.slane %v214, 7
        %v1479 = vrot.slane %v215, 7
        %v1480 = vrot.slane %v216, 7
        %v1481 = vrot.slane %v217, 7
        %v1482 = vrot.slane %v218, 7
        %v1483 = vrot.slane %v219, 7
        %v1484 = vrot.slane %v220, 7
        %v1485 = vrot.slane %v221, 7
        %v1486 = vrot.slane %v222, 7
        %v1487 = vrot.slane %v223, 7
        %v1488 = vrot.slane %v224, 7
        %v1489 = vrot.slane %v225, 7
        %v1490 = vrot.slane %v226, 7
        %v1491 = vrot.slane %v227, 7
        %v1492 = vrot.slane %v228, 7
        %v1493 = vrot.slane %v229, 7
        %v1494 = vrot.slane %v230, 7
        %v1495 = vrot.slane %v231, 7
        %v1496 = vrot.slane %v232, 7
        %v1497 = vrot.slane %v233, 7
        %v1498 = vrot.slane %v234, 7
        %v1499 = vrot.slane %v235, 7
        %v1500 = vrot.slane %v236, 7
        %v1501 = vrot.slane %v237, 7
        %v1502 = vrot.slane %v238, 7
        %v1503 = vrot.slane %v239, 7
        %v1504 = vrot.slane %v240, 7
        %v1505 = vrot.slane %v241, 7
        %v1506 = vrot.slane %v242, 7
        %v1507 = vrot.slane %v243, 7
        %v1508 = vrot.slane %v244, 7
        %v1509 = vrot.slane %v245, 7
        %v1510 = vrot.slane %v246, 7
        %v1511 = vrot.slane %v247, 7
        %v1512 = vrot.slane %v248, 7
        %v1513 = vrot.slane %v249, 7
        %v1514 = vrot.slane %v250, 7
        %v1515 = vrot.slane %v251, 7
        %v1516 = vrot.slane %v252, 7
        %v1517 = vrot.slane %v253, 7
        %v1518 = vrot.slane %v254, 7
        %v1519 = vrot.slane %v255, 7
        %v1520 = vrot.slane %v256, 7
        %v1521 = vrot.slane %v257, 7
        %v1522 = vrot.slane %v258, 7
        %v1523 = vrot.slane %v259, 7
        %v1524 = vrot.slane %v260, 7
        %v1525 = vrot.slane %v261, 7
        %v1526 = vrot.slane %v262, 7
        %v1527 = vrot.slane %v263, 7
        %vm1528 = vcmp.lt.s32.totalorder %v265, 1
        %v1529 = vsel %vm1528, %v1526, %v1527
        %v1530 = vsel %vm1528, %v1525, %v1526
        %v1531 = vsel %vm1528, %v1524, %v1525
        %v1532 = vsel %vm1528, %v1523, %v1524
        %v1533 = vsel %vm1528, %v1522, %v1523
        %v1534 = vsel %vm1528, %v1521, %v1522
        %v1535 = vsel %vm1528, %v1520, %v1521
        %v1536 = vsel %vm1528, %v1519, %v1520
        %v1537 = vsel %vm1528, %v1518, %v1519
        %v1538 = vsel %vm1528, %v1517, %v1518
        %v1539 = vsel %vm1528, %v1516, %v1517
        %v1540 = vsel %vm1528, %v1515, %v1516
        %v1541 = vsel %vm1528, %v1514, %v1515
        %v1542 = vsel %vm1528, %v1513, %v1514
        %v1543 = vsel %vm1528, %v1512, %v1513
        %v1544 = vsel %vm1528, %v1511, %v1512
        %v1545 = vsel %vm1528, %v1510, %v1511
        %v1546 = vsel %vm1528, %v1509, %v1510
        %v1547 = vsel %vm1528, %v1508, %v1509
        %v1548 = vsel %vm1528, %v1507, %v1508
        %v1549 = vsel %vm1528, %v1506, %v1507
        %v1550 = vsel %vm1528, %v1505, %v1506
        %v1551 = vsel %vm1528, %v1504, %v1505
        %v1552 = vsel %vm1528, %v1503, %v1504
        %v1553 = vsel %vm1528, %v1502, %v1503
        %v1554 = vsel %vm1528, %v1501, %v1502
        %v1555 = vsel %vm1528, %v1500, %v1501
        %v1556 = vsel %vm1528, %v1499, %v1500
        %v1557 = vsel %vm1528, %v1498, %v1499
        %v1558 = vsel %vm1528, %v1497, %v1498
        %v1559 = vsel %vm1528, %v1496, %v1497
        %v1560 = vsel %vm1528, %v1495, %v1496
        %v1561 = vsel %vm1528, %v1494, %v1495
        %v1562 = vsel %vm1528, %v1493, %v1494
        %v1563 = vsel %vm1528, %v1492, %v1493
        %v1564 = vsel %vm1528, %v1491, %v1492
        %v1565 = vsel %vm1528, %v1490, %v1491
        %v1566 = vsel %vm1528, %v1489, %v1490
        %v1567 = vsel %vm1528, %v1488, %v1489
        %v1568 = vsel %vm1528, %v1487, %v1488
        %v1569 = vsel %vm1528, %v1486, %v1487
        %v1570 = vsel %vm1528, %v1485, %v1486
        %v1571 = vsel %vm1528, %v1484, %v1485
        %v1572 = vsel %vm1528, %v1483, %v1484
        %v1573 = vsel %vm1528, %v1482, %v1483
        %v1574 = vsel %vm1528, %v1481, %v1482
        %v1575 = vsel %vm1528, %v1480, %v1481
        %v1576 = vsel %vm1528, %v1479, %v1480
        %v1577 = vsel %vm1528, %v1478, %v1479
        %v1578 = vsel %vm1528, %v1477, %v1478
        %v1579 = vsel %vm1528, %v1476, %v1477
        %v1580 = vsel %vm1528, %v1475, %v1476
        %v1581 = vsel %vm1528, %v1474, %v1475
        %v1582 = vsel %vm1528, %v1473, %v1474
        %v1583 = vsel %vm1528, %v1472, %v1473
        %v1584 = vsel %vm1528, %v1471, %v1472
        %v1585 = vsel %vm1528, %v1470, %v1471
        %v1586 = vsel %vm1528, %v1469, %v1470
        %v1587 = vsel %vm1528, %v1468, %v1469
        %v1588 = vsel %vm1528, %v1467, %v1468
        %v1589 = vsel %vm1528, %v1466, %v1467
        %v1590 = vsel %vm1528, %v1465, %v1466
        %v1591 = vsel %vm1528, %v1464, %v1465
        %v1592 = vsel %vm1528, %v1527, %v1464
        %v1593 = vsel %vm1400, 1, 0
        %v1594 = vsel %vm1401, 1, 0
        %v1595 = vsel %vm1402, 1, 0
        %v1596 = vsel %vm1403, 1, 0
        %v1597 = vsel %vm1404, 1, 0
        %v1598 = vsel %vm1405, 1, 0
        %v1599 = vsel %vm1406, 1, 0
        %v1600 = vsel %vm1407, 1, 0
        %v1601 = vsel %vm1408, 1, 0
        %v1602 = vsel %vm1409, 1, 0
        %v1603 = vsel %vm1410, 1, 0
        %v1604 = vsel %vm1411, 1, 0
        %v1605 = vsel %vm1412, 1, 0
        %v1606 = vsel %vm1413, 1, 0
        %v1607 = vsel %vm1414, 1, 0
        %v1608 = vsel %vm1415, 1, 0
        %v1609 = vsel %vm1416, 1, 0
        %v1610 = vsel %vm1417, 1, 0
        %v1611 = vsel %vm1418, 1, 0
        %v1612 = vsel %vm1419, 1, 0
        %v1613 = vsel %vm1420, 1, 0
        %v1614 = vsel %vm1421, 1, 0
        %v1615 = vsel %vm1422, 1, 0
        %v1616 = vsel %vm1423, 1, 0
        %v1617 = vsel %vm1424, 1, 0
        %v1618 = vsel %vm1425, 1, 0
        %v1619 = vsel %vm1426, 1, 0
        %v1620 = vsel %vm1427, 1, 0
        %v1621 = vsel %vm1428, 1, 0
        %v1622 = vsel %vm1429, 1, 0
        %v1623 = vsel %vm1430, 1, 0
        %v1624 = vsel %vm1431, 1, 0
        %v1625 = vsel %vm1432, 1, 0
        %v1626 = vsel %vm1433, 1, 0
        %v1627 = vsel %vm1434, 1, 0
        %v1628 = vsel %vm1435, 1, 0
        %v1629 = vsel %vm1436, 1, 0
        %v1630 = vsel %vm1437, 1, 0
        %v1631 = vsel %vm1438, 1, 0
        %v1632 = vsel %vm1439, 1, 0
        %v1633 = vsel %vm1440, 1, 0
        %v1634 = vsel %vm1441, 1, 0
        %v1635 = vsel %vm1442, 1, 0
        %v1636 = vsel %vm1443, 1, 0
        %v1637 = vsel %vm1444, 1, 0
        %v1638 = vsel %vm1445, 1, 0
        %v1639 = vsel %vm1446, 1, 0
        %v1640 = vsel %vm1447, 1, 0
        %v1641 = vsel %vm1448, 1, 0
        %v1642 = vsel %vm1449, 1, 0
        %v1643 = vsel %vm1450, 1, 0
        %v1644 = vsel %vm1451, 1, 0
        %v1645 = vsel %vm1452, 1, 0
        %v1646 = vsel %vm1453, 1, 0
        %v1647 = vsel %vm1454, 1, 0
        %v1648 = vsel %vm1455, 1, 0
        %v1649 = vsel %vm1456, 1, 0
        %v1650 = vsel %vm1457, 1, 0
        %v1651 = vsel %vm1458, 1, 0
        %v1652 = vsel %vm1459, 1, 0
        %v1653 = vsel %vm1460, 1, 0
        %v1654 = vsel %vm1461, 1, 0
        %v1655 = vsel %vm1462, 1, 0
        %v1656 = vsel %vm1463, 1, 0
        %vm1657 = vcmp.eq.s32.totalorder %v1593, 1
        %vm1658 = vcmp.eq.s32.totalorder %v1594, 1
        %vm1659 = vcmp.eq.s32.totalorder %v1595, 1
        %vm1660 = vcmp.eq.s32.totalorder %v1596, 1
        %vm1661 = vcmp.eq.s32.totalorder %v1597, 1
        %vm1662 = vcmp.eq.s32.totalorder %v1598, 1
        %vm1663 = vcmp.eq.s32.totalorder %v1599, 1
        %vm1664 = vcmp.eq.s32.totalorder %v1600, 1
        %vm1665 = vcmp.eq.s32.totalorder %v1601, 1
        %vm1666 = vcmp.eq.s32.totalorder %v1602, 1
        %vm1667 = vcmp.eq.s32.totalorder %v1603, 1
        %vm1668 = vcmp.eq.s32.totalorder %v1604, 1
        %vm1669 = vcmp.eq.s32.totalorder %v1605, 1
        %vm1670 = vcmp.eq.s32.totalorder %v1606, 1
        %vm1671 = vcmp.eq.s32.totalorder %v1607, 1
        %vm1672 = vcmp.eq.s32.totalorder %v1608, 1
        %vm1673 = vcmp.eq.s32.totalorder %v1609, 1
        %vm1674 = vcmp.eq.s32.totalorder %v1610, 1
        %vm1675 = vcmp.eq.s32.totalorder %v1611, 1
        %vm1676 = vcmp.eq.s32.totalorder %v1612, 1
        %vm1677 = vcmp.eq.s32.totalorder %v1613, 1
        %vm1678 = vcmp.eq.s32.totalorder %v1614, 1
        %vm1679 = vcmp.eq.s32.totalorder %v1615, 1
        %vm1680 = vcmp.eq.s32.totalorder %v1616, 1
        %vm1681 = vcmp.eq.s32.totalorder %v1617, 1
        %vm1682 = vcmp.eq.s32.totalorder %v1618, 1
        %vm1683 = vcmp.eq.s32.totalorder %v1619, 1
        %vm1684 = vcmp.eq.s32.totalorder %v1620, 1
        %vm1685 = vcmp.eq.s32.totalorder %v1621, 1
        %vm1686 = vcmp.eq.s32.totalorder %v1622, 1
        %vm1687 = vcmp.eq.s32.totalorder %v1623, 1
        %vm1688 = vcmp.eq.s32.totalorder %v1624, 1
        %vm1689 = vcmp.eq.s32.totalorder %v1625, 1
        %vm1690 = vcmp.eq.s32.totalorder %v1626, 1
        %vm1691 = vcmp.eq.s32.totalorder %v1627, 1
        %vm1692 = vcmp.eq.s32.totalorder %v1628, 1
        %vm1693 = vcmp.eq.s32.totalorder %v1629, 1
        %vm1694 = vcmp.eq.s32.totalorder %v1630, 1
        %vm1695 = vcmp.eq.s32.totalorder %v1631, 1
        %vm1696 = vcmp.eq.s32.totalorder %v1632, 1
        %vm1697 = vcmp.eq.s32.totalorder %v1633, 1
        %vm1698 = vcmp.eq.s32.totalorder %v1634, 1
        %vm1699 = vcmp.eq.s32.totalorder %v1635, 1
        %vm1700 = vcmp.eq.s32.totalorder %v1636, 1
        %vm1701 = vcmp.eq.s32.totalorder %v1637, 1
        %vm1702 = vcmp.eq.s32.totalorder %v1638, 1
        %vm1703 = vcmp.eq.s32.totalorder %v1639, 1
        %vm1704 = vcmp.eq.s32.totalorder %v1640, 1
        %vm1705 = vcmp.eq.s32.totalorder %v1641, 1
        %vm1706 = vcmp.eq.s32.totalorder %v1642, 1
        %vm1707 = vcmp.eq.s32.totalorder %v1643, 1
        %vm1708 = vcmp.eq.s32.totalorder %v1644, 1
        %vm1709 = vcmp.eq.s32.totalorder %v1645, 1
        %vm1710 = vcmp.eq.s32.totalorder %v1646, 1
        %vm1711 = vcmp.eq.s32.totalorder %v1647, 1
        %vm1712 = vcmp.eq.s32.totalorder %v1648, 1
        %vm1713 = vcmp.eq.s32.totalorder %v1649, 1
        %vm1714 = vcmp.eq.s32.totalorder %v1650, 1
        %vm1715 = vcmp.eq.s32.totalorder %v1651, 1
        %vm1716 = vcmp.eq.s32.totalorder %v1652, 1
        %vm1717 = vcmp.eq.s32.totalorder %v1653, 1
        %vm1718 = vcmp.eq.s32.totalorder %v1654, 1
        %vm1719 = vcmp.eq.s32.totalorder %v1655, 1
        %vm1720 = vcmp.eq.s32.totalorder %v1656, 1
        %v1721 = vsel %vm1657, %v200, %v1592
        %v1722 = vsel %vm1658, %v201, %v1591
        %v1723 = vsel %vm1659, %v202, %v1590
        %v1724 = vsel %vm1660, %v203, %v1589
        %v1725 = vsel %vm1661, %v204, %v1588
        %v1726 = vsel %vm1662, %v205, %v1587
        %v1727 = vsel %vm1663, %v206, %v1586
        %v1728 = vsel %vm1664, %v207, %v1585
        %v1729 = vsel %vm1665, %v208, %v1584
        %v1730 = vsel %vm1666, %v209, %v1583
        %v1731 = vsel %vm1667, %v210, %v1582
        %v1732 = vsel %vm1668, %v211, %v1581
        %v1733 = vsel %vm1669, %v212, %v1580
        %v1734 = vsel %vm1670, %v213, %v1579
        %v1735 = vsel %vm1671, %v214, %v1578
        %v1736 = vsel %vm1672, %v215, %v1577
        %v1737 = vsel %vm1673, %v216, %v1576
        %v1738 = vsel %vm1674, %v217, %v1575
        %v1739 = vsel %vm1675, %v218, %v1574
        %v1740 = vsel %vm1676, %v219, %v1573
        %v1741 = vsel %vm1677, %v220, %v1572
        %v1742 = vsel %vm1678, %v221, %v1571
        %v1743 = vsel %vm1679, %v222, %v1570
        %v1744 = vsel %vm1680, %v223, %v1569
        %v1745 = vsel %vm1681, %v224, %v1568
        %v1746 = vsel %vm1682, %v225, %v1567
        %v1747 = vsel %vm1683, %v226, %v1566
        %v1748 = vsel %vm1684, %v227, %v1565
        %v1749 = vsel %vm1685, %v228, %v1564
        %v1750 = vsel %vm1686, %v229, %v1563
        %v1751 = vsel %vm1687, %v230, %v1562
        %v1752 = vsel %vm1688, %v231, %v1561
        %v1753 = vsel %vm1689, %v232, %v1560
        %v1754 = vsel %vm1690, %v233, %v1559
        %v1755 = vsel %vm1691, %v234, %v1558
        %v1756 = vsel %vm1692, %v235, %v1557
        %v1757 = vsel %vm1693, %v236, %v1556
        %v1758 = vsel %vm1694, %v237, %v1555
        %v1759 = vsel %vm1695, %v238, %v1554
        %v1760 = vsel %vm1696, %v239, %v1553
        %v1761 = vsel %vm1697, %v240, %v1552
        %v1762 = vsel %vm1698, %v241, %v1551
        %v1763 = vsel %vm1699, %v242, %v1550
        %v1764 = vsel %vm1700, %v243, %v1549
        %v1765 = vsel %vm1701, %v244, %v1548
        %v1766 = vsel %vm1702, %v245, %v1547
        %v1767 = vsel %vm1703, %v246, %v1546
        %v1768 = vsel %vm1704, %v247, %v1545
        %v1769 = vsel %vm1705, %v248, %v1544
        %v1770 = vsel %vm1706, %v249, %v1543
        %v1771 = vsel %vm1707, %v250, %v1542
        %v1772 = vsel %vm1708, %v251, %v1541
        %v1773 = vsel %vm1709, %v252, %v1540
        %v1774 = vsel %vm1710, %v253, %v1539
        %v1775 = vsel %vm1711, %v254, %v1538
        %v1776 = vsel %vm1712, %v255, %v1537
        %v1777 = vsel %vm1713, %v256, %v1536
        %v1778 = vsel %vm1714, %v257, %v1535
        %v1779 = vsel %vm1715, %v258, %v1534
        %v1780 = vsel %vm1716, %v259, %v1533
        %v1781 = vsel %vm1717, %v260, %v1532
        %v1782 = vsel %vm1718, %v261, %v1531
        %v1783 = vsel %vm1719, %v262, %v1530
        %v1784 = vsel %vm1720, %v263, %v1529
        %vm1785 = vcmp.eq.s32.totalorder %v1033, 15
        %vm1786 = vcmp.eq.s32.totalorder %v1034, 15
        %vm1787 = vcmp.eq.s32.totalorder %v1035, 15
        %vm1788 = vcmp.eq.s32.totalorder %v1036, 15
        %vm1789 = vcmp.eq.s32.totalorder %v1037, 15
        %vm1790 = vcmp.eq.s32.totalorder %v1038, 15
        %vm1791 = vcmp.eq.s32.totalorder %v1039, 15
        %vm1792 = vcmp.eq.s32.totalorder %v1040, 15
        %vm1793 = vcmp.eq.s32.totalorder %v1041, 15
        %vm1794 = vcmp.eq.s32.totalorder %v1042, 15
        %vm1795 = vcmp.eq.s32.totalorder %v1043, 15
        %vm1796 = vcmp.eq.s32.totalorder %v1044, 15
        %vm1797 = vcmp.eq.s32.totalorder %v1045, 15
        %vm1798 = vcmp.eq.s32.totalorder %v1046, 15
        %vm1799 = vcmp.eq.s32.totalorder %v1047, 15
        %vm1800 = vcmp.eq.s32.totalorder %v1048, 15
        %vm1801 = vcmp.eq.s32.totalorder %v1049, 15
        %vm1802 = vcmp.eq.s32.totalorder %v1050, 15
        %vm1803 = vcmp.eq.s32.totalorder %v1051, 15
        %vm1804 = vcmp.eq.s32.totalorder %v1052, 15
        %vm1805 = vcmp.eq.s32.totalorder %v1053, 15
        %vm1806 = vcmp.eq.s32.totalorder %v1054, 15
        %vm1807 = vcmp.eq.s32.totalorder %v1055, 15
        %vm1808 = vcmp.eq.s32.totalorder %v1056, 15
        %vm1809 = vcmp.eq.s32.totalorder %v1057, 15
        %vm1810 = vcmp.eq.s32.totalorder %v1058, 15
        %vm1811 = vcmp.eq.s32.totalorder %v1059, 15
        %vm1812 = vcmp.eq.s32.totalorder %v1060, 15
        %vm1813 = vcmp.eq.s32.totalorder %v1061, 15
        %vm1814 = vcmp.eq.s32.totalorder %v1062, 15
        %vm1815 = vcmp.eq.s32.totalorder %v1063, 15
        %vm1816 = vcmp.eq.s32.totalorder %v1064, 15
        %vm1817 = vcmp.eq.s32.totalorder %v1065, 15
        %vm1818 = vcmp.eq.s32.totalorder %v1066, 15
        %vm1819 = vcmp.eq.s32.totalorder %v1067, 15
        %vm1820 = vcmp.eq.s32.totalorder %v1068, 15
        %vm1821 = vcmp.eq.s32.totalorder %v1069, 15
        %vm1822 = vcmp.eq.s32.totalorder %v1070, 15
        %vm1823 = vcmp.eq.s32.totalorder %v1071, 15
        %vm1824 = vcmp.eq.s32.totalorder %v1072, 15
        %vm1825 = vcmp.eq.s32.totalorder %v1073, 15
        %vm1826 = vcmp.eq.s32.totalorder %v1074, 15
        %vm1827 = vcmp.eq.s32.totalorder %v1075, 15
        %vm1828 = vcmp.eq.s32.totalorder %v1076, 15
        %vm1829 = vcmp.eq.s32.totalorder %v1077, 15
        %vm1830 = vcmp.eq.s32.totalorder %v1078, 15
        %vm1831 = vcmp.eq.s32.totalorder %v1079, 15
        %vm1832 = vcmp.eq.s32.totalorder %v1080, 15
        %vm1833 = vcmp.eq.s32.totalorder %v1081, 15
        %vm1834 = vcmp.eq.s32.totalorder %v1082, 15
        %vm1835 = vcmp.eq.s32.totalorder %v1083, 15
        %vm1836 = vcmp.eq.s32.totalorder %v1084, 15
        %vm1837 = vcmp.eq.s32.totalorder %v1085, 15
        %vm1838 = vcmp.eq.s32.totalorder %v1086, 15
        %vm1839 = vcmp.eq.s32.totalorder %v1087, 15
        %vm1840 = vcmp.eq.s32.totalorder %v1088, 15
        %vm1841 = vcmp.eq.s32.totalorder %v1089, 15
        %vm1842 = vcmp.eq.s32.totalorder %v1090, 15
        %vm1843 = vcmp.eq.s32.totalorder %v1091, 15
        %vm1844 = vcmp.eq.s32.totalorder %v1092, 15
        %vm1845 = vcmp.eq.s32.totalorder %v1093, 15
        %vm1846 = vcmp.eq.s32.totalorder %v1094, 15
        %vm1847 = vcmp.eq.s32.totalorder %v1095, 15
        %vm1848 = vcmp.eq.s32.totalorder %v1096, 15
        %v1849 = vrot.slane %v200, 1
        %v1850 = vrot.slane %v201, 1
        %v1851 = vrot.slane %v202, 1
        %v1852 = vrot.slane %v203, 1
        %v1853 = vrot.slane %v204, 1
        %v1854 = vrot.slane %v205, 1
        %v1855 = vrot.slane %v206, 1
        %v1856 = vrot.slane %v207, 1
        %v1857 = vrot.slane %v208, 1
        %v1858 = vrot.slane %v209, 1
        %v1859 = vrot.slane %v210, 1
        %v1860 = vrot.slane %v211, 1
        %v1861 = vrot.slane %v212, 1
        %v1862 = vrot.slane %v213, 1
        %v1863 = vrot.slane %v214, 1
        %v1864 = vrot.slane %v215, 1
        %v1865 = vrot.slane %v216, 1
        %v1866 = vrot.slane %v217, 1
        %v1867 = vrot.slane %v218, 1
        %v1868 = vrot.slane %v219, 1
        %v1869 = vrot.slane %v220, 1
        %v1870 = vrot.slane %v221, 1
        %v1871 = vrot.slane %v222, 1
        %v1872 = vrot.slane %v223, 1
        %v1873 = vrot.slane %v224, 1
        %v1874 = vrot.slane %v225, 1
        %v1875 = vrot.slane %v226, 1
        %v1876 = vrot.slane %v227, 1
        %v1877 = vrot.slane %v228, 1
        %v1878 = vrot.slane %v229, 1
        %v1879 = vrot.slane %v230, 1
        %v1880 = vrot.slane %v231, 1
        %v1881 = vrot.slane %v232, 1
        %v1882 = vrot.slane %v233, 1
        %v1883 = vrot.slane %v234, 1
        %v1884 = vrot.slane %v235, 1
        %v1885 = vrot.slane %v236, 1
        %v1886 = vrot.slane %v237, 1
        %v1887 = vrot.slane %v238, 1
        %v1888 = vrot.slane %v239, 1
        %v1889 = vrot.slane %v240, 1
        %v1890 = vrot.slane %v241, 1
        %v1891 = vrot.slane %v242, 1
        %v1892 = vrot.slane %v243, 1
        %v1893 = vrot.slane %v244, 1
        %v1894 = vrot.slane %v245, 1
        %v1895 = vrot.slane %v246, 1
        %v1896 = vrot.slane %v247, 1
        %v1897 = vrot.slane %v248, 1
        %v1898 = vrot.slane %v249, 1
        %v1899 = vrot.slane %v250, 1
        %v1900 = vrot.slane %v251, 1
        %v1901 = vrot.slane %v252, 1
        %v1902 = vrot.slane %v253, 1
        %v1903 = vrot.slane %v254, 1
        %v1904 = vrot.slane %v255, 1
        %v1905 = vrot.slane %v256, 1
        %v1906 = vrot.slane %v257, 1
        %v1907 = vrot.slane %v258, 1
        %v1908 = vrot.slane %v259, 1
        %v1909 = vrot.slane %v260, 1
        %v1910 = vrot.slane %v261, 1
        %v1911 = vrot.slane %v262, 1
        %v1912 = vrot.slane %v263, 1
        %vm1913 = vcmp.lt.s32.totalorder %v265, 7
        %v1914 = vsel %vm1913, %v1911, %v1912
        %v1915 = vsel %vm1913, %v1910, %v1911
        %v1916 = vsel %vm1913, %v1909, %v1910
        %v1917 = vsel %vm1913, %v1908, %v1909
        %v1918 = vsel %vm1913, %v1907, %v1908
        %v1919 = vsel %vm1913, %v1906, %v1907
        %v1920 = vsel %vm1913, %v1905, %v1906
        %v1921 = vsel %vm1913, %v1904, %v1905
        %v1922 = vsel %vm1913, %v1903, %v1904
        %v1923 = vsel %vm1913, %v1902, %v1903
        %v1924 = vsel %vm1913, %v1901, %v1902
        %v1925 = vsel %vm1913, %v1900, %v1901
        %v1926 = vsel %vm1913, %v1899, %v1900
        %v1927 = vsel %vm1913, %v1898, %v1899
        %v1928 = vsel %vm1913, %v1897, %v1898
        %v1929 = vsel %vm1913, %v1896, %v1897
        %v1930 = vsel %vm1913, %v1895, %v1896
        %v1931 = vsel %vm1913, %v1894, %v1895
        %v1932 = vsel %vm1913, %v1893, %v1894
        %v1933 = vsel %vm1913, %v1892, %v1893
        %v1934 = vsel %vm1913, %v1891, %v1892
        %v1935 = vsel %vm1913, %v1890, %v1891
        %v1936 = vsel %vm1913, %v1889, %v1890
        %v1937 = vsel %vm1913, %v1888, %v1889
        %v1938 = vsel %vm1913, %v1887, %v1888
        %v1939 = vsel %vm1913, %v1886, %v1887
        %v1940 = vsel %vm1913, %v1885, %v1886
        %v1941 = vsel %vm1913, %v1884, %v1885
        %v1942 = vsel %vm1913, %v1883, %v1884
        %v1943 = vsel %vm1913, %v1882, %v1883
        %v1944 = vsel %vm1913, %v1881, %v1882
        %v1945 = vsel %vm1913, %v1880, %v1881
        %v1946 = vsel %vm1913, %v1879, %v1880
        %v1947 = vsel %vm1913, %v1878, %v1879
        %v1948 = vsel %vm1913, %v1877, %v1878
        %v1949 = vsel %vm1913, %v1876, %v1877
        %v1950 = vsel %vm1913, %v1875, %v1876
        %v1951 = vsel %vm1913, %v1874, %v1875
        %v1952 = vsel %vm1913, %v1873, %v1874
        %v1953 = vsel %vm1913, %v1872, %v1873
        %v1954 = vsel %vm1913, %v1871, %v1872
        %v1955 = vsel %vm1913, %v1870, %v1871
        %v1956 = vsel %vm1913, %v1869, %v1870
        %v1957 = vsel %vm1913, %v1868, %v1869
        %v1958 = vsel %vm1913, %v1867, %v1868
        %v1959 = vsel %vm1913, %v1866, %v1867
        %v1960 = vsel %vm1913, %v1865, %v1866
        %v1961 = vsel %vm1913, %v1864, %v1865
        %v1962 = vsel %vm1913, %v1863, %v1864
        %v1963 = vsel %vm1913, %v1862, %v1863
        %v1964 = vsel %vm1913, %v1861, %v1862
        %v1965 = vsel %vm1913, %v1860, %v1861
        %v1966 = vsel %vm1913, %v1859, %v1860
        %v1967 = vsel %vm1913, %v1858, %v1859
        %v1968 = vsel %vm1913, %v1857, %v1858
        %v1969 = vsel %vm1913, %v1856, %v1857
        %v1970 = vsel %vm1913, %v1855, %v1856
        %v1971 = vsel %vm1913, %v1854, %v1855
        %v1972 = vsel %vm1913, %v1853, %v1854
        %v1973 = vsel %vm1913, %v1852, %v1853
        %v1974 = vsel %vm1913, %v1851, %v1852
        %v1975 = vsel %vm1913, %v1850, %v1851
        %v1976 = vsel %vm1913, %v1849, %v1850
        %v1977 = vsel %vm1913, %v1912, %v1849
        %v1978 = vsel %vm1785, 1, 0
        %v1979 = vsel %vm1786, 1, 0
        %v1980 = vsel %vm1787, 1, 0
        %v1981 = vsel %vm1788, 1, 0
        %v1982 = vsel %vm1789, 1, 0
        %v1983 = vsel %vm1790, 1, 0
        %v1984 = vsel %vm1791, 1, 0
        %v1985 = vsel %vm1792, 1, 0
        %v1986 = vsel %vm1793, 1, 0
        %v1987 = vsel %vm1794, 1, 0
        %v1988 = vsel %vm1795, 1, 0
        %v1989 = vsel %vm1796, 1, 0
        %v1990 = vsel %vm1797, 1, 0
        %v1991 = vsel %vm1798, 1, 0
        %v1992 = vsel %vm1799, 1, 0
        %v1993 = vsel %vm1800, 1, 0
        %v1994 = vsel %vm1801, 1, 0
        %v1995 = vsel %vm1802, 1, 0
        %v1996 = vsel %vm1803, 1, 0
        %v1997 = vsel %vm1804, 1, 0
        %v1998 = vsel %vm1805, 1, 0
        %v1999 = vsel %vm1806, 1, 0
        %v2000 = vsel %vm1807, 1, 0
        %v2001 = vsel %vm1808, 1, 0
        %v2002 = vsel %vm1809, 1, 0
        %v2003 = vsel %vm1810, 1, 0
        %v2004 = vsel %vm1811, 1, 0
        %v2005 = vsel %vm1812, 1, 0
        %v2006 = vsel %vm1813, 1, 0
        %v2007 = vsel %vm1814, 1, 0
        %v2008 = vsel %vm1815, 1, 0
        %v2009 = vsel %vm1816, 1, 0
        %v2010 = vsel %vm1817, 1, 0
        %v2011 = vsel %vm1818, 1, 0
        %v2012 = vsel %vm1819, 1, 0
        %v2013 = vsel %vm1820, 1, 0
        %v2014 = vsel %vm1821, 1, 0
        %v2015 = vsel %vm1822, 1, 0
        %v2016 = vsel %vm1823, 1, 0
        %v2017 = vsel %vm1824, 1, 0
        %v2018 = vsel %vm1825, 1, 0
        %v2019 = vsel %vm1826, 1, 0
        %v2020 = vsel %vm1827, 1, 0
        %v2021 = vsel %vm1828, 1, 0
        %v2022 = vsel %vm1829, 1, 0
        %v2023 = vsel %vm1830, 1, 0
        %v2024 = vsel %vm1831, 1, 0
        %v2025 = vsel %vm1832, 1, 0
        %v2026 = vsel %vm1833, 1, 0
        %v2027 = vsel %vm1834, 1, 0
        %v2028 = vsel %vm1835, 1, 0
        %v2029 = vsel %vm1836, 1, 0
        %v2030 = vsel %vm1837, 1, 0
        %v2031 = vsel %vm1838, 1, 0
        %v2032 = vsel %vm1839, 1, 0
        %v2033 = vsel %vm1840, 1, 0
        %v2034 = vsel %vm1841, 1, 0
        %v2035 = vsel %vm1842, 1, 0
        %v2036 = vsel %vm1843, 1, 0
        %v2037 = vsel %vm1844, 1, 0
        %v2038 = vsel %vm1845, 1, 0
        %v2039 = vsel %vm1846, 1, 0
        %v2040 = vsel %vm1847, 1, 0
        %v2041 = vsel %vm1848, 1, 0
        %vm2042 = vcmp.eq.s32.totalorder %v1978, 1
        %vm2043 = vcmp.eq.s32.totalorder %v1979, 1
        %vm2044 = vcmp.eq.s32.totalorder %v1980, 1
        %vm2045 = vcmp.eq.s32.totalorder %v1981, 1
        %vm2046 = vcmp.eq.s32.totalorder %v1982, 1
        %vm2047 = vcmp.eq.s32.totalorder %v1983, 1
        %vm2048 = vcmp.eq.s32.totalorder %v1984, 1
        %vm2049 = vcmp.eq.s32.totalorder %v1985, 1
        %vm2050 = vcmp.eq.s32.totalorder %v1986, 1
        %vm2051 = vcmp.eq.s32.totalorder %v1987, 1
        %vm2052 = vcmp.eq.s32.totalorder %v1988, 1
        %vm2053 = vcmp.eq.s32.totalorder %v1989, 1
        %vm2054 = vcmp.eq.s32.totalorder %v1990, 1
        %vm2055 = vcmp.eq.s32.totalorder %v1991, 1
        %vm2056 = vcmp.eq.s32.totalorder %v1992, 1
        %vm2057 = vcmp.eq.s32.totalorder %v1993, 1
        %vm2058 = vcmp.eq.s32.totalorder %v1994, 1
        %vm2059 = vcmp.eq.s32.totalorder %v1995, 1
        %vm2060 = vcmp.eq.s32.totalorder %v1996, 1
        %vm2061 = vcmp.eq.s32.totalorder %v1997, 1
        %vm2062 = vcmp.eq.s32.totalorder %v1998, 1
        %vm2063 = vcmp.eq.s32.totalorder %v1999, 1
        %vm2064 = vcmp.eq.s32.totalorder %v2000, 1
        %vm2065 = vcmp.eq.s32.totalorder %v2001, 1
        %vm2066 = vcmp.eq.s32.totalorder %v2002, 1
        %vm2067 = vcmp.eq.s32.totalorder %v2003, 1
        %vm2068 = vcmp.eq.s32.totalorder %v2004, 1
        %vm2069 = vcmp.eq.s32.totalorder %v2005, 1
        %vm2070 = vcmp.eq.s32.totalorder %v2006, 1
        %vm2071 = vcmp.eq.s32.totalorder %v2007, 1
        %vm2072 = vcmp.eq.s32.totalorder %v2008, 1
        %vm2073 = vcmp.eq.s32.totalorder %v2009, 1
        %vm2074 = vcmp.eq.s32.totalorder %v2010, 1
        %vm2075 = vcmp.eq.s32.totalorder %v2011, 1
        %vm2076 = vcmp.eq.s32.totalorder %v2012, 1
        %vm2077 = vcmp.eq.s32.totalorder %v2013, 1
        %vm2078 = vcmp.eq.s32.totalorder %v2014, 1
        %vm2079 = vcmp.eq.s32.totalorder %v2015, 1
        %vm2080 = vcmp.eq.s32.totalorder %v2016, 1
        %vm2081 = vcmp.eq.s32.totalorder %v2017, 1
        %vm2082 = vcmp.eq.s32.totalorder %v2018, 1
        %vm2083 = vcmp.eq.s32.totalorder %v2019, 1
        %vm2084 = vcmp.eq.s32.totalorder %v2020, 1
        %vm2085 = vcmp.eq.s32.totalorder %v2021, 1
        %vm2086 = vcmp.eq.s32.totalorder %v2022, 1
        %vm2087 = vcmp.eq.s32.totalorder %v2023, 1
        %vm2088 = vcmp.eq.s32.totalorder %v2024, 1
        %vm2089 = vcmp.eq.s32.totalorder %v2025, 1
        %vm2090 = vcmp.eq.s32.totalorder %v2026, 1
        %vm2091 = vcmp.eq.s32.totalorder %v2027, 1
        %vm2092 = vcmp.eq.s32.totalorder %v2028, 1
        %vm2093 = vcmp.eq.s32.totalorder %v2029, 1
        %vm2094 = vcmp.eq.s32.totalorder %v2030, 1
        %vm2095 = vcmp.eq.s32.totalorder %v2031, 1
        %vm2096 = vcmp.eq.s32.totalorder %v2032, 1
        %vm2097 = vcmp.eq.s32.totalorder %v2033, 1
        %vm2098 = vcmp.eq.s32.totalorder %v2034, 1
        %vm2099 = vcmp.eq.s32.totalorder %v2035, 1
        %vm2100 = vcmp.eq.s32.totalorder %v2036, 1
        %vm2101 = vcmp.eq.s32.totalorder %v2037, 1
        %vm2102 = vcmp.eq.s32.totalorder %v2038, 1
        %vm2103 = vcmp.eq.s32.totalorder %v2039, 1
        %vm2104 = vcmp.eq.s32.totalorder %v2040, 1
        %vm2105 = vcmp.eq.s32.totalorder %v2041, 1
        %v2106 = vsel %vm2042, %v200, %v1976
        %v2107 = vsel %vm2043, %v201, %v1975
        %v2108 = vsel %vm2044, %v202, %v1974
        %v2109 = vsel %vm2045, %v203, %v1973
        %v2110 = vsel %vm2046, %v204, %v1972
        %v2111 = vsel %vm2047, %v205, %v1971
        %v2112 = vsel %vm2048, %v206, %v1970
        %v2113 = vsel %vm2049, %v207, %v1969
        %v2114 = vsel %vm2050, %v208, %v1968
        %v2115 = vsel %vm2051, %v209, %v1967
        %v2116 = vsel %vm2052, %v210, %v1966
        %v2117 = vsel %vm2053, %v211, %v1965
        %v2118 = vsel %vm2054, %v212, %v1964
        %v2119 = vsel %vm2055, %v213, %v1963
        %v2120 = vsel %vm2056, %v214, %v1962
        %v2121 = vsel %vm2057, %v215, %v1961
        %v2122 = vsel %vm2058, %v216, %v1960
        %v2123 = vsel %vm2059, %v217, %v1959
        %v2124 = vsel %vm2060, %v218, %v1958
        %v2125 = vsel %vm2061, %v219, %v1957
        %v2126 = vsel %vm2062, %v220, %v1956
        %v2127 = vsel %vm2063, %v221, %v1955
        %v2128 = vsel %vm2064, %v222, %v1954
        %v2129 = vsel %vm2065, %v223, %v1953
        %v2130 = vsel %vm2066, %v224, %v1952
        %v2131 = vsel %vm2067, %v225, %v1951
        %v2132 = vsel %vm2068, %v226, %v1950
        %v2133 = vsel %vm2069, %v227, %v1949
        %v2134 = vsel %vm2070, %v228, %v1948
        %v2135 = vsel %vm2071, %v229, %v1947
        %v2136 = vsel %vm2072, %v230, %v1946
        %v2137 = vsel %vm2073, %v231, %v1945
        %v2138 = vsel %vm2074, %v232, %v1944
        %v2139 = vsel %vm2075, %v233, %v1943
        %v2140 = vsel %vm2076, %v234, %v1942
        %v2141 = vsel %vm2077, %v235, %v1941
        %v2142 = vsel %vm2078, %v236, %v1940
        %v2143 = vsel %vm2079, %v237, %v1939
        %v2144 = vsel %vm2080, %v238, %v1938
        %v2145 = vsel %vm2081, %v239, %v1937
        %v2146 = vsel %vm2082, %v240, %v1936
        %v2147 = vsel %vm2083, %v241, %v1935
        %v2148 = vsel %vm2084, %v242, %v1934
        %v2149 = vsel %vm2085, %v243, %v1933
        %v2150 = vsel %vm2086, %v244, %v1932
        %v2151 = vsel %vm2087, %v245, %v1931
        %v2152 = vsel %vm2088, %v246, %v1930
        %v2153 = vsel %vm2089, %v247, %v1929
        %v2154 = vsel %vm2090, %v248, %v1928
        %v2155 = vsel %vm2091, %v249, %v1927
        %v2156 = vsel %vm2092, %v250, %v1926
        %v2157 = vsel %vm2093, %v251, %v1925
        %v2158 = vsel %vm2094, %v252, %v1924
        %v2159 = vsel %vm2095, %v253, %v1923
        %v2160 = vsel %vm2096, %v254, %v1922
        %v2161 = vsel %vm2097, %v255, %v1921
        %v2162 = vsel %vm2098, %v256, %v1920
        %v2163 = vsel %vm2099, %v257, %v1919
        %v2164 = vsel %vm2100, %v258, %v1918
        %v2165 = vsel %vm2101, %v259, %v1917
        %v2166 = vsel %vm2102, %v260, %v1916
        %v2167 = vsel %vm2103, %v261, %v1915
        %v2168 = vsel %vm2104, %v262, %v1914
        %v2169 = vsel %vm2105, %v263, %v1977
        %v2170 = vmax.f32 %v1721, %v200
        %v2171 = vmax.f32 %v1722, %v201
        %v2172 = vmax.f32 %v1723, %v202
        %v2173 = vmax.f32 %v1724, %v203
        %v2174 = vmax.f32 %v1725, %v204
        %v2175 = vmax.f32 %v1726, %v205
        %v2176 = vmax.f32 %v1727, %v206
        %v2177 = vmax.f32 %v1728, %v207
        %v2178 = vmax.f32 %v1729, %v208
        %v2179 = vmax.f32 %v1730, %v209
        %v2180 = vmax.f32 %v1731, %v210
        %v2181 = vmax.f32 %v1732, %v211
        %v2182 = vmax.f32 %v1733, %v212
        %v2183 = vmax.f32 %v1734, %v213
        %v2184 = vmax.f32 %v1735, %v214
        %v2185 = vmax.f32 %v1736, %v215
        %v2186 = vmax.f32 %v1737, %v216
        %v2187 = vmax.f32 %v1738, %v217
        %v2188 = vmax.f32 %v1739, %v218
        %v2189 = vmax.f32 %v1740, %v219
        %v2190 = vmax.f32 %v1741, %v220
        %v2191 = vmax.f32 %v1742, %v221
        %v2192 = vmax.f32 %v1743, %v222
        %v2193 = vmax.f32 %v1744, %v223
        %v2194 = vmax.f32 %v1745, %v224
        %v2195 = vmax.f32 %v1746, %v225
        %v2196 = vmax.f32 %v1747, %v226
        %v2197 = vmax.f32 %v1748, %v227
        %v2198 = vmax.f32 %v1749, %v228
        %v2199 = vmax.f32 %v1750, %v229
        %v2200 = vmax.f32 %v1751, %v230
        %v2201 = vmax.f32 %v1752, %v231
        %v2202 = vmax.f32 %v1753, %v232
        %v2203 = vmax.f32 %v1754, %v233
        %v2204 = vmax.f32 %v1755, %v234
        %v2205 = vmax.f32 %v1756, %v235
        %v2206 = vmax.f32 %v1757, %v236
        %v2207 = vmax.f32 %v1758, %v237
        %v2208 = vmax.f32 %v1759, %v238
        %v2209 = vmax.f32 %v1760, %v239
        %v2210 = vmax.f32 %v1761, %v240
        %v2211 = vmax.f32 %v1762, %v241
        %v2212 = vmax.f32 %v1763, %v242
        %v2213 = vmax.f32 %v1764, %v243
        %v2214 = vmax.f32 %v1765, %v244
        %v2215 = vmax.f32 %v1766, %v245
        %v2216 = vmax.f32 %v1767, %v246
        %v2217 = vmax.f32 %v1768, %v247
        %v2218 = vmax.f32 %v1769, %v248
        %v2219 = vmax.f32 %v1770, %v249
        %v2220 = vmax.f32 %v1771, %v250
        %v2221 = vmax.f32 %v1772, %v251
        %v2222 = vmax.f32 %v1773, %v252
        %v2223 = vmax.f32 %v1774, %v253
        %v2224 = vmax.f32 %v1775, %v254
        %v2225 = vmax.f32 %v1776, %v255
        %v2226 = vmax.f32 %v1777, %v256
        %v2227 = vmax.f32 %v1778, %v257
        %v2228 = vmax.f32 %v1779, %v258
        %v2229 = vmax.f32 %v1780, %v259
        %v2230 = vmax.f32 %v1781, %v260
        %v2231 = vmax.f32 %v1782, %v261
        %v2232 = vmax.f32 %v1783, %v262
        %v2233 = vmax.f32 %v1784, %v263
        %v2234 = vmax.f32 %v2170, %v2106
        %v2235 = vmax.f32 %v2171, %v2107
        %v2236 = vmax.f32 %v2172, %v2108
        %v2237 = vmax.f32 %v2173, %v2109
        %v2238 = vmax.f32 %v2174, %v2110
        %v2239 = vmax.f32 %v2175, %v2111
        %v2240 = vmax.f32 %v2176, %v2112
        %v2241 = vmax.f32 %v2177, %v2113
        %v2242 = vmax.f32 %v2178, %v2114
        %v2243 = vmax.f32 %v2179, %v2115
        %v2244 = vmax.f32 %v2180, %v2116
        %v2245 = vmax.f32 %v2181, %v2117
        %v2246 = vmax.f32 %v2182, %v2118
        %v2247 = vmax.f32 %v2183, %v2119
        %v2248 = vmax.f32 %v2184, %v2120
        %v2249 = vmax.f32 %v2185, %v2121
        %v2250 = vmax.f32 %v2186, %v2122
        %v2251 = vmax.f32 %v2187, %v2123
        %v2252 = vmax.f32 %v2188, %v2124
        %v2253 = vmax.f32 %v2189, %v2125
        %v2254 = vmax.f32 %v2190, %v2126
        %v2255 = vmax.f32 %v2191, %v2127
        %v2256 = vmax.f32 %v2192, %v2128
        %v2257 = vmax.f32 %v2193, %v2129
        %v2258 = vmax.f32 %v2194, %v2130
        %v2259 = vmax.f32 %v2195, %v2131
        %v2260 = vmax.f32 %v2196, %v2132
        %v2261 = vmax.f32 %v2197, %v2133
        %v2262 = vmax.f32 %v2198, %v2134
        %v2263 = vmax.f32 %v2199, %v2135
        %v2264 = vmax.f32 %v2200, %v2136
        %v2265 = vmax.f32 %v2201, %v2137
        %v2266 = vmax.f32 %v2202, %v2138
        %v2267 = vmax.f32 %v2203, %v2139
        %v2268 = vmax.f32 %v2204, %v2140
        %v2269 = vmax.f32 %v2205, %v2141
        %v2270 = vmax.f32 %v2206, %v2142
        %v2271 = vmax.f32 %v2207, %v2143
        %v2272 = vmax.f32 %v2208, %v2144
        %v2273 = vmax.f32 %v2209, %v2145
        %v2274 = vmax.f32 %v2210, %v2146
        %v2275 = vmax.f32 %v2211, %v2147
        %v2276 = vmax.f32 %v2212, %v2148
        %v2277 = vmax.f32 %v2213, %v2149
        %v2278 = vmax.f32 %v2214, %v2150
        %v2279 = vmax.f32 %v2215, %v2151
        %v2280 = vmax.f32 %v2216, %v2152
        %v2281 = vmax.f32 %v2217, %v2153
        %v2282 = vmax.f32 %v2218, %v2154
        %v2283 = vmax.f32 %v2219, %v2155
        %v2284 = vmax.f32 %v2220, %v2156
        %v2285 = vmax.f32 %v2221, %v2157
        %v2286 = vmax.f32 %v2222, %v2158
        %v2287 = vmax.f32 %v2223, %v2159
        %v2288 = vmax.f32 %v2224, %v2160
        %v2289 = vmax.f32 %v2225, %v2161
        %v2290 = vmax.f32 %v2226, %v2162
        %v2291 = vmax.f32 %v2227, %v2163
        %v2292 = vmax.f32 %v2228, %v2164
        %v2293 = vmax.f32 %v2229, %v2165
        %v2294 = vmax.f32 %v2230, %v2166
        %v2295 = vmax.f32 %v2231, %v2167
        %v2296 = vmax.f32 %v2232, %v2168
        %v2297 = vmax.f32 %v2233, %v2169
        %v2298 = vadd.s32 %v1033, 4294967292
        %v2299 = vadd.s32 %v1034, 4294967292
        %v2300 = vadd.s32 %v1035, 4294967292
        %v2301 = vadd.s32 %v1036, 4294967292
        %v2302 = vadd.s32 %v1037, 4294967292
        %v2303 = vadd.s32 %v1038, 4294967292
        %v2304 = vadd.s32 %v1039, 4294967292
        %v2305 = vadd.s32 %v1040, 4294967292
        %v2306 = vadd.s32 %v1041, 4294967292
        %v2307 = vadd.s32 %v1042, 4294967292
        %v2308 = vadd.s32 %v1043, 4294967292
        %v2309 = vadd.s32 %v1044, 4294967292
        %v2310 = vadd.s32 %v1045, 4294967292
        %v2311 = vadd.s32 %v1046, 4294967292
        %v2312 = vadd.s32 %v1047, 4294967292
        %v2313 = vadd.s32 %v1048, 4294967292
        %v2314 = vadd.s32 %v1049, 4294967292
        %v2315 = vadd.s32 %v1050, 4294967292
        %v2316 = vadd.s32 %v1051, 4294967292
        %v2317 = vadd.s32 %v1052, 4294967292
        %v2318 = vadd.s32 %v1053, 4294967292
        %v2319 = vadd.s32 %v1054, 4294967292
        %v2320 = vadd.s32 %v1055, 4294967292
        %v2321 = vadd.s32 %v1056, 4294967292
        %v2322 = vadd.s32 %v1057, 4294967292
        %v2323 = vadd.s32 %v1058, 4294967292
        %v2324 = vadd.s32 %v1059, 4294967292
        %v2325 = vadd.s32 %v1060, 4294967292
        %v2326 = vadd.s32 %v1061, 4294967292
        %v2327 = vadd.s32 %v1062, 4294967292
        %v2328 = vadd.s32 %v1063, 4294967292
        %v2329 = vadd.s32 %v1064, 4294967292
        %v2330 = vadd.s32 %v1065, 4294967292
        %v2331 = vadd.s32 %v1066, 4294967292
        %v2332 = vadd.s32 %v1067, 4294967292
        %v2333 = vadd.s32 %v1068, 4294967292
        %v2334 = vadd.s32 %v1069, 4294967292
        %v2335 = vadd.s32 %v1070, 4294967292
        %v2336 = vadd.s32 %v1071, 4294967292
        %v2337 = vadd.s32 %v1072, 4294967292
        %v2338 = vadd.s32 %v1073, 4294967292
        %v2339 = vadd.s32 %v1074, 4294967292
        %v2340 = vadd.s32 %v1075, 4294967292
        %v2341 = vadd.s32 %v1076, 4294967292
        %v2342 = vadd.s32 %v1077, 4294967292
        %v2343 = vadd.s32 %v1078, 4294967292
        %v2344 = vadd.s32 %v1079, 4294967292
        %v2345 = vadd.s32 %v1080, 4294967292
        %v2346 = vadd.s32 %v1081, 4294967292
        %v2347 = vadd.s32 %v1082, 4294967292
        %v2348 = vadd.s32 %v1083, 4294967292
        %v2349 = vadd.s32 %v1084, 4294967292
        %v2350 = vadd.s32 %v1085, 4294967292
        %v2351 = vadd.s32 %v1086, 4294967292
        %v2352 = vadd.s32 %v1087, 4294967292
        %v2353 = vadd.s32 %v1088, 4294967292
        %v2354 = vadd.s32 %v1089, 4294967292
        %v2355 = vadd.s32 %v1090, 4294967292
        %v2356 = vadd.s32 %v1091, 4294967292
        %v2357 = vadd.s32 %v1092, 4294967292
        %v2358 = vadd.s32 %v1093, 4294967292
        %v2359 = vadd.s32 %v1094, 4294967292
        %v2360 = vadd.s32 %v1095, 4294967292
        %v2361 = vadd.s32 %v1096, 4294967292
        %vm2362 = vcmp.ge.s32.totalorder %v2298, 0
        %vm2363 = vcmp.ge.s32.totalorder %v2299, 0
        %vm2364 = vcmp.ge.s32.totalorder %v2300, 0
        %vm2365 = vcmp.ge.s32.totalorder %v2301, 0
        %vm2366 = vcmp.ge.s32.totalorder %v2302, 0
        %vm2367 = vcmp.ge.s32.totalorder %v2303, 0
        %vm2368 = vcmp.ge.s32.totalorder %v2304, 0
        %vm2369 = vcmp.ge.s32.totalorder %v2305, 0
        %vm2370 = vcmp.ge.s32.totalorder %v2306, 0
        %vm2371 = vcmp.ge.s32.totalorder %v2307, 0
        %vm2372 = vcmp.ge.s32.totalorder %v2308, 0
        %vm2373 = vcmp.ge.s32.totalorder %v2309, 0
        %vm2374 = vcmp.ge.s32.totalorder %v2310, 0
        %vm2375 = vcmp.ge.s32.totalorder %v2311, 0
        %vm2376 = vcmp.ge.s32.totalorder %v2312, 0
        %vm2377 = vcmp.ge.s32.totalorder %v2313, 0
        %vm2378 = vcmp.ge.s32.totalorder %v2314, 0
        %vm2379 = vcmp.ge.s32.totalorder %v2315, 0
        %vm2380 = vcmp.ge.s32.totalorder %v2316, 0
        %vm2381 = vcmp.ge.s32.totalorder %v2317, 0
        %vm2382 = vcmp.ge.s32.totalorder %v2318, 0
        %vm2383 = vcmp.ge.s32.totalorder %v2319, 0
        %vm2384 = vcmp.ge.s32.totalorder %v2320, 0
        %vm2385 = vcmp.ge.s32.totalorder %v2321, 0
        %vm2386 = vcmp.ge.s32.totalorder %v2322, 0
        %vm2387 = vcmp.ge.s32.totalorder %v2323, 0
        %vm2388 = vcmp.ge.s32.totalorder %v2324, 0
        %vm2389 = vcmp.ge.s32.totalorder %v2325, 0
        %vm2390 = vcmp.ge.s32.totalorder %v2326, 0
        %vm2391 = vcmp.ge.s32.totalorder %v2327, 0
        %vm2392 = vcmp.ge.s32.totalorder %v2328, 0
        %vm2393 = vcmp.ge.s32.totalorder %v2329, 0
        %vm2394 = vcmp.ge.s32.totalorder %v2330, 0
        %vm2395 = vcmp.ge.s32.totalorder %v2331, 0
        %vm2396 = vcmp.ge.s32.totalorder %v2332, 0
        %vm2397 = vcmp.ge.s32.totalorder %v2333, 0
        %vm2398 = vcmp.ge.s32.totalorder %v2334, 0
        %vm2399 = vcmp.ge.s32.totalorder %v2335, 0
        %vm2400 = vcmp.ge.s32.totalorder %v2336, 0
        %vm2401 = vcmp.ge.s32.totalorder %v2337, 0
        %vm2402 = vcmp.ge.s32.totalorder %v2338, 0
        %vm2403 = vcmp.ge.s32.totalorder %v2339, 0
        %vm2404 = vcmp.ge.s32.totalorder %v2340, 0
        %vm2405 = vcmp.ge.s32.totalorder %v2341, 0
        %vm2406 = vcmp.ge.s32.totalorder %v2342, 0
        %vm2407 = vcmp.ge.s32.totalorder %v2343, 0
        %vm2408 = vcmp.ge.s32.totalorder %v2344, 0
        %vm2409 = vcmp.ge.s32.totalorder %v2345, 0
        %vm2410 = vcmp.ge.s32.totalorder %v2346, 0
        %vm2411 = vcmp.ge.s32.totalorder %v2347, 0
        %vm2412 = vcmp.ge.s32.totalorder %v2348, 0
        %vm2413 = vcmp.ge.s32.totalorder %v2349, 0
        %vm2414 = vcmp.ge.s32.totalorder %v2350, 0
        %vm2415 = vcmp.ge.s32.totalorder %v2351, 0
        %vm2416 = vcmp.ge.s32.totalorder %v2352, 0
        %vm2417 = vcmp.ge.s32.totalorder %v2353, 0
        %vm2418 = vcmp.ge.s32.totalorder %v2354, 0
        %vm2419 = vcmp.ge.s32.totalorder %v2355, 0
        %vm2420 = vcmp.ge.s32.totalorder %v2356, 0
        %vm2421 = vcmp.ge.s32.totalorder %v2357, 0
        %vm2422 = vcmp.ge.s32.totalorder %v2358, 0
        %vm2423 = vcmp.ge.s32.totalorder %v2359, 0
        %vm2424 = vcmp.ge.s32.totalorder %v2360, 0
        %vm2425 = vcmp.ge.s32.totalorder %v2361, 0
        %vm2426 = vcmp.lt.s32.totalorder %v2298, 16
        %vm2427 = vcmp.lt.s32.totalorder %v2299, 16
        %vm2428 = vcmp.lt.s32.totalorder %v2300, 16
        %vm2429 = vcmp.lt.s32.totalorder %v2301, 16
        %vm2430 = vcmp.lt.s32.totalorder %v2302, 16
        %vm2431 = vcmp.lt.s32.totalorder %v2303, 16
        %vm2432 = vcmp.lt.s32.totalorder %v2304, 16
        %vm2433 = vcmp.lt.s32.totalorder %v2305, 16
        %vm2434 = vcmp.lt.s32.totalorder %v2306, 16
        %vm2435 = vcmp.lt.s32.totalorder %v2307, 16
        %vm2436 = vcmp.lt.s32.totalorder %v2308, 16
        %vm2437 = vcmp.lt.s32.totalorder %v2309, 16
        %vm2438 = vcmp.lt.s32.totalorder %v2310, 16
        %vm2439 = vcmp.lt.s32.totalorder %v2311, 16
        %vm2440 = vcmp.lt.s32.totalorder %v2312, 16
        %vm2441 = vcmp.lt.s32.totalorder %v2313, 16
        %vm2442 = vcmp.lt.s32.totalorder %v2314, 16
        %vm2443 = vcmp.lt.s32.totalorder %v2315, 16
        %vm2444 = vcmp.lt.s32.totalorder %v2316, 16
        %vm2445 = vcmp.lt.s32.totalorder %v2317, 16
        %vm2446 = vcmp.lt.s32.totalorder %v2318, 16
        %vm2447 = vcmp.lt.s32.totalorder %v2319, 16
        %vm2448 = vcmp.lt.s32.totalorder %v2320, 16
        %vm2449 = vcmp.lt.s32.totalorder %v2321, 16
        %vm2450 = vcmp.lt.s32.totalorder %v2322, 16
        %vm2451 = vcmp.lt.s32.totalorder %v2323, 16
        %vm2452 = vcmp.lt.s32.totalorder %v2324, 16
        %vm2453 = vcmp.lt.s32.totalorder %v2325, 16
        %vm2454 = vcmp.lt.s32.totalorder %v2326, 16
        %vm2455 = vcmp.lt.s32.totalorder %v2327, 16
        %vm2456 = vcmp.lt.s32.totalorder %v2328, 16
        %vm2457 = vcmp.lt.s32.totalorder %v2329, 16
        %vm2458 = vcmp.lt.s32.totalorder %v2330, 16
        %vm2459 = vcmp.lt.s32.totalorder %v2331, 16
        %vm2460 = vcmp.lt.s32.totalorder %v2332, 16
        %vm2461 = vcmp.lt.s32.totalorder %v2333, 16
        %vm2462 = vcmp.lt.s32.totalorder %v2334, 16
        %vm2463 = vcmp.lt.s32.totalorder %v2335, 16
        %vm2464 = vcmp.lt.s32.totalorder %v2336, 16
        %vm2465 = vcmp.lt.s32.totalorder %v2337, 16
        %vm2466 = vcmp.lt.s32.totalorder %v2338, 16
        %vm2467 = vcmp.lt.s32.totalorder %v2339, 16
        %vm2468 = vcmp.lt.s32.totalorder %v2340, 16
        %vm2469 = vcmp.lt.s32.totalorder %v2341, 16
        %vm2470 = vcmp.lt.s32.totalorder %v2342, 16
        %vm2471 = vcmp.lt.s32.totalorder %v2343, 16
        %vm2472 = vcmp.lt.s32.totalorder %v2344, 16
        %vm2473 = vcmp.lt.s32.totalorder %v2345, 16
        %vm2474 = vcmp.lt.s32.totalorder %v2346, 16
        %vm2475 = vcmp.lt.s32.totalorder %v2347, 16
        %vm2476 = vcmp.lt.s32.totalorder %v2348, 16
        %vm2477 = vcmp.lt.s32.totalorder %v2349, 16
        %vm2478 = vcmp.lt.s32.totalorder %v2350, 16
        %vm2479 = vcmp.lt.s32.totalorder %v2351, 16
        %vm2480 = vcmp.lt.s32.totalorder %v2352, 16
        %vm2481 = vcmp.lt.s32.totalorder %v2353, 16
        %vm2482 = vcmp.lt.s32.totalorder %v2354, 16
        %vm2483 = vcmp.lt.s32.totalorder %v2355, 16
        %vm2484 = vcmp.lt.s32.totalorder %v2356, 16
        %vm2485 = vcmp.lt.s32.totalorder %v2357, 16
        %vm2486 = vcmp.lt.s32.totalorder %v2358, 16
        %vm2487 = vcmp.lt.s32.totalorder %v2359, 16
        %vm2488 = vcmp.lt.s32.totalorder %v2360, 16
        %vm2489 = vcmp.lt.s32.totalorder %v2361, 16
        %vm2490 = vmand %vm2362, %vm2426
        %vm2491 = vmand %vm2363, %vm2427
        %vm2492 = vmand %vm2364, %vm2428
        %vm2493 = vmand %vm2365, %vm2429
        %vm2494 = vmand %vm2366, %vm2430
        %vm2495 = vmand %vm2367, %vm2431
        %vm2496 = vmand %vm2368, %vm2432
        %vm2497 = vmand %vm2369, %vm2433
        %vm2498 = vmand %vm2370, %vm2434
        %vm2499 = vmand %vm2371, %vm2435
        %vm2500 = vmand %vm2372, %vm2436
        %vm2501 = vmand %vm2373, %vm2437
        %vm2502 = vmand %vm2374, %vm2438
        %vm2503 = vmand %vm2375, %vm2439
        %vm2504 = vmand %vm2376, %vm2440
        %vm2505 = vmand %vm2377, %vm2441
        %vm2506 = vmand %vm2378, %vm2442
        %vm2507 = vmand %vm2379, %vm2443
        %vm2508 = vmand %vm2380, %vm2444
        %vm2509 = vmand %vm2381, %vm2445
        %vm2510 = vmand %vm2382, %vm2446
        %vm2511 = vmand %vm2383, %vm2447
        %vm2512 = vmand %vm2384, %vm2448
        %vm2513 = vmand %vm2385, %vm2449
        %vm2514 = vmand %vm2386, %vm2450
        %vm2515 = vmand %vm2387, %vm2451
        %vm2516 = vmand %vm2388, %vm2452
        %vm2517 = vmand %vm2389, %vm2453
        %vm2518 = vmand %vm2390, %vm2454
        %vm2519 = vmand %vm2391, %vm2455
        %vm2520 = vmand %vm2392, %vm2456
        %vm2521 = vmand %vm2393, %vm2457
        %vm2522 = vmand %vm2394, %vm2458
        %vm2523 = vmand %vm2395, %vm2459
        %vm2524 = vmand %vm2396, %vm2460
        %vm2525 = vmand %vm2397, %vm2461
        %vm2526 = vmand %vm2398, %vm2462
        %vm2527 = vmand %vm2399, %vm2463
        %vm2528 = vmand %vm2400, %vm2464
        %vm2529 = vmand %vm2401, %vm2465
        %vm2530 = vmand %vm2402, %vm2466
        %vm2531 = vmand %vm2403, %vm2467
        %vm2532 = vmand %vm2404, %vm2468
        %vm2533 = vmand %vm2405, %vm2469
        %vm2534 = vmand %vm2406, %vm2470
        %vm2535 = vmand %vm2407, %vm2471
        %vm2536 = vmand %vm2408, %vm2472
        %vm2537 = vmand %vm2409, %vm2473
        %vm2538 = vmand %vm2410, %vm2474
        %vm2539 = vmand %vm2411, %vm2475
        %vm2540 = vmand %vm2412, %vm2476
        %vm2541 = vmand %vm2413, %vm2477
        %vm2542 = vmand %vm2414, %vm2478
        %vm2543 = vmand %vm2415, %vm2479
        %vm2544 = vmand %vm2416, %vm2480
        %vm2545 = vmand %vm2417, %vm2481
        %vm2546 = vmand %vm2418, %vm2482
        %vm2547 = vmand %vm2419, %vm2483
        %vm2548 = vmand %vm2420, %vm2484
        %vm2549 = vmand %vm2421, %vm2485
        %vm2550 = vmand %vm2422, %vm2486
        %vm2551 = vmand %vm2423, %vm2487
        %vm2552 = vmand %vm2424, %vm2488
        %vm2553 = vmand %vm2425, %vm2489
        %v2554 = vrot.slane %v1241, 4
        %v2555 = vrot.slane %v1243, 4
        %v2556 = vrot.slane %v1246, 4
        %v2557 = vrot.slane %v1248, 4
        %v2558 = vrot.slane %v1251, 4
        %v2559 = vrot.slane %v1253, 4
        %v2560 = vrot.slane %v1256, 4
        %v2561 = vrot.slane %v1258, 4
        %v2562 = vrot.slane %v1261, 4
        %v2563 = vrot.slane %v1263, 4
        %v2564 = vrot.slane %v1266, 4
        %v2565 = vrot.slane %v1268, 4
        %v2566 = vrot.slane %v1271, 4
        %v2567 = vrot.slane %v1273, 4
        %v2568 = vrot.slane %v1276, 4
        %v2569 = vrot.slane %v1278, 4
        %v2570 = vrot.slane %v1281, 4
        %v2571 = vrot.slane %v1283, 4
        %v2572 = vrot.slane %v1286, 4
        %v2573 = vrot.slane %v1288, 4
        %v2574 = vrot.slane %v1291, 4
        %v2575 = vrot.slane %v1293, 4
        %v2576 = vrot.slane %v1296, 4
        %v2577 = vrot.slane %v1298, 4
        %v2578 = vrot.slane %v1301, 4
        %v2579 = vrot.slane %v1303, 4
        %v2580 = vrot.slane %v1306, 4
        %v2581 = vrot.slane %v1308, 4
        %v2582 = vrot.slane %v1311, 4
        %v2583 = vrot.slane %v1313, 4
        %v2584 = vrot.slane %v1316, 4
        %v2585 = vrot.slane %v1318, 4
        %v2586 = vrot.slane %v1321, 4
        %v2587 = vrot.slane %v1323, 4
        %v2588 = vrot.slane %v1326, 4
        %v2589 = vrot.slane %v1328, 4
        %v2590 = vrot.slane %v1331, 4
        %v2591 = vrot.slane %v1333, 4
        %v2592 = vrot.slane %v1336, 4
        %v2593 = vrot.slane %v1338, 4
        %v2594 = vrot.slane %v1341, 4
        %v2595 = vrot.slane %v1343, 4
        %v2596 = vrot.slane %v1346, 4
        %v2597 = vrot.slane %v1348, 4
        %v2598 = vrot.slane %v1351, 4
        %v2599 = vrot.slane %v1353, 4
        %v2600 = vrot.slane %v1356, 4
        %v2601 = vrot.slane %v1358, 4
        %v2602 = vrot.slane %v1361, 4
        %v2603 = vrot.slane %v1363, 4
        %v2604 = vrot.slane %v1366, 4
        %v2605 = vrot.slane %v1368, 4
        %v2606 = vrot.slane %v1371, 4
        %v2607 = vrot.slane %v1373, 4
        %v2608 = vrot.slane %v1376, 4
        %v2609 = vrot.slane %v1378, 4
        %v2610 = vrot.slane %v1381, 4
        %v2611 = vrot.slane %v1383, 4
        %v2612 = vrot.slane %v1386, 4
        %v2613 = vrot.slane %v1388, 4
        %v2614 = vrot.slane %v1391, 4
        %v2615 = vrot.slane %v1393, 4
        %v2616 = vrot.slane %v1396, 4
        %v2617 = vrot.slane %v1398, 4
        %vm2618 = vcmp.lt.s32.totalorder %v265, 4
        %v2619 = vsel %vm2618, %v2616, %v2617
        %v2620 = vsel %vm2618, %v2615, %v2616
        %v2621 = vsel %vm2618, %v2614, %v2615
        %v2622 = vsel %vm2618, %v2613, %v2614
        %v2623 = vsel %vm2618, %v2612, %v2613
        %v2624 = vsel %vm2618, %v2611, %v2612
        %v2625 = vsel %vm2618, %v2610, %v2611
        %v2626 = vsel %vm2618, %v2609, %v2610
        %v2627 = vsel %vm2618, %v2608, %v2609
        %v2628 = vsel %vm2618, %v2607, %v2608
        %v2629 = vsel %vm2618, %v2606, %v2607
        %v2630 = vsel %vm2618, %v2605, %v2606
        %v2631 = vsel %vm2618, %v2604, %v2605
        %v2632 = vsel %vm2618, %v2603, %v2604
        %v2633 = vsel %vm2618, %v2602, %v2603
        %v2634 = vsel %vm2618, %v2601, %v2602
        %v2635 = vsel %vm2618, %v2600, %v2601
        %v2636 = vsel %vm2618, %v2599, %v2600
        %v2637 = vsel %vm2618, %v2598, %v2599
        %v2638 = vsel %vm2618, %v2597, %v2598
        %v2639 = vsel %vm2618, %v2596, %v2597
        %v2640 = vsel %vm2618, %v2595, %v2596
        %v2641 = vsel %vm2618, %v2594, %v2595
        %v2642 = vsel %vm2618, %v2593, %v2594
        %v2643 = vsel %vm2618, %v2592, %v2593
        %v2644 = vsel %vm2618, %v2591, %v2592
        %v2645 = vsel %vm2618, %v2590, %v2591
        %v2646 = vsel %vm2618, %v2589, %v2590
        %v2647 = vsel %vm2618, %v2588, %v2589
        %v2648 = vsel %vm2618, %v2587, %v2588
        %v2649 = vsel %vm2618, %v2586, %v2587
        %v2650 = vsel %vm2618, %v2585, %v2586
        %v2651 = vsel %vm2618, %v2584, %v2585
        %v2652 = vsel %vm2618, %v2583, %v2584
        %v2653 = vsel %vm2618, %v2582, %v2583
        %v2654 = vsel %vm2618, %v2581, %v2582
        %v2655 = vsel %vm2618, %v2580, %v2581
        %v2656 = vsel %vm2618, %v2579, %v2580
        %v2657 = vsel %vm2618, %v2578, %v2579
        %v2658 = vsel %vm2618, %v2577, %v2578
        %v2659 = vsel %vm2618, %v2576, %v2577
        %v2660 = vsel %vm2618, %v2575, %v2576
        %v2661 = vsel %vm2618, %v2574, %v2575
        %v2662 = vsel %vm2618, %v2573, %v2574
        %v2663 = vsel %vm2618, %v2572, %v2573
        %v2664 = vsel %vm2618, %v2571, %v2572
        %v2665 = vsel %vm2618, %v2570, %v2571
        %v2666 = vsel %vm2618, %v2569, %v2570
        %v2667 = vsel %vm2618, %v2568, %v2569
        %v2668 = vsel %vm2618, %v2567, %v2568
        %v2669 = vsel %vm2618, %v2566, %v2567
        %v2670 = vsel %vm2618, %v2565, %v2566
        %v2671 = vsel %vm2618, %v2564, %v2565
        %v2672 = vsel %vm2618, %v2563, %v2564
        %v2673 = vsel %vm2618, %v2562, %v2563
        %v2674 = vsel %vm2618, %v2561, %v2562
        %v2675 = vsel %vm2618, %v2560, %v2561
        %v2676 = vsel %vm2618, %v2559, %v2560
        %v2677 = vsel %vm2618, %v2558, %v2559
        %v2678 = vsel %vm2618, %v2557, %v2558
        %v2679 = vsel %vm2618, %v2556, %v2557
        %v2680 = vsel %vm2618, %v2555, %v2556
        %v2681 = vsel %vm2618, %v2554, %v2555
        %v2682 = vsel %vm2618, %v2617, %v2554
        %v2683 = vsel %vm2490, 1, 0
        %v2684 = vsel %vm2491, 1, 0
        %v2685 = vsel %vm2492, 1, 0
        %v2686 = vsel %vm2493, 1, 0
        %v2687 = vsel %vm2494, 1, 0
        %v2688 = vsel %vm2495, 1, 0
        %v2689 = vsel %vm2496, 1, 0
        %v2690 = vsel %vm2497, 1, 0
        %v2691 = vsel %vm2498, 1, 0
        %v2692 = vsel %vm2499, 1, 0
        %v2693 = vsel %vm2500, 1, 0
        %v2694 = vsel %vm2501, 1, 0
        %v2695 = vsel %vm2502, 1, 0
        %v2696 = vsel %vm2503, 1, 0
        %v2697 = vsel %vm2504, 1, 0
        %v2698 = vsel %vm2505, 1, 0
        %v2699 = vsel %vm2506, 1, 0
        %v2700 = vsel %vm2507, 1, 0
        %v2701 = vsel %vm2508, 1, 0
        %v2702 = vsel %vm2509, 1, 0
        %v2703 = vsel %vm2510, 1, 0
        %v2704 = vsel %vm2511, 1, 0
        %v2705 = vsel %vm2512, 1, 0
        %v2706 = vsel %vm2513, 1, 0
        %v2707 = vsel %vm2514, 1, 0
        %v2708 = vsel %vm2515, 1, 0
        %v2709 = vsel %vm2516, 1, 0
        %v2710 = vsel %vm2517, 1, 0
        %v2711 = vsel %vm2518, 1, 0
        %v2712 = vsel %vm2519, 1, 0
        %v2713 = vsel %vm2520, 1, 0
        %v2714 = vsel %vm2521, 1, 0
        %v2715 = vsel %vm2522, 1, 0
        %v2716 = vsel %vm2523, 1, 0
        %v2717 = vsel %vm2524, 1, 0
        %v2718 = vsel %vm2525, 1, 0
        %v2719 = vsel %vm2526, 1, 0
        %v2720 = vsel %vm2527, 1, 0
        %v2721 = vsel %vm2528, 1, 0
        %v2722 = vsel %vm2529, 1, 0
        %v2723 = vsel %vm2530, 1, 0
        %v2724 = vsel %vm2531, 1, 0
        %v2725 = vsel %vm2532, 1, 0
        %v2726 = vsel %vm2533, 1, 0
        %v2727 = vsel %vm2534, 1, 0
        %v2728 = vsel %vm2535, 1, 0
        %v2729 = vsel %vm2536, 1, 0
        %v2730 = vsel %vm2537, 1, 0
        %v2731 = vsel %vm2538, 1, 0
        %v2732 = vsel %vm2539, 1, 0
        %v2733 = vsel %vm2540, 1, 0
        %v2734 = vsel %vm2541, 1, 0
        %v2735 = vsel %vm2542, 1, 0
        %v2736 = vsel %vm2543, 1, 0
        %v2737 = vsel %vm2544, 1, 0
        %v2738 = vsel %vm2545, 1, 0
        %v2739 = vsel %vm2546, 1, 0
        %v2740 = vsel %vm2547, 1, 0
        %v2741 = vsel %vm2548, 1, 0
        %v2742 = vsel %vm2549, 1, 0
        %v2743 = vsel %vm2550, 1, 0
        %v2744 = vsel %vm2551, 1, 0
        %v2745 = vsel %vm2552, 1, 0
        %v2746 = vsel %vm2553, 1, 0
        %vm2747 = vcmp.eq.s32.totalorder %v2683, 1
        %vm2748 = vcmp.eq.s32.totalorder %v2684, 1
        %vm2749 = vcmp.eq.s32.totalorder %v2685, 1
        %vm2750 = vcmp.eq.s32.totalorder %v2686, 1
        %vm2751 = vcmp.eq.s32.totalorder %v2687, 1
        %vm2752 = vcmp.eq.s32.totalorder %v2688, 1
        %vm2753 = vcmp.eq.s32.totalorder %v2689, 1
        %vm2754 = vcmp.eq.s32.totalorder %v2690, 1
        %vm2755 = vcmp.eq.s32.totalorder %v2691, 1
        %vm2756 = vcmp.eq.s32.totalorder %v2692, 1
        %vm2757 = vcmp.eq.s32.totalorder %v2693, 1
        %vm2758 = vcmp.eq.s32.totalorder %v2694, 1
        %vm2759 = vcmp.eq.s32.totalorder %v2695, 1
        %vm2760 = vcmp.eq.s32.totalorder %v2696, 1
        %vm2761 = vcmp.eq.s32.totalorder %v2697, 1
        %vm2762 = vcmp.eq.s32.totalorder %v2698, 1
        %vm2763 = vcmp.eq.s32.totalorder %v2699, 1
        %vm2764 = vcmp.eq.s32.totalorder %v2700, 1
        %vm2765 = vcmp.eq.s32.totalorder %v2701, 1
        %vm2766 = vcmp.eq.s32.totalorder %v2702, 1
        %vm2767 = vcmp.eq.s32.totalorder %v2703, 1
        %vm2768 = vcmp.eq.s32.totalorder %v2704, 1
        %vm2769 = vcmp.eq.s32.totalorder %v2705, 1
        %vm2770 = vcmp.eq.s32.totalorder %v2706, 1
        %vm2771 = vcmp.eq.s32.totalorder %v2707, 1
        %vm2772 = vcmp.eq.s32.totalorder %v2708, 1
        %vm2773 = vcmp.eq.s32.totalorder %v2709, 1
        %vm2774 = vcmp.eq.s32.totalorder %v2710, 1
        %vm2775 = vcmp.eq.s32.totalorder %v2711, 1
        %vm2776 = vcmp.eq.s32.totalorder %v2712, 1
        %vm2777 = vcmp.eq.s32.totalorder %v2713, 1
        %vm2778 = vcmp.eq.s32.totalorder %v2714, 1
        %vm2779 = vcmp.eq.s32.totalorder %v2715, 1
        %vm2780 = vcmp.eq.s32.totalorder %v2716, 1
        %vm2781 = vcmp.eq.s32.totalorder %v2717, 1
        %vm2782 = vcmp.eq.s32.totalorder %v2718, 1
        %vm2783 = vcmp.eq.s32.totalorder %v2719, 1
        %vm2784 = vcmp.eq.s32.totalorder %v2720, 1
        %vm2785 = vcmp.eq.s32.totalorder %v2721, 1
        %vm2786 = vcmp.eq.s32.totalorder %v2722, 1
        %vm2787 = vcmp.eq.s32.totalorder %v2723, 1
        %vm2788 = vcmp.eq.s32.totalorder %v2724, 1
        %vm2789 = vcmp.eq.s32.totalorder %v2725, 1
        %vm2790 = vcmp.eq.s32.totalorder %v2726, 1
        %vm2791 = vcmp.eq.s32.totalorder %v2727, 1
        %vm2792 = vcmp.eq.s32.totalorder %v2728, 1
        %vm2793 = vcmp.eq.s32.totalorder %v2729, 1
        %vm2794 = vcmp.eq.s32.totalorder %v2730, 1
        %vm2795 = vcmp.eq.s32.totalorder %v2731, 1
        %vm2796 = vcmp.eq.s32.totalorder %v2732, 1
        %vm2797 = vcmp.eq.s32.totalorder %v2733, 1
        %vm2798 = vcmp.eq.s32.totalorder %v2734, 1
        %vm2799 = vcmp.eq.s32.totalorder %v2735, 1
        %vm2800 = vcmp.eq.s32.totalorder %v2736, 1
        %vm2801 = vcmp.eq.s32.totalorder %v2737, 1
        %vm2802 = vcmp.eq.s32.totalorder %v2738, 1
        %vm2803 = vcmp.eq.s32.totalorder %v2739, 1
        %vm2804 = vcmp.eq.s32.totalorder %v2740, 1
        %vm2805 = vcmp.eq.s32.totalorder %v2741, 1
        %vm2806 = vcmp.eq.s32.totalorder %v2742, 1
        %vm2807 = vcmp.eq.s32.totalorder %v2743, 1
        %vm2808 = vcmp.eq.s32.totalorder %v2744, 1
        %vm2809 = vcmp.eq.s32.totalorder %v2745, 1
        %vm2810 = vcmp.eq.s32.totalorder %v2746, 1
        %v2811 = vsel %vm2747, %v2682, 0.0
        %v2812 = vsel %vm2748, %v2681, 0.0
        %v2813 = vsel %vm2749, %v2680, 0.0
        %v2814 = vsel %vm2750, %v2679, 0.0
        %v2815 = vsel %vm2751, %v2678, 0.0
        %v2816 = vsel %vm2752, %v2677, 0.0
        %v2817 = vsel %vm2753, %v2676, 0.0
        %v2818 = vsel %vm2754, %v2675, 0.0
        %v2819 = vsel %vm2755, %v2674, 0.0
        %v2820 = vsel %vm2756, %v2673, 0.0
        %v2821 = vsel %vm2757, %v2672, 0.0
        %v2822 = vsel %vm2758, %v2671, 0.0
        %v2823 = vsel %vm2759, %v2670, 0.0
        %v2824 = vsel %vm2760, %v2669, 0.0
        %v2825 = vsel %vm2761, %v2668, 0.0
        %v2826 = vsel %vm2762, %v2667, 0.0
        %v2827 = vsel %vm2763, %v2666, 0.0
        %v2828 = vsel %vm2764, %v2665, 0.0
        %v2829 = vsel %vm2765, %v2664, 0.0
        %v2830 = vsel %vm2766, %v2663, 0.0
        %v2831 = vsel %vm2767, %v2662, 0.0
        %v2832 = vsel %vm2768, %v2661, 0.0
        %v2833 = vsel %vm2769, %v2660, 0.0
        %v2834 = vsel %vm2770, %v2659, 0.0
        %v2835 = vsel %vm2771, %v2658, 0.0
        %v2836 = vsel %vm2772, %v2657, 0.0
        %v2837 = vsel %vm2773, %v2656, 0.0
        %v2838 = vsel %vm2774, %v2655, 0.0
        %v2839 = vsel %vm2775, %v2654, 0.0
        %v2840 = vsel %vm2776, %v2653, 0.0
        %v2841 = vsel %vm2777, %v2652, 0.0
        %v2842 = vsel %vm2778, %v2651, 0.0
        %v2843 = vsel %vm2779, %v2650, 0.0
        %v2844 = vsel %vm2780, %v2649, 0.0
        %v2845 = vsel %vm2781, %v2648, 0.0
        %v2846 = vsel %vm2782, %v2647, 0.0
        %v2847 = vsel %vm2783, %v2646, 0.0
        %v2848 = vsel %vm2784, %v2645, 0.0
        %v2849 = vsel %vm2785, %v2644, 0.0
        %v2850 = vsel %vm2786, %v2643, 0.0
        %v2851 = vsel %vm2787, %v2642, 0.0
        %v2852 = vsel %vm2788, %v2641, 0.0
        %v2853 = vsel %vm2789, %v2640, 0.0
        %v2854 = vsel %vm2790, %v2639, 0.0
        %v2855 = vsel %vm2791, %v2638, 0.0
        %v2856 = vsel %vm2792, %v2637, 0.0
        %v2857 = vsel %vm2793, %v2636, 0.0
        %v2858 = vsel %vm2794, %v2635, 0.0
        %v2859 = vsel %vm2795, %v2634, 0.0
        %v2860 = vsel %vm2796, %v2633, 0.0
        %v2861 = vsel %vm2797, %v2632, 0.0
        %v2862 = vsel %vm2798, %v2631, 0.0
        %v2863 = vsel %vm2799, %v2630, 0.0
        %v2864 = vsel %vm2800, %v2629, 0.0
        %v2865 = vsel %vm2801, %v2628, 0.0
        %v2866 = vsel %vm2802, %v2627, 0.0
        %v2867 = vsel %vm2803, %v2626, 0.0
        %v2868 = vsel %vm2804, %v2625, 0.0
        %v2869 = vsel %vm2805, %v2624, 0.0
        %v2870 = vsel %vm2806, %v2623, 0.0
        %v2871 = vsel %vm2807, %v2622, 0.0
        %v2872 = vsel %vm2808, %v2621, 0.0
        %v2873 = vsel %vm2809, %v2620, 0.0
        %v2874 = vsel %vm2810, %v2619, 0.0
        %v2875 = vadd.s32 %v1033, 4294967293
        %v2876 = vadd.s32 %v1034, 4294967293
        %v2877 = vadd.s32 %v1035, 4294967293
        %v2878 = vadd.s32 %v1036, 4294967293
        %v2879 = vadd.s32 %v1037, 4294967293
        %v2880 = vadd.s32 %v1038, 4294967293
        %v2881 = vadd.s32 %v1039, 4294967293
        %v2882 = vadd.s32 %v1040, 4294967293
        %v2883 = vadd.s32 %v1041, 4294967293
        %v2884 = vadd.s32 %v1042, 4294967293
        %v2885 = vadd.s32 %v1043, 4294967293
        %v2886 = vadd.s32 %v1044, 4294967293
        %v2887 = vadd.s32 %v1045, 4294967293
        %v2888 = vadd.s32 %v1046, 4294967293
        %v2889 = vadd.s32 %v1047, 4294967293
        %v2890 = vadd.s32 %v1048, 4294967293
        %v2891 = vadd.s32 %v1049, 4294967293
        %v2892 = vadd.s32 %v1050, 4294967293
        %v2893 = vadd.s32 %v1051, 4294967293
        %v2894 = vadd.s32 %v1052, 4294967293
        %v2895 = vadd.s32 %v1053, 4294967293
        %v2896 = vadd.s32 %v1054, 4294967293
        %v2897 = vadd.s32 %v1055, 4294967293
        %v2898 = vadd.s32 %v1056, 4294967293
        %v2899 = vadd.s32 %v1057, 4294967293
        %v2900 = vadd.s32 %v1058, 4294967293
        %v2901 = vadd.s32 %v1059, 4294967293
        %v2902 = vadd.s32 %v1060, 4294967293
        %v2903 = vadd.s32 %v1061, 4294967293
        %v2904 = vadd.s32 %v1062, 4294967293
        %v2905 = vadd.s32 %v1063, 4294967293
        %v2906 = vadd.s32 %v1064, 4294967293
        %v2907 = vadd.s32 %v1065, 4294967293
        %v2908 = vadd.s32 %v1066, 4294967293
        %v2909 = vadd.s32 %v1067, 4294967293
        %v2910 = vadd.s32 %v1068, 4294967293
        %v2911 = vadd.s32 %v1069, 4294967293
        %v2912 = vadd.s32 %v1070, 4294967293
        %v2913 = vadd.s32 %v1071, 4294967293
        %v2914 = vadd.s32 %v1072, 4294967293
        %v2915 = vadd.s32 %v1073, 4294967293
        %v2916 = vadd.s32 %v1074, 4294967293
        %v2917 = vadd.s32 %v1075, 4294967293
        %v2918 = vadd.s32 %v1076, 4294967293
        %v2919 = vadd.s32 %v1077, 4294967293
        %v2920 = vadd.s32 %v1078, 4294967293
        %v2921 = vadd.s32 %v1079, 4294967293
        %v2922 = vadd.s32 %v1080, 4294967293
        %v2923 = vadd.s32 %v1081, 4294967293
        %v2924 = vadd.s32 %v1082, 4294967293
        %v2925 = vadd.s32 %v1083, 4294967293
        %v2926 = vadd.s32 %v1084, 4294967293
        %v2927 = vadd.s32 %v1085, 4294967293
        %v2928 = vadd.s32 %v1086, 4294967293
        %v2929 = vadd.s32 %v1087, 4294967293
        %v2930 = vadd.s32 %v1088, 4294967293
        %v2931 = vadd.s32 %v1089, 4294967293
        %v2932 = vadd.s32 %v1090, 4294967293
        %v2933 = vadd.s32 %v1091, 4294967293
        %v2934 = vadd.s32 %v1092, 4294967293
        %v2935 = vadd.s32 %v1093, 4294967293
        %v2936 = vadd.s32 %v1094, 4294967293
        %v2937 = vadd.s32 %v1095, 4294967293
        %v2938 = vadd.s32 %v1096, 4294967293
        %vm2939 = vcmp.ge.s32.totalorder %v2875, 0
        %vm2940 = vcmp.ge.s32.totalorder %v2876, 0
        %vm2941 = vcmp.ge.s32.totalorder %v2877, 0
        %vm2942 = vcmp.ge.s32.totalorder %v2878, 0
        %vm2943 = vcmp.ge.s32.totalorder %v2879, 0
        %vm2944 = vcmp.ge.s32.totalorder %v2880, 0
        %vm2945 = vcmp.ge.s32.totalorder %v2881, 0
        %vm2946 = vcmp.ge.s32.totalorder %v2882, 0
        %vm2947 = vcmp.ge.s32.totalorder %v2883, 0
        %vm2948 = vcmp.ge.s32.totalorder %v2884, 0
        %vm2949 = vcmp.ge.s32.totalorder %v2885, 0
        %vm2950 = vcmp.ge.s32.totalorder %v2886, 0
        %vm2951 = vcmp.ge.s32.totalorder %v2887, 0
        %vm2952 = vcmp.ge.s32.totalorder %v2888, 0
        %vm2953 = vcmp.ge.s32.totalorder %v2889, 0
        %vm2954 = vcmp.ge.s32.totalorder %v2890, 0
        %vm2955 = vcmp.ge.s32.totalorder %v2891, 0
        %vm2956 = vcmp.ge.s32.totalorder %v2892, 0
        %vm2957 = vcmp.ge.s32.totalorder %v2893, 0
        %vm2958 = vcmp.ge.s32.totalorder %v2894, 0
        %vm2959 = vcmp.ge.s32.totalorder %v2895, 0
        %vm2960 = vcmp.ge.s32.totalorder %v2896, 0
        %vm2961 = vcmp.ge.s32.totalorder %v2897, 0
        %vm2962 = vcmp.ge.s32.totalorder %v2898, 0
        %vm2963 = vcmp.ge.s32.totalorder %v2899, 0
        %vm2964 = vcmp.ge.s32.totalorder %v2900, 0
        %vm2965 = vcmp.ge.s32.totalorder %v2901, 0
        %vm2966 = vcmp.ge.s32.totalorder %v2902, 0
        %vm2967 = vcmp.ge.s32.totalorder %v2903, 0
        %vm2968 = vcmp.ge.s32.totalorder %v2904, 0
        %vm2969 = vcmp.ge.s32.totalorder %v2905, 0
        %vm2970 = vcmp.ge.s32.totalorder %v2906, 0
        %vm2971 = vcmp.ge.s32.totalorder %v2907, 0
        %vm2972 = vcmp.ge.s32.totalorder %v2908, 0
        %vm2973 = vcmp.ge.s32.totalorder %v2909, 0
        %vm2974 = vcmp.ge.s32.totalorder %v2910, 0
        %vm2975 = vcmp.ge.s32.totalorder %v2911, 0
        %vm2976 = vcmp.ge.s32.totalorder %v2912, 0
        %vm2977 = vcmp.ge.s32.totalorder %v2913, 0
        %vm2978 = vcmp.ge.s32.totalorder %v2914, 0
        %vm2979 = vcmp.ge.s32.totalorder %v2915, 0
        %vm2980 = vcmp.ge.s32.totalorder %v2916, 0
        %vm2981 = vcmp.ge.s32.totalorder %v2917, 0
        %vm2982 = vcmp.ge.s32.totalorder %v2918, 0
        %vm2983 = vcmp.ge.s32.totalorder %v2919, 0
        %vm2984 = vcmp.ge.s32.totalorder %v2920, 0
        %vm2985 = vcmp.ge.s32.totalorder %v2921, 0
        %vm2986 = vcmp.ge.s32.totalorder %v2922, 0
        %vm2987 = vcmp.ge.s32.totalorder %v2923, 0
        %vm2988 = vcmp.ge.s32.totalorder %v2924, 0
        %vm2989 = vcmp.ge.s32.totalorder %v2925, 0
        %vm2990 = vcmp.ge.s32.totalorder %v2926, 0
        %vm2991 = vcmp.ge.s32.totalorder %v2927, 0
        %vm2992 = vcmp.ge.s32.totalorder %v2928, 0
        %vm2993 = vcmp.ge.s32.totalorder %v2929, 0
        %vm2994 = vcmp.ge.s32.totalorder %v2930, 0
        %vm2995 = vcmp.ge.s32.totalorder %v2931, 0
        %vm2996 = vcmp.ge.s32.totalorder %v2932, 0
        %vm2997 = vcmp.ge.s32.totalorder %v2933, 0
        %vm2998 = vcmp.ge.s32.totalorder %v2934, 0
        %vm2999 = vcmp.ge.s32.totalorder %v2935, 0
        %vm3000 = vcmp.ge.s32.totalorder %v2936, 0
        %vm3001 = vcmp.ge.s32.totalorder %v2937, 0
        %vm3002 = vcmp.ge.s32.totalorder %v2938, 0
        %vm3003 = vcmp.lt.s32.totalorder %v2875, 16
        %vm3004 = vcmp.lt.s32.totalorder %v2876, 16
        %vm3005 = vcmp.lt.s32.totalorder %v2877, 16
        %vm3006 = vcmp.lt.s32.totalorder %v2878, 16
        %vm3007 = vcmp.lt.s32.totalorder %v2879, 16
        %vm3008 = vcmp.lt.s32.totalorder %v2880, 16
        %vm3009 = vcmp.lt.s32.totalorder %v2881, 16
        %vm3010 = vcmp.lt.s32.totalorder %v2882, 16
        %vm3011 = vcmp.lt.s32.totalorder %v2883, 16
        %vm3012 = vcmp.lt.s32.totalorder %v2884, 16
        %vm3013 = vcmp.lt.s32.totalorder %v2885, 16
        %vm3014 = vcmp.lt.s32.totalorder %v2886, 16
        %vm3015 = vcmp.lt.s32.totalorder %v2887, 16
        %vm3016 = vcmp.lt.s32.totalorder %v2888, 16
        %vm3017 = vcmp.lt.s32.totalorder %v2889, 16
        %vm3018 = vcmp.lt.s32.totalorder %v2890, 16
        %vm3019 = vcmp.lt.s32.totalorder %v2891, 16
        %vm3020 = vcmp.lt.s32.totalorder %v2892, 16
        %vm3021 = vcmp.lt.s32.totalorder %v2893, 16
        %vm3022 = vcmp.lt.s32.totalorder %v2894, 16
        %vm3023 = vcmp.lt.s32.totalorder %v2895, 16
        %vm3024 = vcmp.lt.s32.totalorder %v2896, 16
        %vm3025 = vcmp.lt.s32.totalorder %v2897, 16
        %vm3026 = vcmp.lt.s32.totalorder %v2898, 16
        %vm3027 = vcmp.lt.s32.totalorder %v2899, 16
        %vm3028 = vcmp.lt.s32.totalorder %v2900, 16
        %vm3029 = vcmp.lt.s32.totalorder %v2901, 16
        %vm3030 = vcmp.lt.s32.totalorder %v2902, 16
        %vm3031 = vcmp.lt.s32.totalorder %v2903, 16
        %vm3032 = vcmp.lt.s32.totalorder %v2904, 16
        %vm3033 = vcmp.lt.s32.totalorder %v2905, 16
        %vm3034 = vcmp.lt.s32.totalorder %v2906, 16
        %vm3035 = vcmp.lt.s32.totalorder %v2907, 16
        %vm3036 = vcmp.lt.s32.totalorder %v2908, 16
        %vm3037 = vcmp.lt.s32.totalorder %v2909, 16
        %vm3038 = vcmp.lt.s32.totalorder %v2910, 16
        %vm3039 = vcmp.lt.s32.totalorder %v2911, 16
        %vm3040 = vcmp.lt.s32.totalorder %v2912, 16
        %vm3041 = vcmp.lt.s32.totalorder %v2913, 16
        %vm3042 = vcmp.lt.s32.totalorder %v2914, 16
        %vm3043 = vcmp.lt.s32.totalorder %v2915, 16
        %vm3044 = vcmp.lt.s32.totalorder %v2916, 16
        %vm3045 = vcmp.lt.s32.totalorder %v2917, 16
        %vm3046 = vcmp.lt.s32.totalorder %v2918, 16
        %vm3047 = vcmp.lt.s32.totalorder %v2919, 16
        %vm3048 = vcmp.lt.s32.totalorder %v2920, 16
        %vm3049 = vcmp.lt.s32.totalorder %v2921, 16
        %vm3050 = vcmp.lt.s32.totalorder %v2922, 16
        %vm3051 = vcmp.lt.s32.totalorder %v2923, 16
        %vm3052 = vcmp.lt.s32.totalorder %v2924, 16
        %vm3053 = vcmp.lt.s32.totalorder %v2925, 16
        %vm3054 = vcmp.lt.s32.totalorder %v2926, 16
        %vm3055 = vcmp.lt.s32.totalorder %v2927, 16
        %vm3056 = vcmp.lt.s32.totalorder %v2928, 16
        %vm3057 = vcmp.lt.s32.totalorder %v2929, 16
        %vm3058 = vcmp.lt.s32.totalorder %v2930, 16
        %vm3059 = vcmp.lt.s32.totalorder %v2931, 16
        %vm3060 = vcmp.lt.s32.totalorder %v2932, 16
        %vm3061 = vcmp.lt.s32.totalorder %v2933, 16
        %vm3062 = vcmp.lt.s32.totalorder %v2934, 16
        %vm3063 = vcmp.lt.s32.totalorder %v2935, 16
        %vm3064 = vcmp.lt.s32.totalorder %v2936, 16
        %vm3065 = vcmp.lt.s32.totalorder %v2937, 16
        %vm3066 = vcmp.lt.s32.totalorder %v2938, 16
        %vm3067 = vmand %vm2939, %vm3003
        %vm3068 = vmand %vm2940, %vm3004
        %vm3069 = vmand %vm2941, %vm3005
        %vm3070 = vmand %vm2942, %vm3006
        %vm3071 = vmand %vm2943, %vm3007
        %vm3072 = vmand %vm2944, %vm3008
        %vm3073 = vmand %vm2945, %vm3009
        %vm3074 = vmand %vm2946, %vm3010
        %vm3075 = vmand %vm2947, %vm3011
        %vm3076 = vmand %vm2948, %vm3012
        %vm3077 = vmand %vm2949, %vm3013
        %vm3078 = vmand %vm2950, %vm3014
        %vm3079 = vmand %vm2951, %vm3015
        %vm3080 = vmand %vm2952, %vm3016
        %vm3081 = vmand %vm2953, %vm3017
        %vm3082 = vmand %vm2954, %vm3018
        %vm3083 = vmand %vm2955, %vm3019
        %vm3084 = vmand %vm2956, %vm3020
        %vm3085 = vmand %vm2957, %vm3021
        %vm3086 = vmand %vm2958, %vm3022
        %vm3087 = vmand %vm2959, %vm3023
        %vm3088 = vmand %vm2960, %vm3024
        %vm3089 = vmand %vm2961, %vm3025
        %vm3090 = vmand %vm2962, %vm3026
        %vm3091 = vmand %vm2963, %vm3027
        %vm3092 = vmand %vm2964, %vm3028
        %vm3093 = vmand %vm2965, %vm3029
        %vm3094 = vmand %vm2966, %vm3030
        %vm3095 = vmand %vm2967, %vm3031
        %vm3096 = vmand %vm2968, %vm3032
        %vm3097 = vmand %vm2969, %vm3033
        %vm3098 = vmand %vm2970, %vm3034
        %vm3099 = vmand %vm2971, %vm3035
        %vm3100 = vmand %vm2972, %vm3036
        %vm3101 = vmand %vm2973, %vm3037
        %vm3102 = vmand %vm2974, %vm3038
        %vm3103 = vmand %vm2975, %vm3039
        %vm3104 = vmand %vm2976, %vm3040
        %vm3105 = vmand %vm2977, %vm3041
        %vm3106 = vmand %vm2978, %vm3042
        %vm3107 = vmand %vm2979, %vm3043
        %vm3108 = vmand %vm2980, %vm3044
        %vm3109 = vmand %vm2981, %vm3045
        %vm3110 = vmand %vm2982, %vm3046
        %vm3111 = vmand %vm2983, %vm3047
        %vm3112 = vmand %vm2984, %vm3048
        %vm3113 = vmand %vm2985, %vm3049
        %vm3114 = vmand %vm2986, %vm3050
        %vm3115 = vmand %vm2987, %vm3051
        %vm3116 = vmand %vm2988, %vm3052
        %vm3117 = vmand %vm2989, %vm3053
        %vm3118 = vmand %vm2990, %vm3054
        %vm3119 = vmand %vm2991, %vm3055
        %vm3120 = vmand %vm2992, %vm3056
        %vm3121 = vmand %vm2993, %vm3057
        %vm3122 = vmand %vm2994, %vm3058
        %vm3123 = vmand %vm2995, %vm3059
        %vm3124 = vmand %vm2996, %vm3060
        %vm3125 = vmand %vm2997, %vm3061
        %vm3126 = vmand %vm2998, %vm3062
        %vm3127 = vmand %vm2999, %vm3063
        %vm3128 = vmand %vm3000, %vm3064
        %vm3129 = vmand %vm3001, %vm3065
        %vm3130 = vmand %vm3002, %vm3066
        %v3131 = vrot.slane %v1241, 5
        %v3132 = vrot.slane %v1243, 5
        %v3133 = vrot.slane %v1246, 5
        %v3134 = vrot.slane %v1248, 5
        %v3135 = vrot.slane %v1251, 5
        %v3136 = vrot.slane %v1253, 5
        %v3137 = vrot.slane %v1256, 5
        %v3138 = vrot.slane %v1258, 5
        %v3139 = vrot.slane %v1261, 5
        %v3140 = vrot.slane %v1263, 5
        %v3141 = vrot.slane %v1266, 5
        %v3142 = vrot.slane %v1268, 5
        %v3143 = vrot.slane %v1271, 5
        %v3144 = vrot.slane %v1273, 5
        %v3145 = vrot.slane %v1276, 5
        %v3146 = vrot.slane %v1278, 5
        %v3147 = vrot.slane %v1281, 5
        %v3148 = vrot.slane %v1283, 5
        %v3149 = vrot.slane %v1286, 5
        %v3150 = vrot.slane %v1288, 5
        %v3151 = vrot.slane %v1291, 5
        %v3152 = vrot.slane %v1293, 5
        %v3153 = vrot.slane %v1296, 5
        %v3154 = vrot.slane %v1298, 5
        %v3155 = vrot.slane %v1301, 5
        %v3156 = vrot.slane %v1303, 5
        %v3157 = vrot.slane %v1306, 5
        %v3158 = vrot.slane %v1308, 5
        %v3159 = vrot.slane %v1311, 5
        %v3160 = vrot.slane %v1313, 5
        %v3161 = vrot.slane %v1316, 5
        %v3162 = vrot.slane %v1318, 5
        %v3163 = vrot.slane %v1321, 5
        %v3164 = vrot.slane %v1323, 5
        %v3165 = vrot.slane %v1326, 5
        %v3166 = vrot.slane %v1328, 5
        %v3167 = vrot.slane %v1331, 5
        %v3168 = vrot.slane %v1333, 5
        %v3169 = vrot.slane %v1336, 5
        %v3170 = vrot.slane %v1338, 5
        %v3171 = vrot.slane %v1341, 5
        %v3172 = vrot.slane %v1343, 5
        %v3173 = vrot.slane %v1346, 5
        %v3174 = vrot.slane %v1348, 5
        %v3175 = vrot.slane %v1351, 5
        %v3176 = vrot.slane %v1353, 5
        %v3177 = vrot.slane %v1356, 5
        %v3178 = vrot.slane %v1358, 5
        %v3179 = vrot.slane %v1361, 5
        %v3180 = vrot.slane %v1363, 5
        %v3181 = vrot.slane %v1366, 5
        %v3182 = vrot.slane %v1368, 5
        %v3183 = vrot.slane %v1371, 5
        %v3184 = vrot.slane %v1373, 5
        %v3185 = vrot.slane %v1376, 5
        %v3186 = vrot.slane %v1378, 5
        %v3187 = vrot.slane %v1381, 5
        %v3188 = vrot.slane %v1383, 5
        %v3189 = vrot.slane %v1386, 5
        %v3190 = vrot.slane %v1388, 5
        %v3191 = vrot.slane %v1391, 5
        %v3192 = vrot.slane %v1393, 5
        %v3193 = vrot.slane %v1396, 5
        %v3194 = vrot.slane %v1398, 5
        %vm3195 = vcmp.lt.s32.totalorder %v265, 3
        %v3196 = vsel %vm3195, %v3193, %v3194
        %v3197 = vsel %vm3195, %v3192, %v3193
        %v3198 = vsel %vm3195, %v3191, %v3192
        %v3199 = vsel %vm3195, %v3190, %v3191
        %v3200 = vsel %vm3195, %v3189, %v3190
        %v3201 = vsel %vm3195, %v3188, %v3189
        %v3202 = vsel %vm3195, %v3187, %v3188
        %v3203 = vsel %vm3195, %v3186, %v3187
        %v3204 = vsel %vm3195, %v3185, %v3186
        %v3205 = vsel %vm3195, %v3184, %v3185
        %v3206 = vsel %vm3195, %v3183, %v3184
        %v3207 = vsel %vm3195, %v3182, %v3183
        %v3208 = vsel %vm3195, %v3181, %v3182
        %v3209 = vsel %vm3195, %v3180, %v3181
        %v3210 = vsel %vm3195, %v3179, %v3180
        %v3211 = vsel %vm3195, %v3178, %v3179
        %v3212 = vsel %vm3195, %v3177, %v3178
        %v3213 = vsel %vm3195, %v3176, %v3177
        %v3214 = vsel %vm3195, %v3175, %v3176
        %v3215 = vsel %vm3195, %v3174, %v3175
        %v3216 = vsel %vm3195, %v3173, %v3174
        %v3217 = vsel %vm3195, %v3172, %v3173
        %v3218 = vsel %vm3195, %v3171, %v3172
        %v3219 = vsel %vm3195, %v3170, %v3171
        %v3220 = vsel %vm3195, %v3169, %v3170
        %v3221 = vsel %vm3195, %v3168, %v3169
        %v3222 = vsel %vm3195, %v3167, %v3168
        %v3223 = vsel %vm3195, %v3166, %v3167
        %v3224 = vsel %vm3195, %v3165, %v3166
        %v3225 = vsel %vm3195, %v3164, %v3165
        %v3226 = vsel %vm3195, %v3163, %v3164
        %v3227 = vsel %vm3195, %v3162, %v3163
        %v3228 = vsel %vm3195, %v3161, %v3162
        %v3229 = vsel %vm3195, %v3160, %v3161
        %v3230 = vsel %vm3195, %v3159, %v3160
        %v3231 = vsel %vm3195, %v3158, %v3159
        %v3232 = vsel %vm3195, %v3157, %v3158
        %v3233 = vsel %vm3195, %v3156, %v3157
        %v3234 = vsel %vm3195, %v3155, %v3156
        %v3235 = vsel %vm3195, %v3154, %v3155
        %v3236 = vsel %vm3195, %v3153, %v3154
        %v3237 = vsel %vm3195, %v3152, %v3153
        %v3238 = vsel %vm3195, %v3151, %v3152
        %v3239 = vsel %vm3195, %v3150, %v3151
        %v3240 = vsel %vm3195, %v3149, %v3150
        %v3241 = vsel %vm3195, %v3148, %v3149
        %v3242 = vsel %vm3195, %v3147, %v3148
        %v3243 = vsel %vm3195, %v3146, %v3147
        %v3244 = vsel %vm3195, %v3145, %v3146
        %v3245 = vsel %vm3195, %v3144, %v3145
        %v3246 = vsel %vm3195, %v3143, %v3144
        %v3247 = vsel %vm3195, %v3142, %v3143
        %v3248 = vsel %vm3195, %v3141, %v3142
        %v3249 = vsel %vm3195, %v3140, %v3141
        %v3250 = vsel %vm3195, %v3139, %v3140
        %v3251 = vsel %vm3195, %v3138, %v3139
        %v3252 = vsel %vm3195, %v3137, %v3138
        %v3253 = vsel %vm3195, %v3136, %v3137
        %v3254 = vsel %vm3195, %v3135, %v3136
        %v3255 = vsel %vm3195, %v3134, %v3135
        %v3256 = vsel %vm3195, %v3133, %v3134
        %v3257 = vsel %vm3195, %v3132, %v3133
        %v3258 = vsel %vm3195, %v3131, %v3132
        %v3259 = vsel %vm3195, %v3194, %v3131
        %v3260 = vsel %vm3067, 1, 0
        %v3261 = vsel %vm3068, 1, 0
        %v3262 = vsel %vm3069, 1, 0
        %v3263 = vsel %vm3070, 1, 0
        %v3264 = vsel %vm3071, 1, 0
        %v3265 = vsel %vm3072, 1, 0
        %v3266 = vsel %vm3073, 1, 0
        %v3267 = vsel %vm3074, 1, 0
        %v3268 = vsel %vm3075, 1, 0
        %v3269 = vsel %vm3076, 1, 0
        %v3270 = vsel %vm3077, 1, 0
        %v3271 = vsel %vm3078, 1, 0
        %v3272 = vsel %vm3079, 1, 0
        %v3273 = vsel %vm3080, 1, 0
        %v3274 = vsel %vm3081, 1, 0
        %v3275 = vsel %vm3082, 1, 0
        %v3276 = vsel %vm3083, 1, 0
        %v3277 = vsel %vm3084, 1, 0
        %v3278 = vsel %vm3085, 1, 0
        %v3279 = vsel %vm3086, 1, 0
        %v3280 = vsel %vm3087, 1, 0
        %v3281 = vsel %vm3088, 1, 0
        %v3282 = vsel %vm3089, 1, 0
        %v3283 = vsel %vm3090, 1, 0
        %v3284 = vsel %vm3091, 1, 0
        %v3285 = vsel %vm3092, 1, 0
        %v3286 = vsel %vm3093, 1, 0
        %v3287 = vsel %vm3094, 1, 0
        %v3288 = vsel %vm3095, 1, 0
        %v3289 = vsel %vm3096, 1, 0
        %v3290 = vsel %vm3097, 1, 0
        %v3291 = vsel %vm3098, 1, 0
        %v3292 = vsel %vm3099, 1, 0
        %v3293 = vsel %vm3100, 1, 0
        %v3294 = vsel %vm3101, 1, 0
        %v3295 = vsel %vm3102, 1, 0
        %v3296 = vsel %vm3103, 1, 0
        %v3297 = vsel %vm3104, 1, 0
        %v3298 = vsel %vm3105, 1, 0
        %v3299 = vsel %vm3106, 1, 0
        %v3300 = vsel %vm3107, 1, 0
        %v3301 = vsel %vm3108, 1, 0
        %v3302 = vsel %vm3109, 1, 0
        %v3303 = vsel %vm3110, 1, 0
        %v3304 = vsel %vm3111, 1, 0
        %v3305 = vsel %vm3112, 1, 0
        %v3306 = vsel %vm3113, 1, 0
        %v3307 = vsel %vm3114, 1, 0
        %v3308 = vsel %vm3115, 1, 0
        %v3309 = vsel %vm3116, 1, 0
        %v3310 = vsel %vm3117, 1, 0
        %v3311 = vsel %vm3118, 1, 0
        %v3312 = vsel %vm3119, 1, 0
        %v3313 = vsel %vm3120, 1, 0
        %v3314 = vsel %vm3121, 1, 0
        %v3315 = vsel %vm3122, 1, 0
        %v3316 = vsel %vm3123, 1, 0
        %v3317 = vsel %vm3124, 1, 0
        %v3318 = vsel %vm3125, 1, 0
        %v3319 = vsel %vm3126, 1, 0
        %v3320 = vsel %vm3127, 1, 0
        %v3321 = vsel %vm3128, 1, 0
        %v3322 = vsel %vm3129, 1, 0
        %v3323 = vsel %vm3130, 1, 0
        %vm3324 = vcmp.eq.s32.totalorder %v3260, 1
        %vm3325 = vcmp.eq.s32.totalorder %v3261, 1
        %vm3326 = vcmp.eq.s32.totalorder %v3262, 1
        %vm3327 = vcmp.eq.s32.totalorder %v3263, 1
        %vm3328 = vcmp.eq.s32.totalorder %v3264, 1
        %vm3329 = vcmp.eq.s32.totalorder %v3265, 1
        %vm3330 = vcmp.eq.s32.totalorder %v3266, 1
        %vm3331 = vcmp.eq.s32.totalorder %v3267, 1
        %vm3332 = vcmp.eq.s32.totalorder %v3268, 1
        %vm3333 = vcmp.eq.s32.totalorder %v3269, 1
        %vm3334 = vcmp.eq.s32.totalorder %v3270, 1
        %vm3335 = vcmp.eq.s32.totalorder %v3271, 1
        %vm3336 = vcmp.eq.s32.totalorder %v3272, 1
        %vm3337 = vcmp.eq.s32.totalorder %v3273, 1
        %vm3338 = vcmp.eq.s32.totalorder %v3274, 1
        %vm3339 = vcmp.eq.s32.totalorder %v3275, 1
        %vm3340 = vcmp.eq.s32.totalorder %v3276, 1
        %vm3341 = vcmp.eq.s32.totalorder %v3277, 1
        %vm3342 = vcmp.eq.s32.totalorder %v3278, 1
        %vm3343 = vcmp.eq.s32.totalorder %v3279, 1
        %vm3344 = vcmp.eq.s32.totalorder %v3280, 1
        %vm3345 = vcmp.eq.s32.totalorder %v3281, 1
        %vm3346 = vcmp.eq.s32.totalorder %v3282, 1
        %vm3347 = vcmp.eq.s32.totalorder %v3283, 1
        %vm3348 = vcmp.eq.s32.totalorder %v3284, 1
        %vm3349 = vcmp.eq.s32.totalorder %v3285, 1
        %vm3350 = vcmp.eq.s32.totalorder %v3286, 1
        %vm3351 = vcmp.eq.s32.totalorder %v3287, 1
        %vm3352 = vcmp.eq.s32.totalorder %v3288, 1
        %vm3353 = vcmp.eq.s32.totalorder %v3289, 1
        %vm3354 = vcmp.eq.s32.totalorder %v3290, 1
        %vm3355 = vcmp.eq.s32.totalorder %v3291, 1
        %vm3356 = vcmp.eq.s32.totalorder %v3292, 1
        %vm3357 = vcmp.eq.s32.totalorder %v3293, 1
        %vm3358 = vcmp.eq.s32.totalorder %v3294, 1
        %vm3359 = vcmp.eq.s32.totalorder %v3295, 1
        %vm3360 = vcmp.eq.s32.totalorder %v3296, 1
        %vm3361 = vcmp.eq.s32.totalorder %v3297, 1
        %vm3362 = vcmp.eq.s32.totalorder %v3298, 1
        %vm3363 = vcmp.eq.s32.totalorder %v3299, 1
        %vm3364 = vcmp.eq.s32.totalorder %v3300, 1
        %vm3365 = vcmp.eq.s32.totalorder %v3301, 1
        %vm3366 = vcmp.eq.s32.totalorder %v3302, 1
        %vm3367 = vcmp.eq.s32.totalorder %v3303, 1
        %vm3368 = vcmp.eq.s32.totalorder %v3304, 1
        %vm3369 = vcmp.eq.s32.totalorder %v3305, 1
        %vm3370 = vcmp.eq.s32.totalorder %v3306, 1
        %vm3371 = vcmp.eq.s32.totalorder %v3307, 1
        %vm3372 = vcmp.eq.s32.totalorder %v3308, 1
        %vm3373 = vcmp.eq.s32.totalorder %v3309, 1
        %vm3374 = vcmp.eq.s32.totalorder %v3310, 1
        %vm3375 = vcmp.eq.s32.totalorder %v3311, 1
        %vm3376 = vcmp.eq.s32.totalorder %v3312, 1
        %vm3377 = vcmp.eq.s32.totalorder %v3313, 1
        %vm3378 = vcmp.eq.s32.totalorder %v3314, 1
        %vm3379 = vcmp.eq.s32.totalorder %v3315, 1
        %vm3380 = vcmp.eq.s32.totalorder %v3316, 1
        %vm3381 = vcmp.eq.s32.totalorder %v3317, 1
        %vm3382 = vcmp.eq.s32.totalorder %v3318, 1
        %vm3383 = vcmp.eq.s32.totalorder %v3319, 1
        %vm3384 = vcmp.eq.s32.totalorder %v3320, 1
        %vm3385 = vcmp.eq.s32.totalorder %v3321, 1
        %vm3386 = vcmp.eq.s32.totalorder %v3322, 1
        %vm3387 = vcmp.eq.s32.totalorder %v3323, 1
        %v3388 = vsel %vm3324, %v3259, 0.0
        %v3389 = vsel %vm3325, %v3258, 0.0
        %v3390 = vsel %vm3326, %v3257, 0.0
        %v3391 = vsel %vm3327, %v3256, 0.0
        %v3392 = vsel %vm3328, %v3255, 0.0
        %v3393 = vsel %vm3329, %v3254, 0.0
        %v3394 = vsel %vm3330, %v3253, 0.0
        %v3395 = vsel %vm3331, %v3252, 0.0
        %v3396 = vsel %vm3332, %v3251, 0.0
        %v3397 = vsel %vm3333, %v3250, 0.0
        %v3398 = vsel %vm3334, %v3249, 0.0
        %v3399 = vsel %vm3335, %v3248, 0.0
        %v3400 = vsel %vm3336, %v3247, 0.0
        %v3401 = vsel %vm3337, %v3246, 0.0
        %v3402 = vsel %vm3338, %v3245, 0.0
        %v3403 = vsel %vm3339, %v3244, 0.0
        %v3404 = vsel %vm3340, %v3243, 0.0
        %v3405 = vsel %vm3341, %v3242, 0.0
        %v3406 = vsel %vm3342, %v3241, 0.0
        %v3407 = vsel %vm3343, %v3240, 0.0
        %v3408 = vsel %vm3344, %v3239, 0.0
        %v3409 = vsel %vm3345, %v3238, 0.0
        %v3410 = vsel %vm3346, %v3237, 0.0
        %v3411 = vsel %vm3347, %v3236, 0.0
        %v3412 = vsel %vm3348, %v3235, 0.0
        %v3413 = vsel %vm3349, %v3234, 0.0
        %v3414 = vsel %vm3350, %v3233, 0.0
        %v3415 = vsel %vm3351, %v3232, 0.0
        %v3416 = vsel %vm3352, %v3231, 0.0
        %v3417 = vsel %vm3353, %v3230, 0.0
        %v3418 = vsel %vm3354, %v3229, 0.0
        %v3419 = vsel %vm3355, %v3228, 0.0
        %v3420 = vsel %vm3356, %v3227, 0.0
        %v3421 = vsel %vm3357, %v3226, 0.0
        %v3422 = vsel %vm3358, %v3225, 0.0
        %v3423 = vsel %vm3359, %v3224, 0.0
        %v3424 = vsel %vm3360, %v3223, 0.0
        %v3425 = vsel %vm3361, %v3222, 0.0
        %v3426 = vsel %vm3362, %v3221, 0.0
        %v3427 = vsel %vm3363, %v3220, 0.0
        %v3428 = vsel %vm3364, %v3219, 0.0
        %v3429 = vsel %vm3365, %v3218, 0.0
        %v3430 = vsel %vm3366, %v3217, 0.0
        %v3431 = vsel %vm3367, %v3216, 0.0
        %v3432 = vsel %vm3368, %v3215, 0.0
        %v3433 = vsel %vm3369, %v3214, 0.0
        %v3434 = vsel %vm3370, %v3213, 0.0
        %v3435 = vsel %vm3371, %v3212, 0.0
        %v3436 = vsel %vm3372, %v3211, 0.0
        %v3437 = vsel %vm3373, %v3210, 0.0
        %v3438 = vsel %vm3374, %v3209, 0.0
        %v3439 = vsel %vm3375, %v3208, 0.0
        %v3440 = vsel %vm3376, %v3207, 0.0
        %v3441 = vsel %vm3377, %v3206, 0.0
        %v3442 = vsel %vm3378, %v3205, 0.0
        %v3443 = vsel %vm3379, %v3204, 0.0
        %v3444 = vsel %vm3380, %v3203, 0.0
        %v3445 = vsel %vm3381, %v3202, 0.0
        %v3446 = vsel %vm3382, %v3201, 0.0
        %v3447 = vsel %vm3383, %v3200, 0.0
        %v3448 = vsel %vm3384, %v3199, 0.0
        %v3449 = vsel %vm3385, %v3198, 0.0
        %v3450 = vsel %vm3386, %v3197, 0.0
        %v3451 = vsel %vm3387, %v3196, 0.0
        %v3452 = vadd.s32 %v1033, 4294967294
        %v3453 = vadd.s32 %v1034, 4294967294
        %v3454 = vadd.s32 %v1035, 4294967294
        %v3455 = vadd.s32 %v1036, 4294967294
        %v3456 = vadd.s32 %v1037, 4294967294
        %v3457 = vadd.s32 %v1038, 4294967294
        %v3458 = vadd.s32 %v1039, 4294967294
        %v3459 = vadd.s32 %v1040, 4294967294
        %v3460 = vadd.s32 %v1041, 4294967294
        %v3461 = vadd.s32 %v1042, 4294967294
        %v3462 = vadd.s32 %v1043, 4294967294
        %v3463 = vadd.s32 %v1044, 4294967294
        %v3464 = vadd.s32 %v1045, 4294967294
        %v3465 = vadd.s32 %v1046, 4294967294
        %v3466 = vadd.s32 %v1047, 4294967294
        %v3467 = vadd.s32 %v1048, 4294967294
        %v3468 = vadd.s32 %v1049, 4294967294
        %v3469 = vadd.s32 %v1050, 4294967294
        %v3470 = vadd.s32 %v1051, 4294967294
        %v3471 = vadd.s32 %v1052, 4294967294
        %v3472 = vadd.s32 %v1053, 4294967294
        %v3473 = vadd.s32 %v1054, 4294967294
        %v3474 = vadd.s32 %v1055, 4294967294
        %v3475 = vadd.s32 %v1056, 4294967294
        %v3476 = vadd.s32 %v1057, 4294967294
        %v3477 = vadd.s32 %v1058, 4294967294
        %v3478 = vadd.s32 %v1059, 4294967294
        %v3479 = vadd.s32 %v1060, 4294967294
        %v3480 = vadd.s32 %v1061, 4294967294
        %v3481 = vadd.s32 %v1062, 4294967294
        %v3482 = vadd.s32 %v1063, 4294967294
        %v3483 = vadd.s32 %v1064, 4294967294
        %v3484 = vadd.s32 %v1065, 4294967294
        %v3485 = vadd.s32 %v1066, 4294967294
        %v3486 = vadd.s32 %v1067, 4294967294
        %v3487 = vadd.s32 %v1068, 4294967294
        %v3488 = vadd.s32 %v1069, 4294967294
        %v3489 = vadd.s32 %v1070, 4294967294
        %v3490 = vadd.s32 %v1071, 4294967294
        %v3491 = vadd.s32 %v1072, 4294967294
        %v3492 = vadd.s32 %v1073, 4294967294
        %v3493 = vadd.s32 %v1074, 4294967294
        %v3494 = vadd.s32 %v1075, 4294967294
        %v3495 = vadd.s32 %v1076, 4294967294
        %v3496 = vadd.s32 %v1077, 4294967294
        %v3497 = vadd.s32 %v1078, 4294967294
        %v3498 = vadd.s32 %v1079, 4294967294
        %v3499 = vadd.s32 %v1080, 4294967294
        %v3500 = vadd.s32 %v1081, 4294967294
        %v3501 = vadd.s32 %v1082, 4294967294
        %v3502 = vadd.s32 %v1083, 4294967294
        %v3503 = vadd.s32 %v1084, 4294967294
        %v3504 = vadd.s32 %v1085, 4294967294
        %v3505 = vadd.s32 %v1086, 4294967294
        %v3506 = vadd.s32 %v1087, 4294967294
        %v3507 = vadd.s32 %v1088, 4294967294
        %v3508 = vadd.s32 %v1089, 4294967294
        %v3509 = vadd.s32 %v1090, 4294967294
        %v3510 = vadd.s32 %v1091, 4294967294
        %v3511 = vadd.s32 %v1092, 4294967294
        %v3512 = vadd.s32 %v1093, 4294967294
        %v3513 = vadd.s32 %v1094, 4294967294
        %v3514 = vadd.s32 %v1095, 4294967294
        %v3515 = vadd.s32 %v1096, 4294967294
        %vm3516 = vcmp.ge.s32.totalorder %v3452, 0
        %vm3517 = vcmp.ge.s32.totalorder %v3453, 0
        %vm3518 = vcmp.ge.s32.totalorder %v3454, 0
        %vm3519 = vcmp.ge.s32.totalorder %v3455, 0
        %vm3520 = vcmp.ge.s32.totalorder %v3456, 0
        %vm3521 = vcmp.ge.s32.totalorder %v3457, 0
        %vm3522 = vcmp.ge.s32.totalorder %v3458, 0
        %vm3523 = vcmp.ge.s32.totalorder %v3459, 0
        %vm3524 = vcmp.ge.s32.totalorder %v3460, 0
        %vm3525 = vcmp.ge.s32.totalorder %v3461, 0
        %vm3526 = vcmp.ge.s32.totalorder %v3462, 0
        %vm3527 = vcmp.ge.s32.totalorder %v3463, 0
        %vm3528 = vcmp.ge.s32.totalorder %v3464, 0
        %vm3529 = vcmp.ge.s32.totalorder %v3465, 0
        %vm3530 = vcmp.ge.s32.totalorder %v3466, 0
        %vm3531 = vcmp.ge.s32.totalorder %v3467, 0
        %vm3532 = vcmp.ge.s32.totalorder %v3468, 0
        %vm3533 = vcmp.ge.s32.totalorder %v3469, 0
        %vm3534 = vcmp.ge.s32.totalorder %v3470, 0
        %vm3535 = vcmp.ge.s32.totalorder %v3471, 0
        %vm3536 = vcmp.ge.s32.totalorder %v3472, 0
        %vm3537 = vcmp.ge.s32.totalorder %v3473, 0
        %vm3538 = vcmp.ge.s32.totalorder %v3474, 0
        %vm3539 = vcmp.ge.s32.totalorder %v3475, 0
        %vm3540 = vcmp.ge.s32.totalorder %v3476, 0
        %vm3541 = vcmp.ge.s32.totalorder %v3477, 0
        %vm3542 = vcmp.ge.s32.totalorder %v3478, 0
        %vm3543 = vcmp.ge.s32.totalorder %v3479, 0
        %vm3544 = vcmp.ge.s32.totalorder %v3480, 0
        %vm3545 = vcmp.ge.s32.totalorder %v3481, 0
        %vm3546 = vcmp.ge.s32.totalorder %v3482, 0
        %vm3547 = vcmp.ge.s32.totalorder %v3483, 0
        %vm3548 = vcmp.ge.s32.totalorder %v3484, 0
        %vm3549 = vcmp.ge.s32.totalorder %v3485, 0
        %vm3550 = vcmp.ge.s32.totalorder %v3486, 0
        %vm3551 = vcmp.ge.s32.totalorder %v3487, 0
        %vm3552 = vcmp.ge.s32.totalorder %v3488, 0
        %vm3553 = vcmp.ge.s32.totalorder %v3489, 0
        %vm3554 = vcmp.ge.s32.totalorder %v3490, 0
        %vm3555 = vcmp.ge.s32.totalorder %v3491, 0
        %vm3556 = vcmp.ge.s32.totalorder %v3492, 0
        %vm3557 = vcmp.ge.s32.totalorder %v3493, 0
        %vm3558 = vcmp.ge.s32.totalorder %v3494, 0
        %vm3559 = vcmp.ge.s32.totalorder %v3495, 0
        %vm3560 = vcmp.ge.s32.totalorder %v3496, 0
        %vm3561 = vcmp.ge.s32.totalorder %v3497, 0
        %vm3562 = vcmp.ge.s32.totalorder %v3498, 0
        %vm3563 = vcmp.ge.s32.totalorder %v3499, 0
        %vm3564 = vcmp.ge.s32.totalorder %v3500, 0
        %vm3565 = vcmp.ge.s32.totalorder %v3501, 0
        %vm3566 = vcmp.ge.s32.totalorder %v3502, 0
        %vm3567 = vcmp.ge.s32.totalorder %v3503, 0
        %vm3568 = vcmp.ge.s32.totalorder %v3504, 0
        %vm3569 = vcmp.ge.s32.totalorder %v3505, 0
        %vm3570 = vcmp.ge.s32.totalorder %v3506, 0
        %vm3571 = vcmp.ge.s32.totalorder %v3507, 0
        %vm3572 = vcmp.ge.s32.totalorder %v3508, 0
        %vm3573 = vcmp.ge.s32.totalorder %v3509, 0
        %vm3574 = vcmp.ge.s32.totalorder %v3510, 0
        %vm3575 = vcmp.ge.s32.totalorder %v3511, 0
        %vm3576 = vcmp.ge.s32.totalorder %v3512, 0
        %vm3577 = vcmp.ge.s32.totalorder %v3513, 0
        %vm3578 = vcmp.ge.s32.totalorder %v3514, 0
        %vm3579 = vcmp.ge.s32.totalorder %v3515, 0
        %vm3580 = vcmp.lt.s32.totalorder %v3452, 16
        %vm3581 = vcmp.lt.s32.totalorder %v3453, 16
        %vm3582 = vcmp.lt.s32.totalorder %v3454, 16
        %vm3583 = vcmp.lt.s32.totalorder %v3455, 16
        %vm3584 = vcmp.lt.s32.totalorder %v3456, 16
        %vm3585 = vcmp.lt.s32.totalorder %v3457, 16
        %vm3586 = vcmp.lt.s32.totalorder %v3458, 16
        %vm3587 = vcmp.lt.s32.totalorder %v3459, 16
        %vm3588 = vcmp.lt.s32.totalorder %v3460, 16
        %vm3589 = vcmp.lt.s32.totalorder %v3461, 16
        %vm3590 = vcmp.lt.s32.totalorder %v3462, 16
        %vm3591 = vcmp.lt.s32.totalorder %v3463, 16
        %vm3592 = vcmp.lt.s32.totalorder %v3464, 16
        %vm3593 = vcmp.lt.s32.totalorder %v3465, 16
        %vm3594 = vcmp.lt.s32.totalorder %v3466, 16
        %vm3595 = vcmp.lt.s32.totalorder %v3467, 16
        %vm3596 = vcmp.lt.s32.totalorder %v3468, 16
        %vm3597 = vcmp.lt.s32.totalorder %v3469, 16
        %vm3598 = vcmp.lt.s32.totalorder %v3470, 16
        %vm3599 = vcmp.lt.s32.totalorder %v3471, 16
        %vm3600 = vcmp.lt.s32.totalorder %v3472, 16
        %vm3601 = vcmp.lt.s32.totalorder %v3473, 16
        %vm3602 = vcmp.lt.s32.totalorder %v3474, 16
        %vm3603 = vcmp.lt.s32.totalorder %v3475, 16
        %vm3604 = vcmp.lt.s32.totalorder %v3476, 16
        %vm3605 = vcmp.lt.s32.totalorder %v3477, 16
        %vm3606 = vcmp.lt.s32.totalorder %v3478, 16
        %vm3607 = vcmp.lt.s32.totalorder %v3479, 16
        %vm3608 = vcmp.lt.s32.totalorder %v3480, 16
        %vm3609 = vcmp.lt.s32.totalorder %v3481, 16
        %vm3610 = vcmp.lt.s32.totalorder %v3482, 16
        %vm3611 = vcmp.lt.s32.totalorder %v3483, 16
        %vm3612 = vcmp.lt.s32.totalorder %v3484, 16
        %vm3613 = vcmp.lt.s32.totalorder %v3485, 16
        %vm3614 = vcmp.lt.s32.totalorder %v3486, 16
        %vm3615 = vcmp.lt.s32.totalorder %v3487, 16
        %vm3616 = vcmp.lt.s32.totalorder %v3488, 16
        %vm3617 = vcmp.lt.s32.totalorder %v3489, 16
        %vm3618 = vcmp.lt.s32.totalorder %v3490, 16
        %vm3619 = vcmp.lt.s32.totalorder %v3491, 16
        %vm3620 = vcmp.lt.s32.totalorder %v3492, 16
        %vm3621 = vcmp.lt.s32.totalorder %v3493, 16
        %vm3622 = vcmp.lt.s32.totalorder %v3494, 16
        %vm3623 = vcmp.lt.s32.totalorder %v3495, 16
        %vm3624 = vcmp.lt.s32.totalorder %v3496, 16
        %vm3625 = vcmp.lt.s32.totalorder %v3497, 16
        %vm3626 = vcmp.lt.s32.totalorder %v3498, 16
        %vm3627 = vcmp.lt.s32.totalorder %v3499, 16
        %vm3628 = vcmp.lt.s32.totalorder %v3500, 16
        %vm3629 = vcmp.lt.s32.totalorder %v3501, 16
        %vm3630 = vcmp.lt.s32.totalorder %v3502, 16
        %vm3631 = vcmp.lt.s32.totalorder %v3503, 16
        %vm3632 = vcmp.lt.s32.totalorder %v3504, 16
        %vm3633 = vcmp.lt.s32.totalorder %v3505, 16
        %vm3634 = vcmp.lt.s32.totalorder %v3506, 16
        %vm3635 = vcmp.lt.s32.totalorder %v3507, 16
        %vm3636 = vcmp.lt.s32.totalorder %v3508, 16
        %vm3637 = vcmp.lt.s32.totalorder %v3509, 16
        %vm3638 = vcmp.lt.s32.totalorder %v3510, 16
        %vm3639 = vcmp.lt.s32.totalorder %v3511, 16
        %vm3640 = vcmp.lt.s32.totalorder %v3512, 16
        %vm3641 = vcmp.lt.s32.totalorder %v3513, 16
        %vm3642 = vcmp.lt.s32.totalorder %v3514, 16
        %vm3643 = vcmp.lt.s32.totalorder %v3515, 16
        %vm3644 = vmand %vm3516, %vm3580
        %vm3645 = vmand %vm3517, %vm3581
        %vm3646 = vmand %vm3518, %vm3582
        %vm3647 = vmand %vm3519, %vm3583
        %vm3648 = vmand %vm3520, %vm3584
        %vm3649 = vmand %vm3521, %vm3585
        %vm3650 = vmand %vm3522, %vm3586
        %vm3651 = vmand %vm3523, %vm3587
        %vm3652 = vmand %vm3524, %vm3588
        %vm3653 = vmand %vm3525, %vm3589
        %vm3654 = vmand %vm3526, %vm3590
        %vm3655 = vmand %vm3527, %vm3591
        %vm3656 = vmand %vm3528, %vm3592
        %vm3657 = vmand %vm3529, %vm3593
        %vm3658 = vmand %vm3530, %vm3594
        %vm3659 = vmand %vm3531, %vm3595
        %vm3660 = vmand %vm3532, %vm3596
        %vm3661 = vmand %vm3533, %vm3597
        %vm3662 = vmand %vm3534, %vm3598
        %vm3663 = vmand %vm3535, %vm3599
        %vm3664 = vmand %vm3536, %vm3600
        %vm3665 = vmand %vm3537, %vm3601
        %vm3666 = vmand %vm3538, %vm3602
        %vm3667 = vmand %vm3539, %vm3603
        %vm3668 = vmand %vm3540, %vm3604
        %vm3669 = vmand %vm3541, %vm3605
        %vm3670 = vmand %vm3542, %vm3606
        %vm3671 = vmand %vm3543, %vm3607
        %vm3672 = vmand %vm3544, %vm3608
        %vm3673 = vmand %vm3545, %vm3609
        %vm3674 = vmand %vm3546, %vm3610
        %vm3675 = vmand %vm3547, %vm3611
        %vm3676 = vmand %vm3548, %vm3612
        %vm3677 = vmand %vm3549, %vm3613
        %vm3678 = vmand %vm3550, %vm3614
        %vm3679 = vmand %vm3551, %vm3615
        %vm3680 = vmand %vm3552, %vm3616
        %vm3681 = vmand %vm3553, %vm3617
        %vm3682 = vmand %vm3554, %vm3618
        %vm3683 = vmand %vm3555, %vm3619
        %vm3684 = vmand %vm3556, %vm3620
        %vm3685 = vmand %vm3557, %vm3621
        %vm3686 = vmand %vm3558, %vm3622
        %vm3687 = vmand %vm3559, %vm3623
        %vm3688 = vmand %vm3560, %vm3624
        %vm3689 = vmand %vm3561, %vm3625
        %vm3690 = vmand %vm3562, %vm3626
        %vm3691 = vmand %vm3563, %vm3627
        %vm3692 = vmand %vm3564, %vm3628
        %vm3693 = vmand %vm3565, %vm3629
        %vm3694 = vmand %vm3566, %vm3630
        %vm3695 = vmand %vm3567, %vm3631
        %vm3696 = vmand %vm3568, %vm3632
        %vm3697 = vmand %vm3569, %vm3633
        %vm3698 = vmand %vm3570, %vm3634
        %vm3699 = vmand %vm3571, %vm3635
        %vm3700 = vmand %vm3572, %vm3636
        %vm3701 = vmand %vm3573, %vm3637
        %vm3702 = vmand %vm3574, %vm3638
        %vm3703 = vmand %vm3575, %vm3639
        %vm3704 = vmand %vm3576, %vm3640
        %vm3705 = vmand %vm3577, %vm3641
        %vm3706 = vmand %vm3578, %vm3642
        %vm3707 = vmand %vm3579, %vm3643
        %v3708 = vrot.slane %v1241, 6
        %v3709 = vrot.slane %v1243, 6
        %v3710 = vrot.slane %v1246, 6
        %v3711 = vrot.slane %v1248, 6
        %v3712 = vrot.slane %v1251, 6
        %v3713 = vrot.slane %v1253, 6
        %v3714 = vrot.slane %v1256, 6
        %v3715 = vrot.slane %v1258, 6
        %v3716 = vrot.slane %v1261, 6
        %v3717 = vrot.slane %v1263, 6
        %v3718 = vrot.slane %v1266, 6
        %v3719 = vrot.slane %v1268, 6
        %v3720 = vrot.slane %v1271, 6
        %v3721 = vrot.slane %v1273, 6
        %v3722 = vrot.slane %v1276, 6
        %v3723 = vrot.slane %v1278, 6
        %v3724 = vrot.slane %v1281, 6
        %v3725 = vrot.slane %v1283, 6
        %v3726 = vrot.slane %v1286, 6
        %v3727 = vrot.slane %v1288, 6
        %v3728 = vrot.slane %v1291, 6
        %v3729 = vrot.slane %v1293, 6
        %v3730 = vrot.slane %v1296, 6
        %v3731 = vrot.slane %v1298, 6
        %v3732 = vrot.slane %v1301, 6
        %v3733 = vrot.slane %v1303, 6
        %v3734 = vrot.slane %v1306, 6
        %v3735 = vrot.slane %v1308, 6
        %v3736 = vrot.slane %v1311, 6
        %v3737 = vrot.slane %v1313, 6
        %v3738 = vrot.slane %v1316, 6
        %v3739 = vrot.slane %v1318, 6
        %v3740 = vrot.slane %v1321, 6
        %v3741 = vrot.slane %v1323, 6
        %v3742 = vrot.slane %v1326, 6
        %v3743 = vrot.slane %v1328, 6
        %v3744 = vrot.slane %v1331, 6
        %v3745 = vrot.slane %v1333, 6
        %v3746 = vrot.slane %v1336, 6
        %v3747 = vrot.slane %v1338, 6
        %v3748 = vrot.slane %v1341, 6
        %v3749 = vrot.slane %v1343, 6
        %v3750 = vrot.slane %v1346, 6
        %v3751 = vrot.slane %v1348, 6
        %v3752 = vrot.slane %v1351, 6
        %v3753 = vrot.slane %v1353, 6
        %v3754 = vrot.slane %v1356, 6
        %v3755 = vrot.slane %v1358, 6
        %v3756 = vrot.slane %v1361, 6
        %v3757 = vrot.slane %v1363, 6
        %v3758 = vrot.slane %v1366, 6
        %v3759 = vrot.slane %v1368, 6
        %v3760 = vrot.slane %v1371, 6
        %v3761 = vrot.slane %v1373, 6
        %v3762 = vrot.slane %v1376, 6
        %v3763 = vrot.slane %v1378, 6
        %v3764 = vrot.slane %v1381, 6
        %v3765 = vrot.slane %v1383, 6
        %v3766 = vrot.slane %v1386, 6
        %v3767 = vrot.slane %v1388, 6
        %v3768 = vrot.slane %v1391, 6
        %v3769 = vrot.slane %v1393, 6
        %v3770 = vrot.slane %v1396, 6
        %v3771 = vrot.slane %v1398, 6
        %vm3772 = vcmp.lt.s32.totalorder %v265, 2
        %v3773 = vsel %vm3772, %v3770, %v3771
        %v3774 = vsel %vm3772, %v3769, %v3770
        %v3775 = vsel %vm3772, %v3768, %v3769
        %v3776 = vsel %vm3772, %v3767, %v3768
        %v3777 = vsel %vm3772, %v3766, %v3767
        %v3778 = vsel %vm3772, %v3765, %v3766
        %v3779 = vsel %vm3772, %v3764, %v3765
        %v3780 = vsel %vm3772, %v3763, %v3764
        %v3781 = vsel %vm3772, %v3762, %v3763
        %v3782 = vsel %vm3772, %v3761, %v3762
        %v3783 = vsel %vm3772, %v3760, %v3761
        %v3784 = vsel %vm3772, %v3759, %v3760
        %v3785 = vsel %vm3772, %v3758, %v3759
        %v3786 = vsel %vm3772, %v3757, %v3758
        %v3787 = vsel %vm3772, %v3756, %v3757
        %v3788 = vsel %vm3772, %v3755, %v3756
        %v3789 = vsel %vm3772, %v3754, %v3755
        %v3790 = vsel %vm3772, %v3753, %v3754
        %v3791 = vsel %vm3772, %v3752, %v3753
        %v3792 = vsel %vm3772, %v3751, %v3752
        %v3793 = vsel %vm3772, %v3750, %v3751
        %v3794 = vsel %vm3772, %v3749, %v3750
        %v3795 = vsel %vm3772, %v3748, %v3749
        %v3796 = vsel %vm3772, %v3747, %v3748
        %v3797 = vsel %vm3772, %v3746, %v3747
        %v3798 = vsel %vm3772, %v3745, %v3746
        %v3799 = vsel %vm3772, %v3744, %v3745
        %v3800 = vsel %vm3772, %v3743, %v3744
        %v3801 = vsel %vm3772, %v3742, %v3743
        %v3802 = vsel %vm3772, %v3741, %v3742
        %v3803 = vsel %vm3772, %v3740, %v3741
        %v3804 = vsel %vm3772, %v3739, %v3740
        %v3805 = vsel %vm3772, %v3738, %v3739
        %v3806 = vsel %vm3772, %v3737, %v3738
        %v3807 = vsel %vm3772, %v3736, %v3737
        %v3808 = vsel %vm3772, %v3735, %v3736
        %v3809 = vsel %vm3772, %v3734, %v3735
        %v3810 = vsel %vm3772, %v3733, %v3734
        %v3811 = vsel %vm3772, %v3732, %v3733
        %v3812 = vsel %vm3772, %v3731, %v3732
        %v3813 = vsel %vm3772, %v3730, %v3731
        %v3814 = vsel %vm3772, %v3729, %v3730
        %v3815 = vsel %vm3772, %v3728, %v3729
        %v3816 = vsel %vm3772, %v3727, %v3728
        %v3817 = vsel %vm3772, %v3726, %v3727
        %v3818 = vsel %vm3772, %v3725, %v3726
        %v3819 = vsel %vm3772, %v3724, %v3725
        %v3820 = vsel %vm3772, %v3723, %v3724
        %v3821 = vsel %vm3772, %v3722, %v3723
        %v3822 = vsel %vm3772, %v3721, %v3722
        %v3823 = vsel %vm3772, %v3720, %v3721
        %v3824 = vsel %vm3772, %v3719, %v3720
        %v3825 = vsel %vm3772, %v3718, %v3719
        %v3826 = vsel %vm3772, %v3717, %v3718
        %v3827 = vsel %vm3772, %v3716, %v3717
        %v3828 = vsel %vm3772, %v3715, %v3716
        %v3829 = vsel %vm3772, %v3714, %v3715
        %v3830 = vsel %vm3772, %v3713, %v3714
        %v3831 = vsel %vm3772, %v3712, %v3713
        %v3832 = vsel %vm3772, %v3711, %v3712
        %v3833 = vsel %vm3772, %v3710, %v3711
        %v3834 = vsel %vm3772, %v3709, %v3710
        %v3835 = vsel %vm3772, %v3708, %v3709
        %v3836 = vsel %vm3772, %v3771, %v3708
        %v3837 = vsel %vm3644, 1, 0
        %v3838 = vsel %vm3645, 1, 0
        %v3839 = vsel %vm3646, 1, 0
        %v3840 = vsel %vm3647, 1, 0
        %v3841 = vsel %vm3648, 1, 0
        %v3842 = vsel %vm3649, 1, 0
        %v3843 = vsel %vm3650, 1, 0
        %v3844 = vsel %vm3651, 1, 0
        %v3845 = vsel %vm3652, 1, 0
        %v3846 = vsel %vm3653, 1, 0
        %v3847 = vsel %vm3654, 1, 0
        %v3848 = vsel %vm3655, 1, 0
        %v3849 = vsel %vm3656, 1, 0
        %v3850 = vsel %vm3657, 1, 0
        %v3851 = vsel %vm3658, 1, 0
        %v3852 = vsel %vm3659, 1, 0
        %v3853 = vsel %vm3660, 1, 0
        %v3854 = vsel %vm3661, 1, 0
        %v3855 = vsel %vm3662, 1, 0
        %v3856 = vsel %vm3663, 1, 0
        %v3857 = vsel %vm3664, 1, 0
        %v3858 = vsel %vm3665, 1, 0
        %v3859 = vsel %vm3666, 1, 0
        %v3860 = vsel %vm3667, 1, 0
        %v3861 = vsel %vm3668, 1, 0
        %v3862 = vsel %vm3669, 1, 0
        %v3863 = vsel %vm3670, 1, 0
        %v3864 = vsel %vm3671, 1, 0
        %v3865 = vsel %vm3672, 1, 0
        %v3866 = vsel %vm3673, 1, 0
        %v3867 = vsel %vm3674, 1, 0
        %v3868 = vsel %vm3675, 1, 0
        %v3869 = vsel %vm3676, 1, 0
        %v3870 = vsel %vm3677, 1, 0
        %v3871 = vsel %vm3678, 1, 0
        %v3872 = vsel %vm3679, 1, 0
        %v3873 = vsel %vm3680, 1, 0
        %v3874 = vsel %vm3681, 1, 0
        %v3875 = vsel %vm3682, 1, 0
        %v3876 = vsel %vm3683, 1, 0
        %v3877 = vsel %vm3684, 1, 0
        %v3878 = vsel %vm3685, 1, 0
        %v3879 = vsel %vm3686, 1, 0
        %v3880 = vsel %vm3687, 1, 0
        %v3881 = vsel %vm3688, 1, 0
        %v3882 = vsel %vm3689, 1, 0
        %v3883 = vsel %vm3690, 1, 0
        %v3884 = vsel %vm3691, 1, 0
        %v3885 = vsel %vm3692, 1, 0
        %v3886 = vsel %vm3693, 1, 0
        %v3887 = vsel %vm3694, 1, 0
        %v3888 = vsel %vm3695, 1, 0
        %v3889 = vsel %vm3696, 1, 0
        %v3890 = vsel %vm3697, 1, 0
        %v3891 = vsel %vm3698, 1, 0
        %v3892 = vsel %vm3699, 1, 0
        %v3893 = vsel %vm3700, 1, 0
        %v3894 = vsel %vm3701, 1, 0
        %v3895 = vsel %vm3702, 1, 0
        %v3896 = vsel %vm3703, 1, 0
        %v3897 = vsel %vm3704, 1, 0
        %v3898 = vsel %vm3705, 1, 0
        %v3899 = vsel %vm3706, 1, 0
        %v3900 = vsel %vm3707, 1, 0
        %vm3901 = vcmp.eq.s32.totalorder %v3837, 1
        %vm3902 = vcmp.eq.s32.totalorder %v3838, 1
        %vm3903 = vcmp.eq.s32.totalorder %v3839, 1
        %vm3904 = vcmp.eq.s32.totalorder %v3840, 1
        %vm3905 = vcmp.eq.s32.totalorder %v3841, 1
        %vm3906 = vcmp.eq.s32.totalorder %v3842, 1
        %vm3907 = vcmp.eq.s32.totalorder %v3843, 1
        %vm3908 = vcmp.eq.s32.totalorder %v3844, 1
        %vm3909 = vcmp.eq.s32.totalorder %v3845, 1
        %vm3910 = vcmp.eq.s32.totalorder %v3846, 1
        %vm3911 = vcmp.eq.s32.totalorder %v3847, 1
        %vm3912 = vcmp.eq.s32.totalorder %v3848, 1
        %vm3913 = vcmp.eq.s32.totalorder %v3849, 1
        %vm3914 = vcmp.eq.s32.totalorder %v3850, 1
        %vm3915 = vcmp.eq.s32.totalorder %v3851, 1
        %vm3916 = vcmp.eq.s32.totalorder %v3852, 1
        %vm3917 = vcmp.eq.s32.totalorder %v3853, 1
        %vm3918 = vcmp.eq.s32.totalorder %v3854, 1
        %vm3919 = vcmp.eq.s32.totalorder %v3855, 1
        %vm3920 = vcmp.eq.s32.totalorder %v3856, 1
        %vm3921 = vcmp.eq.s32.totalorder %v3857, 1
        %vm3922 = vcmp.eq.s32.totalorder %v3858, 1
        %vm3923 = vcmp.eq.s32.totalorder %v3859, 1
        %vm3924 = vcmp.eq.s32.totalorder %v3860, 1
        %vm3925 = vcmp.eq.s32.totalorder %v3861, 1
        %vm3926 = vcmp.eq.s32.totalorder %v3862, 1
        %vm3927 = vcmp.eq.s32.totalorder %v3863, 1
        %vm3928 = vcmp.eq.s32.totalorder %v3864, 1
        %vm3929 = vcmp.eq.s32.totalorder %v3865, 1
        %vm3930 = vcmp.eq.s32.totalorder %v3866, 1
        %vm3931 = vcmp.eq.s32.totalorder %v3867, 1
        %vm3932 = vcmp.eq.s32.totalorder %v3868, 1
        %vm3933 = vcmp.eq.s32.totalorder %v3869, 1
        %vm3934 = vcmp.eq.s32.totalorder %v3870, 1
        %vm3935 = vcmp.eq.s32.totalorder %v3871, 1
        %vm3936 = vcmp.eq.s32.totalorder %v3872, 1
        %vm3937 = vcmp.eq.s32.totalorder %v3873, 1
        %vm3938 = vcmp.eq.s32.totalorder %v3874, 1
        %vm3939 = vcmp.eq.s32.totalorder %v3875, 1
        %vm3940 = vcmp.eq.s32.totalorder %v3876, 1
        %vm3941 = vcmp.eq.s32.totalorder %v3877, 1
        %vm3942 = vcmp.eq.s32.totalorder %v3878, 1
        %vm3943 = vcmp.eq.s32.totalorder %v3879, 1
        %vm3944 = vcmp.eq.s32.totalorder %v3880, 1
        %vm3945 = vcmp.eq.s32.totalorder %v3881, 1
        %vm3946 = vcmp.eq.s32.totalorder %v3882, 1
        %vm3947 = vcmp.eq.s32.totalorder %v3883, 1
        %vm3948 = vcmp.eq.s32.totalorder %v3884, 1
        %vm3949 = vcmp.eq.s32.totalorder %v3885, 1
        %vm3950 = vcmp.eq.s32.totalorder %v3886, 1
        %vm3951 = vcmp.eq.s32.totalorder %v3887, 1
        %vm3952 = vcmp.eq.s32.totalorder %v3888, 1
        %vm3953 = vcmp.eq.s32.totalorder %v3889, 1
        %vm3954 = vcmp.eq.s32.totalorder %v3890, 1
        %vm3955 = vcmp.eq.s32.totalorder %v3891, 1
        %vm3956 = vcmp.eq.s32.totalorder %v3892, 1
        %vm3957 = vcmp.eq.s32.totalorder %v3893, 1
        %vm3958 = vcmp.eq.s32.totalorder %v3894, 1
        %vm3959 = vcmp.eq.s32.totalorder %v3895, 1
        %vm3960 = vcmp.eq.s32.totalorder %v3896, 1
        %vm3961 = vcmp.eq.s32.totalorder %v3897, 1
        %vm3962 = vcmp.eq.s32.totalorder %v3898, 1
        %vm3963 = vcmp.eq.s32.totalorder %v3899, 1
        %vm3964 = vcmp.eq.s32.totalorder %v3900, 1
        %v3965 = vsel %vm3901, %v3836, 0.0
        %v3966 = vsel %vm3902, %v3835, 0.0
        %v3967 = vsel %vm3903, %v3834, 0.0
        %v3968 = vsel %vm3904, %v3833, 0.0
        %v3969 = vsel %vm3905, %v3832, 0.0
        %v3970 = vsel %vm3906, %v3831, 0.0
        %v3971 = vsel %vm3907, %v3830, 0.0
        %v3972 = vsel %vm3908, %v3829, 0.0
        %v3973 = vsel %vm3909, %v3828, 0.0
        %v3974 = vsel %vm3910, %v3827, 0.0
        %v3975 = vsel %vm3911, %v3826, 0.0
        %v3976 = vsel %vm3912, %v3825, 0.0
        %v3977 = vsel %vm3913, %v3824, 0.0
        %v3978 = vsel %vm3914, %v3823, 0.0
        %v3979 = vsel %vm3915, %v3822, 0.0
        %v3980 = vsel %vm3916, %v3821, 0.0
        %v3981 = vsel %vm3917, %v3820, 0.0
        %v3982 = vsel %vm3918, %v3819, 0.0
        %v3983 = vsel %vm3919, %v3818, 0.0
        %v3984 = vsel %vm3920, %v3817, 0.0
        %v3985 = vsel %vm3921, %v3816, 0.0
        %v3986 = vsel %vm3922, %v3815, 0.0
        %v3987 = vsel %vm3923, %v3814, 0.0
        %v3988 = vsel %vm3924, %v3813, 0.0
        %v3989 = vsel %vm3925, %v3812, 0.0
        %v3990 = vsel %vm3926, %v3811, 0.0
        %v3991 = vsel %vm3927, %v3810, 0.0
        %v3992 = vsel %vm3928, %v3809, 0.0
        %v3993 = vsel %vm3929, %v3808, 0.0
        %v3994 = vsel %vm3930, %v3807, 0.0
        %v3995 = vsel %vm3931, %v3806, 0.0
        %v3996 = vsel %vm3932, %v3805, 0.0
        %v3997 = vsel %vm3933, %v3804, 0.0
        %v3998 = vsel %vm3934, %v3803, 0.0
        %v3999 = vsel %vm3935, %v3802, 0.0
        %v4000 = vsel %vm3936, %v3801, 0.0
        %v4001 = vsel %vm3937, %v3800, 0.0
        %v4002 = vsel %vm3938, %v3799, 0.0
        %v4003 = vsel %vm3939, %v3798, 0.0
        %v4004 = vsel %vm3940, %v3797, 0.0
        %v4005 = vsel %vm3941, %v3796, 0.0
        %v4006 = vsel %vm3942, %v3795, 0.0
        %v4007 = vsel %vm3943, %v3794, 0.0
        %v4008 = vsel %vm3944, %v3793, 0.0
        %v4009 = vsel %vm3945, %v3792, 0.0
        %v4010 = vsel %vm3946, %v3791, 0.0
        %v4011 = vsel %vm3947, %v3790, 0.0
        %v4012 = vsel %vm3948, %v3789, 0.0
        %v4013 = vsel %vm3949, %v3788, 0.0
        %v4014 = vsel %vm3950, %v3787, 0.0
        %v4015 = vsel %vm3951, %v3786, 0.0
        %v4016 = vsel %vm3952, %v3785, 0.0
        %v4017 = vsel %vm3953, %v3784, 0.0
        %v4018 = vsel %vm3954, %v3783, 0.0
        %v4019 = vsel %vm3955, %v3782, 0.0
        %v4020 = vsel %vm3956, %v3781, 0.0
        %v4021 = vsel %vm3957, %v3780, 0.0
        %v4022 = vsel %vm3958, %v3779, 0.0
        %v4023 = vsel %vm3959, %v3778, 0.0
        %v4024 = vsel %vm3960, %v3777, 0.0
        %v4025 = vsel %vm3961, %v3776, 0.0
        %v4026 = vsel %vm3962, %v3775, 0.0
        %v4027 = vsel %vm3963, %v3774, 0.0
        %v4028 = vsel %vm3964, %v3773, 0.0
        %v4029 = vadd.s32 %v1033, 4294967295
        %v4030 = vadd.s32 %v1034, 4294967295
        %v4031 = vadd.s32 %v1035, 4294967295
        %v4032 = vadd.s32 %v1036, 4294967295
        %v4033 = vadd.s32 %v1037, 4294967295
        %v4034 = vadd.s32 %v1038, 4294967295
        %v4035 = vadd.s32 %v1039, 4294967295
        %v4036 = vadd.s32 %v1040, 4294967295
        %v4037 = vadd.s32 %v1041, 4294967295
        %v4038 = vadd.s32 %v1042, 4294967295
        %v4039 = vadd.s32 %v1043, 4294967295
        %v4040 = vadd.s32 %v1044, 4294967295
        %v4041 = vadd.s32 %v1045, 4294967295
        %v4042 = vadd.s32 %v1046, 4294967295
        %v4043 = vadd.s32 %v1047, 4294967295
        %v4044 = vadd.s32 %v1048, 4294967295
        %v4045 = vadd.s32 %v1049, 4294967295
        %v4046 = vadd.s32 %v1050, 4294967295
        %v4047 = vadd.s32 %v1051, 4294967295
        %v4048 = vadd.s32 %v1052, 4294967295
        %v4049 = vadd.s32 %v1053, 4294967295
        %v4050 = vadd.s32 %v1054, 4294967295
        %v4051 = vadd.s32 %v1055, 4294967295
        %v4052 = vadd.s32 %v1056, 4294967295
        %v4053 = vadd.s32 %v1057, 4294967295
        %v4054 = vadd.s32 %v1058, 4294967295
        %v4055 = vadd.s32 %v1059, 4294967295
        %v4056 = vadd.s32 %v1060, 4294967295
        %v4057 = vadd.s32 %v1061, 4294967295
        %v4058 = vadd.s32 %v1062, 4294967295
        %v4059 = vadd.s32 %v1063, 4294967295
        %v4060 = vadd.s32 %v1064, 4294967295
        %v4061 = vadd.s32 %v1065, 4294967295
        %v4062 = vadd.s32 %v1066, 4294967295
        %v4063 = vadd.s32 %v1067, 4294967295
        %v4064 = vadd.s32 %v1068, 4294967295
        %v4065 = vadd.s32 %v1069, 4294967295
        %v4066 = vadd.s32 %v1070, 4294967295
        %v4067 = vadd.s32 %v1071, 4294967295
        %v4068 = vadd.s32 %v1072, 4294967295
        %v4069 = vadd.s32 %v1073, 4294967295
        %v4070 = vadd.s32 %v1074, 4294967295
        %v4071 = vadd.s32 %v1075, 4294967295
        %v4072 = vadd.s32 %v1076, 4294967295
        %v4073 = vadd.s32 %v1077, 4294967295
        %v4074 = vadd.s32 %v1078, 4294967295
        %v4075 = vadd.s32 %v1079, 4294967295
        %v4076 = vadd.s32 %v1080, 4294967295
        %v4077 = vadd.s32 %v1081, 4294967295
        %v4078 = vadd.s32 %v1082, 4294967295
        %v4079 = vadd.s32 %v1083, 4294967295
        %v4080 = vadd.s32 %v1084, 4294967295
        %v4081 = vadd.s32 %v1085, 4294967295
        %v4082 = vadd.s32 %v1086, 4294967295
        %v4083 = vadd.s32 %v1087, 4294967295
        %v4084 = vadd.s32 %v1088, 4294967295
        %v4085 = vadd.s32 %v1089, 4294967295
        %v4086 = vadd.s32 %v1090, 4294967295
        %v4087 = vadd.s32 %v1091, 4294967295
        %v4088 = vadd.s32 %v1092, 4294967295
        %v4089 = vadd.s32 %v1093, 4294967295
        %v4090 = vadd.s32 %v1094, 4294967295
        %v4091 = vadd.s32 %v1095, 4294967295
        %v4092 = vadd.s32 %v1096, 4294967295
        %vm4093 = vcmp.ge.s32.totalorder %v4029, 0
        %vm4094 = vcmp.ge.s32.totalorder %v4030, 0
        %vm4095 = vcmp.ge.s32.totalorder %v4031, 0
        %vm4096 = vcmp.ge.s32.totalorder %v4032, 0
        %vm4097 = vcmp.ge.s32.totalorder %v4033, 0
        %vm4098 = vcmp.ge.s32.totalorder %v4034, 0
        %vm4099 = vcmp.ge.s32.totalorder %v4035, 0
        %vm4100 = vcmp.ge.s32.totalorder %v4036, 0
        %vm4101 = vcmp.ge.s32.totalorder %v4037, 0
        %vm4102 = vcmp.ge.s32.totalorder %v4038, 0
        %vm4103 = vcmp.ge.s32.totalorder %v4039, 0
        %vm4104 = vcmp.ge.s32.totalorder %v4040, 0
        %vm4105 = vcmp.ge.s32.totalorder %v4041, 0
        %vm4106 = vcmp.ge.s32.totalorder %v4042, 0
        %vm4107 = vcmp.ge.s32.totalorder %v4043, 0
        %vm4108 = vcmp.ge.s32.totalorder %v4044, 0
        %vm4109 = vcmp.ge.s32.totalorder %v4045, 0
        %vm4110 = vcmp.ge.s32.totalorder %v4046, 0
        %vm4111 = vcmp.ge.s32.totalorder %v4047, 0
        %vm4112 = vcmp.ge.s32.totalorder %v4048, 0
        %vm4113 = vcmp.ge.s32.totalorder %v4049, 0
        %vm4114 = vcmp.ge.s32.totalorder %v4050, 0
        %vm4115 = vcmp.ge.s32.totalorder %v4051, 0
        %vm4116 = vcmp.ge.s32.totalorder %v4052, 0
        %vm4117 = vcmp.ge.s32.totalorder %v4053, 0
        %vm4118 = vcmp.ge.s32.totalorder %v4054, 0
        %vm4119 = vcmp.ge.s32.totalorder %v4055, 0
        %vm4120 = vcmp.ge.s32.totalorder %v4056, 0
        %vm4121 = vcmp.ge.s32.totalorder %v4057, 0
        %vm4122 = vcmp.ge.s32.totalorder %v4058, 0
        %vm4123 = vcmp.ge.s32.totalorder %v4059, 0
        %vm4124 = vcmp.ge.s32.totalorder %v4060, 0
        %vm4125 = vcmp.ge.s32.totalorder %v4061, 0
        %vm4126 = vcmp.ge.s32.totalorder %v4062, 0
        %vm4127 = vcmp.ge.s32.totalorder %v4063, 0
        %vm4128 = vcmp.ge.s32.totalorder %v4064, 0
        %vm4129 = vcmp.ge.s32.totalorder %v4065, 0
        %vm4130 = vcmp.ge.s32.totalorder %v4066, 0
        %vm4131 = vcmp.ge.s32.totalorder %v4067, 0
        %vm4132 = vcmp.ge.s32.totalorder %v4068, 0
        %vm4133 = vcmp.ge.s32.totalorder %v4069, 0
        %vm4134 = vcmp.ge.s32.totalorder %v4070, 0
        %vm4135 = vcmp.ge.s32.totalorder %v4071, 0
        %vm4136 = vcmp.ge.s32.totalorder %v4072, 0
        %vm4137 = vcmp.ge.s32.totalorder %v4073, 0
        %vm4138 = vcmp.ge.s32.totalorder %v4074, 0
        %vm4139 = vcmp.ge.s32.totalorder %v4075, 0
        %vm4140 = vcmp.ge.s32.totalorder %v4076, 0
        %vm4141 = vcmp.ge.s32.totalorder %v4077, 0
        %vm4142 = vcmp.ge.s32.totalorder %v4078, 0
        %vm4143 = vcmp.ge.s32.totalorder %v4079, 0
        %vm4144 = vcmp.ge.s32.totalorder %v4080, 0
        %vm4145 = vcmp.ge.s32.totalorder %v4081, 0
        %vm4146 = vcmp.ge.s32.totalorder %v4082, 0
        %vm4147 = vcmp.ge.s32.totalorder %v4083, 0
        %vm4148 = vcmp.ge.s32.totalorder %v4084, 0
        %vm4149 = vcmp.ge.s32.totalorder %v4085, 0
        %vm4150 = vcmp.ge.s32.totalorder %v4086, 0
        %vm4151 = vcmp.ge.s32.totalorder %v4087, 0
        %vm4152 = vcmp.ge.s32.totalorder %v4088, 0
        %vm4153 = vcmp.ge.s32.totalorder %v4089, 0
        %vm4154 = vcmp.ge.s32.totalorder %v4090, 0
        %vm4155 = vcmp.ge.s32.totalorder %v4091, 0
        %vm4156 = vcmp.ge.s32.totalorder %v4092, 0
        %vm4157 = vcmp.lt.s32.totalorder %v4029, 16
        %vm4158 = vcmp.lt.s32.totalorder %v4030, 16
        %vm4159 = vcmp.lt.s32.totalorder %v4031, 16
        %vm4160 = vcmp.lt.s32.totalorder %v4032, 16
        %vm4161 = vcmp.lt.s32.totalorder %v4033, 16
        %vm4162 = vcmp.lt.s32.totalorder %v4034, 16
        %vm4163 = vcmp.lt.s32.totalorder %v4035, 16
        %vm4164 = vcmp.lt.s32.totalorder %v4036, 16
        %vm4165 = vcmp.lt.s32.totalorder %v4037, 16
        %vm4166 = vcmp.lt.s32.totalorder %v4038, 16
        %vm4167 = vcmp.lt.s32.totalorder %v4039, 16
        %vm4168 = vcmp.lt.s32.totalorder %v4040, 16
        %vm4169 = vcmp.lt.s32.totalorder %v4041, 16
        %vm4170 = vcmp.lt.s32.totalorder %v4042, 16
        %vm4171 = vcmp.lt.s32.totalorder %v4043, 16
        %vm4172 = vcmp.lt.s32.totalorder %v4044, 16
        %vm4173 = vcmp.lt.s32.totalorder %v4045, 16
        %vm4174 = vcmp.lt.s32.totalorder %v4046, 16
        %vm4175 = vcmp.lt.s32.totalorder %v4047, 16
        %vm4176 = vcmp.lt.s32.totalorder %v4048, 16
        %vm4177 = vcmp.lt.s32.totalorder %v4049, 16
        %vm4178 = vcmp.lt.s32.totalorder %v4050, 16
        %vm4179 = vcmp.lt.s32.totalorder %v4051, 16
        %vm4180 = vcmp.lt.s32.totalorder %v4052, 16
        %vm4181 = vcmp.lt.s32.totalorder %v4053, 16
        %vm4182 = vcmp.lt.s32.totalorder %v4054, 16
        %vm4183 = vcmp.lt.s32.totalorder %v4055, 16
        %vm4184 = vcmp.lt.s32.totalorder %v4056, 16
        %vm4185 = vcmp.lt.s32.totalorder %v4057, 16
        %vm4186 = vcmp.lt.s32.totalorder %v4058, 16
        %vm4187 = vcmp.lt.s32.totalorder %v4059, 16
        %vm4188 = vcmp.lt.s32.totalorder %v4060, 16
        %vm4189 = vcmp.lt.s32.totalorder %v4061, 16
        %vm4190 = vcmp.lt.s32.totalorder %v4062, 16
        %vm4191 = vcmp.lt.s32.totalorder %v4063, 16
        %vm4192 = vcmp.lt.s32.totalorder %v4064, 16
        %vm4193 = vcmp.lt.s32.totalorder %v4065, 16
        %vm4194 = vcmp.lt.s32.totalorder %v4066, 16
        %vm4195 = vcmp.lt.s32.totalorder %v4067, 16
        %vm4196 = vcmp.lt.s32.totalorder %v4068, 16
        %vm4197 = vcmp.lt.s32.totalorder %v4069, 16
        %vm4198 = vcmp.lt.s32.totalorder %v4070, 16
        %vm4199 = vcmp.lt.s32.totalorder %v4071, 16
        %vm4200 = vcmp.lt.s32.totalorder %v4072, 16
        %vm4201 = vcmp.lt.s32.totalorder %v4073, 16
        %vm4202 = vcmp.lt.s32.totalorder %v4074, 16
        %vm4203 = vcmp.lt.s32.totalorder %v4075, 16
        %vm4204 = vcmp.lt.s32.totalorder %v4076, 16
        %vm4205 = vcmp.lt.s32.totalorder %v4077, 16
        %vm4206 = vcmp.lt.s32.totalorder %v4078, 16
        %vm4207 = vcmp.lt.s32.totalorder %v4079, 16
        %vm4208 = vcmp.lt.s32.totalorder %v4080, 16
        %vm4209 = vcmp.lt.s32.totalorder %v4081, 16
        %vm4210 = vcmp.lt.s32.totalorder %v4082, 16
        %vm4211 = vcmp.lt.s32.totalorder %v4083, 16
        %vm4212 = vcmp.lt.s32.totalorder %v4084, 16
        %vm4213 = vcmp.lt.s32.totalorder %v4085, 16
        %vm4214 = vcmp.lt.s32.totalorder %v4086, 16
        %vm4215 = vcmp.lt.s32.totalorder %v4087, 16
        %vm4216 = vcmp.lt.s32.totalorder %v4088, 16
        %vm4217 = vcmp.lt.s32.totalorder %v4089, 16
        %vm4218 = vcmp.lt.s32.totalorder %v4090, 16
        %vm4219 = vcmp.lt.s32.totalorder %v4091, 16
        %vm4220 = vcmp.lt.s32.totalorder %v4092, 16
        %vm4221 = vmand %vm4093, %vm4157
        %vm4222 = vmand %vm4094, %vm4158
        %vm4223 = vmand %vm4095, %vm4159
        %vm4224 = vmand %vm4096, %vm4160
        %vm4225 = vmand %vm4097, %vm4161
        %vm4226 = vmand %vm4098, %vm4162
        %vm4227 = vmand %vm4099, %vm4163
        %vm4228 = vmand %vm4100, %vm4164
        %vm4229 = vmand %vm4101, %vm4165
        %vm4230 = vmand %vm4102, %vm4166
        %vm4231 = vmand %vm4103, %vm4167
        %vm4232 = vmand %vm4104, %vm4168
        %vm4233 = vmand %vm4105, %vm4169
        %vm4234 = vmand %vm4106, %vm4170
        %vm4235 = vmand %vm4107, %vm4171
        %vm4236 = vmand %vm4108, %vm4172
        %vm4237 = vmand %vm4109, %vm4173
        %vm4238 = vmand %vm4110, %vm4174
        %vm4239 = vmand %vm4111, %vm4175
        %vm4240 = vmand %vm4112, %vm4176
        %vm4241 = vmand %vm4113, %vm4177
        %vm4242 = vmand %vm4114, %vm4178
        %vm4243 = vmand %vm4115, %vm4179
        %vm4244 = vmand %vm4116, %vm4180
        %vm4245 = vmand %vm4117, %vm4181
        %vm4246 = vmand %vm4118, %vm4182
        %vm4247 = vmand %vm4119, %vm4183
        %vm4248 = vmand %vm4120, %vm4184
        %vm4249 = vmand %vm4121, %vm4185
        %vm4250 = vmand %vm4122, %vm4186
        %vm4251 = vmand %vm4123, %vm4187
        %vm4252 = vmand %vm4124, %vm4188
        %vm4253 = vmand %vm4125, %vm4189
        %vm4254 = vmand %vm4126, %vm4190
        %vm4255 = vmand %vm4127, %vm4191
        %vm4256 = vmand %vm4128, %vm4192
        %vm4257 = vmand %vm4129, %vm4193
        %vm4258 = vmand %vm4130, %vm4194
        %vm4259 = vmand %vm4131, %vm4195
        %vm4260 = vmand %vm4132, %vm4196
        %vm4261 = vmand %vm4133, %vm4197
        %vm4262 = vmand %vm4134, %vm4198
        %vm4263 = vmand %vm4135, %vm4199
        %vm4264 = vmand %vm4136, %vm4200
        %vm4265 = vmand %vm4137, %vm4201
        %vm4266 = vmand %vm4138, %vm4202
        %vm4267 = vmand %vm4139, %vm4203
        %vm4268 = vmand %vm4140, %vm4204
        %vm4269 = vmand %vm4141, %vm4205
        %vm4270 = vmand %vm4142, %vm4206
        %vm4271 = vmand %vm4143, %vm4207
        %vm4272 = vmand %vm4144, %vm4208
        %vm4273 = vmand %vm4145, %vm4209
        %vm4274 = vmand %vm4146, %vm4210
        %vm4275 = vmand %vm4147, %vm4211
        %vm4276 = vmand %vm4148, %vm4212
        %vm4277 = vmand %vm4149, %vm4213
        %vm4278 = vmand %vm4150, %vm4214
        %vm4279 = vmand %vm4151, %vm4215
        %vm4280 = vmand %vm4152, %vm4216
        %vm4281 = vmand %vm4153, %vm4217
        %vm4282 = vmand %vm4154, %vm4218
        %vm4283 = vmand %vm4155, %vm4219
        %vm4284 = vmand %vm4156, %vm4220
        %v4285 = vrot.slane %v1241, 7
        %v4286 = vrot.slane %v1243, 7
        %v4287 = vrot.slane %v1246, 7
        %v4288 = vrot.slane %v1248, 7
        %v4289 = vrot.slane %v1251, 7
        %v4290 = vrot.slane %v1253, 7
        %v4291 = vrot.slane %v1256, 7
        %v4292 = vrot.slane %v1258, 7
        %v4293 = vrot.slane %v1261, 7
        %v4294 = vrot.slane %v1263, 7
        %v4295 = vrot.slane %v1266, 7
        %v4296 = vrot.slane %v1268, 7
        %v4297 = vrot.slane %v1271, 7
        %v4298 = vrot.slane %v1273, 7
        %v4299 = vrot.slane %v1276, 7
        %v4300 = vrot.slane %v1278, 7
        %v4301 = vrot.slane %v1281, 7
        %v4302 = vrot.slane %v1283, 7
        %v4303 = vrot.slane %v1286, 7
        %v4304 = vrot.slane %v1288, 7
        %v4305 = vrot.slane %v1291, 7
        %v4306 = vrot.slane %v1293, 7
        %v4307 = vrot.slane %v1296, 7
        %v4308 = vrot.slane %v1298, 7
        %v4309 = vrot.slane %v1301, 7
        %v4310 = vrot.slane %v1303, 7
        %v4311 = vrot.slane %v1306, 7
        %v4312 = vrot.slane %v1308, 7
        %v4313 = vrot.slane %v1311, 7
        %v4314 = vrot.slane %v1313, 7
        %v4315 = vrot.slane %v1316, 7
        %v4316 = vrot.slane %v1318, 7
        %v4317 = vrot.slane %v1321, 7
        %v4318 = vrot.slane %v1323, 7
        %v4319 = vrot.slane %v1326, 7
        %v4320 = vrot.slane %v1328, 7
        %v4321 = vrot.slane %v1331, 7
        %v4322 = vrot.slane %v1333, 7
        %v4323 = vrot.slane %v1336, 7
        %v4324 = vrot.slane %v1338, 7
        %v4325 = vrot.slane %v1341, 7
        %v4326 = vrot.slane %v1343, 7
        %v4327 = vrot.slane %v1346, 7
        %v4328 = vrot.slane %v1348, 7
        %v4329 = vrot.slane %v1351, 7
        %v4330 = vrot.slane %v1353, 7
        %v4331 = vrot.slane %v1356, 7
        %v4332 = vrot.slane %v1358, 7
        %v4333 = vrot.slane %v1361, 7
        %v4334 = vrot.slane %v1363, 7
        %v4335 = vrot.slane %v1366, 7
        %v4336 = vrot.slane %v1368, 7
        %v4337 = vrot.slane %v1371, 7
        %v4338 = vrot.slane %v1373, 7
        %v4339 = vrot.slane %v1376, 7
        %v4340 = vrot.slane %v1378, 7
        %v4341 = vrot.slane %v1381, 7
        %v4342 = vrot.slane %v1383, 7
        %v4343 = vrot.slane %v1386, 7
        %v4344 = vrot.slane %v1388, 7
        %v4345 = vrot.slane %v1391, 7
        %v4346 = vrot.slane %v1393, 7
        %v4347 = vrot.slane %v1396, 7
        %v4348 = vrot.slane %v1398, 7
        %v4349 = vsel %vm1528, %v4347, %v4348
        %v4350 = vsel %vm1528, %v4346, %v4347
        %v4351 = vsel %vm1528, %v4345, %v4346
        %v4352 = vsel %vm1528, %v4344, %v4345
        %v4353 = vsel %vm1528, %v4343, %v4344
        %v4354 = vsel %vm1528, %v4342, %v4343
        %v4355 = vsel %vm1528, %v4341, %v4342
        %v4356 = vsel %vm1528, %v4340, %v4341
        %v4357 = vsel %vm1528, %v4339, %v4340
        %v4358 = vsel %vm1528, %v4338, %v4339
        %v4359 = vsel %vm1528, %v4337, %v4338
        %v4360 = vsel %vm1528, %v4336, %v4337
        %v4361 = vsel %vm1528, %v4335, %v4336
        %v4362 = vsel %vm1528, %v4334, %v4335
        %v4363 = vsel %vm1528, %v4333, %v4334
        %v4364 = vsel %vm1528, %v4332, %v4333
        %v4365 = vsel %vm1528, %v4331, %v4332
        %v4366 = vsel %vm1528, %v4330, %v4331
        %v4367 = vsel %vm1528, %v4329, %v4330
        %v4368 = vsel %vm1528, %v4328, %v4329
        %v4369 = vsel %vm1528, %v4327, %v4328
        %v4370 = vsel %vm1528, %v4326, %v4327
        %v4371 = vsel %vm1528, %v4325, %v4326
        %v4372 = vsel %vm1528, %v4324, %v4325
        %v4373 = vsel %vm1528, %v4323, %v4324
        %v4374 = vsel %vm1528, %v4322, %v4323
        %v4375 = vsel %vm1528, %v4321, %v4322
        %v4376 = vsel %vm1528, %v4320, %v4321
        %v4377 = vsel %vm1528, %v4319, %v4320
        %v4378 = vsel %vm1528, %v4318, %v4319
        %v4379 = vsel %vm1528, %v4317, %v4318
        %v4380 = vsel %vm1528, %v4316, %v4317
        %v4381 = vsel %vm1528, %v4315, %v4316
        %v4382 = vsel %vm1528, %v4314, %v4315
        %v4383 = vsel %vm1528, %v4313, %v4314
        %v4384 = vsel %vm1528, %v4312, %v4313
        %v4385 = vsel %vm1528, %v4311, %v4312
        %v4386 = vsel %vm1528, %v4310, %v4311
        %v4387 = vsel %vm1528, %v4309, %v4310
        %v4388 = vsel %vm1528, %v4308, %v4309
        %v4389 = vsel %vm1528, %v4307, %v4308
        %v4390 = vsel %vm1528, %v4306, %v4307
        %v4391 = vsel %vm1528, %v4305, %v4306
        %v4392 = vsel %vm1528, %v4304, %v4305
        %v4393 = vsel %vm1528, %v4303, %v4304
        %v4394 = vsel %vm1528, %v4302, %v4303
        %v4395 = vsel %vm1528, %v4301, %v4302
        %v4396 = vsel %vm1528, %v4300, %v4301
        %v4397 = vsel %vm1528, %v4299, %v4300
        %v4398 = vsel %vm1528, %v4298, %v4299
        %v4399 = vsel %vm1528, %v4297, %v4298
        %v4400 = vsel %vm1528, %v4296, %v4297
        %v4401 = vsel %vm1528, %v4295, %v4296
        %v4402 = vsel %vm1528, %v4294, %v4295
        %v4403 = vsel %vm1528, %v4293, %v4294
        %v4404 = vsel %vm1528, %v4292, %v4293
        %v4405 = vsel %vm1528, %v4291, %v4292
        %v4406 = vsel %vm1528, %v4290, %v4291
        %v4407 = vsel %vm1528, %v4289, %v4290
        %v4408 = vsel %vm1528, %v4288, %v4289
        %v4409 = vsel %vm1528, %v4287, %v4288
        %v4410 = vsel %vm1528, %v4286, %v4287
        %v4411 = vsel %vm1528, %v4285, %v4286
        %v4412 = vsel %vm1528, %v4348, %v4285
        %v4413 = vsel %vm4221, 1, 0
        %v4414 = vsel %vm4222, 1, 0
        %v4415 = vsel %vm4223, 1, 0
        %v4416 = vsel %vm4224, 1, 0
        %v4417 = vsel %vm4225, 1, 0
        %v4418 = vsel %vm4226, 1, 0
        %v4419 = vsel %vm4227, 1, 0
        %v4420 = vsel %vm4228, 1, 0
        %v4421 = vsel %vm4229, 1, 0
        %v4422 = vsel %vm4230, 1, 0
        %v4423 = vsel %vm4231, 1, 0
        %v4424 = vsel %vm4232, 1, 0
        %v4425 = vsel %vm4233, 1, 0
        %v4426 = vsel %vm4234, 1, 0
        %v4427 = vsel %vm4235, 1, 0
        %v4428 = vsel %vm4236, 1, 0
        %v4429 = vsel %vm4237, 1, 0
        %v4430 = vsel %vm4238, 1, 0
        %v4431 = vsel %vm4239, 1, 0
        %v4432 = vsel %vm4240, 1, 0
        %v4433 = vsel %vm4241, 1, 0
        %v4434 = vsel %vm4242, 1, 0
        %v4435 = vsel %vm4243, 1, 0
        %v4436 = vsel %vm4244, 1, 0
        %v4437 = vsel %vm4245, 1, 0
        %v4438 = vsel %vm4246, 1, 0
        %v4439 = vsel %vm4247, 1, 0
        %v4440 = vsel %vm4248, 1, 0
        %v4441 = vsel %vm4249, 1, 0
        %v4442 = vsel %vm4250, 1, 0
        %v4443 = vsel %vm4251, 1, 0
        %v4444 = vsel %vm4252, 1, 0
        %v4445 = vsel %vm4253, 1, 0
        %v4446 = vsel %vm4254, 1, 0
        %v4447 = vsel %vm4255, 1, 0
        %v4448 = vsel %vm4256, 1, 0
        %v4449 = vsel %vm4257, 1, 0
        %v4450 = vsel %vm4258, 1, 0
        %v4451 = vsel %vm4259, 1, 0
        %v4452 = vsel %vm4260, 1, 0
        %v4453 = vsel %vm4261, 1, 0
        %v4454 = vsel %vm4262, 1, 0
        %v4455 = vsel %vm4263, 1, 0
        %v4456 = vsel %vm4264, 1, 0
        %v4457 = vsel %vm4265, 1, 0
        %v4458 = vsel %vm4266, 1, 0
        %v4459 = vsel %vm4267, 1, 0
        %v4460 = vsel %vm4268, 1, 0
        %v4461 = vsel %vm4269, 1, 0
        %v4462 = vsel %vm4270, 1, 0
        %v4463 = vsel %vm4271, 1, 0
        %v4464 = vsel %vm4272, 1, 0
        %v4465 = vsel %vm4273, 1, 0
        %v4466 = vsel %vm4274, 1, 0
        %v4467 = vsel %vm4275, 1, 0
        %v4468 = vsel %vm4276, 1, 0
        %v4469 = vsel %vm4277, 1, 0
        %v4470 = vsel %vm4278, 1, 0
        %v4471 = vsel %vm4279, 1, 0
        %v4472 = vsel %vm4280, 1, 0
        %v4473 = vsel %vm4281, 1, 0
        %v4474 = vsel %vm4282, 1, 0
        %v4475 = vsel %vm4283, 1, 0
        %v4476 = vsel %vm4284, 1, 0
        %vm4477 = vcmp.eq.s32.totalorder %v4413, 1
        %vm4478 = vcmp.eq.s32.totalorder %v4414, 1
        %vm4479 = vcmp.eq.s32.totalorder %v4415, 1
        %vm4480 = vcmp.eq.s32.totalorder %v4416, 1
        %vm4481 = vcmp.eq.s32.totalorder %v4417, 1
        %vm4482 = vcmp.eq.s32.totalorder %v4418, 1
        %vm4483 = vcmp.eq.s32.totalorder %v4419, 1
        %vm4484 = vcmp.eq.s32.totalorder %v4420, 1
        %vm4485 = vcmp.eq.s32.totalorder %v4421, 1
        %vm4486 = vcmp.eq.s32.totalorder %v4422, 1
        %vm4487 = vcmp.eq.s32.totalorder %v4423, 1
        %vm4488 = vcmp.eq.s32.totalorder %v4424, 1
        %vm4489 = vcmp.eq.s32.totalorder %v4425, 1
        %vm4490 = vcmp.eq.s32.totalorder %v4426, 1
        %vm4491 = vcmp.eq.s32.totalorder %v4427, 1
        %vm4492 = vcmp.eq.s32.totalorder %v4428, 1
        %vm4493 = vcmp.eq.s32.totalorder %v4429, 1
        %vm4494 = vcmp.eq.s32.totalorder %v4430, 1
        %vm4495 = vcmp.eq.s32.totalorder %v4431, 1
        %vm4496 = vcmp.eq.s32.totalorder %v4432, 1
        %vm4497 = vcmp.eq.s32.totalorder %v4433, 1
        %vm4498 = vcmp.eq.s32.totalorder %v4434, 1
        %vm4499 = vcmp.eq.s32.totalorder %v4435, 1
        %vm4500 = vcmp.eq.s32.totalorder %v4436, 1
        %vm4501 = vcmp.eq.s32.totalorder %v4437, 1
        %vm4502 = vcmp.eq.s32.totalorder %v4438, 1
        %vm4503 = vcmp.eq.s32.totalorder %v4439, 1
        %vm4504 = vcmp.eq.s32.totalorder %v4440, 1
        %vm4505 = vcmp.eq.s32.totalorder %v4441, 1
        %vm4506 = vcmp.eq.s32.totalorder %v4442, 1
        %vm4507 = vcmp.eq.s32.totalorder %v4443, 1
        %vm4508 = vcmp.eq.s32.totalorder %v4444, 1
        %vm4509 = vcmp.eq.s32.totalorder %v4445, 1
        %vm4510 = vcmp.eq.s32.totalorder %v4446, 1
        %vm4511 = vcmp.eq.s32.totalorder %v4447, 1
        %vm4512 = vcmp.eq.s32.totalorder %v4448, 1
        %vm4513 = vcmp.eq.s32.totalorder %v4449, 1
        %vm4514 = vcmp.eq.s32.totalorder %v4450, 1
        %vm4515 = vcmp.eq.s32.totalorder %v4451, 1
        %vm4516 = vcmp.eq.s32.totalorder %v4452, 1
        %vm4517 = vcmp.eq.s32.totalorder %v4453, 1
        %vm4518 = vcmp.eq.s32.totalorder %v4454, 1
        %vm4519 = vcmp.eq.s32.totalorder %v4455, 1
        %vm4520 = vcmp.eq.s32.totalorder %v4456, 1
        %vm4521 = vcmp.eq.s32.totalorder %v4457, 1
        %vm4522 = vcmp.eq.s32.totalorder %v4458, 1
        %vm4523 = vcmp.eq.s32.totalorder %v4459, 1
        %vm4524 = vcmp.eq.s32.totalorder %v4460, 1
        %vm4525 = vcmp.eq.s32.totalorder %v4461, 1
        %vm4526 = vcmp.eq.s32.totalorder %v4462, 1
        %vm4527 = vcmp.eq.s32.totalorder %v4463, 1
        %vm4528 = vcmp.eq.s32.totalorder %v4464, 1
        %vm4529 = vcmp.eq.s32.totalorder %v4465, 1
        %vm4530 = vcmp.eq.s32.totalorder %v4466, 1
        %vm4531 = vcmp.eq.s32.totalorder %v4467, 1
        %vm4532 = vcmp.eq.s32.totalorder %v4468, 1
        %vm4533 = vcmp.eq.s32.totalorder %v4469, 1
        %vm4534 = vcmp.eq.s32.totalorder %v4470, 1
        %vm4535 = vcmp.eq.s32.totalorder %v4471, 1
        %vm4536 = vcmp.eq.s32.totalorder %v4472, 1
        %vm4537 = vcmp.eq.s32.totalorder %v4473, 1
        %vm4538 = vcmp.eq.s32.totalorder %v4474, 1
        %vm4539 = vcmp.eq.s32.totalorder %v4475, 1
        %vm4540 = vcmp.eq.s32.totalorder %v4476, 1
        %v4541 = vsel %vm4477, %v4412, 0.0
        %v4542 = vsel %vm4478, %v4411, 0.0
        %v4543 = vsel %vm4479, %v4410, 0.0
        %v4544 = vsel %vm4480, %v4409, 0.0
        %v4545 = vsel %vm4481, %v4408, 0.0
        %v4546 = vsel %vm4482, %v4407, 0.0
        %v4547 = vsel %vm4483, %v4406, 0.0
        %v4548 = vsel %vm4484, %v4405, 0.0
        %v4549 = vsel %vm4485, %v4404, 0.0
        %v4550 = vsel %vm4486, %v4403, 0.0
        %v4551 = vsel %vm4487, %v4402, 0.0
        %v4552 = vsel %vm4488, %v4401, 0.0
        %v4553 = vsel %vm4489, %v4400, 0.0
        %v4554 = vsel %vm4490, %v4399, 0.0
        %v4555 = vsel %vm4491, %v4398, 0.0
        %v4556 = vsel %vm4492, %v4397, 0.0
        %v4557 = vsel %vm4493, %v4396, 0.0
        %v4558 = vsel %vm4494, %v4395, 0.0
        %v4559 = vsel %vm4495, %v4394, 0.0
        %v4560 = vsel %vm4496, %v4393, 0.0
        %v4561 = vsel %vm4497, %v4392, 0.0
        %v4562 = vsel %vm4498, %v4391, 0.0
        %v4563 = vsel %vm4499, %v4390, 0.0
        %v4564 = vsel %vm4500, %v4389, 0.0
        %v4565 = vsel %vm4501, %v4388, 0.0
        %v4566 = vsel %vm4502, %v4387, 0.0
        %v4567 = vsel %vm4503, %v4386, 0.0
        %v4568 = vsel %vm4504, %v4385, 0.0
        %v4569 = vsel %vm4505, %v4384, 0.0
        %v4570 = vsel %vm4506, %v4383, 0.0
        %v4571 = vsel %vm4507, %v4382, 0.0
        %v4572 = vsel %vm4508, %v4381, 0.0
        %v4573 = vsel %vm4509, %v4380, 0.0
        %v4574 = vsel %vm4510, %v4379, 0.0
        %v4575 = vsel %vm4511, %v4378, 0.0
        %v4576 = vsel %vm4512, %v4377, 0.0
        %v4577 = vsel %vm4513, %v4376, 0.0
        %v4578 = vsel %vm4514, %v4375, 0.0
        %v4579 = vsel %vm4515, %v4374, 0.0
        %v4580 = vsel %vm4516, %v4373, 0.0
        %v4581 = vsel %vm4517, %v4372, 0.0
        %v4582 = vsel %vm4518, %v4371, 0.0
        %v4583 = vsel %vm4519, %v4370, 0.0
        %v4584 = vsel %vm4520, %v4369, 0.0
        %v4585 = vsel %vm4521, %v4368, 0.0
        %v4586 = vsel %vm4522, %v4367, 0.0
        %v4587 = vsel %vm4523, %v4366, 0.0
        %v4588 = vsel %vm4524, %v4365, 0.0
        %v4589 = vsel %vm4525, %v4364, 0.0
        %v4590 = vsel %vm4526, %v4363, 0.0
        %v4591 = vsel %vm4527, %v4362, 0.0
        %v4592 = vsel %vm4528, %v4361, 0.0
        %v4593 = vsel %vm4529, %v4360, 0.0
        %v4594 = vsel %vm4530, %v4359, 0.0
        %v4595 = vsel %vm4531, %v4358, 0.0
        %v4596 = vsel %vm4532, %v4357, 0.0
        %v4597 = vsel %vm4533, %v4356, 0.0
        %v4598 = vsel %vm4534, %v4355, 0.0
        %v4599 = vsel %vm4535, %v4354, 0.0
        %v4600 = vsel %vm4536, %v4353, 0.0
        %v4601 = vsel %vm4537, %v4352, 0.0
        %v4602 = vsel %vm4538, %v4351, 0.0
        %v4603 = vsel %vm4539, %v4350, 0.0
        %v4604 = vsel %vm4540, %v4349, 0.0
        %vm4605 = vcmp.ge.s32.totalorder %v1033, 0
        %vm4606 = vcmp.ge.s32.totalorder %v1034, 0
        %vm4607 = vcmp.ge.s32.totalorder %v1035, 0
        %vm4608 = vcmp.ge.s32.totalorder %v1036, 0
        %vm4609 = vcmp.ge.s32.totalorder %v1037, 0
        %vm4610 = vcmp.ge.s32.totalorder %v1038, 0
        %vm4611 = vcmp.ge.s32.totalorder %v1039, 0
        %vm4612 = vcmp.ge.s32.totalorder %v1040, 0
        %vm4613 = vcmp.ge.s32.totalorder %v1041, 0
        %vm4614 = vcmp.ge.s32.totalorder %v1042, 0
        %vm4615 = vcmp.ge.s32.totalorder %v1043, 0
        %vm4616 = vcmp.ge.s32.totalorder %v1044, 0
        %vm4617 = vcmp.ge.s32.totalorder %v1045, 0
        %vm4618 = vcmp.ge.s32.totalorder %v1046, 0
        %vm4619 = vcmp.ge.s32.totalorder %v1047, 0
        %vm4620 = vcmp.ge.s32.totalorder %v1048, 0
        %vm4621 = vcmp.ge.s32.totalorder %v1049, 0
        %vm4622 = vcmp.ge.s32.totalorder %v1050, 0
        %vm4623 = vcmp.ge.s32.totalorder %v1051, 0
        %vm4624 = vcmp.ge.s32.totalorder %v1052, 0
        %vm4625 = vcmp.ge.s32.totalorder %v1053, 0
        %vm4626 = vcmp.ge.s32.totalorder %v1054, 0
        %vm4627 = vcmp.ge.s32.totalorder %v1055, 0
        %vm4628 = vcmp.ge.s32.totalorder %v1056, 0
        %vm4629 = vcmp.ge.s32.totalorder %v1057, 0
        %vm4630 = vcmp.ge.s32.totalorder %v1058, 0
        %vm4631 = vcmp.ge.s32.totalorder %v1059, 0
        %vm4632 = vcmp.ge.s32.totalorder %v1060, 0
        %vm4633 = vcmp.ge.s32.totalorder %v1061, 0
        %vm4634 = vcmp.ge.s32.totalorder %v1062, 0
        %vm4635 = vcmp.ge.s32.totalorder %v1063, 0
        %vm4636 = vcmp.ge.s32.totalorder %v1064, 0
        %vm4637 = vcmp.ge.s32.totalorder %v1065, 0
        %vm4638 = vcmp.ge.s32.totalorder %v1066, 0
        %vm4639 = vcmp.ge.s32.totalorder %v1067, 0
        %vm4640 = vcmp.ge.s32.totalorder %v1068, 0
        %vm4641 = vcmp.ge.s32.totalorder %v1069, 0
        %vm4642 = vcmp.ge.s32.totalorder %v1070, 0
        %vm4643 = vcmp.ge.s32.totalorder %v1071, 0
        %vm4644 = vcmp.ge.s32.totalorder %v1072, 0
        %vm4645 = vcmp.ge.s32.totalorder %v1073, 0
        %vm4646 = vcmp.ge.s32.totalorder %v1074, 0
        %vm4647 = vcmp.ge.s32.totalorder %v1075, 0
        %vm4648 = vcmp.ge.s32.totalorder %v1076, 0
        %vm4649 = vcmp.ge.s32.totalorder %v1077, 0
        %vm4650 = vcmp.ge.s32.totalorder %v1078, 0
        %vm4651 = vcmp.ge.s32.totalorder %v1079, 0
        %vm4652 = vcmp.ge.s32.totalorder %v1080, 0
        %vm4653 = vcmp.ge.s32.totalorder %v1081, 0
        %vm4654 = vcmp.ge.s32.totalorder %v1082, 0
        %vm4655 = vcmp.ge.s32.totalorder %v1083, 0
        %vm4656 = vcmp.ge.s32.totalorder %v1084, 0
        %vm4657 = vcmp.ge.s32.totalorder %v1085, 0
        %vm4658 = vcmp.ge.s32.totalorder %v1086, 0
        %vm4659 = vcmp.ge.s32.totalorder %v1087, 0
        %vm4660 = vcmp.ge.s32.totalorder %v1088, 0
        %vm4661 = vcmp.ge.s32.totalorder %v1089, 0
        %vm4662 = vcmp.ge.s32.totalorder %v1090, 0
        %vm4663 = vcmp.ge.s32.totalorder %v1091, 0
        %vm4664 = vcmp.ge.s32.totalorder %v1092, 0
        %vm4665 = vcmp.ge.s32.totalorder %v1093, 0
        %vm4666 = vcmp.ge.s32.totalorder %v1094, 0
        %vm4667 = vcmp.ge.s32.totalorder %v1095, 0
        %vm4668 = vcmp.ge.s32.totalorder %v1096, 0
        %vm4669 = vcmp.lt.s32.totalorder %v1033, 16
        %vm4670 = vcmp.lt.s32.totalorder %v1034, 16
        %vm4671 = vcmp.lt.s32.totalorder %v1035, 16
        %vm4672 = vcmp.lt.s32.totalorder %v1036, 16
        %vm4673 = vcmp.lt.s32.totalorder %v1037, 16
        %vm4674 = vcmp.lt.s32.totalorder %v1038, 16
        %vm4675 = vcmp.lt.s32.totalorder %v1039, 16
        %vm4676 = vcmp.lt.s32.totalorder %v1040, 16
        %vm4677 = vcmp.lt.s32.totalorder %v1041, 16
        %vm4678 = vcmp.lt.s32.totalorder %v1042, 16
        %vm4679 = vcmp.lt.s32.totalorder %v1043, 16
        %vm4680 = vcmp.lt.s32.totalorder %v1044, 16
        %vm4681 = vcmp.lt.s32.totalorder %v1045, 16
        %vm4682 = vcmp.lt.s32.totalorder %v1046, 16
        %vm4683 = vcmp.lt.s32.totalorder %v1047, 16
        %vm4684 = vcmp.lt.s32.totalorder %v1048, 16
        %vm4685 = vcmp.lt.s32.totalorder %v1049, 16
        %vm4686 = vcmp.lt.s32.totalorder %v1050, 16
        %vm4687 = vcmp.lt.s32.totalorder %v1051, 16
        %vm4688 = vcmp.lt.s32.totalorder %v1052, 16
        %vm4689 = vcmp.lt.s32.totalorder %v1053, 16
        %vm4690 = vcmp.lt.s32.totalorder %v1054, 16
        %vm4691 = vcmp.lt.s32.totalorder %v1055, 16
        %vm4692 = vcmp.lt.s32.totalorder %v1056, 16
        %vm4693 = vcmp.lt.s32.totalorder %v1057, 16
        %vm4694 = vcmp.lt.s32.totalorder %v1058, 16
        %vm4695 = vcmp.lt.s32.totalorder %v1059, 16
        %vm4696 = vcmp.lt.s32.totalorder %v1060, 16
        %vm4697 = vcmp.lt.s32.totalorder %v1061, 16
        %vm4698 = vcmp.lt.s32.totalorder %v1062, 16
        %vm4699 = vcmp.lt.s32.totalorder %v1063, 16
        %vm4700 = vcmp.lt.s32.totalorder %v1064, 16
        %vm4701 = vcmp.lt.s32.totalorder %v1065, 16
        %vm4702 = vcmp.lt.s32.totalorder %v1066, 16
        %vm4703 = vcmp.lt.s32.totalorder %v1067, 16
        %vm4704 = vcmp.lt.s32.totalorder %v1068, 16
        %vm4705 = vcmp.lt.s32.totalorder %v1069, 16
        %vm4706 = vcmp.lt.s32.totalorder %v1070, 16
        %vm4707 = vcmp.lt.s32.totalorder %v1071, 16
        %vm4708 = vcmp.lt.s32.totalorder %v1072, 16
        %vm4709 = vcmp.lt.s32.totalorder %v1073, 16
        %vm4710 = vcmp.lt.s32.totalorder %v1074, 16
        %vm4711 = vcmp.lt.s32.totalorder %v1075, 16
        %vm4712 = vcmp.lt.s32.totalorder %v1076, 16
        %vm4713 = vcmp.lt.s32.totalorder %v1077, 16
        %vm4714 = vcmp.lt.s32.totalorder %v1078, 16
        %vm4715 = vcmp.lt.s32.totalorder %v1079, 16
        %vm4716 = vcmp.lt.s32.totalorder %v1080, 16
        %vm4717 = vcmp.lt.s32.totalorder %v1081, 16
        %vm4718 = vcmp.lt.s32.totalorder %v1082, 16
        %vm4719 = vcmp.lt.s32.totalorder %v1083, 16
        %vm4720 = vcmp.lt.s32.totalorder %v1084, 16
        %vm4721 = vcmp.lt.s32.totalorder %v1085, 16
        %vm4722 = vcmp.lt.s32.totalorder %v1086, 16
        %vm4723 = vcmp.lt.s32.totalorder %v1087, 16
        %vm4724 = vcmp.lt.s32.totalorder %v1088, 16
        %vm4725 = vcmp.lt.s32.totalorder %v1089, 16
        %vm4726 = vcmp.lt.s32.totalorder %v1090, 16
        %vm4727 = vcmp.lt.s32.totalorder %v1091, 16
        %vm4728 = vcmp.lt.s32.totalorder %v1092, 16
        %vm4729 = vcmp.lt.s32.totalorder %v1093, 16
        %vm4730 = vcmp.lt.s32.totalorder %v1094, 16
        %vm4731 = vcmp.lt.s32.totalorder %v1095, 16
        %vm4732 = vcmp.lt.s32.totalorder %v1096, 16
        %vm4733 = vmand %vm4605, %vm4669
        %vm4734 = vmand %vm4606, %vm4670
        %vm4735 = vmand %vm4607, %vm4671
        %vm4736 = vmand %vm4608, %vm4672
        %vm4737 = vmand %vm4609, %vm4673
        %vm4738 = vmand %vm4610, %vm4674
        %vm4739 = vmand %vm4611, %vm4675
        %vm4740 = vmand %vm4612, %vm4676
        %vm4741 = vmand %vm4613, %vm4677
        %vm4742 = vmand %vm4614, %vm4678
        %vm4743 = vmand %vm4615, %vm4679
        %vm4744 = vmand %vm4616, %vm4680
        %vm4745 = vmand %vm4617, %vm4681
        %vm4746 = vmand %vm4618, %vm4682
        %vm4747 = vmand %vm4619, %vm4683
        %vm4748 = vmand %vm4620, %vm4684
        %vm4749 = vmand %vm4621, %vm4685
        %vm4750 = vmand %vm4622, %vm4686
        %vm4751 = vmand %vm4623, %vm4687
        %vm4752 = vmand %vm4624, %vm4688
        %vm4753 = vmand %vm4625, %vm4689
        %vm4754 = vmand %vm4626, %vm4690
        %vm4755 = vmand %vm4627, %vm4691
        %vm4756 = vmand %vm4628, %vm4692
        %vm4757 = vmand %vm4629, %vm4693
        %vm4758 = vmand %vm4630, %vm4694
        %vm4759 = vmand %vm4631, %vm4695
        %vm4760 = vmand %vm4632, %vm4696
        %vm4761 = vmand %vm4633, %vm4697
        %vm4762 = vmand %vm4634, %vm4698
        %vm4763 = vmand %vm4635, %vm4699
        %vm4764 = vmand %vm4636, %vm4700
        %vm4765 = vmand %vm4637, %vm4701
        %vm4766 = vmand %vm4638, %vm4702
        %vm4767 = vmand %vm4639, %vm4703
        %vm4768 = vmand %vm4640, %vm4704
        %vm4769 = vmand %vm4641, %vm4705
        %vm4770 = vmand %vm4642, %vm4706
        %vm4771 = vmand %vm4643, %vm4707
        %vm4772 = vmand %vm4644, %vm4708
        %vm4773 = vmand %vm4645, %vm4709
        %vm4774 = vmand %vm4646, %vm4710
        %vm4775 = vmand %vm4647, %vm4711
        %vm4776 = vmand %vm4648, %vm4712
        %vm4777 = vmand %vm4649, %vm4713
        %vm4778 = vmand %vm4650, %vm4714
        %vm4779 = vmand %vm4651, %vm4715
        %vm4780 = vmand %vm4652, %vm4716
        %vm4781 = vmand %vm4653, %vm4717
        %vm4782 = vmand %vm4654, %vm4718
        %vm4783 = vmand %vm4655, %vm4719
        %vm4784 = vmand %vm4656, %vm4720
        %vm4785 = vmand %vm4657, %vm4721
        %vm4786 = vmand %vm4658, %vm4722
        %vm4787 = vmand %vm4659, %vm4723
        %vm4788 = vmand %vm4660, %vm4724
        %vm4789 = vmand %vm4661, %vm4725
        %vm4790 = vmand %vm4662, %vm4726
        %vm4791 = vmand %vm4663, %vm4727
        %vm4792 = vmand %vm4664, %vm4728
        %vm4793 = vmand %vm4665, %vm4729
        %vm4794 = vmand %vm4666, %vm4730
        %vm4795 = vmand %vm4667, %vm4731
        %vm4796 = vmand %vm4668, %vm4732
        %v4797 = vsel %vm4733, 1, 0
        %v4798 = vsel %vm4734, 1, 0
        %v4799 = vsel %vm4735, 1, 0
        %v4800 = vsel %vm4736, 1, 0
        %v4801 = vsel %vm4737, 1, 0
        %v4802 = vsel %vm4738, 1, 0
        %v4803 = vsel %vm4739, 1, 0
        %v4804 = vsel %vm4740, 1, 0
        %v4805 = vsel %vm4741, 1, 0
        %v4806 = vsel %vm4742, 1, 0
        %v4807 = vsel %vm4743, 1, 0
        %v4808 = vsel %vm4744, 1, 0
        %v4809 = vsel %vm4745, 1, 0
        %v4810 = vsel %vm4746, 1, 0
        %v4811 = vsel %vm4747, 1, 0
        %v4812 = vsel %vm4748, 1, 0
        %v4813 = vsel %vm4749, 1, 0
        %v4814 = vsel %vm4750, 1, 0
        %v4815 = vsel %vm4751, 1, 0
        %v4816 = vsel %vm4752, 1, 0
        %v4817 = vsel %vm4753, 1, 0
        %v4818 = vsel %vm4754, 1, 0
        %v4819 = vsel %vm4755, 1, 0
        %v4820 = vsel %vm4756, 1, 0
        %v4821 = vsel %vm4757, 1, 0
        %v4822 = vsel %vm4758, 1, 0
        %v4823 = vsel %vm4759, 1, 0
        %v4824 = vsel %vm4760, 1, 0
        %v4825 = vsel %vm4761, 1, 0
        %v4826 = vsel %vm4762, 1, 0
        %v4827 = vsel %vm4763, 1, 0
        %v4828 = vsel %vm4764, 1, 0
        %v4829 = vsel %vm4765, 1, 0
        %v4830 = vsel %vm4766, 1, 0
        %v4831 = vsel %vm4767, 1, 0
        %v4832 = vsel %vm4768, 1, 0
        %v4833 = vsel %vm4769, 1, 0
        %v4834 = vsel %vm4770, 1, 0
        %v4835 = vsel %vm4771, 1, 0
        %v4836 = vsel %vm4772, 1, 0
        %v4837 = vsel %vm4773, 1, 0
        %v4838 = vsel %vm4774, 1, 0
        %v4839 = vsel %vm4775, 1, 0
        %v4840 = vsel %vm4776, 1, 0
        %v4841 = vsel %vm4777, 1, 0
        %v4842 = vsel %vm4778, 1, 0
        %v4843 = vsel %vm4779, 1, 0
        %v4844 = vsel %vm4780, 1, 0
        %v4845 = vsel %vm4781, 1, 0
        %v4846 = vsel %vm4782, 1, 0
        %v4847 = vsel %vm4783, 1, 0
        %v4848 = vsel %vm4784, 1, 0
        %v4849 = vsel %vm4785, 1, 0
        %v4850 = vsel %vm4786, 1, 0
        %v4851 = vsel %vm4787, 1, 0
        %v4852 = vsel %vm4788, 1, 0
        %v4853 = vsel %vm4789, 1, 0
        %v4854 = vsel %vm4790, 1, 0
        %v4855 = vsel %vm4791, 1, 0
        %v4856 = vsel %vm4792, 1, 0
        %v4857 = vsel %vm4793, 1, 0
        %v4858 = vsel %vm4794, 1, 0
        %v4859 = vsel %vm4795, 1, 0
        %v4860 = vsel %vm4796, 1, 0
        %vm4861 = vcmp.eq.s32.totalorder %v4797, 1
        %vm4862 = vcmp.eq.s32.totalorder %v4798, 1
        %vm4863 = vcmp.eq.s32.totalorder %v4799, 1
        %vm4864 = vcmp.eq.s32.totalorder %v4800, 1
        %vm4865 = vcmp.eq.s32.totalorder %v4801, 1
        %vm4866 = vcmp.eq.s32.totalorder %v4802, 1
        %vm4867 = vcmp.eq.s32.totalorder %v4803, 1
        %vm4868 = vcmp.eq.s32.totalorder %v4804, 1
        %vm4869 = vcmp.eq.s32.totalorder %v4805, 1
        %vm4870 = vcmp.eq.s32.totalorder %v4806, 1
        %vm4871 = vcmp.eq.s32.totalorder %v4807, 1
        %vm4872 = vcmp.eq.s32.totalorder %v4808, 1
        %vm4873 = vcmp.eq.s32.totalorder %v4809, 1
        %vm4874 = vcmp.eq.s32.totalorder %v4810, 1
        %vm4875 = vcmp.eq.s32.totalorder %v4811, 1
        %vm4876 = vcmp.eq.s32.totalorder %v4812, 1
        %vm4877 = vcmp.eq.s32.totalorder %v4813, 1
        %vm4878 = vcmp.eq.s32.totalorder %v4814, 1
        %vm4879 = vcmp.eq.s32.totalorder %v4815, 1
        %vm4880 = vcmp.eq.s32.totalorder %v4816, 1
        %vm4881 = vcmp.eq.s32.totalorder %v4817, 1
        %vm4882 = vcmp.eq.s32.totalorder %v4818, 1
        %vm4883 = vcmp.eq.s32.totalorder %v4819, 1
        %vm4884 = vcmp.eq.s32.totalorder %v4820, 1
        %vm4885 = vcmp.eq.s32.totalorder %v4821, 1
        %vm4886 = vcmp.eq.s32.totalorder %v4822, 1
        %vm4887 = vcmp.eq.s32.totalorder %v4823, 1
        %vm4888 = vcmp.eq.s32.totalorder %v4824, 1
        %vm4889 = vcmp.eq.s32.totalorder %v4825, 1
        %vm4890 = vcmp.eq.s32.totalorder %v4826, 1
        %vm4891 = vcmp.eq.s32.totalorder %v4827, 1
        %vm4892 = vcmp.eq.s32.totalorder %v4828, 1
        %vm4893 = vcmp.eq.s32.totalorder %v4829, 1
        %vm4894 = vcmp.eq.s32.totalorder %v4830, 1
        %vm4895 = vcmp.eq.s32.totalorder %v4831, 1
        %vm4896 = vcmp.eq.s32.totalorder %v4832, 1
        %vm4897 = vcmp.eq.s32.totalorder %v4833, 1
        %vm4898 = vcmp.eq.s32.totalorder %v4834, 1
        %vm4899 = vcmp.eq.s32.totalorder %v4835, 1
        %vm4900 = vcmp.eq.s32.totalorder %v4836, 1
        %vm4901 = vcmp.eq.s32.totalorder %v4837, 1
        %vm4902 = vcmp.eq.s32.totalorder %v4838, 1
        %vm4903 = vcmp.eq.s32.totalorder %v4839, 1
        %vm4904 = vcmp.eq.s32.totalorder %v4840, 1
        %vm4905 = vcmp.eq.s32.totalorder %v4841, 1
        %vm4906 = vcmp.eq.s32.totalorder %v4842, 1
        %vm4907 = vcmp.eq.s32.totalorder %v4843, 1
        %vm4908 = vcmp.eq.s32.totalorder %v4844, 1
        %vm4909 = vcmp.eq.s32.totalorder %v4845, 1
        %vm4910 = vcmp.eq.s32.totalorder %v4846, 1
        %vm4911 = vcmp.eq.s32.totalorder %v4847, 1
        %vm4912 = vcmp.eq.s32.totalorder %v4848, 1
        %vm4913 = vcmp.eq.s32.totalorder %v4849, 1
        %vm4914 = vcmp.eq.s32.totalorder %v4850, 1
        %vm4915 = vcmp.eq.s32.totalorder %v4851, 1
        %vm4916 = vcmp.eq.s32.totalorder %v4852, 1
        %vm4917 = vcmp.eq.s32.totalorder %v4853, 1
        %vm4918 = vcmp.eq.s32.totalorder %v4854, 1
        %vm4919 = vcmp.eq.s32.totalorder %v4855, 1
        %vm4920 = vcmp.eq.s32.totalorder %v4856, 1
        %vm4921 = vcmp.eq.s32.totalorder %v4857, 1
        %vm4922 = vcmp.eq.s32.totalorder %v4858, 1
        %vm4923 = vcmp.eq.s32.totalorder %v4859, 1
        %vm4924 = vcmp.eq.s32.totalorder %v4860, 1
        %v4925 = vsel %vm4861, %v1241, 0.0
        %v4926 = vsel %vm4862, %v1243, 0.0
        %v4927 = vsel %vm4863, %v1246, 0.0
        %v4928 = vsel %vm4864, %v1248, 0.0
        %v4929 = vsel %vm4865, %v1251, 0.0
        %v4930 = vsel %vm4866, %v1253, 0.0
        %v4931 = vsel %vm4867, %v1256, 0.0
        %v4932 = vsel %vm4868, %v1258, 0.0
        %v4933 = vsel %vm4869, %v1261, 0.0
        %v4934 = vsel %vm4870, %v1263, 0.0
        %v4935 = vsel %vm4871, %v1266, 0.0
        %v4936 = vsel %vm4872, %v1268, 0.0
        %v4937 = vsel %vm4873, %v1271, 0.0
        %v4938 = vsel %vm4874, %v1273, 0.0
        %v4939 = vsel %vm4875, %v1276, 0.0
        %v4940 = vsel %vm4876, %v1278, 0.0
        %v4941 = vsel %vm4877, %v1281, 0.0
        %v4942 = vsel %vm4878, %v1283, 0.0
        %v4943 = vsel %vm4879, %v1286, 0.0
        %v4944 = vsel %vm4880, %v1288, 0.0
        %v4945 = vsel %vm4881, %v1291, 0.0
        %v4946 = vsel %vm4882, %v1293, 0.0
        %v4947 = vsel %vm4883, %v1296, 0.0
        %v4948 = vsel %vm4884, %v1298, 0.0
        %v4949 = vsel %vm4885, %v1301, 0.0
        %v4950 = vsel %vm4886, %v1303, 0.0
        %v4951 = vsel %vm4887, %v1306, 0.0
        %v4952 = vsel %vm4888, %v1308, 0.0
        %v4953 = vsel %vm4889, %v1311, 0.0
        %v4954 = vsel %vm4890, %v1313, 0.0
        %v4955 = vsel %vm4891, %v1316, 0.0
        %v4956 = vsel %vm4892, %v1318, 0.0
        %v4957 = vsel %vm4893, %v1321, 0.0
        %v4958 = vsel %vm4894, %v1323, 0.0
        %v4959 = vsel %vm4895, %v1326, 0.0
        %v4960 = vsel %vm4896, %v1328, 0.0
        %v4961 = vsel %vm4897, %v1331, 0.0
        %v4962 = vsel %vm4898, %v1333, 0.0
        %v4963 = vsel %vm4899, %v1336, 0.0
        %v4964 = vsel %vm4900, %v1338, 0.0
        %v4965 = vsel %vm4901, %v1341, 0.0
        %v4966 = vsel %vm4902, %v1343, 0.0
        %v4967 = vsel %vm4903, %v1346, 0.0
        %v4968 = vsel %vm4904, %v1348, 0.0
        %v4969 = vsel %vm4905, %v1351, 0.0
        %v4970 = vsel %vm4906, %v1353, 0.0
        %v4971 = vsel %vm4907, %v1356, 0.0
        %v4972 = vsel %vm4908, %v1358, 0.0
        %v4973 = vsel %vm4909, %v1361, 0.0
        %v4974 = vsel %vm4910, %v1363, 0.0
        %v4975 = vsel %vm4911, %v1366, 0.0
        %v4976 = vsel %vm4912, %v1368, 0.0
        %v4977 = vsel %vm4913, %v1371, 0.0
        %v4978 = vsel %vm4914, %v1373, 0.0
        %v4979 = vsel %vm4915, %v1376, 0.0
        %v4980 = vsel %vm4916, %v1378, 0.0
        %v4981 = vsel %vm4917, %v1381, 0.0
        %v4982 = vsel %vm4918, %v1383, 0.0
        %v4983 = vsel %vm4919, %v1386, 0.0
        %v4984 = vsel %vm4920, %v1388, 0.0
        %v4985 = vsel %vm4921, %v1391, 0.0
        %v4986 = vsel %vm4922, %v1393, 0.0
        %v4987 = vsel %vm4923, %v1396, 0.0
        %v4988 = vsel %vm4924, %v1398, 0.0
        %v4989 = vadd.s32 %v1033, 1
        %v4990 = vadd.s32 %v1034, 1
        %v4991 = vadd.s32 %v1035, 1
        %v4992 = vadd.s32 %v1036, 1
        %v4993 = vadd.s32 %v1037, 1
        %v4994 = vadd.s32 %v1038, 1
        %v4995 = vadd.s32 %v1039, 1
        %v4996 = vadd.s32 %v1040, 1
        %v4997 = vadd.s32 %v1041, 1
        %v4998 = vadd.s32 %v1042, 1
        %v4999 = vadd.s32 %v1043, 1
        %v5000 = vadd.s32 %v1044, 1
        %v5001 = vadd.s32 %v1045, 1
        %v5002 = vadd.s32 %v1046, 1
        %v5003 = vadd.s32 %v1047, 1
        %v5004 = vadd.s32 %v1048, 1
        %v5005 = vadd.s32 %v1049, 1
        %v5006 = vadd.s32 %v1050, 1
        %v5007 = vadd.s32 %v1051, 1
        %v5008 = vadd.s32 %v1052, 1
        %v5009 = vadd.s32 %v1053, 1
        %v5010 = vadd.s32 %v1054, 1
        %v5011 = vadd.s32 %v1055, 1
        %v5012 = vadd.s32 %v1056, 1
        %v5013 = vadd.s32 %v1057, 1
        %v5014 = vadd.s32 %v1058, 1
        %v5015 = vadd.s32 %v1059, 1
        %v5016 = vadd.s32 %v1060, 1
        %v5017 = vadd.s32 %v1061, 1
        %v5018 = vadd.s32 %v1062, 1
        %v5019 = vadd.s32 %v1063, 1
        %v5020 = vadd.s32 %v1064, 1
        %v5021 = vadd.s32 %v1065, 1
        %v5022 = vadd.s32 %v1066, 1
        %v5023 = vadd.s32 %v1067, 1
        %v5024 = vadd.s32 %v1068, 1
        %v5025 = vadd.s32 %v1069, 1
        %v5026 = vadd.s32 %v1070, 1
        %v5027 = vadd.s32 %v1071, 1
        %v5028 = vadd.s32 %v1072, 1
        %v5029 = vadd.s32 %v1073, 1
        %v5030 = vadd.s32 %v1074, 1
        %v5031 = vadd.s32 %v1075, 1
        %v5032 = vadd.s32 %v1076, 1
        %v5033 = vadd.s32 %v1077, 1
        %v5034 = vadd.s32 %v1078, 1
        %v5035 = vadd.s32 %v1079, 1
        %v5036 = vadd.s32 %v1080, 1
        %v5037 = vadd.s32 %v1081, 1
        %v5038 = vadd.s32 %v1082, 1
        %v5039 = vadd.s32 %v1083, 1
        %v5040 = vadd.s32 %v1084, 1
        %v5041 = vadd.s32 %v1085, 1
        %v5042 = vadd.s32 %v1086, 1
        %v5043 = vadd.s32 %v1087, 1
        %v5044 = vadd.s32 %v1088, 1
        %v5045 = vadd.s32 %v1089, 1
        %v5046 = vadd.s32 %v1090, 1
        %v5047 = vadd.s32 %v1091, 1
        %v5048 = vadd.s32 %v1092, 1
        %v5049 = vadd.s32 %v1093, 1
        %v5050 = vadd.s32 %v1094, 1
        %v5051 = vadd.s32 %v1095, 1
        %v5052 = vadd.s32 %v1096, 1
        %vm5053 = vcmp.ge.s32.totalorder %v4989, 0
        %vm5054 = vcmp.ge.s32.totalorder %v4990, 0
        %vm5055 = vcmp.ge.s32.totalorder %v4991, 0
        %vm5056 = vcmp.ge.s32.totalorder %v4992, 0
        %vm5057 = vcmp.ge.s32.totalorder %v4993, 0
        %vm5058 = vcmp.ge.s32.totalorder %v4994, 0
        %vm5059 = vcmp.ge.s32.totalorder %v4995, 0
        %vm5060 = vcmp.ge.s32.totalorder %v4996, 0
        %vm5061 = vcmp.ge.s32.totalorder %v4997, 0
        %vm5062 = vcmp.ge.s32.totalorder %v4998, 0
        %vm5063 = vcmp.ge.s32.totalorder %v4999, 0
        %vm5064 = vcmp.ge.s32.totalorder %v5000, 0
        %vm5065 = vcmp.ge.s32.totalorder %v5001, 0
        %vm5066 = vcmp.ge.s32.totalorder %v5002, 0
        %vm5067 = vcmp.ge.s32.totalorder %v5003, 0
        %vm5068 = vcmp.ge.s32.totalorder %v5004, 0
        %vm5069 = vcmp.ge.s32.totalorder %v5005, 0
        %vm5070 = vcmp.ge.s32.totalorder %v5006, 0
        %vm5071 = vcmp.ge.s32.totalorder %v5007, 0
        %vm5072 = vcmp.ge.s32.totalorder %v5008, 0
        %vm5073 = vcmp.ge.s32.totalorder %v5009, 0
        %vm5074 = vcmp.ge.s32.totalorder %v5010, 0
        %vm5075 = vcmp.ge.s32.totalorder %v5011, 0
        %vm5076 = vcmp.ge.s32.totalorder %v5012, 0
        %vm5077 = vcmp.ge.s32.totalorder %v5013, 0
        %vm5078 = vcmp.ge.s32.totalorder %v5014, 0
        %vm5079 = vcmp.ge.s32.totalorder %v5015, 0
        %vm5080 = vcmp.ge.s32.totalorder %v5016, 0
        %vm5081 = vcmp.ge.s32.totalorder %v5017, 0
        %vm5082 = vcmp.ge.s32.totalorder %v5018, 0
        %vm5083 = vcmp.ge.s32.totalorder %v5019, 0
        %vm5084 = vcmp.ge.s32.totalorder %v5020, 0
        %vm5085 = vcmp.ge.s32.totalorder %v5021, 0
        %vm5086 = vcmp.ge.s32.totalorder %v5022, 0
        %vm5087 = vcmp.ge.s32.totalorder %v5023, 0
        %vm5088 = vcmp.ge.s32.totalorder %v5024, 0
        %vm5089 = vcmp.ge.s32.totalorder %v5025, 0
        %vm5090 = vcmp.ge.s32.totalorder %v5026, 0
        %vm5091 = vcmp.ge.s32.totalorder %v5027, 0
        %vm5092 = vcmp.ge.s32.totalorder %v5028, 0
        %vm5093 = vcmp.ge.s32.totalorder %v5029, 0
        %vm5094 = vcmp.ge.s32.totalorder %v5030, 0
        %vm5095 = vcmp.ge.s32.totalorder %v5031, 0
        %vm5096 = vcmp.ge.s32.totalorder %v5032, 0
        %vm5097 = vcmp.ge.s32.totalorder %v5033, 0
        %vm5098 = vcmp.ge.s32.totalorder %v5034, 0
        %vm5099 = vcmp.ge.s32.totalorder %v5035, 0
        %vm5100 = vcmp.ge.s32.totalorder %v5036, 0
        %vm5101 = vcmp.ge.s32.totalorder %v5037, 0
        %vm5102 = vcmp.ge.s32.totalorder %v5038, 0
        %vm5103 = vcmp.ge.s32.totalorder %v5039, 0
        %vm5104 = vcmp.ge.s32.totalorder %v5040, 0
        %vm5105 = vcmp.ge.s32.totalorder %v5041, 0
        %vm5106 = vcmp.ge.s32.totalorder %v5042, 0
        %vm5107 = vcmp.ge.s32.totalorder %v5043, 0
        %vm5108 = vcmp.ge.s32.totalorder %v5044, 0
        %vm5109 = vcmp.ge.s32.totalorder %v5045, 0
        %vm5110 = vcmp.ge.s32.totalorder %v5046, 0
        %vm5111 = vcmp.ge.s32.totalorder %v5047, 0
        %vm5112 = vcmp.ge.s32.totalorder %v5048, 0
        %vm5113 = vcmp.ge.s32.totalorder %v5049, 0
        %vm5114 = vcmp.ge.s32.totalorder %v5050, 0
        %vm5115 = vcmp.ge.s32.totalorder %v5051, 0
        %vm5116 = vcmp.ge.s32.totalorder %v5052, 0
        %vm5117 = vcmp.lt.s32.totalorder %v4989, 16
        %vm5118 = vcmp.lt.s32.totalorder %v4990, 16
        %vm5119 = vcmp.lt.s32.totalorder %v4991, 16
        %vm5120 = vcmp.lt.s32.totalorder %v4992, 16
        %vm5121 = vcmp.lt.s32.totalorder %v4993, 16
        %vm5122 = vcmp.lt.s32.totalorder %v4994, 16
        %vm5123 = vcmp.lt.s32.totalorder %v4995, 16
        %vm5124 = vcmp.lt.s32.totalorder %v4996, 16
        %vm5125 = vcmp.lt.s32.totalorder %v4997, 16
        %vm5126 = vcmp.lt.s32.totalorder %v4998, 16
        %vm5127 = vcmp.lt.s32.totalorder %v4999, 16
        %vm5128 = vcmp.lt.s32.totalorder %v5000, 16
        %vm5129 = vcmp.lt.s32.totalorder %v5001, 16
        %vm5130 = vcmp.lt.s32.totalorder %v5002, 16
        %vm5131 = vcmp.lt.s32.totalorder %v5003, 16
        %vm5132 = vcmp.lt.s32.totalorder %v5004, 16
        %vm5133 = vcmp.lt.s32.totalorder %v5005, 16
        %vm5134 = vcmp.lt.s32.totalorder %v5006, 16
        %vm5135 = vcmp.lt.s32.totalorder %v5007, 16
        %vm5136 = vcmp.lt.s32.totalorder %v5008, 16
        %vm5137 = vcmp.lt.s32.totalorder %v5009, 16
        %vm5138 = vcmp.lt.s32.totalorder %v5010, 16
        %vm5139 = vcmp.lt.s32.totalorder %v5011, 16
        %vm5140 = vcmp.lt.s32.totalorder %v5012, 16
        %vm5141 = vcmp.lt.s32.totalorder %v5013, 16
        %vm5142 = vcmp.lt.s32.totalorder %v5014, 16
        %vm5143 = vcmp.lt.s32.totalorder %v5015, 16
        %vm5144 = vcmp.lt.s32.totalorder %v5016, 16
        %vm5145 = vcmp.lt.s32.totalorder %v5017, 16
        %vm5146 = vcmp.lt.s32.totalorder %v5018, 16
        %vm5147 = vcmp.lt.s32.totalorder %v5019, 16
        %vm5148 = vcmp.lt.s32.totalorder %v5020, 16
        %vm5149 = vcmp.lt.s32.totalorder %v5021, 16
        %vm5150 = vcmp.lt.s32.totalorder %v5022, 16
        %vm5151 = vcmp.lt.s32.totalorder %v5023, 16
        %vm5152 = vcmp.lt.s32.totalorder %v5024, 16
        %vm5153 = vcmp.lt.s32.totalorder %v5025, 16
        %vm5154 = vcmp.lt.s32.totalorder %v5026, 16
        %vm5155 = vcmp.lt.s32.totalorder %v5027, 16
        %vm5156 = vcmp.lt.s32.totalorder %v5028, 16
        %vm5157 = vcmp.lt.s32.totalorder %v5029, 16
        %vm5158 = vcmp.lt.s32.totalorder %v5030, 16
        %vm5159 = vcmp.lt.s32.totalorder %v5031, 16
        %vm5160 = vcmp.lt.s32.totalorder %v5032, 16
        %vm5161 = vcmp.lt.s32.totalorder %v5033, 16
        %vm5162 = vcmp.lt.s32.totalorder %v5034, 16
        %vm5163 = vcmp.lt.s32.totalorder %v5035, 16
        %vm5164 = vcmp.lt.s32.totalorder %v5036, 16
        %vm5165 = vcmp.lt.s32.totalorder %v5037, 16
        %vm5166 = vcmp.lt.s32.totalorder %v5038, 16
        %vm5167 = vcmp.lt.s32.totalorder %v5039, 16
        %vm5168 = vcmp.lt.s32.totalorder %v5040, 16
        %vm5169 = vcmp.lt.s32.totalorder %v5041, 16
        %vm5170 = vcmp.lt.s32.totalorder %v5042, 16
        %vm5171 = vcmp.lt.s32.totalorder %v5043, 16
        %vm5172 = vcmp.lt.s32.totalorder %v5044, 16
        %vm5173 = vcmp.lt.s32.totalorder %v5045, 16
        %vm5174 = vcmp.lt.s32.totalorder %v5046, 16
        %vm5175 = vcmp.lt.s32.totalorder %v5047, 16
        %vm5176 = vcmp.lt.s32.totalorder %v5048, 16
        %vm5177 = vcmp.lt.s32.totalorder %v5049, 16
        %vm5178 = vcmp.lt.s32.totalorder %v5050, 16
        %vm5179 = vcmp.lt.s32.totalorder %v5051, 16
        %vm5180 = vcmp.lt.s32.totalorder %v5052, 16
        %vm5181 = vmand %vm5053, %vm5117
        %vm5182 = vmand %vm5054, %vm5118
        %vm5183 = vmand %vm5055, %vm5119
        %vm5184 = vmand %vm5056, %vm5120
        %vm5185 = vmand %vm5057, %vm5121
        %vm5186 = vmand %vm5058, %vm5122
        %vm5187 = vmand %vm5059, %vm5123
        %vm5188 = vmand %vm5060, %vm5124
        %vm5189 = vmand %vm5061, %vm5125
        %vm5190 = vmand %vm5062, %vm5126
        %vm5191 = vmand %vm5063, %vm5127
        %vm5192 = vmand %vm5064, %vm5128
        %vm5193 = vmand %vm5065, %vm5129
        %vm5194 = vmand %vm5066, %vm5130
        %vm5195 = vmand %vm5067, %vm5131
        %vm5196 = vmand %vm5068, %vm5132
        %vm5197 = vmand %vm5069, %vm5133
        %vm5198 = vmand %vm5070, %vm5134
        %vm5199 = vmand %vm5071, %vm5135
        %vm5200 = vmand %vm5072, %vm5136
        %vm5201 = vmand %vm5073, %vm5137
        %vm5202 = vmand %vm5074, %vm5138
        %vm5203 = vmand %vm5075, %vm5139
        %vm5204 = vmand %vm5076, %vm5140
        %vm5205 = vmand %vm5077, %vm5141
        %vm5206 = vmand %vm5078, %vm5142
        %vm5207 = vmand %vm5079, %vm5143
        %vm5208 = vmand %vm5080, %vm5144
        %vm5209 = vmand %vm5081, %vm5145
        %vm5210 = vmand %vm5082, %vm5146
        %vm5211 = vmand %vm5083, %vm5147
        %vm5212 = vmand %vm5084, %vm5148
        %vm5213 = vmand %vm5085, %vm5149
        %vm5214 = vmand %vm5086, %vm5150
        %vm5215 = vmand %vm5087, %vm5151
        %vm5216 = vmand %vm5088, %vm5152
        %vm5217 = vmand %vm5089, %vm5153
        %vm5218 = vmand %vm5090, %vm5154
        %vm5219 = vmand %vm5091, %vm5155
        %vm5220 = vmand %vm5092, %vm5156
        %vm5221 = vmand %vm5093, %vm5157
        %vm5222 = vmand %vm5094, %vm5158
        %vm5223 = vmand %vm5095, %vm5159
        %vm5224 = vmand %vm5096, %vm5160
        %vm5225 = vmand %vm5097, %vm5161
        %vm5226 = vmand %vm5098, %vm5162
        %vm5227 = vmand %vm5099, %vm5163
        %vm5228 = vmand %vm5100, %vm5164
        %vm5229 = vmand %vm5101, %vm5165
        %vm5230 = vmand %vm5102, %vm5166
        %vm5231 = vmand %vm5103, %vm5167
        %vm5232 = vmand %vm5104, %vm5168
        %vm5233 = vmand %vm5105, %vm5169
        %vm5234 = vmand %vm5106, %vm5170
        %vm5235 = vmand %vm5107, %vm5171
        %vm5236 = vmand %vm5108, %vm5172
        %vm5237 = vmand %vm5109, %vm5173
        %vm5238 = vmand %vm5110, %vm5174
        %vm5239 = vmand %vm5111, %vm5175
        %vm5240 = vmand %vm5112, %vm5176
        %vm5241 = vmand %vm5113, %vm5177
        %vm5242 = vmand %vm5114, %vm5178
        %vm5243 = vmand %vm5115, %vm5179
        %vm5244 = vmand %vm5116, %vm5180
        %v5245 = vrot.slane %v1241, 1
        %v5246 = vrot.slane %v1243, 1
        %v5247 = vrot.slane %v1246, 1
        %v5248 = vrot.slane %v1248, 1
        %v5249 = vrot.slane %v1251, 1
        %v5250 = vrot.slane %v1253, 1
        %v5251 = vrot.slane %v1256, 1
        %v5252 = vrot.slane %v1258, 1
        %v5253 = vrot.slane %v1261, 1
        %v5254 = vrot.slane %v1263, 1
        %v5255 = vrot.slane %v1266, 1
        %v5256 = vrot.slane %v1268, 1
        %v5257 = vrot.slane %v1271, 1
        %v5258 = vrot.slane %v1273, 1
        %v5259 = vrot.slane %v1276, 1
        %v5260 = vrot.slane %v1278, 1
        %v5261 = vrot.slane %v1281, 1
        %v5262 = vrot.slane %v1283, 1
        %v5263 = vrot.slane %v1286, 1
        %v5264 = vrot.slane %v1288, 1
        %v5265 = vrot.slane %v1291, 1
        %v5266 = vrot.slane %v1293, 1
        %v5267 = vrot.slane %v1296, 1
        %v5268 = vrot.slane %v1298, 1
        %v5269 = vrot.slane %v1301, 1
        %v5270 = vrot.slane %v1303, 1
        %v5271 = vrot.slane %v1306, 1
        %v5272 = vrot.slane %v1308, 1
        %v5273 = vrot.slane %v1311, 1
        %v5274 = vrot.slane %v1313, 1
        %v5275 = vrot.slane %v1316, 1
        %v5276 = vrot.slane %v1318, 1
        %v5277 = vrot.slane %v1321, 1
        %v5278 = vrot.slane %v1323, 1
        %v5279 = vrot.slane %v1326, 1
        %v5280 = vrot.slane %v1328, 1
        %v5281 = vrot.slane %v1331, 1
        %v5282 = vrot.slane %v1333, 1
        %v5283 = vrot.slane %v1336, 1
        %v5284 = vrot.slane %v1338, 1
        %v5285 = vrot.slane %v1341, 1
        %v5286 = vrot.slane %v1343, 1
        %v5287 = vrot.slane %v1346, 1
        %v5288 = vrot.slane %v1348, 1
        %v5289 = vrot.slane %v1351, 1
        %v5290 = vrot.slane %v1353, 1
        %v5291 = vrot.slane %v1356, 1
        %v5292 = vrot.slane %v1358, 1
        %v5293 = vrot.slane %v1361, 1
        %v5294 = vrot.slane %v1363, 1
        %v5295 = vrot.slane %v1366, 1
        %v5296 = vrot.slane %v1368, 1
        %v5297 = vrot.slane %v1371, 1
        %v5298 = vrot.slane %v1373, 1
        %v5299 = vrot.slane %v1376, 1
        %v5300 = vrot.slane %v1378, 1
        %v5301 = vrot.slane %v1381, 1
        %v5302 = vrot.slane %v1383, 1
        %v5303 = vrot.slane %v1386, 1
        %v5304 = vrot.slane %v1388, 1
        %v5305 = vrot.slane %v1391, 1
        %v5306 = vrot.slane %v1393, 1
        %v5307 = vrot.slane %v1396, 1
        %v5308 = vrot.slane %v1398, 1
        %v5309 = vsel %vm1913, %v5307, %v5308
        %v5310 = vsel %vm1913, %v5306, %v5307
        %v5311 = vsel %vm1913, %v5305, %v5306
        %v5312 = vsel %vm1913, %v5304, %v5305
        %v5313 = vsel %vm1913, %v5303, %v5304
        %v5314 = vsel %vm1913, %v5302, %v5303
        %v5315 = vsel %vm1913, %v5301, %v5302
        %v5316 = vsel %vm1913, %v5300, %v5301
        %v5317 = vsel %vm1913, %v5299, %v5300
        %v5318 = vsel %vm1913, %v5298, %v5299
        %v5319 = vsel %vm1913, %v5297, %v5298
        %v5320 = vsel %vm1913, %v5296, %v5297
        %v5321 = vsel %vm1913, %v5295, %v5296
        %v5322 = vsel %vm1913, %v5294, %v5295
        %v5323 = vsel %vm1913, %v5293, %v5294
        %v5324 = vsel %vm1913, %v5292, %v5293
        %v5325 = vsel %vm1913, %v5291, %v5292
        %v5326 = vsel %vm1913, %v5290, %v5291
        %v5327 = vsel %vm1913, %v5289, %v5290
        %v5328 = vsel %vm1913, %v5288, %v5289
        %v5329 = vsel %vm1913, %v5287, %v5288
        %v5330 = vsel %vm1913, %v5286, %v5287
        %v5331 = vsel %vm1913, %v5285, %v5286
        %v5332 = vsel %vm1913, %v5284, %v5285
        %v5333 = vsel %vm1913, %v5283, %v5284
        %v5334 = vsel %vm1913, %v5282, %v5283
        %v5335 = vsel %vm1913, %v5281, %v5282
        %v5336 = vsel %vm1913, %v5280, %v5281
        %v5337 = vsel %vm1913, %v5279, %v5280
        %v5338 = vsel %vm1913, %v5278, %v5279
        %v5339 = vsel %vm1913, %v5277, %v5278
        %v5340 = vsel %vm1913, %v5276, %v5277
        %v5341 = vsel %vm1913, %v5275, %v5276
        %v5342 = vsel %vm1913, %v5274, %v5275
        %v5343 = vsel %vm1913, %v5273, %v5274
        %v5344 = vsel %vm1913, %v5272, %v5273
        %v5345 = vsel %vm1913, %v5271, %v5272
        %v5346 = vsel %vm1913, %v5270, %v5271
        %v5347 = vsel %vm1913, %v5269, %v5270
        %v5348 = vsel %vm1913, %v5268, %v5269
        %v5349 = vsel %vm1913, %v5267, %v5268
        %v5350 = vsel %vm1913, %v5266, %v5267
        %v5351 = vsel %vm1913, %v5265, %v5266
        %v5352 = vsel %vm1913, %v5264, %v5265
        %v5353 = vsel %vm1913, %v5263, %v5264
        %v5354 = vsel %vm1913, %v5262, %v5263
        %v5355 = vsel %vm1913, %v5261, %v5262
        %v5356 = vsel %vm1913, %v5260, %v5261
        %v5357 = vsel %vm1913, %v5259, %v5260
        %v5358 = vsel %vm1913, %v5258, %v5259
        %v5359 = vsel %vm1913, %v5257, %v5258
        %v5360 = vsel %vm1913, %v5256, %v5257
        %v5361 = vsel %vm1913, %v5255, %v5256
        %v5362 = vsel %vm1913, %v5254, %v5255
        %v5363 = vsel %vm1913, %v5253, %v5254
        %v5364 = vsel %vm1913, %v5252, %v5253
        %v5365 = vsel %vm1913, %v5251, %v5252
        %v5366 = vsel %vm1913, %v5250, %v5251
        %v5367 = vsel %vm1913, %v5249, %v5250
        %v5368 = vsel %vm1913, %v5248, %v5249
        %v5369 = vsel %vm1913, %v5247, %v5248
        %v5370 = vsel %vm1913, %v5246, %v5247
        %v5371 = vsel %vm1913, %v5245, %v5246
        %v5372 = vsel %vm1913, %v5308, %v5245
        %v5373 = vsel %vm5181, 1, 0
        %v5374 = vsel %vm5182, 1, 0
        %v5375 = vsel %vm5183, 1, 0
        %v5376 = vsel %vm5184, 1, 0
        %v5377 = vsel %vm5185, 1, 0
        %v5378 = vsel %vm5186, 1, 0
        %v5379 = vsel %vm5187, 1, 0
        %v5380 = vsel %vm5188, 1, 0
        %v5381 = vsel %vm5189, 1, 0
        %v5382 = vsel %vm5190, 1, 0
        %v5383 = vsel %vm5191, 1, 0
        %v5384 = vsel %vm5192, 1, 0
        %v5385 = vsel %vm5193, 1, 0
        %v5386 = vsel %vm5194, 1, 0
        %v5387 = vsel %vm5195, 1, 0
        %v5388 = vsel %vm5196, 1, 0
        %v5389 = vsel %vm5197, 1, 0
        %v5390 = vsel %vm5198, 1, 0
        %v5391 = vsel %vm5199, 1, 0
        %v5392 = vsel %vm5200, 1, 0
        %v5393 = vsel %vm5201, 1, 0
        %v5394 = vsel %vm5202, 1, 0
        %v5395 = vsel %vm5203, 1, 0
        %v5396 = vsel %vm5204, 1, 0
        %v5397 = vsel %vm5205, 1, 0
        %v5398 = vsel %vm5206, 1, 0
        %v5399 = vsel %vm5207, 1, 0
        %v5400 = vsel %vm5208, 1, 0
        %v5401 = vsel %vm5209, 1, 0
        %v5402 = vsel %vm5210, 1, 0
        %v5403 = vsel %vm5211, 1, 0
        %v5404 = vsel %vm5212, 1, 0
        %v5405 = vsel %vm5213, 1, 0
        %v5406 = vsel %vm5214, 1, 0
        %v5407 = vsel %vm5215, 1, 0
        %v5408 = vsel %vm5216, 1, 0
        %v5409 = vsel %vm5217, 1, 0
        %v5410 = vsel %vm5218, 1, 0
        %v5411 = vsel %vm5219, 1, 0
        %v5412 = vsel %vm5220, 1, 0
        %v5413 = vsel %vm5221, 1, 0
        %v5414 = vsel %vm5222, 1, 0
        %v5415 = vsel %vm5223, 1, 0
        %v5416 = vsel %vm5224, 1, 0
        %v5417 = vsel %vm5225, 1, 0
        %v5418 = vsel %vm5226, 1, 0
        %v5419 = vsel %vm5227, 1, 0
        %v5420 = vsel %vm5228, 1, 0
        %v5421 = vsel %vm5229, 1, 0
        %v5422 = vsel %vm5230, 1, 0
        %v5423 = vsel %vm5231, 1, 0
        %v5424 = vsel %vm5232, 1, 0
        %v5425 = vsel %vm5233, 1, 0
        %v5426 = vsel %vm5234, 1, 0
        %v5427 = vsel %vm5235, 1, 0
        %v5428 = vsel %vm5236, 1, 0
        %v5429 = vsel %vm5237, 1, 0
        %v5430 = vsel %vm5238, 1, 0
        %v5431 = vsel %vm5239, 1, 0
        %v5432 = vsel %vm5240, 1, 0
        %v5433 = vsel %vm5241, 1, 0
        %v5434 = vsel %vm5242, 1, 0
        %v5435 = vsel %vm5243, 1, 0
        %v5436 = vsel %vm5244, 1, 0
        %vm5437 = vcmp.eq.s32.totalorder %v5373, 1
        %vm5438 = vcmp.eq.s32.totalorder %v5374, 1
        %vm5439 = vcmp.eq.s32.totalorder %v5375, 1
        %vm5440 = vcmp.eq.s32.totalorder %v5376, 1
        %vm5441 = vcmp.eq.s32.totalorder %v5377, 1
        %vm5442 = vcmp.eq.s32.totalorder %v5378, 1
        %vm5443 = vcmp.eq.s32.totalorder %v5379, 1
        %vm5444 = vcmp.eq.s32.totalorder %v5380, 1
        %vm5445 = vcmp.eq.s32.totalorder %v5381, 1
        %vm5446 = vcmp.eq.s32.totalorder %v5382, 1
        %vm5447 = vcmp.eq.s32.totalorder %v5383, 1
        %vm5448 = vcmp.eq.s32.totalorder %v5384, 1
        %vm5449 = vcmp.eq.s32.totalorder %v5385, 1
        %vm5450 = vcmp.eq.s32.totalorder %v5386, 1
        %vm5451 = vcmp.eq.s32.totalorder %v5387, 1
        %vm5452 = vcmp.eq.s32.totalorder %v5388, 1
        %vm5453 = vcmp.eq.s32.totalorder %v5389, 1
        %vm5454 = vcmp.eq.s32.totalorder %v5390, 1
        %vm5455 = vcmp.eq.s32.totalorder %v5391, 1
        %vm5456 = vcmp.eq.s32.totalorder %v5392, 1
        %vm5457 = vcmp.eq.s32.totalorder %v5393, 1
        %vm5458 = vcmp.eq.s32.totalorder %v5394, 1
        %vm5459 = vcmp.eq.s32.totalorder %v5395, 1
        %vm5460 = vcmp.eq.s32.totalorder %v5396, 1
        %vm5461 = vcmp.eq.s32.totalorder %v5397, 1
        %vm5462 = vcmp.eq.s32.totalorder %v5398, 1
        %vm5463 = vcmp.eq.s32.totalorder %v5399, 1
        %vm5464 = vcmp.eq.s32.totalorder %v5400, 1
        %vm5465 = vcmp.eq.s32.totalorder %v5401, 1
        %vm5466 = vcmp.eq.s32.totalorder %v5402, 1
        %vm5467 = vcmp.eq.s32.totalorder %v5403, 1
        %vm5468 = vcmp.eq.s32.totalorder %v5404, 1
        %vm5469 = vcmp.eq.s32.totalorder %v5405, 1
        %vm5470 = vcmp.eq.s32.totalorder %v5406, 1
        %vm5471 = vcmp.eq.s32.totalorder %v5407, 1
        %vm5472 = vcmp.eq.s32.totalorder %v5408, 1
        %vm5473 = vcmp.eq.s32.totalorder %v5409, 1
        %vm5474 = vcmp.eq.s32.totalorder %v5410, 1
        %vm5475 = vcmp.eq.s32.totalorder %v5411, 1
        %vm5476 = vcmp.eq.s32.totalorder %v5412, 1
        %vm5477 = vcmp.eq.s32.totalorder %v5413, 1
        %vm5478 = vcmp.eq.s32.totalorder %v5414, 1
        %vm5479 = vcmp.eq.s32.totalorder %v5415, 1
        %vm5480 = vcmp.eq.s32.totalorder %v5416, 1
        %vm5481 = vcmp.eq.s32.totalorder %v5417, 1
        %vm5482 = vcmp.eq.s32.totalorder %v5418, 1
        %vm5483 = vcmp.eq.s32.totalorder %v5419, 1
        %vm5484 = vcmp.eq.s32.totalorder %v5420, 1
        %vm5485 = vcmp.eq.s32.totalorder %v5421, 1
        %vm5486 = vcmp.eq.s32.totalorder %v5422, 1
        %vm5487 = vcmp.eq.s32.totalorder %v5423, 1
        %vm5488 = vcmp.eq.s32.totalorder %v5424, 1
        %vm5489 = vcmp.eq.s32.totalorder %v5425, 1
        %vm5490 = vcmp.eq.s32.totalorder %v5426, 1
        %vm5491 = vcmp.eq.s32.totalorder %v5427, 1
        %vm5492 = vcmp.eq.s32.totalorder %v5428, 1
        %vm5493 = vcmp.eq.s32.totalorder %v5429, 1
        %vm5494 = vcmp.eq.s32.totalorder %v5430, 1
        %vm5495 = vcmp.eq.s32.totalorder %v5431, 1
        %vm5496 = vcmp.eq.s32.totalorder %v5432, 1
        %vm5497 = vcmp.eq.s32.totalorder %v5433, 1
        %vm5498 = vcmp.eq.s32.totalorder %v5434, 1
        %vm5499 = vcmp.eq.s32.totalorder %v5435, 1
        %vm5500 = vcmp.eq.s32.totalorder %v5436, 1
        %v5501 = vsel %vm5437, %v5371, 0.0
        %v5502 = vsel %vm5438, %v5370, 0.0
        %v5503 = vsel %vm5439, %v5369, 0.0
        %v5504 = vsel %vm5440, %v5368, 0.0
        %v5505 = vsel %vm5441, %v5367, 0.0
        %v5506 = vsel %vm5442, %v5366, 0.0
        %v5507 = vsel %vm5443, %v5365, 0.0
        %v5508 = vsel %vm5444, %v5364, 0.0
        %v5509 = vsel %vm5445, %v5363, 0.0
        %v5510 = vsel %vm5446, %v5362, 0.0
        %v5511 = vsel %vm5447, %v5361, 0.0
        %v5512 = vsel %vm5448, %v5360, 0.0
        %v5513 = vsel %vm5449, %v5359, 0.0
        %v5514 = vsel %vm5450, %v5358, 0.0
        %v5515 = vsel %vm5451, %v5357, 0.0
        %v5516 = vsel %vm5452, %v5356, 0.0
        %v5517 = vsel %vm5453, %v5355, 0.0
        %v5518 = vsel %vm5454, %v5354, 0.0
        %v5519 = vsel %vm5455, %v5353, 0.0
        %v5520 = vsel %vm5456, %v5352, 0.0
        %v5521 = vsel %vm5457, %v5351, 0.0
        %v5522 = vsel %vm5458, %v5350, 0.0
        %v5523 = vsel %vm5459, %v5349, 0.0
        %v5524 = vsel %vm5460, %v5348, 0.0
        %v5525 = vsel %vm5461, %v5347, 0.0
        %v5526 = vsel %vm5462, %v5346, 0.0
        %v5527 = vsel %vm5463, %v5345, 0.0
        %v5528 = vsel %vm5464, %v5344, 0.0
        %v5529 = vsel %vm5465, %v5343, 0.0
        %v5530 = vsel %vm5466, %v5342, 0.0
        %v5531 = vsel %vm5467, %v5341, 0.0
        %v5532 = vsel %vm5468, %v5340, 0.0
        %v5533 = vsel %vm5469, %v5339, 0.0
        %v5534 = vsel %vm5470, %v5338, 0.0
        %v5535 = vsel %vm5471, %v5337, 0.0
        %v5536 = vsel %vm5472, %v5336, 0.0
        %v5537 = vsel %vm5473, %v5335, 0.0
        %v5538 = vsel %vm5474, %v5334, 0.0
        %v5539 = vsel %vm5475, %v5333, 0.0
        %v5540 = vsel %vm5476, %v5332, 0.0
        %v5541 = vsel %vm5477, %v5331, 0.0
        %v5542 = vsel %vm5478, %v5330, 0.0
        %v5543 = vsel %vm5479, %v5329, 0.0
        %v5544 = vsel %vm5480, %v5328, 0.0
        %v5545 = vsel %vm5481, %v5327, 0.0
        %v5546 = vsel %vm5482, %v5326, 0.0
        %v5547 = vsel %vm5483, %v5325, 0.0
        %v5548 = vsel %vm5484, %v5324, 0.0
        %v5549 = vsel %vm5485, %v5323, 0.0
        %v5550 = vsel %vm5486, %v5322, 0.0
        %v5551 = vsel %vm5487, %v5321, 0.0
        %v5552 = vsel %vm5488, %v5320, 0.0
        %v5553 = vsel %vm5489, %v5319, 0.0
        %v5554 = vsel %vm5490, %v5318, 0.0
        %v5555 = vsel %vm5491, %v5317, 0.0
        %v5556 = vsel %vm5492, %v5316, 0.0
        %v5557 = vsel %vm5493, %v5315, 0.0
        %v5558 = vsel %vm5494, %v5314, 0.0
        %v5559 = vsel %vm5495, %v5313, 0.0
        %v5560 = vsel %vm5496, %v5312, 0.0
        %v5561 = vsel %vm5497, %v5311, 0.0
        %v5562 = vsel %vm5498, %v5310, 0.0
        %v5563 = vsel %vm5499, %v5309, 0.0
        %v5564 = vsel %vm5500, %v5372, 0.0
        %v5565 = vadd.s32 %v1033, 2
        %v5566 = vadd.s32 %v1034, 2
        %v5567 = vadd.s32 %v1035, 2
        %v5568 = vadd.s32 %v1036, 2
        %v5569 = vadd.s32 %v1037, 2
        %v5570 = vadd.s32 %v1038, 2
        %v5571 = vadd.s32 %v1039, 2
        %v5572 = vadd.s32 %v1040, 2
        %v5573 = vadd.s32 %v1041, 2
        %v5574 = vadd.s32 %v1042, 2
        %v5575 = vadd.s32 %v1043, 2
        %v5576 = vadd.s32 %v1044, 2
        %v5577 = vadd.s32 %v1045, 2
        %v5578 = vadd.s32 %v1046, 2
        %v5579 = vadd.s32 %v1047, 2
        %v5580 = vadd.s32 %v1048, 2
        %v5581 = vadd.s32 %v1049, 2
        %v5582 = vadd.s32 %v1050, 2
        %v5583 = vadd.s32 %v1051, 2
        %v5584 = vadd.s32 %v1052, 2
        %v5585 = vadd.s32 %v1053, 2
        %v5586 = vadd.s32 %v1054, 2
        %v5587 = vadd.s32 %v1055, 2
        %v5588 = vadd.s32 %v1056, 2
        %v5589 = vadd.s32 %v1057, 2
        %v5590 = vadd.s32 %v1058, 2
        %v5591 = vadd.s32 %v1059, 2
        %v5592 = vadd.s32 %v1060, 2
        %v5593 = vadd.s32 %v1061, 2
        %v5594 = vadd.s32 %v1062, 2
        %v5595 = vadd.s32 %v1063, 2
        %v5596 = vadd.s32 %v1064, 2
        %v5597 = vadd.s32 %v1065, 2
        %v5598 = vadd.s32 %v1066, 2
        %v5599 = vadd.s32 %v1067, 2
        %v5600 = vadd.s32 %v1068, 2
        %v5601 = vadd.s32 %v1069, 2
        %v5602 = vadd.s32 %v1070, 2
        %v5603 = vadd.s32 %v1071, 2
        %v5604 = vadd.s32 %v1072, 2
        %v5605 = vadd.s32 %v1073, 2
        %v5606 = vadd.s32 %v1074, 2
        %v5607 = vadd.s32 %v1075, 2
        %v5608 = vadd.s32 %v1076, 2
        %v5609 = vadd.s32 %v1077, 2
        %v5610 = vadd.s32 %v1078, 2
        %v5611 = vadd.s32 %v1079, 2
        %v5612 = vadd.s32 %v1080, 2
        %v5613 = vadd.s32 %v1081, 2
        %v5614 = vadd.s32 %v1082, 2
        %v5615 = vadd.s32 %v1083, 2
        %v5616 = vadd.s32 %v1084, 2
        %v5617 = vadd.s32 %v1085, 2
        %v5618 = vadd.s32 %v1086, 2
        %v5619 = vadd.s32 %v1087, 2
        %v5620 = vadd.s32 %v1088, 2
        %v5621 = vadd.s32 %v1089, 2
        %v5622 = vadd.s32 %v1090, 2
        %v5623 = vadd.s32 %v1091, 2
        %v5624 = vadd.s32 %v1092, 2
        %v5625 = vadd.s32 %v1093, 2
        %v5626 = vadd.s32 %v1094, 2
        %v5627 = vadd.s32 %v1095, 2
        %v5628 = vadd.s32 %v1096, 2
        %vm5629 = vcmp.ge.s32.totalorder %v5565, 0
        %vm5630 = vcmp.ge.s32.totalorder %v5566, 0
        %vm5631 = vcmp.ge.s32.totalorder %v5567, 0
        %vm5632 = vcmp.ge.s32.totalorder %v5568, 0
        %vm5633 = vcmp.ge.s32.totalorder %v5569, 0
        %vm5634 = vcmp.ge.s32.totalorder %v5570, 0
        %vm5635 = vcmp.ge.s32.totalorder %v5571, 0
        %vm5636 = vcmp.ge.s32.totalorder %v5572, 0
        %vm5637 = vcmp.ge.s32.totalorder %v5573, 0
        %vm5638 = vcmp.ge.s32.totalorder %v5574, 0
        %vm5639 = vcmp.ge.s32.totalorder %v5575, 0
        %vm5640 = vcmp.ge.s32.totalorder %v5576, 0
        %vm5641 = vcmp.ge.s32.totalorder %v5577, 0
        %vm5642 = vcmp.ge.s32.totalorder %v5578, 0
        %vm5643 = vcmp.ge.s32.totalorder %v5579, 0
        %vm5644 = vcmp.ge.s32.totalorder %v5580, 0
        %vm5645 = vcmp.ge.s32.totalorder %v5581, 0
        %vm5646 = vcmp.ge.s32.totalorder %v5582, 0
        %vm5647 = vcmp.ge.s32.totalorder %v5583, 0
        %vm5648 = vcmp.ge.s32.totalorder %v5584, 0
        %vm5649 = vcmp.ge.s32.totalorder %v5585, 0
        %vm5650 = vcmp.ge.s32.totalorder %v5586, 0
        %vm5651 = vcmp.ge.s32.totalorder %v5587, 0
        %vm5652 = vcmp.ge.s32.totalorder %v5588, 0
        %vm5653 = vcmp.ge.s32.totalorder %v5589, 0
        %vm5654 = vcmp.ge.s32.totalorder %v5590, 0
        %vm5655 = vcmp.ge.s32.totalorder %v5591, 0
        %vm5656 = vcmp.ge.s32.totalorder %v5592, 0
        %vm5657 = vcmp.ge.s32.totalorder %v5593, 0
        %vm5658 = vcmp.ge.s32.totalorder %v5594, 0
        %vm5659 = vcmp.ge.s32.totalorder %v5595, 0
        %vm5660 = vcmp.ge.s32.totalorder %v5596, 0
        %vm5661 = vcmp.ge.s32.totalorder %v5597, 0
        %vm5662 = vcmp.ge.s32.totalorder %v5598, 0
        %vm5663 = vcmp.ge.s32.totalorder %v5599, 0
        %vm5664 = vcmp.ge.s32.totalorder %v5600, 0
        %vm5665 = vcmp.ge.s32.totalorder %v5601, 0
        %vm5666 = vcmp.ge.s32.totalorder %v5602, 0
        %vm5667 = vcmp.ge.s32.totalorder %v5603, 0
        %vm5668 = vcmp.ge.s32.totalorder %v5604, 0
        %vm5669 = vcmp.ge.s32.totalorder %v5605, 0
        %vm5670 = vcmp.ge.s32.totalorder %v5606, 0
        %vm5671 = vcmp.ge.s32.totalorder %v5607, 0
        %vm5672 = vcmp.ge.s32.totalorder %v5608, 0
        %vm5673 = vcmp.ge.s32.totalorder %v5609, 0
        %vm5674 = vcmp.ge.s32.totalorder %v5610, 0
        %vm5675 = vcmp.ge.s32.totalorder %v5611, 0
        %vm5676 = vcmp.ge.s32.totalorder %v5612, 0
        %vm5677 = vcmp.ge.s32.totalorder %v5613, 0
        %vm5678 = vcmp.ge.s32.totalorder %v5614, 0
        %vm5679 = vcmp.ge.s32.totalorder %v5615, 0
        %vm5680 = vcmp.ge.s32.totalorder %v5616, 0
        %vm5681 = vcmp.ge.s32.totalorder %v5617, 0
        %vm5682 = vcmp.ge.s32.totalorder %v5618, 0
        %vm5683 = vcmp.ge.s32.totalorder %v5619, 0
        %vm5684 = vcmp.ge.s32.totalorder %v5620, 0
        %vm5685 = vcmp.ge.s32.totalorder %v5621, 0
        %vm5686 = vcmp.ge.s32.totalorder %v5622, 0
        %vm5687 = vcmp.ge.s32.totalorder %v5623, 0
        %vm5688 = vcmp.ge.s32.totalorder %v5624, 0
        %vm5689 = vcmp.ge.s32.totalorder %v5625, 0
        %vm5690 = vcmp.ge.s32.totalorder %v5626, 0
        %vm5691 = vcmp.ge.s32.totalorder %v5627, 0
        %vm5692 = vcmp.ge.s32.totalorder %v5628, 0
        %vm5693 = vcmp.lt.s32.totalorder %v5565, 16
        %vm5694 = vcmp.lt.s32.totalorder %v5566, 16
        %vm5695 = vcmp.lt.s32.totalorder %v5567, 16
        %vm5696 = vcmp.lt.s32.totalorder %v5568, 16
        %vm5697 = vcmp.lt.s32.totalorder %v5569, 16
        %vm5698 = vcmp.lt.s32.totalorder %v5570, 16
        %vm5699 = vcmp.lt.s32.totalorder %v5571, 16
        %vm5700 = vcmp.lt.s32.totalorder %v5572, 16
        %vm5701 = vcmp.lt.s32.totalorder %v5573, 16
        %vm5702 = vcmp.lt.s32.totalorder %v5574, 16
        %vm5703 = vcmp.lt.s32.totalorder %v5575, 16
        %vm5704 = vcmp.lt.s32.totalorder %v5576, 16
        %vm5705 = vcmp.lt.s32.totalorder %v5577, 16
        %vm5706 = vcmp.lt.s32.totalorder %v5578, 16
        %vm5707 = vcmp.lt.s32.totalorder %v5579, 16
        %vm5708 = vcmp.lt.s32.totalorder %v5580, 16
        %vm5709 = vcmp.lt.s32.totalorder %v5581, 16
        %vm5710 = vcmp.lt.s32.totalorder %v5582, 16
        %vm5711 = vcmp.lt.s32.totalorder %v5583, 16
        %vm5712 = vcmp.lt.s32.totalorder %v5584, 16
        %vm5713 = vcmp.lt.s32.totalorder %v5585, 16
        %vm5714 = vcmp.lt.s32.totalorder %v5586, 16
        %vm5715 = vcmp.lt.s32.totalorder %v5587, 16
        %vm5716 = vcmp.lt.s32.totalorder %v5588, 16
        %vm5717 = vcmp.lt.s32.totalorder %v5589, 16
        %vm5718 = vcmp.lt.s32.totalorder %v5590, 16
        %vm5719 = vcmp.lt.s32.totalorder %v5591, 16
        %vm5720 = vcmp.lt.s32.totalorder %v5592, 16
        %vm5721 = vcmp.lt.s32.totalorder %v5593, 16
        %vm5722 = vcmp.lt.s32.totalorder %v5594, 16
        %vm5723 = vcmp.lt.s32.totalorder %v5595, 16
        %vm5724 = vcmp.lt.s32.totalorder %v5596, 16
        %vm5725 = vcmp.lt.s32.totalorder %v5597, 16
        %vm5726 = vcmp.lt.s32.totalorder %v5598, 16
        %vm5727 = vcmp.lt.s32.totalorder %v5599, 16
        %vm5728 = vcmp.lt.s32.totalorder %v5600, 16
        %vm5729 = vcmp.lt.s32.totalorder %v5601, 16
        %vm5730 = vcmp.lt.s32.totalorder %v5602, 16
        %vm5731 = vcmp.lt.s32.totalorder %v5603, 16
        %vm5732 = vcmp.lt.s32.totalorder %v5604, 16
        %vm5733 = vcmp.lt.s32.totalorder %v5605, 16
        %vm5734 = vcmp.lt.s32.totalorder %v5606, 16
        %vm5735 = vcmp.lt.s32.totalorder %v5607, 16
        %vm5736 = vcmp.lt.s32.totalorder %v5608, 16
        %vm5737 = vcmp.lt.s32.totalorder %v5609, 16
        %vm5738 = vcmp.lt.s32.totalorder %v5610, 16
        %vm5739 = vcmp.lt.s32.totalorder %v5611, 16
        %vm5740 = vcmp.lt.s32.totalorder %v5612, 16
        %vm5741 = vcmp.lt.s32.totalorder %v5613, 16
        %vm5742 = vcmp.lt.s32.totalorder %v5614, 16
        %vm5743 = vcmp.lt.s32.totalorder %v5615, 16
        %vm5744 = vcmp.lt.s32.totalorder %v5616, 16
        %vm5745 = vcmp.lt.s32.totalorder %v5617, 16
        %vm5746 = vcmp.lt.s32.totalorder %v5618, 16
        %vm5747 = vcmp.lt.s32.totalorder %v5619, 16
        %vm5748 = vcmp.lt.s32.totalorder %v5620, 16
        %vm5749 = vcmp.lt.s32.totalorder %v5621, 16
        %vm5750 = vcmp.lt.s32.totalorder %v5622, 16
        %vm5751 = vcmp.lt.s32.totalorder %v5623, 16
        %vm5752 = vcmp.lt.s32.totalorder %v5624, 16
        %vm5753 = vcmp.lt.s32.totalorder %v5625, 16
        %vm5754 = vcmp.lt.s32.totalorder %v5626, 16
        %vm5755 = vcmp.lt.s32.totalorder %v5627, 16
        %vm5756 = vcmp.lt.s32.totalorder %v5628, 16
        %vm5757 = vmand %vm5629, %vm5693
        %vm5758 = vmand %vm5630, %vm5694
        %vm5759 = vmand %vm5631, %vm5695
        %vm5760 = vmand %vm5632, %vm5696
        %vm5761 = vmand %vm5633, %vm5697
        %vm5762 = vmand %vm5634, %vm5698
        %vm5763 = vmand %vm5635, %vm5699
        %vm5764 = vmand %vm5636, %vm5700
        %vm5765 = vmand %vm5637, %vm5701
        %vm5766 = vmand %vm5638, %vm5702
        %vm5767 = vmand %vm5639, %vm5703
        %vm5768 = vmand %vm5640, %vm5704
        %vm5769 = vmand %vm5641, %vm5705
        %vm5770 = vmand %vm5642, %vm5706
        %vm5771 = vmand %vm5643, %vm5707
        %vm5772 = vmand %vm5644, %vm5708
        %vm5773 = vmand %vm5645, %vm5709
        %vm5774 = vmand %vm5646, %vm5710
        %vm5775 = vmand %vm5647, %vm5711
        %vm5776 = vmand %vm5648, %vm5712
        %vm5777 = vmand %vm5649, %vm5713
        %vm5778 = vmand %vm5650, %vm5714
        %vm5779 = vmand %vm5651, %vm5715
        %vm5780 = vmand %vm5652, %vm5716
        %vm5781 = vmand %vm5653, %vm5717
        %vm5782 = vmand %vm5654, %vm5718
        %vm5783 = vmand %vm5655, %vm5719
        %vm5784 = vmand %vm5656, %vm5720
        %vm5785 = vmand %vm5657, %vm5721
        %vm5786 = vmand %vm5658, %vm5722
        %vm5787 = vmand %vm5659, %vm5723
        %vm5788 = vmand %vm5660, %vm5724
        %vm5789 = vmand %vm5661, %vm5725
        %vm5790 = vmand %vm5662, %vm5726
        %vm5791 = vmand %vm5663, %vm5727
        %vm5792 = vmand %vm5664, %vm5728
        %vm5793 = vmand %vm5665, %vm5729
        %vm5794 = vmand %vm5666, %vm5730
        %vm5795 = vmand %vm5667, %vm5731
        %vm5796 = vmand %vm5668, %vm5732
        %vm5797 = vmand %vm5669, %vm5733
        %vm5798 = vmand %vm5670, %vm5734
        %vm5799 = vmand %vm5671, %vm5735
        %vm5800 = vmand %vm5672, %vm5736
        %vm5801 = vmand %vm5673, %vm5737
        %vm5802 = vmand %vm5674, %vm5738
        %vm5803 = vmand %vm5675, %vm5739
        %vm5804 = vmand %vm5676, %vm5740
        %vm5805 = vmand %vm5677, %vm5741
        %vm5806 = vmand %vm5678, %vm5742
        %vm5807 = vmand %vm5679, %vm5743
        %vm5808 = vmand %vm5680, %vm5744
        %vm5809 = vmand %vm5681, %vm5745
        %vm5810 = vmand %vm5682, %vm5746
        %vm5811 = vmand %vm5683, %vm5747
        %vm5812 = vmand %vm5684, %vm5748
        %vm5813 = vmand %vm5685, %vm5749
        %vm5814 = vmand %vm5686, %vm5750
        %vm5815 = vmand %vm5687, %vm5751
        %vm5816 = vmand %vm5688, %vm5752
        %vm5817 = vmand %vm5689, %vm5753
        %vm5818 = vmand %vm5690, %vm5754
        %vm5819 = vmand %vm5691, %vm5755
        %vm5820 = vmand %vm5692, %vm5756
        %v5821 = vrot.slane %v1241, 2
        %v5822 = vrot.slane %v1243, 2
        %v5823 = vrot.slane %v1246, 2
        %v5824 = vrot.slane %v1248, 2
        %v5825 = vrot.slane %v1251, 2
        %v5826 = vrot.slane %v1253, 2
        %v5827 = vrot.slane %v1256, 2
        %v5828 = vrot.slane %v1258, 2
        %v5829 = vrot.slane %v1261, 2
        %v5830 = vrot.slane %v1263, 2
        %v5831 = vrot.slane %v1266, 2
        %v5832 = vrot.slane %v1268, 2
        %v5833 = vrot.slane %v1271, 2
        %v5834 = vrot.slane %v1273, 2
        %v5835 = vrot.slane %v1276, 2
        %v5836 = vrot.slane %v1278, 2
        %v5837 = vrot.slane %v1281, 2
        %v5838 = vrot.slane %v1283, 2
        %v5839 = vrot.slane %v1286, 2
        %v5840 = vrot.slane %v1288, 2
        %v5841 = vrot.slane %v1291, 2
        %v5842 = vrot.slane %v1293, 2
        %v5843 = vrot.slane %v1296, 2
        %v5844 = vrot.slane %v1298, 2
        %v5845 = vrot.slane %v1301, 2
        %v5846 = vrot.slane %v1303, 2
        %v5847 = vrot.slane %v1306, 2
        %v5848 = vrot.slane %v1308, 2
        %v5849 = vrot.slane %v1311, 2
        %v5850 = vrot.slane %v1313, 2
        %v5851 = vrot.slane %v1316, 2
        %v5852 = vrot.slane %v1318, 2
        %v5853 = vrot.slane %v1321, 2
        %v5854 = vrot.slane %v1323, 2
        %v5855 = vrot.slane %v1326, 2
        %v5856 = vrot.slane %v1328, 2
        %v5857 = vrot.slane %v1331, 2
        %v5858 = vrot.slane %v1333, 2
        %v5859 = vrot.slane %v1336, 2
        %v5860 = vrot.slane %v1338, 2
        %v5861 = vrot.slane %v1341, 2
        %v5862 = vrot.slane %v1343, 2
        %v5863 = vrot.slane %v1346, 2
        %v5864 = vrot.slane %v1348, 2
        %v5865 = vrot.slane %v1351, 2
        %v5866 = vrot.slane %v1353, 2
        %v5867 = vrot.slane %v1356, 2
        %v5868 = vrot.slane %v1358, 2
        %v5869 = vrot.slane %v1361, 2
        %v5870 = vrot.slane %v1363, 2
        %v5871 = vrot.slane %v1366, 2
        %v5872 = vrot.slane %v1368, 2
        %v5873 = vrot.slane %v1371, 2
        %v5874 = vrot.slane %v1373, 2
        %v5875 = vrot.slane %v1376, 2
        %v5876 = vrot.slane %v1378, 2
        %v5877 = vrot.slane %v1381, 2
        %v5878 = vrot.slane %v1383, 2
        %v5879 = vrot.slane %v1386, 2
        %v5880 = vrot.slane %v1388, 2
        %v5881 = vrot.slane %v1391, 2
        %v5882 = vrot.slane %v1393, 2
        %v5883 = vrot.slane %v1396, 2
        %v5884 = vrot.slane %v1398, 2
        %vm5885 = vcmp.lt.s32.totalorder %v265, 6
        %v5886 = vsel %vm5885, %v5883, %v5884
        %v5887 = vsel %vm5885, %v5882, %v5883
        %v5888 = vsel %vm5885, %v5881, %v5882
        %v5889 = vsel %vm5885, %v5880, %v5881
        %v5890 = vsel %vm5885, %v5879, %v5880
        %v5891 = vsel %vm5885, %v5878, %v5879
        %v5892 = vsel %vm5885, %v5877, %v5878
        %v5893 = vsel %vm5885, %v5876, %v5877
        %v5894 = vsel %vm5885, %v5875, %v5876
        %v5895 = vsel %vm5885, %v5874, %v5875
        %v5896 = vsel %vm5885, %v5873, %v5874
        %v5897 = vsel %vm5885, %v5872, %v5873
        %v5898 = vsel %vm5885, %v5871, %v5872
        %v5899 = vsel %vm5885, %v5870, %v5871
        %v5900 = vsel %vm5885, %v5869, %v5870
        %v5901 = vsel %vm5885, %v5868, %v5869
        %v5902 = vsel %vm5885, %v5867, %v5868
        %v5903 = vsel %vm5885, %v5866, %v5867
        %v5904 = vsel %vm5885, %v5865, %v5866
        %v5905 = vsel %vm5885, %v5864, %v5865
        %v5906 = vsel %vm5885, %v5863, %v5864
        %v5907 = vsel %vm5885, %v5862, %v5863
        %v5908 = vsel %vm5885, %v5861, %v5862
        %v5909 = vsel %vm5885, %v5860, %v5861
        %v5910 = vsel %vm5885, %v5859, %v5860
        %v5911 = vsel %vm5885, %v5858, %v5859
        %v5912 = vsel %vm5885, %v5857, %v5858
        %v5913 = vsel %vm5885, %v5856, %v5857
        %v5914 = vsel %vm5885, %v5855, %v5856
        %v5915 = vsel %vm5885, %v5854, %v5855
        %v5916 = vsel %vm5885, %v5853, %v5854
        %v5917 = vsel %vm5885, %v5852, %v5853
        %v5918 = vsel %vm5885, %v5851, %v5852
        %v5919 = vsel %vm5885, %v5850, %v5851
        %v5920 = vsel %vm5885, %v5849, %v5850
        %v5921 = vsel %vm5885, %v5848, %v5849
        %v5922 = vsel %vm5885, %v5847, %v5848
        %v5923 = vsel %vm5885, %v5846, %v5847
        %v5924 = vsel %vm5885, %v5845, %v5846
        %v5925 = vsel %vm5885, %v5844, %v5845
        %v5926 = vsel %vm5885, %v5843, %v5844
        %v5927 = vsel %vm5885, %v5842, %v5843
        %v5928 = vsel %vm5885, %v5841, %v5842
        %v5929 = vsel %vm5885, %v5840, %v5841
        %v5930 = vsel %vm5885, %v5839, %v5840
        %v5931 = vsel %vm5885, %v5838, %v5839
        %v5932 = vsel %vm5885, %v5837, %v5838
        %v5933 = vsel %vm5885, %v5836, %v5837
        %v5934 = vsel %vm5885, %v5835, %v5836
        %v5935 = vsel %vm5885, %v5834, %v5835
        %v5936 = vsel %vm5885, %v5833, %v5834
        %v5937 = vsel %vm5885, %v5832, %v5833
        %v5938 = vsel %vm5885, %v5831, %v5832
        %v5939 = vsel %vm5885, %v5830, %v5831
        %v5940 = vsel %vm5885, %v5829, %v5830
        %v5941 = vsel %vm5885, %v5828, %v5829
        %v5942 = vsel %vm5885, %v5827, %v5828
        %v5943 = vsel %vm5885, %v5826, %v5827
        %v5944 = vsel %vm5885, %v5825, %v5826
        %v5945 = vsel %vm5885, %v5824, %v5825
        %v5946 = vsel %vm5885, %v5823, %v5824
        %v5947 = vsel %vm5885, %v5822, %v5823
        %v5948 = vsel %vm5885, %v5821, %v5822
        %v5949 = vsel %vm5885, %v5884, %v5821
        %v5950 = vsel %vm5757, 1, 0
        %v5951 = vsel %vm5758, 1, 0
        %v5952 = vsel %vm5759, 1, 0
        %v5953 = vsel %vm5760, 1, 0
        %v5954 = vsel %vm5761, 1, 0
        %v5955 = vsel %vm5762, 1, 0
        %v5956 = vsel %vm5763, 1, 0
        %v5957 = vsel %vm5764, 1, 0
        %v5958 = vsel %vm5765, 1, 0
        %v5959 = vsel %vm5766, 1, 0
        %v5960 = vsel %vm5767, 1, 0
        %v5961 = vsel %vm5768, 1, 0
        %v5962 = vsel %vm5769, 1, 0
        %v5963 = vsel %vm5770, 1, 0
        %v5964 = vsel %vm5771, 1, 0
        %v5965 = vsel %vm5772, 1, 0
        %v5966 = vsel %vm5773, 1, 0
        %v5967 = vsel %vm5774, 1, 0
        %v5968 = vsel %vm5775, 1, 0
        %v5969 = vsel %vm5776, 1, 0
        %v5970 = vsel %vm5777, 1, 0
        %v5971 = vsel %vm5778, 1, 0
        %v5972 = vsel %vm5779, 1, 0
        %v5973 = vsel %vm5780, 1, 0
        %v5974 = vsel %vm5781, 1, 0
        %v5975 = vsel %vm5782, 1, 0
        %v5976 = vsel %vm5783, 1, 0
        %v5977 = vsel %vm5784, 1, 0
        %v5978 = vsel %vm5785, 1, 0
        %v5979 = vsel %vm5786, 1, 0
        %v5980 = vsel %vm5787, 1, 0
        %v5981 = vsel %vm5788, 1, 0
        %v5982 = vsel %vm5789, 1, 0
        %v5983 = vsel %vm5790, 1, 0
        %v5984 = vsel %vm5791, 1, 0
        %v5985 = vsel %vm5792, 1, 0
        %v5986 = vsel %vm5793, 1, 0
        %v5987 = vsel %vm5794, 1, 0
        %v5988 = vsel %vm5795, 1, 0
        %v5989 = vsel %vm5796, 1, 0
        %v5990 = vsel %vm5797, 1, 0
        %v5991 = vsel %vm5798, 1, 0
        %v5992 = vsel %vm5799, 1, 0
        %v5993 = vsel %vm5800, 1, 0
        %v5994 = vsel %vm5801, 1, 0
        %v5995 = vsel %vm5802, 1, 0
        %v5996 = vsel %vm5803, 1, 0
        %v5997 = vsel %vm5804, 1, 0
        %v5998 = vsel %vm5805, 1, 0
        %v5999 = vsel %vm5806, 1, 0
        %v6000 = vsel %vm5807, 1, 0
        %v6001 = vsel %vm5808, 1, 0
        %v6002 = vsel %vm5809, 1, 0
        %v6003 = vsel %vm5810, 1, 0
        %v6004 = vsel %vm5811, 1, 0
        %v6005 = vsel %vm5812, 1, 0
        %v6006 = vsel %vm5813, 1, 0
        %v6007 = vsel %vm5814, 1, 0
        %v6008 = vsel %vm5815, 1, 0
        %v6009 = vsel %vm5816, 1, 0
        %v6010 = vsel %vm5817, 1, 0
        %v6011 = vsel %vm5818, 1, 0
        %v6012 = vsel %vm5819, 1, 0
        %v6013 = vsel %vm5820, 1, 0
        %vm6014 = vcmp.eq.s32.totalorder %v5950, 1
        %vm6015 = vcmp.eq.s32.totalorder %v5951, 1
        %vm6016 = vcmp.eq.s32.totalorder %v5952, 1
        %vm6017 = vcmp.eq.s32.totalorder %v5953, 1
        %vm6018 = vcmp.eq.s32.totalorder %v5954, 1
        %vm6019 = vcmp.eq.s32.totalorder %v5955, 1
        %vm6020 = vcmp.eq.s32.totalorder %v5956, 1
        %vm6021 = vcmp.eq.s32.totalorder %v5957, 1
        %vm6022 = vcmp.eq.s32.totalorder %v5958, 1
        %vm6023 = vcmp.eq.s32.totalorder %v5959, 1
        %vm6024 = vcmp.eq.s32.totalorder %v5960, 1
        %vm6025 = vcmp.eq.s32.totalorder %v5961, 1
        %vm6026 = vcmp.eq.s32.totalorder %v5962, 1
        %vm6027 = vcmp.eq.s32.totalorder %v5963, 1
        %vm6028 = vcmp.eq.s32.totalorder %v5964, 1
        %vm6029 = vcmp.eq.s32.totalorder %v5965, 1
        %vm6030 = vcmp.eq.s32.totalorder %v5966, 1
        %vm6031 = vcmp.eq.s32.totalorder %v5967, 1
        %vm6032 = vcmp.eq.s32.totalorder %v5968, 1
        %vm6033 = vcmp.eq.s32.totalorder %v5969, 1
        %vm6034 = vcmp.eq.s32.totalorder %v5970, 1
        %vm6035 = vcmp.eq.s32.totalorder %v5971, 1
        %vm6036 = vcmp.eq.s32.totalorder %v5972, 1
        %vm6037 = vcmp.eq.s32.totalorder %v5973, 1
        %vm6038 = vcmp.eq.s32.totalorder %v5974, 1
        %vm6039 = vcmp.eq.s32.totalorder %v5975, 1
        %vm6040 = vcmp.eq.s32.totalorder %v5976, 1
        %vm6041 = vcmp.eq.s32.totalorder %v5977, 1
        %vm6042 = vcmp.eq.s32.totalorder %v5978, 1
        %vm6043 = vcmp.eq.s32.totalorder %v5979, 1
        %vm6044 = vcmp.eq.s32.totalorder %v5980, 1
        %vm6045 = vcmp.eq.s32.totalorder %v5981, 1
        %vm6046 = vcmp.eq.s32.totalorder %v5982, 1
        %vm6047 = vcmp.eq.s32.totalorder %v5983, 1
        %vm6048 = vcmp.eq.s32.totalorder %v5984, 1
        %vm6049 = vcmp.eq.s32.totalorder %v5985, 1
        %vm6050 = vcmp.eq.s32.totalorder %v5986, 1
        %vm6051 = vcmp.eq.s32.totalorder %v5987, 1
        %vm6052 = vcmp.eq.s32.totalorder %v5988, 1
        %vm6053 = vcmp.eq.s32.totalorder %v5989, 1
        %vm6054 = vcmp.eq.s32.totalorder %v5990, 1
        %vm6055 = vcmp.eq.s32.totalorder %v5991, 1
        %vm6056 = vcmp.eq.s32.totalorder %v5992, 1
        %vm6057 = vcmp.eq.s32.totalorder %v5993, 1
        %vm6058 = vcmp.eq.s32.totalorder %v5994, 1
        %vm6059 = vcmp.eq.s32.totalorder %v5995, 1
        %vm6060 = vcmp.eq.s32.totalorder %v5996, 1
        %vm6061 = vcmp.eq.s32.totalorder %v5997, 1
        %vm6062 = vcmp.eq.s32.totalorder %v5998, 1
        %vm6063 = vcmp.eq.s32.totalorder %v5999, 1
        %vm6064 = vcmp.eq.s32.totalorder %v6000, 1
        %vm6065 = vcmp.eq.s32.totalorder %v6001, 1
        %vm6066 = vcmp.eq.s32.totalorder %v6002, 1
        %vm6067 = vcmp.eq.s32.totalorder %v6003, 1
        %vm6068 = vcmp.eq.s32.totalorder %v6004, 1
        %vm6069 = vcmp.eq.s32.totalorder %v6005, 1
        %vm6070 = vcmp.eq.s32.totalorder %v6006, 1
        %vm6071 = vcmp.eq.s32.totalorder %v6007, 1
        %vm6072 = vcmp.eq.s32.totalorder %v6008, 1
        %vm6073 = vcmp.eq.s32.totalorder %v6009, 1
        %vm6074 = vcmp.eq.s32.totalorder %v6010, 1
        %vm6075 = vcmp.eq.s32.totalorder %v6011, 1
        %vm6076 = vcmp.eq.s32.totalorder %v6012, 1
        %vm6077 = vcmp.eq.s32.totalorder %v6013, 1
        %v6078 = vsel %vm6014, %v5948, 0.0
        %v6079 = vsel %vm6015, %v5947, 0.0
        %v6080 = vsel %vm6016, %v5946, 0.0
        %v6081 = vsel %vm6017, %v5945, 0.0
        %v6082 = vsel %vm6018, %v5944, 0.0
        %v6083 = vsel %vm6019, %v5943, 0.0
        %v6084 = vsel %vm6020, %v5942, 0.0
        %v6085 = vsel %vm6021, %v5941, 0.0
        %v6086 = vsel %vm6022, %v5940, 0.0
        %v6087 = vsel %vm6023, %v5939, 0.0
        %v6088 = vsel %vm6024, %v5938, 0.0
        %v6089 = vsel %vm6025, %v5937, 0.0
        %v6090 = vsel %vm6026, %v5936, 0.0
        %v6091 = vsel %vm6027, %v5935, 0.0
        %v6092 = vsel %vm6028, %v5934, 0.0
        %v6093 = vsel %vm6029, %v5933, 0.0
        %v6094 = vsel %vm6030, %v5932, 0.0
        %v6095 = vsel %vm6031, %v5931, 0.0
        %v6096 = vsel %vm6032, %v5930, 0.0
        %v6097 = vsel %vm6033, %v5929, 0.0
        %v6098 = vsel %vm6034, %v5928, 0.0
        %v6099 = vsel %vm6035, %v5927, 0.0
        %v6100 = vsel %vm6036, %v5926, 0.0
        %v6101 = vsel %vm6037, %v5925, 0.0
        %v6102 = vsel %vm6038, %v5924, 0.0
        %v6103 = vsel %vm6039, %v5923, 0.0
        %v6104 = vsel %vm6040, %v5922, 0.0
        %v6105 = vsel %vm6041, %v5921, 0.0
        %v6106 = vsel %vm6042, %v5920, 0.0
        %v6107 = vsel %vm6043, %v5919, 0.0
        %v6108 = vsel %vm6044, %v5918, 0.0
        %v6109 = vsel %vm6045, %v5917, 0.0
        %v6110 = vsel %vm6046, %v5916, 0.0
        %v6111 = vsel %vm6047, %v5915, 0.0
        %v6112 = vsel %vm6048, %v5914, 0.0
        %v6113 = vsel %vm6049, %v5913, 0.0
        %v6114 = vsel %vm6050, %v5912, 0.0
        %v6115 = vsel %vm6051, %v5911, 0.0
        %v6116 = vsel %vm6052, %v5910, 0.0
        %v6117 = vsel %vm6053, %v5909, 0.0
        %v6118 = vsel %vm6054, %v5908, 0.0
        %v6119 = vsel %vm6055, %v5907, 0.0
        %v6120 = vsel %vm6056, %v5906, 0.0
        %v6121 = vsel %vm6057, %v5905, 0.0
        %v6122 = vsel %vm6058, %v5904, 0.0
        %v6123 = vsel %vm6059, %v5903, 0.0
        %v6124 = vsel %vm6060, %v5902, 0.0
        %v6125 = vsel %vm6061, %v5901, 0.0
        %v6126 = vsel %vm6062, %v5900, 0.0
        %v6127 = vsel %vm6063, %v5899, 0.0
        %v6128 = vsel %vm6064, %v5898, 0.0
        %v6129 = vsel %vm6065, %v5897, 0.0
        %v6130 = vsel %vm6066, %v5896, 0.0
        %v6131 = vsel %vm6067, %v5895, 0.0
        %v6132 = vsel %vm6068, %v5894, 0.0
        %v6133 = vsel %vm6069, %v5893, 0.0
        %v6134 = vsel %vm6070, %v5892, 0.0
        %v6135 = vsel %vm6071, %v5891, 0.0
        %v6136 = vsel %vm6072, %v5890, 0.0
        %v6137 = vsel %vm6073, %v5889, 0.0
        %v6138 = vsel %vm6074, %v5888, 0.0
        %v6139 = vsel %vm6075, %v5887, 0.0
        %v6140 = vsel %vm6076, %v5886, 0.0
        %v6141 = vsel %vm6077, %v5949, 0.0
        %v6142 = vadd.s32 %v1033, 3
        %v6143 = vadd.s32 %v1034, 3
        %v6144 = vadd.s32 %v1035, 3
        %v6145 = vadd.s32 %v1036, 3
        %v6146 = vadd.s32 %v1037, 3
        %v6147 = vadd.s32 %v1038, 3
        %v6148 = vadd.s32 %v1039, 3
        %v6149 = vadd.s32 %v1040, 3
        %v6150 = vadd.s32 %v1041, 3
        %v6151 = vadd.s32 %v1042, 3
        %v6152 = vadd.s32 %v1043, 3
        %v6153 = vadd.s32 %v1044, 3
        %v6154 = vadd.s32 %v1045, 3
        %v6155 = vadd.s32 %v1046, 3
        %v6156 = vadd.s32 %v1047, 3
        %v6157 = vadd.s32 %v1048, 3
        %v6158 = vadd.s32 %v1049, 3
        %v6159 = vadd.s32 %v1050, 3
        %v6160 = vadd.s32 %v1051, 3
        %v6161 = vadd.s32 %v1052, 3
        %v6162 = vadd.s32 %v1053, 3
        %v6163 = vadd.s32 %v1054, 3
        %v6164 = vadd.s32 %v1055, 3
        %v6165 = vadd.s32 %v1056, 3
        %v6166 = vadd.s32 %v1057, 3
        %v6167 = vadd.s32 %v1058, 3
        %v6168 = vadd.s32 %v1059, 3
        %v6169 = vadd.s32 %v1060, 3
        %v6170 = vadd.s32 %v1061, 3
        %v6171 = vadd.s32 %v1062, 3
        %v6172 = vadd.s32 %v1063, 3
        %v6173 = vadd.s32 %v1064, 3
        %v6174 = vadd.s32 %v1065, 3
        %v6175 = vadd.s32 %v1066, 3
        %v6176 = vadd.s32 %v1067, 3
        %v6177 = vadd.s32 %v1068, 3
        %v6178 = vadd.s32 %v1069, 3
        %v6179 = vadd.s32 %v1070, 3
        %v6180 = vadd.s32 %v1071, 3
        %v6181 = vadd.s32 %v1072, 3
        %v6182 = vadd.s32 %v1073, 3
        %v6183 = vadd.s32 %v1074, 3
        %v6184 = vadd.s32 %v1075, 3
        %v6185 = vadd.s32 %v1076, 3
        %v6186 = vadd.s32 %v1077, 3
        %v6187 = vadd.s32 %v1078, 3
        %v6188 = vadd.s32 %v1079, 3
        %v6189 = vadd.s32 %v1080, 3
        %v6190 = vadd.s32 %v1081, 3
        %v6191 = vadd.s32 %v1082, 3
        %v6192 = vadd.s32 %v1083, 3
        %v6193 = vadd.s32 %v1084, 3
        %v6194 = vadd.s32 %v1085, 3
        %v6195 = vadd.s32 %v1086, 3
        %v6196 = vadd.s32 %v1087, 3
        %v6197 = vadd.s32 %v1088, 3
        %v6198 = vadd.s32 %v1089, 3
        %v6199 = vadd.s32 %v1090, 3
        %v6200 = vadd.s32 %v1091, 3
        %v6201 = vadd.s32 %v1092, 3
        %v6202 = vadd.s32 %v1093, 3
        %v6203 = vadd.s32 %v1094, 3
        %v6204 = vadd.s32 %v1095, 3
        %v6205 = vadd.s32 %v1096, 3
        %vm6206 = vcmp.ge.s32.totalorder %v6142, 0
        %vm6207 = vcmp.ge.s32.totalorder %v6143, 0
        %vm6208 = vcmp.ge.s32.totalorder %v6144, 0
        %vm6209 = vcmp.ge.s32.totalorder %v6145, 0
        %vm6210 = vcmp.ge.s32.totalorder %v6146, 0
        %vm6211 = vcmp.ge.s32.totalorder %v6147, 0
        %vm6212 = vcmp.ge.s32.totalorder %v6148, 0
        %vm6213 = vcmp.ge.s32.totalorder %v6149, 0
        %vm6214 = vcmp.ge.s32.totalorder %v6150, 0
        %vm6215 = vcmp.ge.s32.totalorder %v6151, 0
        %vm6216 = vcmp.ge.s32.totalorder %v6152, 0
        %vm6217 = vcmp.ge.s32.totalorder %v6153, 0
        %vm6218 = vcmp.ge.s32.totalorder %v6154, 0
        %vm6219 = vcmp.ge.s32.totalorder %v6155, 0
        %vm6220 = vcmp.ge.s32.totalorder %v6156, 0
        %vm6221 = vcmp.ge.s32.totalorder %v6157, 0
        %vm6222 = vcmp.ge.s32.totalorder %v6158, 0
        %vm6223 = vcmp.ge.s32.totalorder %v6159, 0
        %vm6224 = vcmp.ge.s32.totalorder %v6160, 0
        %vm6225 = vcmp.ge.s32.totalorder %v6161, 0
        %vm6226 = vcmp.ge.s32.totalorder %v6162, 0
        %vm6227 = vcmp.ge.s32.totalorder %v6163, 0
        %vm6228 = vcmp.ge.s32.totalorder %v6164, 0
        %vm6229 = vcmp.ge.s32.totalorder %v6165, 0
        %vm6230 = vcmp.ge.s32.totalorder %v6166, 0
        %vm6231 = vcmp.ge.s32.totalorder %v6167, 0
        %vm6232 = vcmp.ge.s32.totalorder %v6168, 0
        %vm6233 = vcmp.ge.s32.totalorder %v6169, 0
        %vm6234 = vcmp.ge.s32.totalorder %v6170, 0
        %vm6235 = vcmp.ge.s32.totalorder %v6171, 0
        %vm6236 = vcmp.ge.s32.totalorder %v6172, 0
        %vm6237 = vcmp.ge.s32.totalorder %v6173, 0
        %vm6238 = vcmp.ge.s32.totalorder %v6174, 0
        %vm6239 = vcmp.ge.s32.totalorder %v6175, 0
        %vm6240 = vcmp.ge.s32.totalorder %v6176, 0
        %vm6241 = vcmp.ge.s32.totalorder %v6177, 0
        %vm6242 = vcmp.ge.s32.totalorder %v6178, 0
        %vm6243 = vcmp.ge.s32.totalorder %v6179, 0
        %vm6244 = vcmp.ge.s32.totalorder %v6180, 0
        %vm6245 = vcmp.ge.s32.totalorder %v6181, 0
        %vm6246 = vcmp.ge.s32.totalorder %v6182, 0
        %vm6247 = vcmp.ge.s32.totalorder %v6183, 0
        %vm6248 = vcmp.ge.s32.totalorder %v6184, 0
        %vm6249 = vcmp.ge.s32.totalorder %v6185, 0
        %vm6250 = vcmp.ge.s32.totalorder %v6186, 0
        %vm6251 = vcmp.ge.s32.totalorder %v6187, 0
        %vm6252 = vcmp.ge.s32.totalorder %v6188, 0
        %vm6253 = vcmp.ge.s32.totalorder %v6189, 0
        %vm6254 = vcmp.ge.s32.totalorder %v6190, 0
        %vm6255 = vcmp.ge.s32.totalorder %v6191, 0
        %vm6256 = vcmp.ge.s32.totalorder %v6192, 0
        %vm6257 = vcmp.ge.s32.totalorder %v6193, 0
        %vm6258 = vcmp.ge.s32.totalorder %v6194, 0
        %vm6259 = vcmp.ge.s32.totalorder %v6195, 0
        %vm6260 = vcmp.ge.s32.totalorder %v6196, 0
        %vm6261 = vcmp.ge.s32.totalorder %v6197, 0
        %vm6262 = vcmp.ge.s32.totalorder %v6198, 0
        %vm6263 = vcmp.ge.s32.totalorder %v6199, 0
        %vm6264 = vcmp.ge.s32.totalorder %v6200, 0
        %vm6265 = vcmp.ge.s32.totalorder %v6201, 0
        %vm6266 = vcmp.ge.s32.totalorder %v6202, 0
        %vm6267 = vcmp.ge.s32.totalorder %v6203, 0
        %vm6268 = vcmp.ge.s32.totalorder %v6204, 0
        %vm6269 = vcmp.ge.s32.totalorder %v6205, 0
        %vm6270 = vcmp.lt.s32.totalorder %v6142, 16
        %vm6271 = vcmp.lt.s32.totalorder %v6143, 16
        %vm6272 = vcmp.lt.s32.totalorder %v6144, 16
        %vm6273 = vcmp.lt.s32.totalorder %v6145, 16
        %vm6274 = vcmp.lt.s32.totalorder %v6146, 16
        %vm6275 = vcmp.lt.s32.totalorder %v6147, 16
        %vm6276 = vcmp.lt.s32.totalorder %v6148, 16
        %vm6277 = vcmp.lt.s32.totalorder %v6149, 16
        %vm6278 = vcmp.lt.s32.totalorder %v6150, 16
        %vm6279 = vcmp.lt.s32.totalorder %v6151, 16
        %vm6280 = vcmp.lt.s32.totalorder %v6152, 16
        %vm6281 = vcmp.lt.s32.totalorder %v6153, 16
        %vm6282 = vcmp.lt.s32.totalorder %v6154, 16
        %vm6283 = vcmp.lt.s32.totalorder %v6155, 16
        %vm6284 = vcmp.lt.s32.totalorder %v6156, 16
        %vm6285 = vcmp.lt.s32.totalorder %v6157, 16
        %vm6286 = vcmp.lt.s32.totalorder %v6158, 16
        %vm6287 = vcmp.lt.s32.totalorder %v6159, 16
        %vm6288 = vcmp.lt.s32.totalorder %v6160, 16
        %vm6289 = vcmp.lt.s32.totalorder %v6161, 16
        %vm6290 = vcmp.lt.s32.totalorder %v6162, 16
        %vm6291 = vcmp.lt.s32.totalorder %v6163, 16
        %vm6292 = vcmp.lt.s32.totalorder %v6164, 16
        %vm6293 = vcmp.lt.s32.totalorder %v6165, 16
        %vm6294 = vcmp.lt.s32.totalorder %v6166, 16
        %vm6295 = vcmp.lt.s32.totalorder %v6167, 16
        %vm6296 = vcmp.lt.s32.totalorder %v6168, 16
        %vm6297 = vcmp.lt.s32.totalorder %v6169, 16
        %vm6298 = vcmp.lt.s32.totalorder %v6170, 16
        %vm6299 = vcmp.lt.s32.totalorder %v6171, 16
        %vm6300 = vcmp.lt.s32.totalorder %v6172, 16
        %vm6301 = vcmp.lt.s32.totalorder %v6173, 16
        %vm6302 = vcmp.lt.s32.totalorder %v6174, 16
        %vm6303 = vcmp.lt.s32.totalorder %v6175, 16
        %vm6304 = vcmp.lt.s32.totalorder %v6176, 16
        %vm6305 = vcmp.lt.s32.totalorder %v6177, 16
        %vm6306 = vcmp.lt.s32.totalorder %v6178, 16
        %vm6307 = vcmp.lt.s32.totalorder %v6179, 16
        %vm6308 = vcmp.lt.s32.totalorder %v6180, 16
        %vm6309 = vcmp.lt.s32.totalorder %v6181, 16
        %vm6310 = vcmp.lt.s32.totalorder %v6182, 16
        %vm6311 = vcmp.lt.s32.totalorder %v6183, 16
        %vm6312 = vcmp.lt.s32.totalorder %v6184, 16
        %vm6313 = vcmp.lt.s32.totalorder %v6185, 16
        %vm6314 = vcmp.lt.s32.totalorder %v6186, 16
        %vm6315 = vcmp.lt.s32.totalorder %v6187, 16
        %vm6316 = vcmp.lt.s32.totalorder %v6188, 16
        %vm6317 = vcmp.lt.s32.totalorder %v6189, 16
        %vm6318 = vcmp.lt.s32.totalorder %v6190, 16
        %vm6319 = vcmp.lt.s32.totalorder %v6191, 16
        %vm6320 = vcmp.lt.s32.totalorder %v6192, 16
        %vm6321 = vcmp.lt.s32.totalorder %v6193, 16
        %vm6322 = vcmp.lt.s32.totalorder %v6194, 16
        %vm6323 = vcmp.lt.s32.totalorder %v6195, 16
        %vm6324 = vcmp.lt.s32.totalorder %v6196, 16
        %vm6325 = vcmp.lt.s32.totalorder %v6197, 16
        %vm6326 = vcmp.lt.s32.totalorder %v6198, 16
        %vm6327 = vcmp.lt.s32.totalorder %v6199, 16
        %vm6328 = vcmp.lt.s32.totalorder %v6200, 16
        %vm6329 = vcmp.lt.s32.totalorder %v6201, 16
        %vm6330 = vcmp.lt.s32.totalorder %v6202, 16
        %vm6331 = vcmp.lt.s32.totalorder %v6203, 16
        %vm6332 = vcmp.lt.s32.totalorder %v6204, 16
        %vm6333 = vcmp.lt.s32.totalorder %v6205, 16
        %vm6334 = vmand %vm6206, %vm6270
        %vm6335 = vmand %vm6207, %vm6271
        %vm6336 = vmand %vm6208, %vm6272
        %vm6337 = vmand %vm6209, %vm6273
        %vm6338 = vmand %vm6210, %vm6274
        %vm6339 = vmand %vm6211, %vm6275
        %vm6340 = vmand %vm6212, %vm6276
        %vm6341 = vmand %vm6213, %vm6277
        %vm6342 = vmand %vm6214, %vm6278
        %vm6343 = vmand %vm6215, %vm6279
        %vm6344 = vmand %vm6216, %vm6280
        %vm6345 = vmand %vm6217, %vm6281
        %vm6346 = vmand %vm6218, %vm6282
        %vm6347 = vmand %vm6219, %vm6283
        %vm6348 = vmand %vm6220, %vm6284
        %vm6349 = vmand %vm6221, %vm6285
        %vm6350 = vmand %vm6222, %vm6286
        %vm6351 = vmand %vm6223, %vm6287
        %vm6352 = vmand %vm6224, %vm6288
        %vm6353 = vmand %vm6225, %vm6289
        %vm6354 = vmand %vm6226, %vm6290
        %vm6355 = vmand %vm6227, %vm6291
        %vm6356 = vmand %vm6228, %vm6292
        %vm6357 = vmand %vm6229, %vm6293
        %vm6358 = vmand %vm6230, %vm6294
        %vm6359 = vmand %vm6231, %vm6295
        %vm6360 = vmand %vm6232, %vm6296
        %vm6361 = vmand %vm6233, %vm6297
        %vm6362 = vmand %vm6234, %vm6298
        %vm6363 = vmand %vm6235, %vm6299
        %vm6364 = vmand %vm6236, %vm6300
        %vm6365 = vmand %vm6237, %vm6301
        %vm6366 = vmand %vm6238, %vm6302
        %vm6367 = vmand %vm6239, %vm6303
        %vm6368 = vmand %vm6240, %vm6304
        %vm6369 = vmand %vm6241, %vm6305
        %vm6370 = vmand %vm6242, %vm6306
        %vm6371 = vmand %vm6243, %vm6307
        %vm6372 = vmand %vm6244, %vm6308
        %vm6373 = vmand %vm6245, %vm6309
        %vm6374 = vmand %vm6246, %vm6310
        %vm6375 = vmand %vm6247, %vm6311
        %vm6376 = vmand %vm6248, %vm6312
        %vm6377 = vmand %vm6249, %vm6313
        %vm6378 = vmand %vm6250, %vm6314
        %vm6379 = vmand %vm6251, %vm6315
        %vm6380 = vmand %vm6252, %vm6316
        %vm6381 = vmand %vm6253, %vm6317
        %vm6382 = vmand %vm6254, %vm6318
        %vm6383 = vmand %vm6255, %vm6319
        %vm6384 = vmand %vm6256, %vm6320
        %vm6385 = vmand %vm6257, %vm6321
        %vm6386 = vmand %vm6258, %vm6322
        %vm6387 = vmand %vm6259, %vm6323
        %vm6388 = vmand %vm6260, %vm6324
        %vm6389 = vmand %vm6261, %vm6325
        %vm6390 = vmand %vm6262, %vm6326
        %vm6391 = vmand %vm6263, %vm6327
        %vm6392 = vmand %vm6264, %vm6328
        %vm6393 = vmand %vm6265, %vm6329
        %vm6394 = vmand %vm6266, %vm6330
        %vm6395 = vmand %vm6267, %vm6331
        %vm6396 = vmand %vm6268, %vm6332
        %vm6397 = vmand %vm6269, %vm6333
        %v6398 = vrot.slane %v1241, 3
        %v6399 = vrot.slane %v1243, 3
        %v6400 = vrot.slane %v1246, 3
        %v6401 = vrot.slane %v1248, 3
        %v6402 = vrot.slane %v1251, 3
        %v6403 = vrot.slane %v1253, 3
        %v6404 = vrot.slane %v1256, 3
        %v6405 = vrot.slane %v1258, 3
        %v6406 = vrot.slane %v1261, 3
        %v6407 = vrot.slane %v1263, 3
        %v6408 = vrot.slane %v1266, 3
        %v6409 = vrot.slane %v1268, 3
        %v6410 = vrot.slane %v1271, 3
        %v6411 = vrot.slane %v1273, 3
        %v6412 = vrot.slane %v1276, 3
        %v6413 = vrot.slane %v1278, 3
        %v6414 = vrot.slane %v1281, 3
        %v6415 = vrot.slane %v1283, 3
        %v6416 = vrot.slane %v1286, 3
        %v6417 = vrot.slane %v1288, 3
        %v6418 = vrot.slane %v1291, 3
        %v6419 = vrot.slane %v1293, 3
        %v6420 = vrot.slane %v1296, 3
        %v6421 = vrot.slane %v1298, 3
        %v6422 = vrot.slane %v1301, 3
        %v6423 = vrot.slane %v1303, 3
        %v6424 = vrot.slane %v1306, 3
        %v6425 = vrot.slane %v1308, 3
        %v6426 = vrot.slane %v1311, 3
        %v6427 = vrot.slane %v1313, 3
        %v6428 = vrot.slane %v1316, 3
        %v6429 = vrot.slane %v1318, 3
        %v6430 = vrot.slane %v1321, 3
        %v6431 = vrot.slane %v1323, 3
        %v6432 = vrot.slane %v1326, 3
        %v6433 = vrot.slane %v1328, 3
        %v6434 = vrot.slane %v1331, 3
        %v6435 = vrot.slane %v1333, 3
        %v6436 = vrot.slane %v1336, 3
        %v6437 = vrot.slane %v1338, 3
        %v6438 = vrot.slane %v1341, 3
        %v6439 = vrot.slane %v1343, 3
        %v6440 = vrot.slane %v1346, 3
        %v6441 = vrot.slane %v1348, 3
        %v6442 = vrot.slane %v1351, 3
        %v6443 = vrot.slane %v1353, 3
        %v6444 = vrot.slane %v1356, 3
        %v6445 = vrot.slane %v1358, 3
        %v6446 = vrot.slane %v1361, 3
        %v6447 = vrot.slane %v1363, 3
        %v6448 = vrot.slane %v1366, 3
        %v6449 = vrot.slane %v1368, 3
        %v6450 = vrot.slane %v1371, 3
        %v6451 = vrot.slane %v1373, 3
        %v6452 = vrot.slane %v1376, 3
        %v6453 = vrot.slane %v1378, 3
        %v6454 = vrot.slane %v1381, 3
        %v6455 = vrot.slane %v1383, 3
        %v6456 = vrot.slane %v1386, 3
        %v6457 = vrot.slane %v1388, 3
        %v6458 = vrot.slane %v1391, 3
        %v6459 = vrot.slane %v1393, 3
        %v6460 = vrot.slane %v1396, 3
        %v6461 = vrot.slane %v1398, 3
        %vm6462 = vcmp.lt.s32.totalorder %v265, 5
        %v6463 = vsel %vm6462, %v6460, %v6461
        %v6464 = vsel %vm6462, %v6459, %v6460
        %v6465 = vsel %vm6462, %v6458, %v6459
        %v6466 = vsel %vm6462, %v6457, %v6458
        %v6467 = vsel %vm6462, %v6456, %v6457
        %v6468 = vsel %vm6462, %v6455, %v6456
        %v6469 = vsel %vm6462, %v6454, %v6455
        %v6470 = vsel %vm6462, %v6453, %v6454
        %v6471 = vsel %vm6462, %v6452, %v6453
        %v6472 = vsel %vm6462, %v6451, %v6452
        %v6473 = vsel %vm6462, %v6450, %v6451
        %v6474 = vsel %vm6462, %v6449, %v6450
        %v6475 = vsel %vm6462, %v6448, %v6449
        %v6476 = vsel %vm6462, %v6447, %v6448
        %v6477 = vsel %vm6462, %v6446, %v6447
        %v6478 = vsel %vm6462, %v6445, %v6446
        %v6479 = vsel %vm6462, %v6444, %v6445
        %v6480 = vsel %vm6462, %v6443, %v6444
        %v6481 = vsel %vm6462, %v6442, %v6443
        %v6482 = vsel %vm6462, %v6441, %v6442
        %v6483 = vsel %vm6462, %v6440, %v6441
        %v6484 = vsel %vm6462, %v6439, %v6440
        %v6485 = vsel %vm6462, %v6438, %v6439
        %v6486 = vsel %vm6462, %v6437, %v6438
        %v6487 = vsel %vm6462, %v6436, %v6437
        %v6488 = vsel %vm6462, %v6435, %v6436
        %v6489 = vsel %vm6462, %v6434, %v6435
        %v6490 = vsel %vm6462, %v6433, %v6434
        %v6491 = vsel %vm6462, %v6432, %v6433
        %v6492 = vsel %vm6462, %v6431, %v6432
        %v6493 = vsel %vm6462, %v6430, %v6431
        %v6494 = vsel %vm6462, %v6429, %v6430
        %v6495 = vsel %vm6462, %v6428, %v6429
        %v6496 = vsel %vm6462, %v6427, %v6428
        %v6497 = vsel %vm6462, %v6426, %v6427
        %v6498 = vsel %vm6462, %v6425, %v6426
        %v6499 = vsel %vm6462, %v6424, %v6425
        %v6500 = vsel %vm6462, %v6423, %v6424
        %v6501 = vsel %vm6462, %v6422, %v6423
        %v6502 = vsel %vm6462, %v6421, %v6422
        %v6503 = vsel %vm6462, %v6420, %v6421
        %v6504 = vsel %vm6462, %v6419, %v6420
        %v6505 = vsel %vm6462, %v6418, %v6419
        %v6506 = vsel %vm6462, %v6417, %v6418
        %v6507 = vsel %vm6462, %v6416, %v6417
        %v6508 = vsel %vm6462, %v6415, %v6416
        %v6509 = vsel %vm6462, %v6414, %v6415
        %v6510 = vsel %vm6462, %v6413, %v6414
        %v6511 = vsel %vm6462, %v6412, %v6413
        %v6512 = vsel %vm6462, %v6411, %v6412
        %v6513 = vsel %vm6462, %v6410, %v6411
        %v6514 = vsel %vm6462, %v6409, %v6410
        %v6515 = vsel %vm6462, %v6408, %v6409
        %v6516 = vsel %vm6462, %v6407, %v6408
        %v6517 = vsel %vm6462, %v6406, %v6407
        %v6518 = vsel %vm6462, %v6405, %v6406
        %v6519 = vsel %vm6462, %v6404, %v6405
        %v6520 = vsel %vm6462, %v6403, %v6404
        %v6521 = vsel %vm6462, %v6402, %v6403
        %v6522 = vsel %vm6462, %v6401, %v6402
        %v6523 = vsel %vm6462, %v6400, %v6401
        %v6524 = vsel %vm6462, %v6399, %v6400
        %v6525 = vsel %vm6462, %v6398, %v6399
        %v6526 = vsel %vm6462, %v6461, %v6398
        %v6527 = vsel %vm6334, 1, 0
        %v6528 = vsel %vm6335, 1, 0
        %v6529 = vsel %vm6336, 1, 0
        %v6530 = vsel %vm6337, 1, 0
        %v6531 = vsel %vm6338, 1, 0
        %v6532 = vsel %vm6339, 1, 0
        %v6533 = vsel %vm6340, 1, 0
        %v6534 = vsel %vm6341, 1, 0
        %v6535 = vsel %vm6342, 1, 0
        %v6536 = vsel %vm6343, 1, 0
        %v6537 = vsel %vm6344, 1, 0
        %v6538 = vsel %vm6345, 1, 0
        %v6539 = vsel %vm6346, 1, 0
        %v6540 = vsel %vm6347, 1, 0
        %v6541 = vsel %vm6348, 1, 0
        %v6542 = vsel %vm6349, 1, 0
        %v6543 = vsel %vm6350, 1, 0
        %v6544 = vsel %vm6351, 1, 0
        %v6545 = vsel %vm6352, 1, 0
        %v6546 = vsel %vm6353, 1, 0
        %v6547 = vsel %vm6354, 1, 0
        %v6548 = vsel %vm6355, 1, 0
        %v6549 = vsel %vm6356, 1, 0
        %v6550 = vsel %vm6357, 1, 0
        %v6551 = vsel %vm6358, 1, 0
        %v6552 = vsel %vm6359, 1, 0
        %v6553 = vsel %vm6360, 1, 0
        %v6554 = vsel %vm6361, 1, 0
        %v6555 = vsel %vm6362, 1, 0
        %v6556 = vsel %vm6363, 1, 0
        %v6557 = vsel %vm6364, 1, 0
        %v6558 = vsel %vm6365, 1, 0
        %v6559 = vsel %vm6366, 1, 0
        %v6560 = vsel %vm6367, 1, 0
        %v6561 = vsel %vm6368, 1, 0
        %v6562 = vsel %vm6369, 1, 0
        %v6563 = vsel %vm6370, 1, 0
        %v6564 = vsel %vm6371, 1, 0
        %v6565 = vsel %vm6372, 1, 0
        %v6566 = vsel %vm6373, 1, 0
        %v6567 = vsel %vm6374, 1, 0
        %v6568 = vsel %vm6375, 1, 0
        %v6569 = vsel %vm6376, 1, 0
        %v6570 = vsel %vm6377, 1, 0
        %v6571 = vsel %vm6378, 1, 0
        %v6572 = vsel %vm6379, 1, 0
        %v6573 = vsel %vm6380, 1, 0
        %v6574 = vsel %vm6381, 1, 0
        %v6575 = vsel %vm6382, 1, 0
        %v6576 = vsel %vm6383, 1, 0
        %v6577 = vsel %vm6384, 1, 0
        %v6578 = vsel %vm6385, 1, 0
        %v6579 = vsel %vm6386, 1, 0
        %v6580 = vsel %vm6387, 1, 0
        %v6581 = vsel %vm6388, 1, 0
        %v6582 = vsel %vm6389, 1, 0
        %v6583 = vsel %vm6390, 1, 0
        %v6584 = vsel %vm6391, 1, 0
        %v6585 = vsel %vm6392, 1, 0
        %v6586 = vsel %vm6393, 1, 0
        %v6587 = vsel %vm6394, 1, 0
        %v6588 = vsel %vm6395, 1, 0
        %v6589 = vsel %vm6396, 1, 0
        %v6590 = vsel %vm6397, 1, 0
        %vm6591 = vcmp.eq.s32.totalorder %v6527, 1
        %vm6592 = vcmp.eq.s32.totalorder %v6528, 1
        %vm6593 = vcmp.eq.s32.totalorder %v6529, 1
        %vm6594 = vcmp.eq.s32.totalorder %v6530, 1
        %vm6595 = vcmp.eq.s32.totalorder %v6531, 1
        %vm6596 = vcmp.eq.s32.totalorder %v6532, 1
        %vm6597 = vcmp.eq.s32.totalorder %v6533, 1
        %vm6598 = vcmp.eq.s32.totalorder %v6534, 1
        %vm6599 = vcmp.eq.s32.totalorder %v6535, 1
        %vm6600 = vcmp.eq.s32.totalorder %v6536, 1
        %vm6601 = vcmp.eq.s32.totalorder %v6537, 1
        %vm6602 = vcmp.eq.s32.totalorder %v6538, 1
        %vm6603 = vcmp.eq.s32.totalorder %v6539, 1
        %vm6604 = vcmp.eq.s32.totalorder %v6540, 1
        %vm6605 = vcmp.eq.s32.totalorder %v6541, 1
        %vm6606 = vcmp.eq.s32.totalorder %v6542, 1
        %vm6607 = vcmp.eq.s32.totalorder %v6543, 1
        %vm6608 = vcmp.eq.s32.totalorder %v6544, 1
        %vm6609 = vcmp.eq.s32.totalorder %v6545, 1
        %vm6610 = vcmp.eq.s32.totalorder %v6546, 1
        %vm6611 = vcmp.eq.s32.totalorder %v6547, 1
        %vm6612 = vcmp.eq.s32.totalorder %v6548, 1
        %vm6613 = vcmp.eq.s32.totalorder %v6549, 1
        %vm6614 = vcmp.eq.s32.totalorder %v6550, 1
        %vm6615 = vcmp.eq.s32.totalorder %v6551, 1
        %vm6616 = vcmp.eq.s32.totalorder %v6552, 1
        %vm6617 = vcmp.eq.s32.totalorder %v6553, 1
        %vm6618 = vcmp.eq.s32.totalorder %v6554, 1
        %vm6619 = vcmp.eq.s32.totalorder %v6555, 1
        %vm6620 = vcmp.eq.s32.totalorder %v6556, 1
        %vm6621 = vcmp.eq.s32.totalorder %v6557, 1
        %vm6622 = vcmp.eq.s32.totalorder %v6558, 1
        %vm6623 = vcmp.eq.s32.totalorder %v6559, 1
        %vm6624 = vcmp.eq.s32.totalorder %v6560, 1
        %vm6625 = vcmp.eq.s32.totalorder %v6561, 1
        %vm6626 = vcmp.eq.s32.totalorder %v6562, 1
        %vm6627 = vcmp.eq.s32.totalorder %v6563, 1
        %vm6628 = vcmp.eq.s32.totalorder %v6564, 1
        %vm6629 = vcmp.eq.s32.totalorder %v6565, 1
        %vm6630 = vcmp.eq.s32.totalorder %v6566, 1
        %vm6631 = vcmp.eq.s32.totalorder %v6567, 1
        %vm6632 = vcmp.eq.s32.totalorder %v6568, 1
        %vm6633 = vcmp.eq.s32.totalorder %v6569, 1
        %vm6634 = vcmp.eq.s32.totalorder %v6570, 1
        %vm6635 = vcmp.eq.s32.totalorder %v6571, 1
        %vm6636 = vcmp.eq.s32.totalorder %v6572, 1
        %vm6637 = vcmp.eq.s32.totalorder %v6573, 1
        %vm6638 = vcmp.eq.s32.totalorder %v6574, 1
        %vm6639 = vcmp.eq.s32.totalorder %v6575, 1
        %vm6640 = vcmp.eq.s32.totalorder %v6576, 1
        %vm6641 = vcmp.eq.s32.totalorder %v6577, 1
        %vm6642 = vcmp.eq.s32.totalorder %v6578, 1
        %vm6643 = vcmp.eq.s32.totalorder %v6579, 1
        %vm6644 = vcmp.eq.s32.totalorder %v6580, 1
        %vm6645 = vcmp.eq.s32.totalorder %v6581, 1
        %vm6646 = vcmp.eq.s32.totalorder %v6582, 1
        %vm6647 = vcmp.eq.s32.totalorder %v6583, 1
        %vm6648 = vcmp.eq.s32.totalorder %v6584, 1
        %vm6649 = vcmp.eq.s32.totalorder %v6585, 1
        %vm6650 = vcmp.eq.s32.totalorder %v6586, 1
        %vm6651 = vcmp.eq.s32.totalorder %v6587, 1
        %vm6652 = vcmp.eq.s32.totalorder %v6588, 1
        %vm6653 = vcmp.eq.s32.totalorder %v6589, 1
        %vm6654 = vcmp.eq.s32.totalorder %v6590, 1
        %v6655 = vsel %vm6591, %v6525, 0.0
        %v6656 = vsel %vm6592, %v6524, 0.0
        %v6657 = vsel %vm6593, %v6523, 0.0
        %v6658 = vsel %vm6594, %v6522, 0.0
        %v6659 = vsel %vm6595, %v6521, 0.0
        %v6660 = vsel %vm6596, %v6520, 0.0
        %v6661 = vsel %vm6597, %v6519, 0.0
        %v6662 = vsel %vm6598, %v6518, 0.0
        %v6663 = vsel %vm6599, %v6517, 0.0
        %v6664 = vsel %vm6600, %v6516, 0.0
        %v6665 = vsel %vm6601, %v6515, 0.0
        %v6666 = vsel %vm6602, %v6514, 0.0
        %v6667 = vsel %vm6603, %v6513, 0.0
        %v6668 = vsel %vm6604, %v6512, 0.0
        %v6669 = vsel %vm6605, %v6511, 0.0
        %v6670 = vsel %vm6606, %v6510, 0.0
        %v6671 = vsel %vm6607, %v6509, 0.0
        %v6672 = vsel %vm6608, %v6508, 0.0
        %v6673 = vsel %vm6609, %v6507, 0.0
        %v6674 = vsel %vm6610, %v6506, 0.0
        %v6675 = vsel %vm6611, %v6505, 0.0
        %v6676 = vsel %vm6612, %v6504, 0.0
        %v6677 = vsel %vm6613, %v6503, 0.0
        %v6678 = vsel %vm6614, %v6502, 0.0
        %v6679 = vsel %vm6615, %v6501, 0.0
        %v6680 = vsel %vm6616, %v6500, 0.0
        %v6681 = vsel %vm6617, %v6499, 0.0
        %v6682 = vsel %vm6618, %v6498, 0.0
        %v6683 = vsel %vm6619, %v6497, 0.0
        %v6684 = vsel %vm6620, %v6496, 0.0
        %v6685 = vsel %vm6621, %v6495, 0.0
        %v6686 = vsel %vm6622, %v6494, 0.0
        %v6687 = vsel %vm6623, %v6493, 0.0
        %v6688 = vsel %vm6624, %v6492, 0.0
        %v6689 = vsel %vm6625, %v6491, 0.0
        %v6690 = vsel %vm6626, %v6490, 0.0
        %v6691 = vsel %vm6627, %v6489, 0.0
        %v6692 = vsel %vm6628, %v6488, 0.0
        %v6693 = vsel %vm6629, %v6487, 0.0
        %v6694 = vsel %vm6630, %v6486, 0.0
        %v6695 = vsel %vm6631, %v6485, 0.0
        %v6696 = vsel %vm6632, %v6484, 0.0
        %v6697 = vsel %vm6633, %v6483, 0.0
        %v6698 = vsel %vm6634, %v6482, 0.0
        %v6699 = vsel %vm6635, %v6481, 0.0
        %v6700 = vsel %vm6636, %v6480, 0.0
        %v6701 = vsel %vm6637, %v6479, 0.0
        %v6702 = vsel %vm6638, %v6478, 0.0
        %v6703 = vsel %vm6639, %v6477, 0.0
        %v6704 = vsel %vm6640, %v6476, 0.0
        %v6705 = vsel %vm6641, %v6475, 0.0
        %v6706 = vsel %vm6642, %v6474, 0.0
        %v6707 = vsel %vm6643, %v6473, 0.0
        %v6708 = vsel %vm6644, %v6472, 0.0
        %v6709 = vsel %vm6645, %v6471, 0.0
        %v6710 = vsel %vm6646, %v6470, 0.0
        %v6711 = vsel %vm6647, %v6469, 0.0
        %v6712 = vsel %vm6648, %v6468, 0.0
        %v6713 = vsel %vm6649, %v6467, 0.0
        %v6714 = vsel %vm6650, %v6466, 0.0
        %v6715 = vsel %vm6651, %v6465, 0.0
        %v6716 = vsel %vm6652, %v6464, 0.0
        %v6717 = vsel %vm6653, %v6463, 0.0
        %v6718 = vsel %vm6654, %v6526, 0.0
        %v6719 = vadd.s32 %v1033, 4
        %v6720 = vadd.s32 %v1034, 4
        %v6721 = vadd.s32 %v1035, 4
        %v6722 = vadd.s32 %v1036, 4
        %v6723 = vadd.s32 %v1037, 4
        %v6724 = vadd.s32 %v1038, 4
        %v6725 = vadd.s32 %v1039, 4
        %v6726 = vadd.s32 %v1040, 4
        %v6727 = vadd.s32 %v1041, 4
        %v6728 = vadd.s32 %v1042, 4
        %v6729 = vadd.s32 %v1043, 4
        %v6730 = vadd.s32 %v1044, 4
        %v6731 = vadd.s32 %v1045, 4
        %v6732 = vadd.s32 %v1046, 4
        %v6733 = vadd.s32 %v1047, 4
        %v6734 = vadd.s32 %v1048, 4
        %v6735 = vadd.s32 %v1049, 4
        %v6736 = vadd.s32 %v1050, 4
        %v6737 = vadd.s32 %v1051, 4
        %v6738 = vadd.s32 %v1052, 4
        %v6739 = vadd.s32 %v1053, 4
        %v6740 = vadd.s32 %v1054, 4
        %v6741 = vadd.s32 %v1055, 4
        %v6742 = vadd.s32 %v1056, 4
        %v6743 = vadd.s32 %v1057, 4
        %v6744 = vadd.s32 %v1058, 4
        %v6745 = vadd.s32 %v1059, 4
        %v6746 = vadd.s32 %v1060, 4
        %v6747 = vadd.s32 %v1061, 4
        %v6748 = vadd.s32 %v1062, 4
        %v6749 = vadd.s32 %v1063, 4
        %v6750 = vadd.s32 %v1064, 4
        %v6751 = vadd.s32 %v1065, 4
        %v6752 = vadd.s32 %v1066, 4
        %v6753 = vadd.s32 %v1067, 4
        %v6754 = vadd.s32 %v1068, 4
        %v6755 = vadd.s32 %v1069, 4
        %v6756 = vadd.s32 %v1070, 4
        %v6757 = vadd.s32 %v1071, 4
        %v6758 = vadd.s32 %v1072, 4
        %v6759 = vadd.s32 %v1073, 4
        %v6760 = vadd.s32 %v1074, 4
        %v6761 = vadd.s32 %v1075, 4
        %v6762 = vadd.s32 %v1076, 4
        %v6763 = vadd.s32 %v1077, 4
        %v6764 = vadd.s32 %v1078, 4
        %v6765 = vadd.s32 %v1079, 4
        %v6766 = vadd.s32 %v1080, 4
        %v6767 = vadd.s32 %v1081, 4
        %v6768 = vadd.s32 %v1082, 4
        %v6769 = vadd.s32 %v1083, 4
        %v6770 = vadd.s32 %v1084, 4
        %v6771 = vadd.s32 %v1085, 4
        %v6772 = vadd.s32 %v1086, 4
        %v6773 = vadd.s32 %v1087, 4
        %v6774 = vadd.s32 %v1088, 4
        %v6775 = vadd.s32 %v1089, 4
        %v6776 = vadd.s32 %v1090, 4
        %v6777 = vadd.s32 %v1091, 4
        %v6778 = vadd.s32 %v1092, 4
        %v6779 = vadd.s32 %v1093, 4
        %v6780 = vadd.s32 %v1094, 4
        %v6781 = vadd.s32 %v1095, 4
        %v6782 = vadd.s32 %v1096, 4
        %vm6783 = vcmp.ge.s32.totalorder %v6719, 0
        %vm6784 = vcmp.ge.s32.totalorder %v6720, 0
        %vm6785 = vcmp.ge.s32.totalorder %v6721, 0
        %vm6786 = vcmp.ge.s32.totalorder %v6722, 0
        %vm6787 = vcmp.ge.s32.totalorder %v6723, 0
        %vm6788 = vcmp.ge.s32.totalorder %v6724, 0
        %vm6789 = vcmp.ge.s32.totalorder %v6725, 0
        %vm6790 = vcmp.ge.s32.totalorder %v6726, 0
        %vm6791 = vcmp.ge.s32.totalorder %v6727, 0
        %vm6792 = vcmp.ge.s32.totalorder %v6728, 0
        %vm6793 = vcmp.ge.s32.totalorder %v6729, 0
        %vm6794 = vcmp.ge.s32.totalorder %v6730, 0
        %vm6795 = vcmp.ge.s32.totalorder %v6731, 0
        %vm6796 = vcmp.ge.s32.totalorder %v6732, 0
        %vm6797 = vcmp.ge.s32.totalorder %v6733, 0
        %vm6798 = vcmp.ge.s32.totalorder %v6734, 0
        %vm6799 = vcmp.ge.s32.totalorder %v6735, 0
        %vm6800 = vcmp.ge.s32.totalorder %v6736, 0
        %vm6801 = vcmp.ge.s32.totalorder %v6737, 0
        %vm6802 = vcmp.ge.s32.totalorder %v6738, 0
        %vm6803 = vcmp.ge.s32.totalorder %v6739, 0
        %vm6804 = vcmp.ge.s32.totalorder %v6740, 0
        %vm6805 = vcmp.ge.s32.totalorder %v6741, 0
        %vm6806 = vcmp.ge.s32.totalorder %v6742, 0
        %vm6807 = vcmp.ge.s32.totalorder %v6743, 0
        %vm6808 = vcmp.ge.s32.totalorder %v6744, 0
        %vm6809 = vcmp.ge.s32.totalorder %v6745, 0
        %vm6810 = vcmp.ge.s32.totalorder %v6746, 0
        %vm6811 = vcmp.ge.s32.totalorder %v6747, 0
        %vm6812 = vcmp.ge.s32.totalorder %v6748, 0
        %vm6813 = vcmp.ge.s32.totalorder %v6749, 0
        %vm6814 = vcmp.ge.s32.totalorder %v6750, 0
        %vm6815 = vcmp.ge.s32.totalorder %v6751, 0
        %vm6816 = vcmp.ge.s32.totalorder %v6752, 0
        %vm6817 = vcmp.ge.s32.totalorder %v6753, 0
        %vm6818 = vcmp.ge.s32.totalorder %v6754, 0
        %vm6819 = vcmp.ge.s32.totalorder %v6755, 0
        %vm6820 = vcmp.ge.s32.totalorder %v6756, 0
        %vm6821 = vcmp.ge.s32.totalorder %v6757, 0
        %vm6822 = vcmp.ge.s32.totalorder %v6758, 0
        %vm6823 = vcmp.ge.s32.totalorder %v6759, 0
        %vm6824 = vcmp.ge.s32.totalorder %v6760, 0
        %vm6825 = vcmp.ge.s32.totalorder %v6761, 0
        %vm6826 = vcmp.ge.s32.totalorder %v6762, 0
        %vm6827 = vcmp.ge.s32.totalorder %v6763, 0
        %vm6828 = vcmp.ge.s32.totalorder %v6764, 0
        %vm6829 = vcmp.ge.s32.totalorder %v6765, 0
        %vm6830 = vcmp.ge.s32.totalorder %v6766, 0
        %vm6831 = vcmp.ge.s32.totalorder %v6767, 0
        %vm6832 = vcmp.ge.s32.totalorder %v6768, 0
        %vm6833 = vcmp.ge.s32.totalorder %v6769, 0
        %vm6834 = vcmp.ge.s32.totalorder %v6770, 0
        %vm6835 = vcmp.ge.s32.totalorder %v6771, 0
        %vm6836 = vcmp.ge.s32.totalorder %v6772, 0
        %vm6837 = vcmp.ge.s32.totalorder %v6773, 0
        %vm6838 = vcmp.ge.s32.totalorder %v6774, 0
        %vm6839 = vcmp.ge.s32.totalorder %v6775, 0
        %vm6840 = vcmp.ge.s32.totalorder %v6776, 0
        %vm6841 = vcmp.ge.s32.totalorder %v6777, 0
        %vm6842 = vcmp.ge.s32.totalorder %v6778, 0
        %vm6843 = vcmp.ge.s32.totalorder %v6779, 0
        %vm6844 = vcmp.ge.s32.totalorder %v6780, 0
        %vm6845 = vcmp.ge.s32.totalorder %v6781, 0
        %vm6846 = vcmp.ge.s32.totalorder %v6782, 0
        %vm6847 = vcmp.lt.s32.totalorder %v6719, 16
        %vm6848 = vcmp.lt.s32.totalorder %v6720, 16
        %vm6849 = vcmp.lt.s32.totalorder %v6721, 16
        %vm6850 = vcmp.lt.s32.totalorder %v6722, 16
        %vm6851 = vcmp.lt.s32.totalorder %v6723, 16
        %vm6852 = vcmp.lt.s32.totalorder %v6724, 16
        %vm6853 = vcmp.lt.s32.totalorder %v6725, 16
        %vm6854 = vcmp.lt.s32.totalorder %v6726, 16
        %vm6855 = vcmp.lt.s32.totalorder %v6727, 16
        %vm6856 = vcmp.lt.s32.totalorder %v6728, 16
        %vm6857 = vcmp.lt.s32.totalorder %v6729, 16
        %vm6858 = vcmp.lt.s32.totalorder %v6730, 16
        %vm6859 = vcmp.lt.s32.totalorder %v6731, 16
        %vm6860 = vcmp.lt.s32.totalorder %v6732, 16
        %vm6861 = vcmp.lt.s32.totalorder %v6733, 16
        %vm6862 = vcmp.lt.s32.totalorder %v6734, 16
        %vm6863 = vcmp.lt.s32.totalorder %v6735, 16
        %vm6864 = vcmp.lt.s32.totalorder %v6736, 16
        %vm6865 = vcmp.lt.s32.totalorder %v6737, 16
        %vm6866 = vcmp.lt.s32.totalorder %v6738, 16
        %vm6867 = vcmp.lt.s32.totalorder %v6739, 16
        %vm6868 = vcmp.lt.s32.totalorder %v6740, 16
        %vm6869 = vcmp.lt.s32.totalorder %v6741, 16
        %vm6870 = vcmp.lt.s32.totalorder %v6742, 16
        %vm6871 = vcmp.lt.s32.totalorder %v6743, 16
        %vm6872 = vcmp.lt.s32.totalorder %v6744, 16
        %vm6873 = vcmp.lt.s32.totalorder %v6745, 16
        %vm6874 = vcmp.lt.s32.totalorder %v6746, 16
        %vm6875 = vcmp.lt.s32.totalorder %v6747, 16
        %vm6876 = vcmp.lt.s32.totalorder %v6748, 16
        %vm6877 = vcmp.lt.s32.totalorder %v6749, 16
        %vm6878 = vcmp.lt.s32.totalorder %v6750, 16
        %vm6879 = vcmp.lt.s32.totalorder %v6751, 16
        %vm6880 = vcmp.lt.s32.totalorder %v6752, 16
        %vm6881 = vcmp.lt.s32.totalorder %v6753, 16
        %vm6882 = vcmp.lt.s32.totalorder %v6754, 16
        %vm6883 = vcmp.lt.s32.totalorder %v6755, 16
        %vm6884 = vcmp.lt.s32.totalorder %v6756, 16
        %vm6885 = vcmp.lt.s32.totalorder %v6757, 16
        %vm6886 = vcmp.lt.s32.totalorder %v6758, 16
        %vm6887 = vcmp.lt.s32.totalorder %v6759, 16
        %vm6888 = vcmp.lt.s32.totalorder %v6760, 16
        %vm6889 = vcmp.lt.s32.totalorder %v6761, 16
        %vm6890 = vcmp.lt.s32.totalorder %v6762, 16
        %vm6891 = vcmp.lt.s32.totalorder %v6763, 16
        %vm6892 = vcmp.lt.s32.totalorder %v6764, 16
        %vm6893 = vcmp.lt.s32.totalorder %v6765, 16
        %vm6894 = vcmp.lt.s32.totalorder %v6766, 16
        %vm6895 = vcmp.lt.s32.totalorder %v6767, 16
        %vm6896 = vcmp.lt.s32.totalorder %v6768, 16
        %vm6897 = vcmp.lt.s32.totalorder %v6769, 16
        %vm6898 = vcmp.lt.s32.totalorder %v6770, 16
        %vm6899 = vcmp.lt.s32.totalorder %v6771, 16
        %vm6900 = vcmp.lt.s32.totalorder %v6772, 16
        %vm6901 = vcmp.lt.s32.totalorder %v6773, 16
        %vm6902 = vcmp.lt.s32.totalorder %v6774, 16
        %vm6903 = vcmp.lt.s32.totalorder %v6775, 16
        %vm6904 = vcmp.lt.s32.totalorder %v6776, 16
        %vm6905 = vcmp.lt.s32.totalorder %v6777, 16
        %vm6906 = vcmp.lt.s32.totalorder %v6778, 16
        %vm6907 = vcmp.lt.s32.totalorder %v6779, 16
        %vm6908 = vcmp.lt.s32.totalorder %v6780, 16
        %vm6909 = vcmp.lt.s32.totalorder %v6781, 16
        %vm6910 = vcmp.lt.s32.totalorder %v6782, 16
        %vm6911 = vmand %vm6783, %vm6847
        %vm6912 = vmand %vm6784, %vm6848
        %vm6913 = vmand %vm6785, %vm6849
        %vm6914 = vmand %vm6786, %vm6850
        %vm6915 = vmand %vm6787, %vm6851
        %vm6916 = vmand %vm6788, %vm6852
        %vm6917 = vmand %vm6789, %vm6853
        %vm6918 = vmand %vm6790, %vm6854
        %vm6919 = vmand %vm6791, %vm6855
        %vm6920 = vmand %vm6792, %vm6856
        %vm6921 = vmand %vm6793, %vm6857
        %vm6922 = vmand %vm6794, %vm6858
        %vm6923 = vmand %vm6795, %vm6859
        %vm6924 = vmand %vm6796, %vm6860
        %vm6925 = vmand %vm6797, %vm6861
        %vm6926 = vmand %vm6798, %vm6862
        %vm6927 = vmand %vm6799, %vm6863
        %vm6928 = vmand %vm6800, %vm6864
        %vm6929 = vmand %vm6801, %vm6865
        %vm6930 = vmand %vm6802, %vm6866
        %vm6931 = vmand %vm6803, %vm6867
        %vm6932 = vmand %vm6804, %vm6868
        %vm6933 = vmand %vm6805, %vm6869
        %vm6934 = vmand %vm6806, %vm6870
        %vm6935 = vmand %vm6807, %vm6871
        %vm6936 = vmand %vm6808, %vm6872
        %vm6937 = vmand %vm6809, %vm6873
        %vm6938 = vmand %vm6810, %vm6874
        %vm6939 = vmand %vm6811, %vm6875
        %vm6940 = vmand %vm6812, %vm6876
        %vm6941 = vmand %vm6813, %vm6877
        %vm6942 = vmand %vm6814, %vm6878
        %vm6943 = vmand %vm6815, %vm6879
        %vm6944 = vmand %vm6816, %vm6880
        %vm6945 = vmand %vm6817, %vm6881
        %vm6946 = vmand %vm6818, %vm6882
        %vm6947 = vmand %vm6819, %vm6883
        %vm6948 = vmand %vm6820, %vm6884
        %vm6949 = vmand %vm6821, %vm6885
        %vm6950 = vmand %vm6822, %vm6886
        %vm6951 = vmand %vm6823, %vm6887
        %vm6952 = vmand %vm6824, %vm6888
        %vm6953 = vmand %vm6825, %vm6889
        %vm6954 = vmand %vm6826, %vm6890
        %vm6955 = vmand %vm6827, %vm6891
        %vm6956 = vmand %vm6828, %vm6892
        %vm6957 = vmand %vm6829, %vm6893
        %vm6958 = vmand %vm6830, %vm6894
        %vm6959 = vmand %vm6831, %vm6895
        %vm6960 = vmand %vm6832, %vm6896
        %vm6961 = vmand %vm6833, %vm6897
        %vm6962 = vmand %vm6834, %vm6898
        %vm6963 = vmand %vm6835, %vm6899
        %vm6964 = vmand %vm6836, %vm6900
        %vm6965 = vmand %vm6837, %vm6901
        %vm6966 = vmand %vm6838, %vm6902
        %vm6967 = vmand %vm6839, %vm6903
        %vm6968 = vmand %vm6840, %vm6904
        %vm6969 = vmand %vm6841, %vm6905
        %vm6970 = vmand %vm6842, %vm6906
        %vm6971 = vmand %vm6843, %vm6907
        %vm6972 = vmand %vm6844, %vm6908
        %vm6973 = vmand %vm6845, %vm6909
        %vm6974 = vmand %vm6846, %vm6910
        %v6975 = vsel %vm6911, 1, 0
        %v6976 = vsel %vm6912, 1, 0
        %v6977 = vsel %vm6913, 1, 0
        %v6978 = vsel %vm6914, 1, 0
        %v6979 = vsel %vm6915, 1, 0
        %v6980 = vsel %vm6916, 1, 0
        %v6981 = vsel %vm6917, 1, 0
        %v6982 = vsel %vm6918, 1, 0
        %v6983 = vsel %vm6919, 1, 0
        %v6984 = vsel %vm6920, 1, 0
        %v6985 = vsel %vm6921, 1, 0
        %v6986 = vsel %vm6922, 1, 0
        %v6987 = vsel %vm6923, 1, 0
        %v6988 = vsel %vm6924, 1, 0
        %v6989 = vsel %vm6925, 1, 0
        %v6990 = vsel %vm6926, 1, 0
        %v6991 = vsel %vm6927, 1, 0
        %v6992 = vsel %vm6928, 1, 0
        %v6993 = vsel %vm6929, 1, 0
        %v6994 = vsel %vm6930, 1, 0
        %v6995 = vsel %vm6931, 1, 0
        %v6996 = vsel %vm6932, 1, 0
        %v6997 = vsel %vm6933, 1, 0
        %v6998 = vsel %vm6934, 1, 0
        %v6999 = vsel %vm6935, 1, 0
        %v7000 = vsel %vm6936, 1, 0
        %v7001 = vsel %vm6937, 1, 0
        %v7002 = vsel %vm6938, 1, 0
        %v7003 = vsel %vm6939, 1, 0
        %v7004 = vsel %vm6940, 1, 0
        %v7005 = vsel %vm6941, 1, 0
        %v7006 = vsel %vm6942, 1, 0
        %v7007 = vsel %vm6943, 1, 0
        %v7008 = vsel %vm6944, 1, 0
        %v7009 = vsel %vm6945, 1, 0
        %v7010 = vsel %vm6946, 1, 0
        %v7011 = vsel %vm6947, 1, 0
        %v7012 = vsel %vm6948, 1, 0
        %v7013 = vsel %vm6949, 1, 0
        %v7014 = vsel %vm6950, 1, 0
        %v7015 = vsel %vm6951, 1, 0
        %v7016 = vsel %vm6952, 1, 0
        %v7017 = vsel %vm6953, 1, 0
        %v7018 = vsel %vm6954, 1, 0
        %v7019 = vsel %vm6955, 1, 0
        %v7020 = vsel %vm6956, 1, 0
        %v7021 = vsel %vm6957, 1, 0
        %v7022 = vsel %vm6958, 1, 0
        %v7023 = vsel %vm6959, 1, 0
        %v7024 = vsel %vm6960, 1, 0
        %v7025 = vsel %vm6961, 1, 0
        %v7026 = vsel %vm6962, 1, 0
        %v7027 = vsel %vm6963, 1, 0
        %v7028 = vsel %vm6964, 1, 0
        %v7029 = vsel %vm6965, 1, 0
        %v7030 = vsel %vm6966, 1, 0
        %v7031 = vsel %vm6967, 1, 0
        %v7032 = vsel %vm6968, 1, 0
        %v7033 = vsel %vm6969, 1, 0
        %v7034 = vsel %vm6970, 1, 0
        %v7035 = vsel %vm6971, 1, 0
        %v7036 = vsel %vm6972, 1, 0
        %v7037 = vsel %vm6973, 1, 0
        %v7038 = vsel %vm6974, 1, 0
        %vm7039 = vcmp.eq.s32.totalorder %v6975, 1
        %vm7040 = vcmp.eq.s32.totalorder %v6976, 1
        %vm7041 = vcmp.eq.s32.totalorder %v6977, 1
        %vm7042 = vcmp.eq.s32.totalorder %v6978, 1
        %vm7043 = vcmp.eq.s32.totalorder %v6979, 1
        %vm7044 = vcmp.eq.s32.totalorder %v6980, 1
        %vm7045 = vcmp.eq.s32.totalorder %v6981, 1
        %vm7046 = vcmp.eq.s32.totalorder %v6982, 1
        %vm7047 = vcmp.eq.s32.totalorder %v6983, 1
        %vm7048 = vcmp.eq.s32.totalorder %v6984, 1
        %vm7049 = vcmp.eq.s32.totalorder %v6985, 1
        %vm7050 = vcmp.eq.s32.totalorder %v6986, 1
        %vm7051 = vcmp.eq.s32.totalorder %v6987, 1
        %vm7052 = vcmp.eq.s32.totalorder %v6988, 1
        %vm7053 = vcmp.eq.s32.totalorder %v6989, 1
        %vm7054 = vcmp.eq.s32.totalorder %v6990, 1
        %vm7055 = vcmp.eq.s32.totalorder %v6991, 1
        %vm7056 = vcmp.eq.s32.totalorder %v6992, 1
        %vm7057 = vcmp.eq.s32.totalorder %v6993, 1
        %vm7058 = vcmp.eq.s32.totalorder %v6994, 1
        %vm7059 = vcmp.eq.s32.totalorder %v6995, 1
        %vm7060 = vcmp.eq.s32.totalorder %v6996, 1
        %vm7061 = vcmp.eq.s32.totalorder %v6997, 1
        %vm7062 = vcmp.eq.s32.totalorder %v6998, 1
        %vm7063 = vcmp.eq.s32.totalorder %v6999, 1
        %vm7064 = vcmp.eq.s32.totalorder %v7000, 1
        %vm7065 = vcmp.eq.s32.totalorder %v7001, 1
        %vm7066 = vcmp.eq.s32.totalorder %v7002, 1
        %vm7067 = vcmp.eq.s32.totalorder %v7003, 1
        %vm7068 = vcmp.eq.s32.totalorder %v7004, 1
        %vm7069 = vcmp.eq.s32.totalorder %v7005, 1
        %vm7070 = vcmp.eq.s32.totalorder %v7006, 1
        %vm7071 = vcmp.eq.s32.totalorder %v7007, 1
        %vm7072 = vcmp.eq.s32.totalorder %v7008, 1
        %vm7073 = vcmp.eq.s32.totalorder %v7009, 1
        %vm7074 = vcmp.eq.s32.totalorder %v7010, 1
        %vm7075 = vcmp.eq.s32.totalorder %v7011, 1
        %vm7076 = vcmp.eq.s32.totalorder %v7012, 1
        %vm7077 = vcmp.eq.s32.totalorder %v7013, 1
        %vm7078 = vcmp.eq.s32.totalorder %v7014, 1
        %vm7079 = vcmp.eq.s32.totalorder %v7015, 1
        %vm7080 = vcmp.eq.s32.totalorder %v7016, 1
        %vm7081 = vcmp.eq.s32.totalorder %v7017, 1
        %vm7082 = vcmp.eq.s32.totalorder %v7018, 1
        %vm7083 = vcmp.eq.s32.totalorder %v7019, 1
        %vm7084 = vcmp.eq.s32.totalorder %v7020, 1
        %vm7085 = vcmp.eq.s32.totalorder %v7021, 1
        %vm7086 = vcmp.eq.s32.totalorder %v7022, 1
        %vm7087 = vcmp.eq.s32.totalorder %v7023, 1
        %vm7088 = vcmp.eq.s32.totalorder %v7024, 1
        %vm7089 = vcmp.eq.s32.totalorder %v7025, 1
        %vm7090 = vcmp.eq.s32.totalorder %v7026, 1
        %vm7091 = vcmp.eq.s32.totalorder %v7027, 1
        %vm7092 = vcmp.eq.s32.totalorder %v7028, 1
        %vm7093 = vcmp.eq.s32.totalorder %v7029, 1
        %vm7094 = vcmp.eq.s32.totalorder %v7030, 1
        %vm7095 = vcmp.eq.s32.totalorder %v7031, 1
        %vm7096 = vcmp.eq.s32.totalorder %v7032, 1
        %vm7097 = vcmp.eq.s32.totalorder %v7033, 1
        %vm7098 = vcmp.eq.s32.totalorder %v7034, 1
        %vm7099 = vcmp.eq.s32.totalorder %v7035, 1
        %vm7100 = vcmp.eq.s32.totalorder %v7036, 1
        %vm7101 = vcmp.eq.s32.totalorder %v7037, 1
        %vm7102 = vcmp.eq.s32.totalorder %v7038, 1
        %v7103 = vsel %vm7039, %v2681, 0.0
        %v7104 = vsel %vm7040, %v2680, 0.0
        %v7105 = vsel %vm7041, %v2679, 0.0
        %v7106 = vsel %vm7042, %v2678, 0.0
        %v7107 = vsel %vm7043, %v2677, 0.0
        %v7108 = vsel %vm7044, %v2676, 0.0
        %v7109 = vsel %vm7045, %v2675, 0.0
        %v7110 = vsel %vm7046, %v2674, 0.0
        %v7111 = vsel %vm7047, %v2673, 0.0
        %v7112 = vsel %vm7048, %v2672, 0.0
        %v7113 = vsel %vm7049, %v2671, 0.0
        %v7114 = vsel %vm7050, %v2670, 0.0
        %v7115 = vsel %vm7051, %v2669, 0.0
        %v7116 = vsel %vm7052, %v2668, 0.0
        %v7117 = vsel %vm7053, %v2667, 0.0
        %v7118 = vsel %vm7054, %v2666, 0.0
        %v7119 = vsel %vm7055, %v2665, 0.0
        %v7120 = vsel %vm7056, %v2664, 0.0
        %v7121 = vsel %vm7057, %v2663, 0.0
        %v7122 = vsel %vm7058, %v2662, 0.0
        %v7123 = vsel %vm7059, %v2661, 0.0
        %v7124 = vsel %vm7060, %v2660, 0.0
        %v7125 = vsel %vm7061, %v2659, 0.0
        %v7126 = vsel %vm7062, %v2658, 0.0
        %v7127 = vsel %vm7063, %v2657, 0.0
        %v7128 = vsel %vm7064, %v2656, 0.0
        %v7129 = vsel %vm7065, %v2655, 0.0
        %v7130 = vsel %vm7066, %v2654, 0.0
        %v7131 = vsel %vm7067, %v2653, 0.0
        %v7132 = vsel %vm7068, %v2652, 0.0
        %v7133 = vsel %vm7069, %v2651, 0.0
        %v7134 = vsel %vm7070, %v2650, 0.0
        %v7135 = vsel %vm7071, %v2649, 0.0
        %v7136 = vsel %vm7072, %v2648, 0.0
        %v7137 = vsel %vm7073, %v2647, 0.0
        %v7138 = vsel %vm7074, %v2646, 0.0
        %v7139 = vsel %vm7075, %v2645, 0.0
        %v7140 = vsel %vm7076, %v2644, 0.0
        %v7141 = vsel %vm7077, %v2643, 0.0
        %v7142 = vsel %vm7078, %v2642, 0.0
        %v7143 = vsel %vm7079, %v2641, 0.0
        %v7144 = vsel %vm7080, %v2640, 0.0
        %v7145 = vsel %vm7081, %v2639, 0.0
        %v7146 = vsel %vm7082, %v2638, 0.0
        %v7147 = vsel %vm7083, %v2637, 0.0
        %v7148 = vsel %vm7084, %v2636, 0.0
        %v7149 = vsel %vm7085, %v2635, 0.0
        %v7150 = vsel %vm7086, %v2634, 0.0
        %v7151 = vsel %vm7087, %v2633, 0.0
        %v7152 = vsel %vm7088, %v2632, 0.0
        %v7153 = vsel %vm7089, %v2631, 0.0
        %v7154 = vsel %vm7090, %v2630, 0.0
        %v7155 = vsel %vm7091, %v2629, 0.0
        %v7156 = vsel %vm7092, %v2628, 0.0
        %v7157 = vsel %vm7093, %v2627, 0.0
        %v7158 = vsel %vm7094, %v2626, 0.0
        %v7159 = vsel %vm7095, %v2625, 0.0
        %v7160 = vsel %vm7096, %v2624, 0.0
        %v7161 = vsel %vm7097, %v2623, 0.0
        %v7162 = vsel %vm7098, %v2622, 0.0
        %v7163 = vsel %vm7099, %v2621, 0.0
        %v7164 = vsel %vm7100, %v2620, 0.0
        %v7165 = vsel %vm7101, %v2619, 0.0
        %v7166 = vsel %vm7102, %v2682, 0.0
        %7231 = vrot.lane.b32.xlu0 %v3388, 32
        %v7232 = vpop.permute.xlu0 %7231
        %7233 = vrot.lane.b32.xlu0 %v3389, 32
        %v7234 = vpop.permute.xlu0 %7233
        %7235 = vrot.lane.b32.xlu0 %v3390, 32
        %v7236 = vpop.permute.xlu0 %7235
        %7237 = vrot.lane.b32.xlu0 %v3391, 32
        %v7238 = vpop.permute.xlu0 %7237
        %7239 = vrot.lane.b32.xlu0 %v3392, 32
        %v7240 = vpop.permute.xlu0 %7239
        %7241 = vrot.lane.b32.xlu0 %v3393, 32
        %v7242 = vpop.permute.xlu0 %7241
        %7243 = vrot.lane.b32.xlu0 %v3394, 32
        %v7244 = vpop.permute.xlu0 %7243
        %7245 = vrot.lane.b32.xlu0 %v3395, 32
        %v7246 = vpop.permute.xlu0 %7245
        %7247 = vrot.lane.b32.xlu0 %v3396, 32
        %v7248 = vpop.permute.xlu0 %7247
        %7249 = vrot.lane.b32.xlu0 %v3397, 32
        %v7250 = vpop.permute.xlu0 %7249
        %7251 = vrot.lane.b32.xlu0 %v3398, 32
        %v7252 = vpop.permute.xlu0 %7251
        %7253 = vrot.lane.b32.xlu0 %v3399, 32
        %v7254 = vpop.permute.xlu0 %7253
        %7255 = vrot.lane.b32.xlu0 %v3400, 32
        %v7256 = vpop.permute.xlu0 %7255
        %7257 = vrot.lane.b32.xlu0 %v3401, 32
        %v7258 = vpop.permute.xlu0 %7257
        %7259 = vrot.lane.b32.xlu0 %v3402, 32
        %v7260 = vpop.permute.xlu0 %7259
        %7261 = vrot.lane.b32.xlu0 %v3403, 32
        %v7262 = vpop.permute.xlu0 %7261
        %7263 = vrot.lane.b32.xlu0 %v3404, 32
        %v7264 = vpop.permute.xlu0 %7263
        %7265 = vrot.lane.b32.xlu0 %v3405, 32
        %v7266 = vpop.permute.xlu0 %7265
        %7267 = vrot.lane.b32.xlu0 %v3406, 32
        %v7268 = vpop.permute.xlu0 %7267
        %7269 = vrot.lane.b32.xlu0 %v3407, 32
        %v7270 = vpop.permute.xlu0 %7269
        %7271 = vrot.lane.b32.xlu0 %v3408, 32
        %v7272 = vpop.permute.xlu0 %7271
        %7273 = vrot.lane.b32.xlu0 %v3409, 32
        %v7274 = vpop.permute.xlu0 %7273
        %7275 = vrot.lane.b32.xlu0 %v3410, 32
        %v7276 = vpop.permute.xlu0 %7275
        %7277 = vrot.lane.b32.xlu0 %v3411, 32
        %v7278 = vpop.permute.xlu0 %7277
        %7279 = vrot.lane.b32.xlu0 %v3412, 32
        %v7280 = vpop.permute.xlu0 %7279
        %7281 = vrot.lane.b32.xlu0 %v3413, 32
        %v7282 = vpop.permute.xlu0 %7281
        %7283 = vrot.lane.b32.xlu0 %v3414, 32
        %v7284 = vpop.permute.xlu0 %7283
        %7285 = vrot.lane.b32.xlu0 %v3415, 32
        %v7286 = vpop.permute.xlu0 %7285
        %7287 = vrot.lane.b32.xlu0 %v3416, 32
        %v7288 = vpop.permute.xlu0 %7287
        %7289 = vrot.lane.b32.xlu0 %v3417, 32
        %v7290 = vpop.permute.xlu0 %7289
        %7291 = vrot.lane.b32.xlu0 %v3418, 32
        %v7292 = vpop.permute.xlu0 %7291
        %7293 = vrot.lane.b32.xlu0 %v3419, 32
        %v7294 = vpop.permute.xlu0 %7293
        %7295 = vrot.lane.b32.xlu0 %v3420, 32
        %v7296 = vpop.permute.xlu0 %7295
        %7297 = vrot.lane.b32.xlu0 %v3421, 32
        %v7298 = vpop.permute.xlu0 %7297
        %7299 = vrot.lane.b32.xlu0 %v3422, 32
        %v7300 = vpop.permute.xlu0 %7299
        %7301 = vrot.lane.b32.xlu0 %v3423, 32
        %v7302 = vpop.permute.xlu0 %7301
        %7303 = vrot.lane.b32.xlu0 %v3424, 32
        %v7304 = vpop.permute.xlu0 %7303
        %7305 = vrot.lane.b32.xlu0 %v3425, 32
        %v7306 = vpop.permute.xlu0 %7305
        %7307 = vrot.lane.b32.xlu0 %v3426, 32
        %v7308 = vpop.permute.xlu0 %7307
        %7309 = vrot.lane.b32.xlu0 %v3427, 32
        %v7310 = vpop.permute.xlu0 %7309
        %7311 = vrot.lane.b32.xlu0 %v3428, 32
        %v7312 = vpop.permute.xlu0 %7311
        %7313 = vrot.lane.b32.xlu0 %v3429, 32
        %v7314 = vpop.permute.xlu0 %7313
        %7315 = vrot.lane.b32.xlu0 %v3430, 32
        %v7316 = vpop.permute.xlu0 %7315
        %7317 = vrot.lane.b32.xlu0 %v3431, 32
        %v7318 = vpop.permute.xlu0 %7317
        %7319 = vrot.lane.b32.xlu0 %v3432, 32
        %v7320 = vpop.permute.xlu0 %7319
        %7321 = vrot.lane.b32.xlu0 %v3433, 32
        %v7322 = vpop.permute.xlu0 %7321
        %7323 = vrot.lane.b32.xlu0 %v3434, 32
        %v7324 = vpop.permute.xlu0 %7323
        %7325 = vrot.lane.b32.xlu0 %v3435, 32
        %v7326 = vpop.permute.xlu0 %7325
        %7327 = vrot.lane.b32.xlu0 %v3436, 32
        %v7328 = vpop.permute.xlu0 %7327
        %7329 = vrot.lane.b32.xlu0 %v3437, 32
        %v7330 = vpop.permute.xlu0 %7329
        %7331 = vrot.lane.b32.xlu0 %v3438, 32
        %v7332 = vpop.permute.xlu0 %7331
        %7333 = vrot.lane.b32.xlu0 %v3439, 32
        %v7334 = vpop.permute.xlu0 %7333
        %7335 = vrot.lane.b32.xlu0 %v3440, 32
        %v7336 = vpop.permute.xlu0 %7335
        %7337 = vrot.lane.b32.xlu0 %v3441, 32
        %v7338 = vpop.permute.xlu0 %7337
        %7339 = vrot.lane.b32.xlu0 %v3442, 32
        %v7340 = vpop.permute.xlu0 %7339
        %7341 = vrot.lane.b32.xlu0 %v3443, 32
        %v7342 = vpop.permute.xlu0 %7341
        %7343 = vrot.lane.b32.xlu0 %v3444, 32
        %v7344 = vpop.permute.xlu0 %7343
        %7345 = vrot.lane.b32.xlu0 %v3445, 32
        %v7346 = vpop.permute.xlu0 %7345
        %7347 = vrot.lane.b32.xlu0 %v3446, 32
        %v7348 = vpop.permute.xlu0 %7347
        %7349 = vrot.lane.b32.xlu0 %v3447, 32
        %v7350 = vpop.permute.xlu0 %7349
        %7351 = vrot.lane.b32.xlu0 %v3448, 32
        %v7352 = vpop.permute.xlu0 %7351
        %7353 = vrot.lane.b32.xlu0 %v3449, 32
        %v7354 = vpop.permute.xlu0 %7353
        %7355 = vrot.lane.b32.xlu0 %v3450, 32
        %v7356 = vpop.permute.xlu0 %7355
        %7357 = vrot.lane.b32.xlu0 %v3451, 32
        %v7358 = vpop.permute.xlu0 %7357
        %7487 = vrot.lane.b32.xlu0 %v3965, 64
        %v7488 = vpop.permute.xlu0 %7487
        %7489 = vrot.lane.b32.xlu0 %v3966, 64
        %v7490 = vpop.permute.xlu0 %7489
        %7491 = vrot.lane.b32.xlu0 %v3967, 64
        %v7492 = vpop.permute.xlu0 %7491
        %7493 = vrot.lane.b32.xlu0 %v3968, 64
        %v7494 = vpop.permute.xlu0 %7493
        %7495 = vrot.lane.b32.xlu0 %v3969, 64
        %v7496 = vpop.permute.xlu0 %7495
        %7497 = vrot.lane.b32.xlu0 %v3970, 64
        %v7498 = vpop.permute.xlu0 %7497
        %7499 = vrot.lane.b32.xlu0 %v3971, 64
        %v7500 = vpop.permute.xlu0 %7499
        %7501 = vrot.lane.b32.xlu0 %v3972, 64
        %v7502 = vpop.permute.xlu0 %7501
        %7503 = vrot.lane.b32.xlu0 %v3973, 64
        %v7504 = vpop.permute.xlu0 %7503
        %7505 = vrot.lane.b32.xlu0 %v3974, 64
        %v7506 = vpop.permute.xlu0 %7505
        %7507 = vrot.lane.b32.xlu0 %v3975, 64
        %v7508 = vpop.permute.xlu0 %7507
        %7509 = vrot.lane.b32.xlu0 %v3976, 64
        %v7510 = vpop.permute.xlu0 %7509
        %7511 = vrot.lane.b32.xlu0 %v3977, 64
        %v7512 = vpop.permute.xlu0 %7511
        %7513 = vrot.lane.b32.xlu0 %v3978, 64
        %v7514 = vpop.permute.xlu0 %7513
        %7515 = vrot.lane.b32.xlu0 %v3979, 64
        %v7516 = vpop.permute.xlu0 %7515
        %7517 = vrot.lane.b32.xlu0 %v3980, 64
        %v7518 = vpop.permute.xlu0 %7517
        %7519 = vrot.lane.b32.xlu0 %v3981, 64
        %v7520 = vpop.permute.xlu0 %7519
        %7521 = vrot.lane.b32.xlu0 %v3982, 64
        %v7522 = vpop.permute.xlu0 %7521
        %7523 = vrot.lane.b32.xlu0 %v3983, 64
        %v7524 = vpop.permute.xlu0 %7523
        %7525 = vrot.lane.b32.xlu0 %v3984, 64
        %v7526 = vpop.permute.xlu0 %7525
        %7527 = vrot.lane.b32.xlu0 %v3985, 64
        %v7528 = vpop.permute.xlu0 %7527
        %7529 = vrot.lane.b32.xlu0 %v3986, 64
        %v7530 = vpop.permute.xlu0 %7529
        %7531 = vrot.lane.b32.xlu0 %v3987, 64
        %v7532 = vpop.permute.xlu0 %7531
        %7533 = vrot.lane.b32.xlu0 %v3988, 64
        %v7534 = vpop.permute.xlu0 %7533
        %7535 = vrot.lane.b32.xlu0 %v3989, 64
        %v7536 = vpop.permute.xlu0 %7535
        %7537 = vrot.lane.b32.xlu0 %v3990, 64
        %v7538 = vpop.permute.xlu0 %7537
        %7539 = vrot.lane.b32.xlu0 %v3991, 64
        %v7540 = vpop.permute.xlu0 %7539
        %7541 = vrot.lane.b32.xlu0 %v3992, 64
        %v7542 = vpop.permute.xlu0 %7541
        %7543 = vrot.lane.b32.xlu0 %v3993, 64
        %v7544 = vpop.permute.xlu0 %7543
        %7545 = vrot.lane.b32.xlu0 %v3994, 64
        %v7546 = vpop.permute.xlu0 %7545
        %7547 = vrot.lane.b32.xlu0 %v3995, 64
        %v7548 = vpop.permute.xlu0 %7547
        %7549 = vrot.lane.b32.xlu0 %v3996, 64
        %v7550 = vpop.permute.xlu0 %7549
        %7551 = vrot.lane.b32.xlu0 %v3997, 64
        %v7552 = vpop.permute.xlu0 %7551
        %7553 = vrot.lane.b32.xlu0 %v3998, 64
        %v7554 = vpop.permute.xlu0 %7553
        %7555 = vrot.lane.b32.xlu0 %v3999, 64
        %v7556 = vpop.permute.xlu0 %7555
        %7557 = vrot.lane.b32.xlu0 %v4000, 64
        %v7558 = vpop.permute.xlu0 %7557
        %7559 = vrot.lane.b32.xlu0 %v4001, 64
        %v7560 = vpop.permute.xlu0 %7559
        %7561 = vrot.lane.b32.xlu0 %v4002, 64
        %v7562 = vpop.permute.xlu0 %7561
        %7563 = vrot.lane.b32.xlu0 %v4003, 64
        %v7564 = vpop.permute.xlu0 %7563
        %7565 = vrot.lane.b32.xlu0 %v4004, 64
        %v7566 = vpop.permute.xlu0 %7565
        %7567 = vrot.lane.b32.xlu0 %v4005, 64
        %v7568 = vpop.permute.xlu0 %7567
        %7569 = vrot.lane.b32.xlu0 %v4006, 64
        %v7570 = vpop.permute.xlu0 %7569
        %7571 = vrot.lane.b32.xlu0 %v4007, 64
        %v7572 = vpop.permute.xlu0 %7571
        %7573 = vrot.lane.b32.xlu0 %v4008, 64
        %v7574 = vpop.permute.xlu0 %7573
        %7575 = vrot.lane.b32.xlu0 %v4009, 64
        %v7576 = vpop.permute.xlu0 %7575
        %7577 = vrot.lane.b32.xlu0 %v4010, 64
        %v7578 = vpop.permute.xlu0 %7577
        %7579 = vrot.lane.b32.xlu0 %v4011, 64
        %v7580 = vpop.permute.xlu0 %7579
        %7581 = vrot.lane.b32.xlu0 %v4012, 64
        %v7582 = vpop.permute.xlu0 %7581
        %7583 = vrot.lane.b32.xlu0 %v4013, 64
        %v7584 = vpop.permute.xlu0 %7583
        %7585 = vrot.lane.b32.xlu0 %v4014, 64
        %v7586 = vpop.permute.xlu0 %7585
        %7587 = vrot.lane.b32.xlu0 %v4015, 64
        %v7588 = vpop.permute.xlu0 %7587
        %7589 = vrot.lane.b32.xlu0 %v4016, 64
        %v7590 = vpop.permute.xlu0 %7589
        %7591 = vrot.lane.b32.xlu0 %v4017, 64
        %v7592 = vpop.permute.xlu0 %7591
        %7593 = vrot.lane.b32.xlu0 %v4018, 64
        %v7594 = vpop.permute.xlu0 %7593
        %7595 = vrot.lane.b32.xlu0 %v4019, 64
        %v7596 = vpop.permute.xlu0 %7595
        %7597 = vrot.lane.b32.xlu0 %v4020, 64
        %v7598 = vpop.permute.xlu0 %7597
        %7599 = vrot.lane.b32.xlu0 %v4021, 64
        %v7600 = vpop.permute.xlu0 %7599
        %7601 = vrot.lane.b32.xlu0 %v4022, 64
        %v7602 = vpop.permute.xlu0 %7601
        %7603 = vrot.lane.b32.xlu0 %v4023, 64
        %v7604 = vpop.permute.xlu0 %7603
        %7605 = vrot.lane.b32.xlu0 %v4024, 64
        %v7606 = vpop.permute.xlu0 %7605
        %7607 = vrot.lane.b32.xlu0 %v4025, 64
        %v7608 = vpop.permute.xlu0 %7607
        %7609 = vrot.lane.b32.xlu0 %v4026, 64
        %v7610 = vpop.permute.xlu0 %7609
        %7611 = vrot.lane.b32.xlu0 %v4027, 64
        %v7612 = vpop.permute.xlu0 %7611
        %7613 = vrot.lane.b32.xlu0 %v4028, 64
        %v7614 = vpop.permute.xlu0 %7613
        %7743 = vrot.lane.b32.xlu0 %v4541, 96
        %v7744 = vpop.permute.xlu0 %7743
        %7745 = vrot.lane.b32.xlu0 %v4542, 96
        %v7746 = vpop.permute.xlu0 %7745
        %7747 = vrot.lane.b32.xlu0 %v4543, 96
        %v7748 = vpop.permute.xlu0 %7747
        %7749 = vrot.lane.b32.xlu0 %v4544, 96
        %v7750 = vpop.permute.xlu0 %7749
        %7751 = vrot.lane.b32.xlu0 %v4545, 96
        %v7752 = vpop.permute.xlu0 %7751
        %7753 = vrot.lane.b32.xlu0 %v4546, 96
        %v7754 = vpop.permute.xlu0 %7753
        %7755 = vrot.lane.b32.xlu0 %v4547, 96
        %v7756 = vpop.permute.xlu0 %7755
        %7757 = vrot.lane.b32.xlu0 %v4548, 96
        %v7758 = vpop.permute.xlu0 %7757
        %7759 = vrot.lane.b32.xlu0 %v4549, 96
        %v7760 = vpop.permute.xlu0 %7759
        %7761 = vrot.lane.b32.xlu0 %v4550, 96
        %v7762 = vpop.permute.xlu0 %7761
        %7763 = vrot.lane.b32.xlu0 %v4551, 96
        %v7764 = vpop.permute.xlu0 %7763
        %7765 = vrot.lane.b32.xlu0 %v4552, 96
        %v7766 = vpop.permute.xlu0 %7765
        %7767 = vrot.lane.b32.xlu0 %v4553, 96
        %v7768 = vpop.permute.xlu0 %7767
        %7769 = vrot.lane.b32.xlu0 %v4554, 96
        %v7770 = vpop.permute.xlu0 %7769
        %7771 = vrot.lane.b32.xlu0 %v4555, 96
        %v7772 = vpop.permute.xlu0 %7771
        %7773 = vrot.lane.b32.xlu0 %v4556, 96
        %v7774 = vpop.permute.xlu0 %7773
        %7775 = vrot.lane.b32.xlu0 %v4557, 96
        %v7776 = vpop.permute.xlu0 %7775
        %7777 = vrot.lane.b32.xlu0 %v4558, 96
        %v7778 = vpop.permute.xlu0 %7777
        %7779 = vrot.lane.b32.xlu0 %v4559, 96
        %v7780 = vpop.permute.xlu0 %7779
        %7781 = vrot.lane.b32.xlu0 %v4560, 96
        %v7782 = vpop.permute.xlu0 %7781
        %7783 = vrot.lane.b32.xlu0 %v4561, 96
        %v7784 = vpop.permute.xlu0 %7783
        %7785 = vrot.lane.b32.xlu0 %v4562, 96
        %v7786 = vpop.permute.xlu0 %7785
        %7787 = vrot.lane.b32.xlu0 %v4563, 96
        %v7788 = vpop.permute.xlu0 %7787
        %7789 = vrot.lane.b32.xlu0 %v4564, 96
        %v7790 = vpop.permute.xlu0 %7789
        %7791 = vrot.lane.b32.xlu0 %v4565, 96
        %v7792 = vpop.permute.xlu0 %7791
        %7793 = vrot.lane.b32.xlu0 %v4566, 96
        %v7794 = vpop.permute.xlu0 %7793
        %7795 = vrot.lane.b32.xlu0 %v4567, 96
        %v7796 = vpop.permute.xlu0 %7795
        %7797 = vrot.lane.b32.xlu0 %v4568, 96
        %v7798 = vpop.permute.xlu0 %7797
        %7799 = vrot.lane.b32.xlu0 %v4569, 96
        %v7800 = vpop.permute.xlu0 %7799
        %7801 = vrot.lane.b32.xlu0 %v4570, 96
        %v7802 = vpop.permute.xlu0 %7801
        %7803 = vrot.lane.b32.xlu0 %v4571, 96
        %v7804 = vpop.permute.xlu0 %7803
        %7805 = vrot.lane.b32.xlu0 %v4572, 96
        %v7806 = vpop.permute.xlu0 %7805
        %7807 = vrot.lane.b32.xlu0 %v4573, 96
        %v7808 = vpop.permute.xlu0 %7807
        %7809 = vrot.lane.b32.xlu0 %v4574, 96
        %v7810 = vpop.permute.xlu0 %7809
        %7811 = vrot.lane.b32.xlu0 %v4575, 96
        %v7812 = vpop.permute.xlu0 %7811
        %7813 = vrot.lane.b32.xlu0 %v4576, 96
        %v7814 = vpop.permute.xlu0 %7813
        %7815 = vrot.lane.b32.xlu0 %v4577, 96
        %v7816 = vpop.permute.xlu0 %7815
        %7817 = vrot.lane.b32.xlu0 %v4578, 96
        %v7818 = vpop.permute.xlu0 %7817
        %7819 = vrot.lane.b32.xlu0 %v4579, 96
        %v7820 = vpop.permute.xlu0 %7819
        %7821 = vrot.lane.b32.xlu0 %v4580, 96
        %v7822 = vpop.permute.xlu0 %7821
        %7823 = vrot.lane.b32.xlu0 %v4581, 96
        %v7824 = vpop.permute.xlu0 %7823
        %7825 = vrot.lane.b32.xlu0 %v4582, 96
        %v7826 = vpop.permute.xlu0 %7825
        %7827 = vrot.lane.b32.xlu0 %v4583, 96
        %v7828 = vpop.permute.xlu0 %7827
        %7829 = vrot.lane.b32.xlu0 %v4584, 96
        %v7830 = vpop.permute.xlu0 %7829
        %7831 = vrot.lane.b32.xlu0 %v4585, 96
        %v7832 = vpop.permute.xlu0 %7831
        %7833 = vrot.lane.b32.xlu0 %v4586, 96
        %v7834 = vpop.permute.xlu0 %7833
        %7835 = vrot.lane.b32.xlu0 %v4587, 96
        %v7836 = vpop.permute.xlu0 %7835
        %7837 = vrot.lane.b32.xlu0 %v4588, 96
        %v7838 = vpop.permute.xlu0 %7837
        %7839 = vrot.lane.b32.xlu0 %v4589, 96
        %v7840 = vpop.permute.xlu0 %7839
        %7841 = vrot.lane.b32.xlu0 %v4590, 96
        %v7842 = vpop.permute.xlu0 %7841
        %7843 = vrot.lane.b32.xlu0 %v4591, 96
        %v7844 = vpop.permute.xlu0 %7843
        %7845 = vrot.lane.b32.xlu0 %v4592, 96
        %v7846 = vpop.permute.xlu0 %7845
        %7847 = vrot.lane.b32.xlu0 %v4593, 96
        %v7848 = vpop.permute.xlu0 %7847
        %7849 = vrot.lane.b32.xlu0 %v4594, 96
        %v7850 = vpop.permute.xlu0 %7849
        %7851 = vrot.lane.b32.xlu0 %v4595, 96
        %v7852 = vpop.permute.xlu0 %7851
        %7853 = vrot.lane.b32.xlu0 %v4596, 96
        %v7854 = vpop.permute.xlu0 %7853
        %7855 = vrot.lane.b32.xlu0 %v4597, 96
        %v7856 = vpop.permute.xlu0 %7855
        %7857 = vrot.lane.b32.xlu0 %v4598, 96
        %v7858 = vpop.permute.xlu0 %7857
        %7859 = vrot.lane.b32.xlu0 %v4599, 96
        %v7860 = vpop.permute.xlu0 %7859
        %7861 = vrot.lane.b32.xlu0 %v4600, 96
        %v7862 = vpop.permute.xlu0 %7861
        %7863 = vrot.lane.b32.xlu0 %v4601, 96
        %v7864 = vpop.permute.xlu0 %7863
        %7865 = vrot.lane.b32.xlu0 %v4602, 96
        %v7866 = vpop.permute.xlu0 %7865
        %7867 = vrot.lane.b32.xlu0 %v4603, 96
        %v7868 = vpop.permute.xlu0 %7867
        %7869 = vrot.lane.b32.xlu0 %v4604, 96
        %v7870 = vpop.permute.xlu0 %7869
        %vm7935 = vcmask 261120
        %v7936 = vsel %vm7935, %v2811, %v7232
        %v7937 = vsel %vm7935, %v2812, %v7234
        %v7938 = vsel %vm7935, %v2813, %v7236
        %v7939 = vsel %vm7935, %v2814, %v7238
        %v7940 = vsel %vm7935, %v2815, %v7240
        %v7941 = vsel %vm7935, %v2816, %v7242
        %v7942 = vsel %vm7935, %v2817, %v7244
        %v7943 = vsel %vm7935, %v2818, %v7246
        %v7944 = vsel %vm7935, %v2819, %v7248
        %v7945 = vsel %vm7935, %v2820, %v7250
        %v7946 = vsel %vm7935, %v2821, %v7252
        %v7947 = vsel %vm7935, %v2822, %v7254
        %v7948 = vsel %vm7935, %v2823, %v7256
        %v7949 = vsel %vm7935, %v2824, %v7258
        %v7950 = vsel %vm7935, %v2825, %v7260
        %v7951 = vsel %vm7935, %v2826, %v7262
        %v7952 = vsel %vm7935, %v2827, %v7264
        %v7953 = vsel %vm7935, %v2828, %v7266
        %v7954 = vsel %vm7935, %v2829, %v7268
        %v7955 = vsel %vm7935, %v2830, %v7270
        %v7956 = vsel %vm7935, %v2831, %v7272
        %v7957 = vsel %vm7935, %v2832, %v7274
        %v7958 = vsel %vm7935, %v2833, %v7276
        %v7959 = vsel %vm7935, %v2834, %v7278
        %v7960 = vsel %vm7935, %v2835, %v7280
        %v7961 = vsel %vm7935, %v2836, %v7282
        %v7962 = vsel %vm7935, %v2837, %v7284
        %v7963 = vsel %vm7935, %v2838, %v7286
        %v7964 = vsel %vm7935, %v2839, %v7288
        %v7965 = vsel %vm7935, %v2840, %v7290
        %v7966 = vsel %vm7935, %v2841, %v7292
        %v7967 = vsel %vm7935, %v2842, %v7294
        %v7968 = vsel %vm7935, %v2843, %v7296
        %v7969 = vsel %vm7935, %v2844, %v7298
        %v7970 = vsel %vm7935, %v2845, %v7300
        %v7971 = vsel %vm7935, %v2846, %v7302
        %v7972 = vsel %vm7935, %v2847, %v7304
        %v7973 = vsel %vm7935, %v2848, %v7306
        %v7974 = vsel %vm7935, %v2849, %v7308
        %v7975 = vsel %vm7935, %v2850, %v7310
        %v7976 = vsel %vm7935, %v2851, %v7312
        %v7977 = vsel %vm7935, %v2852, %v7314
        %v7978 = vsel %vm7935, %v2853, %v7316
        %v7979 = vsel %vm7935, %v2854, %v7318
        %v7980 = vsel %vm7935, %v2855, %v7320
        %v7981 = vsel %vm7935, %v2856, %v7322
        %v7982 = vsel %vm7935, %v2857, %v7324
        %v7983 = vsel %vm7935, %v2858, %v7326
        %v7984 = vsel %vm7935, %v2859, %v7328
        %v7985 = vsel %vm7935, %v2860, %v7330
        %v7986 = vsel %vm7935, %v2861, %v7332
        %v7987 = vsel %vm7935, %v2862, %v7334
        %v7988 = vsel %vm7935, %v2863, %v7336
        %v7989 = vsel %vm7935, %v2864, %v7338
        %v7990 = vsel %vm7935, %v2865, %v7340
        %v7991 = vsel %vm7935, %v2866, %v7342
        %v7992 = vsel %vm7935, %v2867, %v7344
        %v7993 = vsel %vm7935, %v2868, %v7346
        %v7994 = vsel %vm7935, %v2869, %v7348
        %v7995 = vsel %vm7935, %v2870, %v7350
        %v7996 = vsel %vm7935, %v2871, %v7352
        %v7997 = vsel %vm7935, %v2872, %v7354
        %v7998 = vsel %vm7935, %v2873, %v7356
        %v7999 = vsel %vm7935, %v2874, %v7358
        %vm8000 = vcmask 523264
        %v8001 = vsel %vm8000, %v7936, %v7488
        %v8002 = vsel %vm8000, %v7937, %v7490
        %v8003 = vsel %vm8000, %v7938, %v7492
        %v8004 = vsel %vm8000, %v7939, %v7494
        %v8005 = vsel %vm8000, %v7940, %v7496
        %v8006 = vsel %vm8000, %v7941, %v7498
        %v8007 = vsel %vm8000, %v7942, %v7500
        %v8008 = vsel %vm8000, %v7943, %v7502
        %v8009 = vsel %vm8000, %v7944, %v7504
        %v8010 = vsel %vm8000, %v7945, %v7506
        %v8011 = vsel %vm8000, %v7946, %v7508
        %v8012 = vsel %vm8000, %v7947, %v7510
        %v8013 = vsel %vm8000, %v7948, %v7512
        %v8014 = vsel %vm8000, %v7949, %v7514
        %v8015 = vsel %vm8000, %v7950, %v7516
        %v8016 = vsel %vm8000, %v7951, %v7518
        %v8017 = vsel %vm8000, %v7952, %v7520
        %v8018 = vsel %vm8000, %v7953, %v7522
        %v8019 = vsel %vm8000, %v7954, %v7524
        %v8020 = vsel %vm8000, %v7955, %v7526
        %v8021 = vsel %vm8000, %v7956, %v7528
        %v8022 = vsel %vm8000, %v7957, %v7530
        %v8023 = vsel %vm8000, %v7958, %v7532
        %v8024 = vsel %vm8000, %v7959, %v7534
        %v8025 = vsel %vm8000, %v7960, %v7536
        %v8026 = vsel %vm8000, %v7961, %v7538
        %v8027 = vsel %vm8000, %v7962, %v7540
        %v8028 = vsel %vm8000, %v7963, %v7542
        %v8029 = vsel %vm8000, %v7964, %v7544
        %v8030 = vsel %vm8000, %v7965, %v7546
        %v8031 = vsel %vm8000, %v7966, %v7548
        %v8032 = vsel %vm8000, %v7967, %v7550
        %v8033 = vsel %vm8000, %v7968, %v7552
        %v8034 = vsel %vm8000, %v7969, %v7554
        %v8035 = vsel %vm8000, %v7970, %v7556
        %v8036 = vsel %vm8000, %v7971, %v7558
        %v8037 = vsel %vm8000, %v7972, %v7560
        %v8038 = vsel %vm8000, %v7973, %v7562
        %v8039 = vsel %vm8000, %v7974, %v7564
        %v8040 = vsel %vm8000, %v7975, %v7566
        %v8041 = vsel %vm8000, %v7976, %v7568
        %v8042 = vsel %vm8000, %v7977, %v7570
        %v8043 = vsel %vm8000, %v7978, %v7572
        %v8044 = vsel %vm8000, %v7979, %v7574
        %v8045 = vsel %vm8000, %v7980, %v7576
        %v8046 = vsel %vm8000, %v7981, %v7578
        %v8047 = vsel %vm8000, %v7982, %v7580
        %v8048 = vsel %vm8000, %v7983, %v7582
        %v8049 = vsel %vm8000, %v7984, %v7584
        %v8050 = vsel %vm8000, %v7985, %v7586
        %v8051 = vsel %vm8000, %v7986, %v7588
        %v8052 = vsel %vm8000, %v7987, %v7590
        %v8053 = vsel %vm8000, %v7988, %v7592
        %v8054 = vsel %vm8000, %v7989, %v7594
        %v8055 = vsel %vm8000, %v7990, %v7596
        %v8056 = vsel %vm8000, %v7991, %v7598
        %v8057 = vsel %vm8000, %v7992, %v7600
        %v8058 = vsel %vm8000, %v7993, %v7602
        %v8059 = vsel %vm8000, %v7994, %v7604
        %v8060 = vsel %vm8000, %v7995, %v7606
        %v8061 = vsel %vm8000, %v7996, %v7608
        %v8062 = vsel %vm8000, %v7997, %v7610
        %v8063 = vsel %vm8000, %v7998, %v7612
        %v8064 = vsel %vm8000, %v7999, %v7614
        %vm8065 = vcmask 785408
        %v8066 = vsel %vm8065, %v8001, %v7744
        %v8067 = vsel %vm8065, %v8002, %v7746
        %v8068 = vsel %vm8065, %v8003, %v7748
        %v8069 = vsel %vm8065, %v8004, %v7750
        %v8070 = vsel %vm8065, %v8005, %v7752
        %v8071 = vsel %vm8065, %v8006, %v7754
        %v8072 = vsel %vm8065, %v8007, %v7756
        %v8073 = vsel %vm8065, %v8008, %v7758
        %v8074 = vsel %vm8065, %v8009, %v7760
        %v8075 = vsel %vm8065, %v8010, %v7762
        %v8076 = vsel %vm8065, %v8011, %v7764
        %v8077 = vsel %vm8065, %v8012, %v7766
        %v8078 = vsel %vm8065, %v8013, %v7768
        %v8079 = vsel %vm8065, %v8014, %v7770
        %v8080 = vsel %vm8065, %v8015, %v7772
        %v8081 = vsel %vm8065, %v8016, %v7774
        %v8082 = vsel %vm8065, %v8017, %v7776
        %v8083 = vsel %vm8065, %v8018, %v7778
        %v8084 = vsel %vm8065, %v8019, %v7780
        %v8085 = vsel %vm8065, %v8020, %v7782
        %v8086 = vsel %vm8065, %v8021, %v7784
        %v8087 = vsel %vm8065, %v8022, %v7786
        %v8088 = vsel %vm8065, %v8023, %v7788
        %v8089 = vsel %vm8065, %v8024, %v7790
        %v8090 = vsel %vm8065, %v8025, %v7792
        %v8091 = vsel %vm8065, %v8026, %v7794
        %v8092 = vsel %vm8065, %v8027, %v7796
        %v8093 = vsel %vm8065, %v8028, %v7798
        %v8094 = vsel %vm8065, %v8029, %v7800
        %v8095 = vsel %vm8065, %v8030, %v7802
        %v8096 = vsel %vm8065, %v8031, %v7804
        %v8097 = vsel %vm8065, %v8032, %v7806
        %v8098 = vsel %vm8065, %v8033, %v7808
        %v8099 = vsel %vm8065, %v8034, %v7810
        %v8100 = vsel %vm8065, %v8035, %v7812
        %v8101 = vsel %vm8065, %v8036, %v7814
        %v8102 = vsel %vm8065, %v8037, %v7816
        %v8103 = vsel %vm8065, %v8038, %v7818
        %v8104 = vsel %vm8065, %v8039, %v7820
        %v8105 = vsel %vm8065, %v8040, %v7822
        %v8106 = vsel %vm8065, %v8041, %v7824
        %v8107 = vsel %vm8065, %v8042, %v7826
        %v8108 = vsel %vm8065, %v8043, %v7828
        %v8109 = vsel %vm8065, %v8044, %v7830
        %v8110 = vsel %vm8065, %v8045, %v7832
        %v8111 = vsel %vm8065, %v8046, %v7834
        %v8112 = vsel %vm8065, %v8047, %v7836
        %v8113 = vsel %vm8065, %v8048, %v7838
        %v8114 = vsel %vm8065, %v8049, %v7840
        %v8115 = vsel %vm8065, %v8050, %v7842
        %v8116 = vsel %vm8065, %v8051, %v7844
        %v8117 = vsel %vm8065, %v8052, %v7846
        %v8118 = vsel %vm8065, %v8053, %v7848
        %v8119 = vsel %vm8065, %v8054, %v7850
        %v8120 = vsel %vm8065, %v8055, %v7852
        %v8121 = vsel %vm8065, %v8056, %v7854
        %v8122 = vsel %vm8065, %v8057, %v7856
        %v8123 = vsel %vm8065, %v8058, %v7858
        %v8124 = vsel %vm8065, %v8059, %v7860
        %v8125 = vsel %vm8065, %v8060, %v7862
        %v8126 = vsel %vm8065, %v8061, %v7864
        %v8127 = vsel %vm8065, %v8062, %v7866
        %v8128 = vsel %vm8065, %v8063, %v7868
        %v8129 = vsel %vm8065, %v8064, %v7870
        %v8130 = vpack.c.bf16 %v8066, %v8066
        %v8131 = vpack.c.bf16 %v8067, %v8067
        %v8132 = vpack.c.bf16 %v8068, %v8068
        %v8133 = vpack.c.bf16 %v8069, %v8069
        %v8134 = vpack.c.bf16 %v8070, %v8070
        %v8135 = vpack.c.bf16 %v8071, %v8071
        %v8136 = vpack.c.bf16 %v8072, %v8072
        %v8137 = vpack.c.bf16 %v8073, %v8073
        %v8138 = vpack.c.bf16 %v8074, %v8074
        %v8139 = vpack.c.bf16 %v8075, %v8075
        %v8140 = vpack.c.bf16 %v8076, %v8076
        %v8141 = vpack.c.bf16 %v8077, %v8077
        %v8142 = vpack.c.bf16 %v8078, %v8078
        %v8143 = vpack.c.bf16 %v8079, %v8079
        %v8144 = vpack.c.bf16 %v8080, %v8080
        %v8145 = vpack.c.bf16 %v8081, %v8081
        %v8146 = vpack.c.bf16 %v8082, %v8082
        %v8147 = vpack.c.bf16 %v8083, %v8083
        %v8148 = vpack.c.bf16 %v8084, %v8084
        %v8149 = vpack.c.bf16 %v8085, %v8085
        %v8150 = vpack.c.bf16 %v8086, %v8086
        %v8151 = vpack.c.bf16 %v8087, %v8087
        %v8152 = vpack.c.bf16 %v8088, %v8088
        %v8153 = vpack.c.bf16 %v8089, %v8089
        %v8154 = vpack.c.bf16 %v8090, %v8090
        %v8155 = vpack.c.bf16 %v8091, %v8091
        %v8156 = vpack.c.bf16 %v8092, %v8092
        %v8157 = vpack.c.bf16 %v8093, %v8093
        %v8158 = vpack.c.bf16 %v8094, %v8094
        %v8159 = vpack.c.bf16 %v8095, %v8095
        %v8160 = vpack.c.bf16 %v8096, %v8096
        %v8161 = vpack.c.bf16 %v8097, %v8097
        %v8162 = vpack.c.bf16 %v8098, %v8098
        %v8163 = vpack.c.bf16 %v8099, %v8099
        %v8164 = vpack.c.bf16 %v8100, %v8100
        %v8165 = vpack.c.bf16 %v8101, %v8101
        %v8166 = vpack.c.bf16 %v8102, %v8102
        %v8167 = vpack.c.bf16 %v8103, %v8103
        %v8168 = vpack.c.bf16 %v8104, %v8104
        %v8169 = vpack.c.bf16 %v8105, %v8105
        %v8170 = vpack.c.bf16 %v8106, %v8106
        %v8171 = vpack.c.bf16 %v8107, %v8107
        %v8172 = vpack.c.bf16 %v8108, %v8108
        %v8173 = vpack.c.bf16 %v8109, %v8109
        %v8174 = vpack.c.bf16 %v8110, %v8110
        %v8175 = vpack.c.bf16 %v8111, %v8111
        %v8176 = vpack.c.bf16 %v8112, %v8112
        %v8177 = vpack.c.bf16 %v8113, %v8113
        %v8178 = vpack.c.bf16 %v8114, %v8114
        %v8179 = vpack.c.bf16 %v8115, %v8115
        %v8180 = vpack.c.bf16 %v8116, %v8116
        %v8181 = vpack.c.bf16 %v8117, %v8117
        %v8182 = vpack.c.bf16 %v8118, %v8118
        %v8183 = vpack.c.bf16 %v8119, %v8119
        %v8184 = vpack.c.bf16 %v8120, %v8120
        %v8185 = vpack.c.bf16 %v8121, %v8121
        %v8186 = vpack.c.bf16 %v8122, %v8122
        %v8187 = vpack.c.bf16 %v8123, %v8123
        %v8188 = vpack.c.bf16 %v8124, %v8124
        %v8189 = vpack.c.bf16 %v8125, %v8125
        %v8190 = vpack.c.bf16 %v8126, %v8126
        %v8191 = vpack.c.bf16 %v8127, %v8127
        %v8192 = vpack.c.bf16 %v8128, %v8128
        %v8193 = vpack.c.bf16 %v8129, %v8129
        %8194 = vst [vmem:[#allocation2] sm:$0xf] %v8130
        %8195 = vst [vmem:[#allocation2 + $0xc] sm:$0xf] %v8131
        %8196 = vst [vmem:[#allocation2 + $0x18] sm:$0xf] %v8132
        %8197 = vst [vmem:[#allocation2 + $0x24] sm:$0xf] %v8133
        %8198 = vst [vmem:[#allocation2 + $0x30] sm:$0xf] %v8134
        %8199 = vst [vmem:[#allocation2 + $0x3c] sm:$0xf] %v8135
        %8200 = vst [vmem:[#allocation2 + $0x48] sm:$0xf] %v8136
        %8201 = vst [vmem:[#allocation2 + $0x54] sm:$0xf] %v8137
        %8202 = vst [vmem:[#allocation2 + $0x60] sm:$0xf] %v8138
        %8203 = vst [vmem:[#allocation2 + $0x6c] sm:$0xf] %v8139
        %8204 = vst [vmem:[#allocation2 + $0x78] sm:$0xf] %v8140
        %8205 = vst [vmem:[#allocation2 + $0x84] sm:$0xf] %v8141
        %8206 = vst [vmem:[#allocation2 + $0x90] sm:$0xf] %v8142
        %8207 = vst [vmem:[#allocation2 + $0x9c] sm:$0xf] %v8143
        %8208 = vst [vmem:[#allocation2 + $0xa8] sm:$0xf] %v8144
        %8209 = vst [vmem:[#allocation2 + $0xb4] sm:$0xf] %v8145
        %8210 = vst [vmem:[#allocation2 + $0xc0] sm:$0xf] %v8146
        %8211 = vst [vmem:[#allocation2 + $0xcc] sm:$0xf] %v8147
        %8212 = vst [vmem:[#allocation2 + $0xd8] sm:$0xf] %v8148
        %8213 = vst [vmem:[#allocation2 + $0xe4] sm:$0xf] %v8149
        %8214 = vst [vmem:[#allocation2 + $0xf0] sm:$0xf] %v8150
        %8215 = vst [vmem:[#allocation2 + $0xfc] sm:$0xf] %v8151
        %8216 = vst [vmem:[#allocation2 + $0x108] sm:$0xf] %v8152
        %8217 = vst [vmem:[#allocation2 + $0x114] sm:$0xf] %v8153
        %8218 = vst [vmem:[#allocation2 + $0x120] sm:$0xf] %v8154
        %8219 = vst [vmem:[#allocation2 + $0x12c] sm:$0xf] %v8155
        %8220 = vst [vmem:[#allocation2 + $0x138] sm:$0xf] %v8156
        %8221 = vst [vmem:[#allocation2 + $0x144] sm:$0xf] %v8157
        %8222 = vst [vmem:[#allocation2 + $0x150] sm:$0xf] %v8158
        %8223 = vst [vmem:[#allocation2 + $0x15c] sm:$0xf] %v8159
        %8224 = vst [vmem:[#allocation2 + $0x168] sm:$0xf] %v8160
        %8225 = vst [vmem:[#allocation2 + $0x174] sm:$0xf] %v8161
        %8226 = vst [vmem:[#allocation2 + $0x180] sm:$0xf] %v8162
        %8227 = vst [vmem:[#allocation2 + $0x18c] sm:$0xf] %v8163
        %8228 = vst [vmem:[#allocation2 + $0x198] sm:$0xf] %v8164
        %8229 = vst [vmem:[#allocation2 + $0x1a4] sm:$0xf] %v8165
        %8230 = vst [vmem:[#allocation2 + $0x1b0] sm:$0xf] %v8166
        %8231 = vst [vmem:[#allocation2 + $0x1bc] sm:$0xf] %v8167
        %8232 = vst [vmem:[#allocation2 + $0x1c8] sm:$0xf] %v8168
        %8233 = vst [vmem:[#allocation2 + $0x1d4] sm:$0xf] %v8169
        %8234 = vst [vmem:[#allocation2 + $0x1e0] sm:$0xf] %v8170
        %8235 = vst [vmem:[#allocation2 + $0x1ec] sm:$0xf] %v8171
        %8236 = vst [vmem:[#allocation2 + $0x1f8] sm:$0xf] %v8172
        %8237 = vst [vmem:[#allocation2 + $0x204] sm:$0xf] %v8173
        %8238 = vst [vmem:[#allocation2 + $0x210] sm:$0xf] %v8174
        %8239 = vst [vmem:[#allocation2 + $0x21c] sm:$0xf] %v8175
        %8240 = vst [vmem:[#allocation2 + $0x228] sm:$0xf] %v8176
        %8241 = vst [vmem:[#allocation2 + $0x234] sm:$0xf] %v8177
        %8242 = vst [vmem:[#allocation2 + $0x240] sm:$0xf] %v8178
        %8243 = vst [vmem:[#allocation2 + $0x24c] sm:$0xf] %v8179
        %8244 = vst [vmem:[#allocation2 + $0x258] sm:$0xf] %v8180
        %8245 = vst [vmem:[#allocation2 + $0x264] sm:$0xf] %v8181
        %8246 = vst [vmem:[#allocation2 + $0x270] sm:$0xf] %v8182
        %8247 = vst [vmem:[#allocation2 + $0x27c] sm:$0xf] %v8183
        %8248 = vst [vmem:[#allocation2 + $0x288] sm:$0xf] %v8184
        %8249 = vst [vmem:[#allocation2 + $0x294] sm:$0xf] %v8185
        %8250 = vst [vmem:[#allocation2 + $0x2a0] sm:$0xf] %v8186
        %8251 = vst [vmem:[#allocation2 + $0x2ac] sm:$0xf] %v8187
        %8252 = vst [vmem:[#allocation2 + $0x2b8] sm:$0xf] %v8188
        %8253 = vst [vmem:[#allocation2 + $0x2c4] sm:$0xf] %v8189
        %8254 = vst [vmem:[#allocation2 + $0x2d0] sm:$0xf] %v8190
        %8255 = vst [vmem:[#allocation2 + $0x2dc] sm:$0xf] %v8191
        %8256 = vst [vmem:[#allocation2 + $0x2e8] sm:$0xf] %v8192
        %8257 = vst [vmem:[#allocation2 + $0x2f4] sm:$0xf] %v8193
        %8322 = vrot.lane.b32.xlu0 %v5501, 32
        %v8323 = vpop.permute.xlu0 %8322
        %8324 = vrot.lane.b32.xlu0 %v5502, 32
        %v8325 = vpop.permute.xlu0 %8324
        %8326 = vrot.lane.b32.xlu0 %v5503, 32
        %v8327 = vpop.permute.xlu0 %8326
        %8328 = vrot.lane.b32.xlu0 %v5504, 32
        %v8329 = vpop.permute.xlu0 %8328
        %8330 = vrot.lane.b32.xlu0 %v5505, 32
        %v8331 = vpop.permute.xlu0 %8330
        %8332 = vrot.lane.b32.xlu0 %v5506, 32
        %v8333 = vpop.permute.xlu0 %8332
        %8334 = vrot.lane.b32.xlu0 %v5507, 32
        %v8335 = vpop.permute.xlu0 %8334
        %8336 = vrot.lane.b32.xlu0 %v5508, 32
        %v8337 = vpop.permute.xlu0 %8336
        %8338 = vrot.lane.b32.xlu0 %v5509, 32
        %v8339 = vpop.permute.xlu0 %8338
        %8340 = vrot.lane.b32.xlu0 %v5510, 32
        %v8341 = vpop.permute.xlu0 %8340
        %8342 = vrot.lane.b32.xlu0 %v5511, 32
        %v8343 = vpop.permute.xlu0 %8342
        %8344 = vrot.lane.b32.xlu0 %v5512, 32
        %v8345 = vpop.permute.xlu0 %8344
        %8346 = vrot.lane.b32.xlu0 %v5513, 32
        %v8347 = vpop.permute.xlu0 %8346
        %8348 = vrot.lane.b32.xlu0 %v5514, 32
        %v8349 = vpop.permute.xlu0 %8348
        %8350 = vrot.lane.b32.xlu0 %v5515, 32
        %v8351 = vpop.permute.xlu0 %8350
        %8352 = vrot.lane.b32.xlu0 %v5516, 32
        %v8353 = vpop.permute.xlu0 %8352
        %8354 = vrot.lane.b32.xlu0 %v5517, 32
        %v8355 = vpop.permute.xlu0 %8354
        %8356 = vrot.lane.b32.xlu0 %v5518, 32
        %v8357 = vpop.permute.xlu0 %8356
        %8358 = vrot.lane.b32.xlu0 %v5519, 32
        %v8359 = vpop.permute.xlu0 %8358
        %8360 = vrot.lane.b32.xlu0 %v5520, 32
        %v8361 = vpop.permute.xlu0 %8360
        %8362 = vrot.lane.b32.xlu0 %v5521, 32
        %v8363 = vpop.permute.xlu0 %8362
        %8364 = vrot.lane.b32.xlu0 %v5522, 32
        %v8365 = vpop.permute.xlu0 %8364
        %8366 = vrot.lane.b32.xlu0 %v5523, 32
        %v8367 = vpop.permute.xlu0 %8366
        %8368 = vrot.lane.b32.xlu0 %v5524, 32
        %v8369 = vpop.permute.xlu0 %8368
        %8370 = vrot.lane.b32.xlu0 %v5525, 32
        %v8371 = vpop.permute.xlu0 %8370
        %8372 = vrot.lane.b32.xlu0 %v5526, 32
        %v8373 = vpop.permute.xlu0 %8372
        %8374 = vrot.lane.b32.xlu0 %v5527, 32
        %v8375 = vpop.permute.xlu0 %8374
        %8376 = vrot.lane.b32.xlu0 %v5528, 32
        %v8377 = vpop.permute.xlu0 %8376
        %8378 = vrot.lane.b32.xlu0 %v5529, 32
        %v8379 = vpop.permute.xlu0 %8378
        %8380 = vrot.lane.b32.xlu0 %v5530, 32
        %v8381 = vpop.permute.xlu0 %8380
        %8382 = vrot.lane.b32.xlu0 %v5531, 32
        %v8383 = vpop.permute.xlu0 %8382
        %8384 = vrot.lane.b32.xlu0 %v5532, 32
        %v8385 = vpop.permute.xlu0 %8384
        %8386 = vrot.lane.b32.xlu0 %v5533, 32
        %v8387 = vpop.permute.xlu0 %8386
        %8388 = vrot.lane.b32.xlu0 %v5534, 32
        %v8389 = vpop.permute.xlu0 %8388
        %8390 = vrot.lane.b32.xlu0 %v5535, 32
        %v8391 = vpop.permute.xlu0 %8390
        %8392 = vrot.lane.b32.xlu0 %v5536, 32
        %v8393 = vpop.permute.xlu0 %8392
        %8394 = vrot.lane.b32.xlu0 %v5537, 32
        %v8395 = vpop.permute.xlu0 %8394
        %8396 = vrot.lane.b32.xlu0 %v5538, 32
        %v8397 = vpop.permute.xlu0 %8396
        %8398 = vrot.lane.b32.xlu0 %v5539, 32
        %v8399 = vpop.permute.xlu0 %8398
        %8400 = vrot.lane.b32.xlu0 %v5540, 32
        %v8401 = vpop.permute.xlu0 %8400
        %8402 = vrot.lane.b32.xlu0 %v5541, 32
        %v8403 = vpop.permute.xlu0 %8402
        %8404 = vrot.lane.b32.xlu0 %v5542, 32
        %v8405 = vpop.permute.xlu0 %8404
        %8406 = vrot.lane.b32.xlu0 %v5543, 32
        %v8407 = vpop.permute.xlu0 %8406
        %8408 = vrot.lane.b32.xlu0 %v5544, 32
        %v8409 = vpop.permute.xlu0 %8408
        %8410 = vrot.lane.b32.xlu0 %v5545, 32
        %v8411 = vpop.permute.xlu0 %8410
        %8412 = vrot.lane.b32.xlu0 %v5546, 32
        %v8413 = vpop.permute.xlu0 %8412
        %8414 = vrot.lane.b32.xlu0 %v5547, 32
        %v8415 = vpop.permute.xlu0 %8414
        %8416 = vrot.lane.b32.xlu0 %v5548, 32
        %v8417 = vpop.permute.xlu0 %8416
        %8418 = vrot.lane.b32.xlu0 %v5549, 32
        %v8419 = vpop.permute.xlu0 %8418
        %8420 = vrot.lane.b32.xlu0 %v5550, 32
        %v8421 = vpop.permute.xlu0 %8420
        %8422 = vrot.lane.b32.xlu0 %v5551, 32
        %v8423 = vpop.permute.xlu0 %8422
        %8424 = vrot.lane.b32.xlu0 %v5552, 32
        %v8425 = vpop.permute.xlu0 %8424
        %8426 = vrot.lane.b32.xlu0 %v5553, 32
        %v8427 = vpop.permute.xlu0 %8426
        %8428 = vrot.lane.b32.xlu0 %v5554, 32
        %v8429 = vpop.permute.xlu0 %8428
        %8430 = vrot.lane.b32.xlu0 %v5555, 32
        %v8431 = vpop.permute.xlu0 %8430
        %8432 = vrot.lane.b32.xlu0 %v5556, 32
        %v8433 = vpop.permute.xlu0 %8432
        %8434 = vrot.lane.b32.xlu0 %v5557, 32
        %v8435 = vpop.permute.xlu0 %8434
        %8436 = vrot.lane.b32.xlu0 %v5558, 32
        %v8437 = vpop.permute.xlu0 %8436
        %8438 = vrot.lane.b32.xlu0 %v5559, 32
        %v8439 = vpop.permute.xlu0 %8438
        %8440 = vrot.lane.b32.xlu0 %v5560, 32
        %v8441 = vpop.permute.xlu0 %8440
        %8442 = vrot.lane.b32.xlu0 %v5561, 32
        %v8443 = vpop.permute.xlu0 %8442
        %8444 = vrot.lane.b32.xlu0 %v5562, 32
        %v8445 = vpop.permute.xlu0 %8444
        %8446 = vrot.lane.b32.xlu0 %v5563, 32
        %v8447 = vpop.permute.xlu0 %8446
        %8448 = vrot.lane.b32.xlu0 %v5564, 32
        %v8449 = vpop.permute.xlu0 %8448
        %8578 = vrot.lane.b32.xlu0 %v6078, 64
        %v8579 = vpop.permute.xlu0 %8578
        %8580 = vrot.lane.b32.xlu0 %v6079, 64
        %v8581 = vpop.permute.xlu0 %8580
        %8582 = vrot.lane.b32.xlu0 %v6080, 64
        %v8583 = vpop.permute.xlu0 %8582
        %8584 = vrot.lane.b32.xlu0 %v6081, 64
        %v8585 = vpop.permute.xlu0 %8584
        %8586 = vrot.lane.b32.xlu0 %v6082, 64
        %v8587 = vpop.permute.xlu0 %8586
        %8588 = vrot.lane.b32.xlu0 %v6083, 64
        %v8589 = vpop.permute.xlu0 %8588
        %8590 = vrot.lane.b32.xlu0 %v6084, 64
        %v8591 = vpop.permute.xlu0 %8590
        %8592 = vrot.lane.b32.xlu0 %v6085, 64
        %v8593 = vpop.permute.xlu0 %8592
        %8594 = vrot.lane.b32.xlu0 %v6086, 64
        %v8595 = vpop.permute.xlu0 %8594
        %8596 = vrot.lane.b32.xlu0 %v6087, 64
        %v8597 = vpop.permute.xlu0 %8596
        %8598 = vrot.lane.b32.xlu0 %v6088, 64
        %v8599 = vpop.permute.xlu0 %8598
        %8600 = vrot.lane.b32.xlu0 %v6089, 64
        %v8601 = vpop.permute.xlu0 %8600
        %8602 = vrot.lane.b32.xlu0 %v6090, 64
        %v8603 = vpop.permute.xlu0 %8602
        %8604 = vrot.lane.b32.xlu0 %v6091, 64
        %v8605 = vpop.permute.xlu0 %8604
        %8606 = vrot.lane.b32.xlu0 %v6092, 64
        %v8607 = vpop.permute.xlu0 %8606
        %8608 = vrot.lane.b32.xlu0 %v6093, 64
        %v8609 = vpop.permute.xlu0 %8608
        %8610 = vrot.lane.b32.xlu0 %v6094, 64
        %v8611 = vpop.permute.xlu0 %8610
        %8612 = vrot.lane.b32.xlu0 %v6095, 64
        %v8613 = vpop.permute.xlu0 %8612
        %8614 = vrot.lane.b32.xlu0 %v6096, 64
        %v8615 = vpop.permute.xlu0 %8614
        %8616 = vrot.lane.b32.xlu0 %v6097, 64
        %v8617 = vpop.permute.xlu0 %8616
        %8618 = vrot.lane.b32.xlu0 %v6098, 64
        %v8619 = vpop.permute.xlu0 %8618
        %8620 = vrot.lane.b32.xlu0 %v6099, 64
        %v8621 = vpop.permute.xlu0 %8620
        %8622 = vrot.lane.b32.xlu0 %v6100, 64
        %v8623 = vpop.permute.xlu0 %8622
        %8624 = vrot.lane.b32.xlu0 %v6101, 64
        %v8625 = vpop.permute.xlu0 %8624
        %8626 = vrot.lane.b32.xlu0 %v6102, 64
        %v8627 = vpop.permute.xlu0 %8626
        %8628 = vrot.lane.b32.xlu0 %v6103, 64
        %v8629 = vpop.permute.xlu0 %8628
        %8630 = vrot.lane.b32.xlu0 %v6104, 64
        %v8631 = vpop.permute.xlu0 %8630
        %8632 = vrot.lane.b32.xlu0 %v6105, 64
        %v8633 = vpop.permute.xlu0 %8632
        %8634 = vrot.lane.b32.xlu0 %v6106, 64
        %v8635 = vpop.permute.xlu0 %8634
        %8636 = vrot.lane.b32.xlu0 %v6107, 64
        %v8637 = vpop.permute.xlu0 %8636
        %8638 = vrot.lane.b32.xlu0 %v6108, 64
        %v8639 = vpop.permute.xlu0 %8638
        %8640 = vrot.lane.b32.xlu0 %v6109, 64
        %v8641 = vpop.permute.xlu0 %8640
        %8642 = vrot.lane.b32.xlu0 %v6110, 64
        %v8643 = vpop.permute.xlu0 %8642
        %8644 = vrot.lane.b32.xlu0 %v6111, 64
        %v8645 = vpop.permute.xlu0 %8644
        %8646 = vrot.lane.b32.xlu0 %v6112, 64
        %v8647 = vpop.permute.xlu0 %8646
        %8648 = vrot.lane.b32.xlu0 %v6113, 64
        %v8649 = vpop.permute.xlu0 %8648
        %8650 = vrot.lane.b32.xlu0 %v6114, 64
        %v8651 = vpop.permute.xlu0 %8650
        %8652 = vrot.lane.b32.xlu0 %v6115, 64
        %v8653 = vpop.permute.xlu0 %8652
        %8654 = vrot.lane.b32.xlu0 %v6116, 64
        %v8655 = vpop.permute.xlu0 %8654
        %8656 = vrot.lane.b32.xlu0 %v6117, 64
        %v8657 = vpop.permute.xlu0 %8656
        %8658 = vrot.lane.b32.xlu0 %v6118, 64
        %v8659 = vpop.permute.xlu0 %8658
        %8660 = vrot.lane.b32.xlu0 %v6119, 64
        %v8661 = vpop.permute.xlu0 %8660
        %8662 = vrot.lane.b32.xlu0 %v6120, 64
        %v8663 = vpop.permute.xlu0 %8662
        %8664 = vrot.lane.b32.xlu0 %v6121, 64
        %v8665 = vpop.permute.xlu0 %8664
        %8666 = vrot.lane.b32.xlu0 %v6122, 64
        %v8667 = vpop.permute.xlu0 %8666
        %8668 = vrot.lane.b32.xlu0 %v6123, 64
        %v8669 = vpop.permute.xlu0 %8668
        %8670 = vrot.lane.b32.xlu0 %v6124, 64
        %v8671 = vpop.permute.xlu0 %8670
        %8672 = vrot.lane.b32.xlu0 %v6125, 64
        %v8673 = vpop.permute.xlu0 %8672
        %8674 = vrot.lane.b32.xlu0 %v6126, 64
        %v8675 = vpop.permute.xlu0 %8674
        %8676 = vrot.lane.b32.xlu0 %v6127, 64
        %v8677 = vpop.permute.xlu0 %8676
        %8678 = vrot.lane.b32.xlu0 %v6128, 64
        %v8679 = vpop.permute.xlu0 %8678
        %8680 = vrot.lane.b32.xlu0 %v6129, 64
        %v8681 = vpop.permute.xlu0 %8680
        %8682 = vrot.lane.b32.xlu0 %v6130, 64
        %v8683 = vpop.permute.xlu0 %8682
        %8684 = vrot.lane.b32.xlu0 %v6131, 64
        %v8685 = vpop.permute.xlu0 %8684
        %8686 = vrot.lane.b32.xlu0 %v6132, 64
        %v8687 = vpop.permute.xlu0 %8686
        %8688 = vrot.lane.b32.xlu0 %v6133, 64
        %v8689 = vpop.permute.xlu0 %8688
        %8690 = vrot.lane.b32.xlu0 %v6134, 64
        %v8691 = vpop.permute.xlu0 %8690
        %8692 = vrot.lane.b32.xlu0 %v6135, 64
        %v8693 = vpop.permute.xlu0 %8692
        %8694 = vrot.lane.b32.xlu0 %v6136, 64
        %v8695 = vpop.permute.xlu0 %8694
        %8696 = vrot.lane.b32.xlu0 %v6137, 64
        %v8697 = vpop.permute.xlu0 %8696
        %8698 = vrot.lane.b32.xlu0 %v6138, 64
        %v8699 = vpop.permute.xlu0 %8698
        %8700 = vrot.lane.b32.xlu0 %v6139, 64
        %v8701 = vpop.permute.xlu0 %8700
        %8702 = vrot.lane.b32.xlu0 %v6140, 64
        %v8703 = vpop.permute.xlu0 %8702
        %8704 = vrot.lane.b32.xlu0 %v6141, 64
        %v8705 = vpop.permute.xlu0 %8704
        %8834 = vrot.lane.b32.xlu0 %v6655, 96
        %v8835 = vpop.permute.xlu0 %8834
        %8836 = vrot.lane.b32.xlu0 %v6656, 96
        %v8837 = vpop.permute.xlu0 %8836
        %8838 = vrot.lane.b32.xlu0 %v6657, 96
        %v8839 = vpop.permute.xlu0 %8838
        %8840 = vrot.lane.b32.xlu0 %v6658, 96
        %v8841 = vpop.permute.xlu0 %8840
        %8842 = vrot.lane.b32.xlu0 %v6659, 96
        %v8843 = vpop.permute.xlu0 %8842
        %8844 = vrot.lane.b32.xlu0 %v6660, 96
        %v8845 = vpop.permute.xlu0 %8844
        %8846 = vrot.lane.b32.xlu0 %v6661, 96
        %v8847 = vpop.permute.xlu0 %8846
        %8848 = vrot.lane.b32.xlu0 %v6662, 96
        %v8849 = vpop.permute.xlu0 %8848
        %8850 = vrot.lane.b32.xlu0 %v6663, 96
        %v8851 = vpop.permute.xlu0 %8850
        %8852 = vrot.lane.b32.xlu0 %v6664, 96
        %v8853 = vpop.permute.xlu0 %8852
        %8854 = vrot.lane.b32.xlu0 %v6665, 96
        %v8855 = vpop.permute.xlu0 %8854
        %8856 = vrot.lane.b32.xlu0 %v6666, 96
        %v8857 = vpop.permute.xlu0 %8856
        %8858 = vrot.lane.b32.xlu0 %v6667, 96
        %v8859 = vpop.permute.xlu0 %8858
        %8860 = vrot.lane.b32.xlu0 %v6668, 96
        %v8861 = vpop.permute.xlu0 %8860
        %8862 = vrot.lane.b32.xlu0 %v6669, 96
        %v8863 = vpop.permute.xlu0 %8862
        %8864 = vrot.lane.b32.xlu0 %v6670, 96
        %v8865 = vpop.permute.xlu0 %8864
        %8866 = vrot.lane.b32.xlu0 %v6671, 96
        %v8867 = vpop.permute.xlu0 %8866
        %8868 = vrot.lane.b32.xlu0 %v6672, 96
        %v8869 = vpop.permute.xlu0 %8868
        %8870 = vrot.lane.b32.xlu0 %v6673, 96
        %v8871 = vpop.permute.xlu0 %8870
        %8872 = vrot.lane.b32.xlu0 %v6674, 96
        %v8873 = vpop.permute.xlu0 %8872
        %8874 = vrot.lane.b32.xlu0 %v6675, 96
        %v8875 = vpop.permute.xlu0 %8874
        %8876 = vrot.lane.b32.xlu0 %v6676, 96
        %v8877 = vpop.permute.xlu0 %8876
        %8878 = vrot.lane.b32.xlu0 %v6677, 96
        %v8879 = vpop.permute.xlu0 %8878
        %8880 = vrot.lane.b32.xlu0 %v6678, 96
        %v8881 = vpop.permute.xlu0 %8880
        %8882 = vrot.lane.b32.xlu0 %v6679, 96
        %v8883 = vpop.permute.xlu0 %8882
        %8884 = vrot.lane.b32.xlu0 %v6680, 96
        %v8885 = vpop.permute.xlu0 %8884
        %8886 = vrot.lane.b32.xlu0 %v6681, 96
        %v8887 = vpop.permute.xlu0 %8886
        %8888 = vrot.lane.b32.xlu0 %v6682, 96
        %v8889 = vpop.permute.xlu0 %8888
        %8890 = vrot.lane.b32.xlu0 %v6683, 96
        %v8891 = vpop.permute.xlu0 %8890
        %8892 = vrot.lane.b32.xlu0 %v6684, 96
        %v8893 = vpop.permute.xlu0 %8892
        %8894 = vrot.lane.b32.xlu0 %v6685, 96
        %v8895 = vpop.permute.xlu0 %8894
        %8896 = vrot.lane.b32.xlu0 %v6686, 96
        %v8897 = vpop.permute.xlu0 %8896
        %8898 = vrot.lane.b32.xlu0 %v6687, 96
        %v8899 = vpop.permute.xlu0 %8898
        %8900 = vrot.lane.b32.xlu0 %v6688, 96
        %v8901 = vpop.permute.xlu0 %8900
        %8902 = vrot.lane.b32.xlu0 %v6689, 96
        %v8903 = vpop.permute.xlu0 %8902
        %8904 = vrot.lane.b32.xlu0 %v6690, 96
        %v8905 = vpop.permute.xlu0 %8904
        %8906 = vrot.lane.b32.xlu0 %v6691, 96
        %v8907 = vpop.permute.xlu0 %8906
        %8908 = vrot.lane.b32.xlu0 %v6692, 96
        %v8909 = vpop.permute.xlu0 %8908
        %8910 = vrot.lane.b32.xlu0 %v6693, 96
        %v8911 = vpop.permute.xlu0 %8910
        %8912 = vrot.lane.b32.xlu0 %v6694, 96
        %v8913 = vpop.permute.xlu0 %8912
        %8914 = vrot.lane.b32.xlu0 %v6695, 96
        %v8915 = vpop.permute.xlu0 %8914
        %8916 = vrot.lane.b32.xlu0 %v6696, 96
        %v8917 = vpop.permute.xlu0 %8916
        %8918 = vrot.lane.b32.xlu0 %v6697, 96
        %v8919 = vpop.permute.xlu0 %8918
        %8920 = vrot.lane.b32.xlu0 %v6698, 96
        %v8921 = vpop.permute.xlu0 %8920
        %8922 = vrot.lane.b32.xlu0 %v6699, 96
        %v8923 = vpop.permute.xlu0 %8922
        %8924 = vrot.lane.b32.xlu0 %v6700, 96
        %v8925 = vpop.permute.xlu0 %8924
        %8926 = vrot.lane.b32.xlu0 %v6701, 96
        %v8927 = vpop.permute.xlu0 %8926
        %8928 = vrot.lane.b32.xlu0 %v6702, 96
        %v8929 = vpop.permute.xlu0 %8928
        %8930 = vrot.lane.b32.xlu0 %v6703, 96
        %v8931 = vpop.permute.xlu0 %8930
        %8932 = vrot.lane.b32.xlu0 %v6704, 96
        %v8933 = vpop.permute.xlu0 %8932
        %8934 = vrot.lane.b32.xlu0 %v6705, 96
        %v8935 = vpop.permute.xlu0 %8934
        %8936 = vrot.lane.b32.xlu0 %v6706, 96
        %v8937 = vpop.permute.xlu0 %8936
        %8938 = vrot.lane.b32.xlu0 %v6707, 96
        %v8939 = vpop.permute.xlu0 %8938
        %8940 = vrot.lane.b32.xlu0 %v6708, 96
        %v8941 = vpop.permute.xlu0 %8940
        %8942 = vrot.lane.b32.xlu0 %v6709, 96
        %v8943 = vpop.permute.xlu0 %8942
        %8944 = vrot.lane.b32.xlu0 %v6710, 96
        %v8945 = vpop.permute.xlu0 %8944
        %8946 = vrot.lane.b32.xlu0 %v6711, 96
        %v8947 = vpop.permute.xlu0 %8946
        %8948 = vrot.lane.b32.xlu0 %v6712, 96
        %v8949 = vpop.permute.xlu0 %8948
        %8950 = vrot.lane.b32.xlu0 %v6713, 96
        %v8951 = vpop.permute.xlu0 %8950
        %8952 = vrot.lane.b32.xlu0 %v6714, 96
        %v8953 = vpop.permute.xlu0 %8952
        %8954 = vrot.lane.b32.xlu0 %v6715, 96
        %v8955 = vpop.permute.xlu0 %8954
        %8956 = vrot.lane.b32.xlu0 %v6716, 96
        %v8957 = vpop.permute.xlu0 %8956
        %8958 = vrot.lane.b32.xlu0 %v6717, 96
        %v8959 = vpop.permute.xlu0 %8958
        %8960 = vrot.lane.b32.xlu0 %v6718, 96
        %v8961 = vpop.permute.xlu0 %8960
        %v9026 = vsel %vm7935, %v4925, %v8323
        %v9027 = vsel %vm7935, %v4926, %v8325
        %v9028 = vsel %vm7935, %v4927, %v8327
        %v9029 = vsel %vm7935, %v4928, %v8329
        %v9030 = vsel %vm7935, %v4929, %v8331
        %v9031 = vsel %vm7935, %v4930, %v8333
        %v9032 = vsel %vm7935, %v4931, %v8335
        %v9033 = vsel %vm7935, %v4932, %v8337
        %v9034 = vsel %vm7935, %v4933, %v8339
        %v9035 = vsel %vm7935, %v4934, %v8341
        %v9036 = vsel %vm7935, %v4935, %v8343
        %v9037 = vsel %vm7935, %v4936, %v8345
        %v9038 = vsel %vm7935, %v4937, %v8347
        %v9039 = vsel %vm7935, %v4938, %v8349
        %v9040 = vsel %vm7935, %v4939, %v8351
        %v9041 = vsel %vm7935, %v4940, %v8353
        %v9042 = vsel %vm7935, %v4941, %v8355
        %v9043 = vsel %vm7935, %v4942, %v8357
        %v9044 = vsel %vm7935, %v4943, %v8359
        %v9045 = vsel %vm7935, %v4944, %v8361
        %v9046 = vsel %vm7935, %v4945, %v8363
        %v9047 = vsel %vm7935, %v4946, %v8365
        %v9048 = vsel %vm7935, %v4947, %v8367
        %v9049 = vsel %vm7935, %v4948, %v8369
        %v9050 = vsel %vm7935, %v4949, %v8371
        %v9051 = vsel %vm7935, %v4950, %v8373
        %v9052 = vsel %vm7935, %v4951, %v8375
        %v9053 = vsel %vm7935, %v4952, %v8377
        %v9054 = vsel %vm7935, %v4953, %v8379
        %v9055 = vsel %vm7935, %v4954, %v8381
        %v9056 = vsel %vm7935, %v4955, %v8383
        %v9057 = vsel %vm7935, %v4956, %v8385
        %v9058 = vsel %vm7935, %v4957, %v8387
        %v9059 = vsel %vm7935, %v4958, %v8389
        %v9060 = vsel %vm7935, %v4959, %v8391
        %v9061 = vsel %vm7935, %v4960, %v8393
        %v9062 = vsel %vm7935, %v4961, %v8395
        %v9063 = vsel %vm7935, %v4962, %v8397
        %v9064 = vsel %vm7935, %v4963, %v8399
        %v9065 = vsel %vm7935, %v4964, %v8401
        %v9066 = vsel %vm7935, %v4965, %v8403
        %v9067 = vsel %vm7935, %v4966, %v8405
        %v9068 = vsel %vm7935, %v4967, %v8407
        %v9069 = vsel %vm7935, %v4968, %v8409
        %v9070 = vsel %vm7935, %v4969, %v8411
        %v9071 = vsel %vm7935, %v4970, %v8413
        %v9072 = vsel %vm7935, %v4971, %v8415
        %v9073 = vsel %vm7935, %v4972, %v8417
        %v9074 = vsel %vm7935, %v4973, %v8419
        %v9075 = vsel %vm7935, %v4974, %v8421
        %v9076 = vsel %vm7935, %v4975, %v8423
        %v9077 = vsel %vm7935, %v4976, %v8425
        %v9078 = vsel %vm7935, %v4977, %v8427
        %v9079 = vsel %vm7935, %v4978, %v8429
        %v9080 = vsel %vm7935, %v4979, %v8431
        %v9081 = vsel %vm7935, %v4980, %v8433
        %v9082 = vsel %vm7935, %v4981, %v8435
        %v9083 = vsel %vm7935, %v4982, %v8437
        %v9084 = vsel %vm7935, %v4983, %v8439
        %v9085 = vsel %vm7935, %v4984, %v8441
        %v9086 = vsel %vm7935, %v4985, %v8443
        %v9087 = vsel %vm7935, %v4986, %v8445
        %v9088 = vsel %vm7935, %v4987, %v8447
        %v9089 = vsel %vm7935, %v4988, %v8449
        %v9090 = vsel %vm8000, %v9026, %v8579
        %v9091 = vsel %vm8000, %v9027, %v8581
        %v9092 = vsel %vm8000, %v9028, %v8583
        %v9093 = vsel %vm8000, %v9029, %v8585
        %v9094 = vsel %vm8000, %v9030, %v8587
        %v9095 = vsel %vm8000, %v9031, %v8589
        %v9096 = vsel %vm8000, %v9032, %v8591
        %v9097 = vsel %vm8000, %v9033, %v8593
        %v9098 = vsel %vm8000, %v9034, %v8595
        %v9099 = vsel %vm8000, %v9035, %v8597
        %v9100 = vsel %vm8000, %v9036, %v8599
        %v9101 = vsel %vm8000, %v9037, %v8601
        %v9102 = vsel %vm8000, %v9038, %v8603
        %v9103 = vsel %vm8000, %v9039, %v8605
        %v9104 = vsel %vm8000, %v9040, %v8607
        %v9105 = vsel %vm8000, %v9041, %v8609
        %v9106 = vsel %vm8000, %v9042, %v8611
        %v9107 = vsel %vm8000, %v9043, %v8613
        %v9108 = vsel %vm8000, %v9044, %v8615
        %v9109 = vsel %vm8000, %v9045, %v8617
        %v9110 = vsel %vm8000, %v9046, %v8619
        %v9111 = vsel %vm8000, %v9047, %v8621
        %v9112 = vsel %vm8000, %v9048, %v8623
        %v9113 = vsel %vm8000, %v9049, %v8625
        %v9114 = vsel %vm8000, %v9050, %v8627
        %v9115 = vsel %vm8000, %v9051, %v8629
        %v9116 = vsel %vm8000, %v9052, %v8631
        %v9117 = vsel %vm8000, %v9053, %v8633
        %v9118 = vsel %vm8000, %v9054, %v8635
        %v9119 = vsel %vm8000, %v9055, %v8637
        %v9120 = vsel %vm8000, %v9056, %v8639
        %v9121 = vsel %vm8000, %v9057, %v8641
        %v9122 = vsel %vm8000, %v9058, %v8643
        %v9123 = vsel %vm8000, %v9059, %v8645
        %v9124 = vsel %vm8000, %v9060, %v8647
        %v9125 = vsel %vm8000, %v9061, %v8649
        %v9126 = vsel %vm8000, %v9062, %v8651
        %v9127 = vsel %vm8000, %v9063, %v8653
        %v9128 = vsel %vm8000, %v9064, %v8655
        %v9129 = vsel %vm8000, %v9065, %v8657
        %v9130 = vsel %vm8000, %v9066, %v8659
        %v9131 = vsel %vm8000, %v9067, %v8661
        %v9132 = vsel %vm8000, %v9068, %v8663
        %v9133 = vsel %vm8000, %v9069, %v8665
        %v9134 = vsel %vm8000, %v9070, %v8667
        %v9135 = vsel %vm8000, %v9071, %v8669
        %v9136 = vsel %vm8000, %v9072, %v8671
        %v9137 = vsel %vm8000, %v9073, %v8673
        %v9138 = vsel %vm8000, %v9074, %v8675
        %v9139 = vsel %vm8000, %v9075, %v8677
        %v9140 = vsel %vm8000, %v9076, %v8679
        %v9141 = vsel %vm8000, %v9077, %v8681
        %v9142 = vsel %vm8000, %v9078, %v8683
        %v9143 = vsel %vm8000, %v9079, %v8685
        %v9144 = vsel %vm8000, %v9080, %v8687
        %v9145 = vsel %vm8000, %v9081, %v8689
        %v9146 = vsel %vm8000, %v9082, %v8691
        %v9147 = vsel %vm8000, %v9083, %v8693
        %v9148 = vsel %vm8000, %v9084, %v8695
        %v9149 = vsel %vm8000, %v9085, %v8697
        %v9150 = vsel %vm8000, %v9086, %v8699
        %v9151 = vsel %vm8000, %v9087, %v8701
        %v9152 = vsel %vm8000, %v9088, %v8703
        %v9153 = vsel %vm8000, %v9089, %v8705
        %v9154 = vsel %vm8065, %v9090, %v8835
        %v9155 = vsel %vm8065, %v9091, %v8837
        %v9156 = vsel %vm8065, %v9092, %v8839
        %v9157 = vsel %vm8065, %v9093, %v8841
        %v9158 = vsel %vm8065, %v9094, %v8843
        %v9159 = vsel %vm8065, %v9095, %v8845
        %v9160 = vsel %vm8065, %v9096, %v8847
        %v9161 = vsel %vm8065, %v9097, %v8849
        %v9162 = vsel %vm8065, %v9098, %v8851
        %v9163 = vsel %vm8065, %v9099, %v8853
        %v9164 = vsel %vm8065, %v9100, %v8855
        %v9165 = vsel %vm8065, %v9101, %v8857
        %v9166 = vsel %vm8065, %v9102, %v8859
        %v9167 = vsel %vm8065, %v9103, %v8861
        %v9168 = vsel %vm8065, %v9104, %v8863
        %v9169 = vsel %vm8065, %v9105, %v8865
        %v9170 = vsel %vm8065, %v9106, %v8867
        %v9171 = vsel %vm8065, %v9107, %v8869
        %v9172 = vsel %vm8065, %v9108, %v8871
        %v9173 = vsel %vm8065, %v9109, %v8873
        %v9174 = vsel %vm8065, %v9110, %v8875
        %v9175 = vsel %vm8065, %v9111, %v8877
        %v9176 = vsel %vm8065, %v9112, %v8879
        %v9177 = vsel %vm8065, %v9113, %v8881
        %v9178 = vsel %vm8065, %v9114, %v8883
        %v9179 = vsel %vm8065, %v9115, %v8885
        %v9180 = vsel %vm8065, %v9116, %v8887
        %v9181 = vsel %vm8065, %v9117, %v8889
        %v9182 = vsel %vm8065, %v9118, %v8891
        %v9183 = vsel %vm8065, %v9119, %v8893
        %v9184 = vsel %vm8065, %v9120, %v8895
        %v9185 = vsel %vm8065, %v9121, %v8897
        %v9186 = vsel %vm8065, %v9122, %v8899
        %v9187 = vsel %vm8065, %v9123, %v8901
        %v9188 = vsel %vm8065, %v9124, %v8903
        %v9189 = vsel %vm8065, %v9125, %v8905
        %v9190 = vsel %vm8065, %v9126, %v8907
        %v9191 = vsel %vm8065, %v9127, %v8909
        %v9192 = vsel %vm8065, %v9128, %v8911
        %v9193 = vsel %vm8065, %v9129, %v8913
        %v9194 = vsel %vm8065, %v9130, %v8915
        %v9195 = vsel %vm8065, %v9131, %v8917
        %v9196 = vsel %vm8065, %v9132, %v8919
        %v9197 = vsel %vm8065, %v9133, %v8921
        %v9198 = vsel %vm8065, %v9134, %v8923
        %v9199 = vsel %vm8065, %v9135, %v8925
        %v9200 = vsel %vm8065, %v9136, %v8927
        %v9201 = vsel %vm8065, %v9137, %v8929
        %v9202 = vsel %vm8065, %v9138, %v8931
        %v9203 = vsel %vm8065, %v9139, %v8933
        %v9204 = vsel %vm8065, %v9140, %v8935
        %v9205 = vsel %vm8065, %v9141, %v8937
        %v9206 = vsel %vm8065, %v9142, %v8939
        %v9207 = vsel %vm8065, %v9143, %v8941
        %v9208 = vsel %vm8065, %v9144, %v8943
        %v9209 = vsel %vm8065, %v9145, %v8945
        %v9210 = vsel %vm8065, %v9146, %v8947
        %v9211 = vsel %vm8065, %v9147, %v8949
        %v9212 = vsel %vm8065, %v9148, %v8951
        %v9213 = vsel %vm8065, %v9149, %v8953
        %v9214 = vsel %vm8065, %v9150, %v8955
        %v9215 = vsel %vm8065, %v9151, %v8957
        %v9216 = vsel %vm8065, %v9152, %v8959
        %v9217 = vsel %vm8065, %v9153, %v8961
        %v9218 = vpack.c.bf16 %v9154, %v9154
        %v9219 = vpack.c.bf16 %v9155, %v9155
        %v9220 = vpack.c.bf16 %v9156, %v9156
        %v9221 = vpack.c.bf16 %v9157, %v9157
        %v9222 = vpack.c.bf16 %v9158, %v9158
        %v9223 = vpack.c.bf16 %v9159, %v9159
        %v9224 = vpack.c.bf16 %v9160, %v9160
        %v9225 = vpack.c.bf16 %v9161, %v9161
        %v9226 = vpack.c.bf16 %v9162, %v9162
        %v9227 = vpack.c.bf16 %v9163, %v9163
        %v9228 = vpack.c.bf16 %v9164, %v9164
        %v9229 = vpack.c.bf16 %v9165, %v9165
        %v9230 = vpack.c.bf16 %v9166, %v9166
        %v9231 = vpack.c.bf16 %v9167, %v9167
        %v9232 = vpack.c.bf16 %v9168, %v9168
        %v9233 = vpack.c.bf16 %v9169, %v9169
        %v9234 = vpack.c.bf16 %v9170, %v9170
        %v9235 = vpack.c.bf16 %v9171, %v9171
        %v9236 = vpack.c.bf16 %v9172, %v9172
        %v9237 = vpack.c.bf16 %v9173, %v9173
        %v9238 = vpack.c.bf16 %v9174, %v9174
        %v9239 = vpack.c.bf16 %v9175, %v9175
        %v9240 = vpack.c.bf16 %v9176, %v9176
        %v9241 = vpack.c.bf16 %v9177, %v9177
        %v9242 = vpack.c.bf16 %v9178, %v9178
        %v9243 = vpack.c.bf16 %v9179, %v9179
        %v9244 = vpack.c.bf16 %v9180, %v9180
        %v9245 = vpack.c.bf16 %v9181, %v9181
        %v9246 = vpack.c.bf16 %v9182, %v9182
        %v9247 = vpack.c.bf16 %v9183, %v9183
        %v9248 = vpack.c.bf16 %v9184, %v9184
        %v9249 = vpack.c.bf16 %v9185, %v9185
        %v9250 = vpack.c.bf16 %v9186, %v9186
        %v9251 = vpack.c.bf16 %v9187, %v9187
        %v9252 = vpack.c.bf16 %v9188, %v9188
        %v9253 = vpack.c.bf16 %v9189, %v9189
        %v9254 = vpack.c.bf16 %v9190, %v9190
        %v9255 = vpack.c.bf16 %v9191, %v9191
        %v9256 = vpack.c.bf16 %v9192, %v9192
        %v9257 = vpack.c.bf16 %v9193, %v9193
        %v9258 = vpack.c.bf16 %v9194, %v9194
        %v9259 = vpack.c.bf16 %v9195, %v9195
        %v9260 = vpack.c.bf16 %v9196, %v9196
        %v9261 = vpack.c.bf16 %v9197, %v9197
        %v9262 = vpack.c.bf16 %v9198, %v9198
        %v9263 = vpack.c.bf16 %v9199, %v9199
        %v9264 = vpack.c.bf16 %v9200, %v9200
        %v9265 = vpack.c.bf16 %v9201, %v9201
        %v9266 = vpack.c.bf16 %v9202, %v9202
        %v9267 = vpack.c.bf16 %v9203, %v9203
        %v9268 = vpack.c.bf16 %v9204, %v9204
        %v9269 = vpack.c.bf16 %v9205, %v9205
        %v9270 = vpack.c.bf16 %v9206, %v9206
        %v9271 = vpack.c.bf16 %v9207, %v9207
        %v9272 = vpack.c.bf16 %v9208, %v9208
        %v9273 = vpack.c.bf16 %v9209, %v9209
        %v9274 = vpack.c.bf16 %v9210, %v9210
        %v9275 = vpack.c.bf16 %v9211, %v9211
        %v9276 = vpack.c.bf16 %v9212, %v9212
        %v9277 = vpack.c.bf16 %v9213, %v9213
        %v9278 = vpack.c.bf16 %v9214, %v9214
        %v9279 = vpack.c.bf16 %v9215, %v9215
        %v9280 = vpack.c.bf16 %v9216, %v9216
        %v9281 = vpack.c.bf16 %v9217, %v9217
        %9282 = vst [vmem:[#allocation2 + $0x4] sm:$0xf] %v9218
        %9283 = vst [vmem:[#allocation2 + $0x10] sm:$0xf] %v9219
        %9284 = vst [vmem:[#allocation2 + $0x1c] sm:$0xf] %v9220
        %9285 = vst [vmem:[#allocation2 + $0x28] sm:$0xf] %v9221
        %9286 = vst [vmem:[#allocation2 + $0x34] sm:$0xf] %v9222
        %9287 = vst [vmem:[#allocation2 + $0x40] sm:$0xf] %v9223
        %9288 = vst [vmem:[#allocation2 + $0x4c] sm:$0xf] %v9224
        %9289 = vst [vmem:[#allocation2 + $0x58] sm:$0xf] %v9225
        %9290 = vst [vmem:[#allocation2 + $0x64] sm:$0xf] %v9226
        %9291 = vst [vmem:[#allocation2 + $0x70] sm:$0xf] %v9227
        %9292 = vst [vmem:[#allocation2 + $0x7c] sm:$0xf] %v9228
        %9293 = vst [vmem:[#allocation2 + $0x88] sm:$0xf] %v9229
        %9294 = vst [vmem:[#allocation2 + $0x94] sm:$0xf] %v9230
        %9295 = vst [vmem:[#allocation2 + $0xa0] sm:$0xf] %v9231
        %9296 = vst [vmem:[#allocation2 + $0xac] sm:$0xf] %v9232
        %9297 = vst [vmem:[#allocation2 + $0xb8] sm:$0xf] %v9233
        %9298 = vst [vmem:[#allocation2 + $0xc4] sm:$0xf] %v9234
        %9299 = vst [vmem:[#allocation2 + $0xd0] sm:$0xf] %v9235
        %9300 = vst [vmem:[#allocation2 + $0xdc] sm:$0xf] %v9236
        %9301 = vst [vmem:[#allocation2 + $0xe8] sm:$0xf] %v9237
        %9302 = vst [vmem:[#allocation2 + $0xf4] sm:$0xf] %v9238
        %9303 = vst [vmem:[#allocation2 + $0x100] sm:$0xf] %v9239
        %9304 = vst [vmem:[#allocation2 + $0x10c] sm:$0xf] %v9240
        %9305 = vst [vmem:[#allocation2 + $0x118] sm:$0xf] %v9241
        %9306 = vst [vmem:[#allocation2 + $0x124] sm:$0xf] %v9242
        %9307 = vst [vmem:[#allocation2 + $0x130] sm:$0xf] %v9243
        %9308 = vst [vmem:[#allocation2 + $0x13c] sm:$0xf] %v9244
        %9309 = vst [vmem:[#allocation2 + $0x148] sm:$0xf] %v9245
        %9310 = vst [vmem:[#allocation2 + $0x154] sm:$0xf] %v9246
        %9311 = vst [vmem:[#allocation2 + $0x160] sm:$0xf] %v9247
        %9312 = vst [vmem:[#allocation2 + $0x16c] sm:$0xf] %v9248
        %9313 = vst [vmem:[#allocation2 + $0x178] sm:$0xf] %v9249
        %9314 = vst [vmem:[#allocation2 + $0x184] sm:$0xf] %v9250
        %9315 = vst [vmem:[#allocation2 + $0x190] sm:$0xf] %v9251
        %9316 = vst [vmem:[#allocation2 + $0x19c] sm:$0xf] %v9252
        %9317 = vst [vmem:[#allocation2 + $0x1a8] sm:$0xf] %v9253
        %9318 = vst [vmem:[#allocation2 + $0x1b4] sm:$0xf] %v9254
        %9319 = vst [vmem:[#allocation2 + $0x1c0] sm:$0xf] %v9255
        %9320 = vst [vmem:[#allocation2 + $0x1cc] sm:$0xf] %v9256
        %9321 = vst [vmem:[#allocation2 + $0x1d8] sm:$0xf] %v9257
        %9322 = vst [vmem:[#allocation2 + $0x1e4] sm:$0xf] %v9258
        %9323 = vst [vmem:[#allocation2 + $0x1f0] sm:$0xf] %v9259
        %9324 = vst [vmem:[#allocation2 + $0x1fc] sm:$0xf] %v9260
        %9325 = vst [vmem:[#allocation2 + $0x208] sm:$0xf] %v9261
        %9326 = vst [vmem:[#allocation2 + $0x214] sm:$0xf] %v9262
        %9327 = vst [vmem:[#allocation2 + $0x220] sm:$0xf] %v9263
        %9328 = vst [vmem:[#allocation2 + $0x22c] sm:$0xf] %v9264
        %9329 = vst [vmem:[#allocation2 + $0x238] sm:$0xf] %v9265
        %9330 = vst [vmem:[#allocation2 + $0x244] sm:$0xf] %v9266
        %9331 = vst [vmem:[#allocation2 + $0x250] sm:$0xf] %v9267
        %9332 = vst [vmem:[#allocation2 + $0x25c] sm:$0xf] %v9268
        %9333 = vst [vmem:[#allocation2 + $0x268] sm:$0xf] %v9269
        %9334 = vst [vmem:[#allocation2 + $0x274] sm:$0xf] %v9270
        %9335 = vst [vmem:[#allocation2 + $0x280] sm:$0xf] %v9271
        %9336 = vst [vmem:[#allocation2 + $0x28c] sm:$0xf] %v9272
        %9337 = vst [vmem:[#allocation2 + $0x298] sm:$0xf] %v9273
        %9338 = vst [vmem:[#allocation2 + $0x2a4] sm:$0xf] %v9274
        %9339 = vst [vmem:[#allocation2 + $0x2b0] sm:$0xf] %v9275
        %9340 = vst [vmem:[#allocation2 + $0x2bc] sm:$0xf] %v9276
        %9341 = vst [vmem:[#allocation2 + $0x2c8] sm:$0xf] %v9277
        %9342 = vst [vmem:[#allocation2 + $0x2d4] sm:$0xf] %v9278
        %9343 = vst [vmem:[#allocation2 + $0x2e0] sm:$0xf] %v9279
        %9344 = vst [vmem:[#allocation2 + $0x2ec] sm:$0xf] %v9280
        %9345 = vst [vmem:[#allocation2 + $0x2f8] sm:$0xf] %v9281
        %9410 = vrot.lane.b32.xlu0 %v2234, 32
        %v9411 = vpop.permute.xlu0 %9410
        %9412 = vrot.lane.b32.xlu0 %v2235, 32
        %v9413 = vpop.permute.xlu0 %9412
        %9414 = vrot.lane.b32.xlu0 %v2236, 32
        %v9415 = vpop.permute.xlu0 %9414
        %9416 = vrot.lane.b32.xlu0 %v2237, 32
        %v9417 = vpop.permute.xlu0 %9416
        %9418 = vrot.lane.b32.xlu0 %v2238, 32
        %v9419 = vpop.permute.xlu0 %9418
        %9420 = vrot.lane.b32.xlu0 %v2239, 32
        %v9421 = vpop.permute.xlu0 %9420
        %9422 = vrot.lane.b32.xlu0 %v2240, 32
        %v9423 = vpop.permute.xlu0 %9422
        %9424 = vrot.lane.b32.xlu0 %v2241, 32
        %v9425 = vpop.permute.xlu0 %9424
        %9426 = vrot.lane.b32.xlu0 %v2242, 32
        %v9427 = vpop.permute.xlu0 %9426
        %9428 = vrot.lane.b32.xlu0 %v2243, 32
        %v9429 = vpop.permute.xlu0 %9428
        %9430 = vrot.lane.b32.xlu0 %v2244, 32
        %v9431 = vpop.permute.xlu0 %9430
        %9432 = vrot.lane.b32.xlu0 %v2245, 32
        %v9433 = vpop.permute.xlu0 %9432
        %9434 = vrot.lane.b32.xlu0 %v2246, 32
        %v9435 = vpop.permute.xlu0 %9434
        %9436 = vrot.lane.b32.xlu0 %v2247, 32
        %v9437 = vpop.permute.xlu0 %9436
        %9438 = vrot.lane.b32.xlu0 %v2248, 32
        %v9439 = vpop.permute.xlu0 %9438
        %9440 = vrot.lane.b32.xlu0 %v2249, 32
        %v9441 = vpop.permute.xlu0 %9440
        %9442 = vrot.lane.b32.xlu0 %v2250, 32
        %v9443 = vpop.permute.xlu0 %9442
        %9444 = vrot.lane.b32.xlu0 %v2251, 32
        %v9445 = vpop.permute.xlu0 %9444
        %9446 = vrot.lane.b32.xlu0 %v2252, 32
        %v9447 = vpop.permute.xlu0 %9446
        %9448 = vrot.lane.b32.xlu0 %v2253, 32
        %v9449 = vpop.permute.xlu0 %9448
        %9450 = vrot.lane.b32.xlu0 %v2254, 32
        %v9451 = vpop.permute.xlu0 %9450
        %9452 = vrot.lane.b32.xlu0 %v2255, 32
        %v9453 = vpop.permute.xlu0 %9452
        %9454 = vrot.lane.b32.xlu0 %v2256, 32
        %v9455 = vpop.permute.xlu0 %9454
        %9456 = vrot.lane.b32.xlu0 %v2257, 32
        %v9457 = vpop.permute.xlu0 %9456
        %9458 = vrot.lane.b32.xlu0 %v2258, 32
        %v9459 = vpop.permute.xlu0 %9458
        %9460 = vrot.lane.b32.xlu0 %v2259, 32
        %v9461 = vpop.permute.xlu0 %9460
        %9462 = vrot.lane.b32.xlu0 %v2260, 32
        %v9463 = vpop.permute.xlu0 %9462
        %9464 = vrot.lane.b32.xlu0 %v2261, 32
        %v9465 = vpop.permute.xlu0 %9464
        %9466 = vrot.lane.b32.xlu0 %v2262, 32
        %v9467 = vpop.permute.xlu0 %9466
        %9468 = vrot.lane.b32.xlu0 %v2263, 32
        %v9469 = vpop.permute.xlu0 %9468
        %9470 = vrot.lane.b32.xlu0 %v2264, 32
        %v9471 = vpop.permute.xlu0 %9470
        %9472 = vrot.lane.b32.xlu0 %v2265, 32
        %v9473 = vpop.permute.xlu0 %9472
        %9474 = vrot.lane.b32.xlu0 %v2266, 32
        %v9475 = vpop.permute.xlu0 %9474
        %9476 = vrot.lane.b32.xlu0 %v2267, 32
        %v9477 = vpop.permute.xlu0 %9476
        %9478 = vrot.lane.b32.xlu0 %v2268, 32
        %v9479 = vpop.permute.xlu0 %9478
        %9480 = vrot.lane.b32.xlu0 %v2269, 32
        %v9481 = vpop.permute.xlu0 %9480
        %9482 = vrot.lane.b32.xlu0 %v2270, 32
        %v9483 = vpop.permute.xlu0 %9482
        %9484 = vrot.lane.b32.xlu0 %v2271, 32
        %v9485 = vpop.permute.xlu0 %9484
        %9486 = vrot.lane.b32.xlu0 %v2272, 32
        %v9487 = vpop.permute.xlu0 %9486
        %9488 = vrot.lane.b32.xlu0 %v2273, 32
        %v9489 = vpop.permute.xlu0 %9488
        %9490 = vrot.lane.b32.xlu0 %v2274, 32
        %v9491 = vpop.permute.xlu0 %9490
        %9492 = vrot.lane.b32.xlu0 %v2275, 32
        %v9493 = vpop.permute.xlu0 %9492
        %9494 = vrot.lane.b32.xlu0 %v2276, 32
        %v9495 = vpop.permute.xlu0 %9494
        %9496 = vrot.lane.b32.xlu0 %v2277, 32
        %v9497 = vpop.permute.xlu0 %9496
        %9498 = vrot.lane.b32.xlu0 %v2278, 32
        %v9499 = vpop.permute.xlu0 %9498
        %9500 = vrot.lane.b32.xlu0 %v2279, 32
        %v9501 = vpop.permute.xlu0 %9500
        %9502 = vrot.lane.b32.xlu0 %v2280, 32
        %v9503 = vpop.permute.xlu0 %9502
        %9504 = vrot.lane.b32.xlu0 %v2281, 32
        %v9505 = vpop.permute.xlu0 %9504
        %9506 = vrot.lane.b32.xlu0 %v2282, 32
        %v9507 = vpop.permute.xlu0 %9506
        %9508 = vrot.lane.b32.xlu0 %v2283, 32
        %v9509 = vpop.permute.xlu0 %9508
        %9510 = vrot.lane.b32.xlu0 %v2284, 32
        %v9511 = vpop.permute.xlu0 %9510
        %9512 = vrot.lane.b32.xlu0 %v2285, 32
        %v9513 = vpop.permute.xlu0 %9512
        %9514 = vrot.lane.b32.xlu0 %v2286, 32
        %v9515 = vpop.permute.xlu0 %9514
        %9516 = vrot.lane.b32.xlu0 %v2287, 32
        %v9517 = vpop.permute.xlu0 %9516
        %9518 = vrot.lane.b32.xlu0 %v2288, 32
        %v9519 = vpop.permute.xlu0 %9518
        %9520 = vrot.lane.b32.xlu0 %v2289, 32
        %v9521 = vpop.permute.xlu0 %9520
        %9522 = vrot.lane.b32.xlu0 %v2290, 32
        %v9523 = vpop.permute.xlu0 %9522
        %9524 = vrot.lane.b32.xlu0 %v2291, 32
        %v9525 = vpop.permute.xlu0 %9524
        %9526 = vrot.lane.b32.xlu0 %v2292, 32
        %v9527 = vpop.permute.xlu0 %9526
        %9528 = vrot.lane.b32.xlu0 %v2293, 32
        %v9529 = vpop.permute.xlu0 %9528
        %9530 = vrot.lane.b32.xlu0 %v2294, 32
        %v9531 = vpop.permute.xlu0 %9530
        %9532 = vrot.lane.b32.xlu0 %v2295, 32
        %v9533 = vpop.permute.xlu0 %9532
        %9534 = vrot.lane.b32.xlu0 %v2296, 32
        %v9535 = vpop.permute.xlu0 %9534
        %9536 = vrot.lane.b32.xlu0 %v2297, 32
        %v9537 = vpop.permute.xlu0 %9536
        %v9602 = vsel %vm7935, %v7103, %v9411
        %v9603 = vsel %vm7935, %v7104, %v9413
        %v9604 = vsel %vm7935, %v7105, %v9415
        %v9605 = vsel %vm7935, %v7106, %v9417
        %v9606 = vsel %vm7935, %v7107, %v9419
        %v9607 = vsel %vm7935, %v7108, %v9421
        %v9608 = vsel %vm7935, %v7109, %v9423
        %v9609 = vsel %vm7935, %v7110, %v9425
        %v9610 = vsel %vm7935, %v7111, %v9427
        %v9611 = vsel %vm7935, %v7112, %v9429
        %v9612 = vsel %vm7935, %v7113, %v9431
        %v9613 = vsel %vm7935, %v7114, %v9433
        %v9614 = vsel %vm7935, %v7115, %v9435
        %v9615 = vsel %vm7935, %v7116, %v9437
        %v9616 = vsel %vm7935, %v7117, %v9439
        %v9617 = vsel %vm7935, %v7118, %v9441
        %v9618 = vsel %vm7935, %v7119, %v9443
        %v9619 = vsel %vm7935, %v7120, %v9445
        %v9620 = vsel %vm7935, %v7121, %v9447
        %v9621 = vsel %vm7935, %v7122, %v9449
        %v9622 = vsel %vm7935, %v7123, %v9451
        %v9623 = vsel %vm7935, %v7124, %v9453
        %v9624 = vsel %vm7935, %v7125, %v9455
        %v9625 = vsel %vm7935, %v7126, %v9457
        %v9626 = vsel %vm7935, %v7127, %v9459
        %v9627 = vsel %vm7935, %v7128, %v9461
        %v9628 = vsel %vm7935, %v7129, %v9463
        %v9629 = vsel %vm7935, %v7130, %v9465
        %v9630 = vsel %vm7935, %v7131, %v9467
        %v9631 = vsel %vm7935, %v7132, %v9469
        %v9632 = vsel %vm7935, %v7133, %v9471
        %v9633 = vsel %vm7935, %v7134, %v9473
        %v9634 = vsel %vm7935, %v7135, %v9475
        %v9635 = vsel %vm7935, %v7136, %v9477
        %v9636 = vsel %vm7935, %v7137, %v9479
        %v9637 = vsel %vm7935, %v7138, %v9481
        %v9638 = vsel %vm7935, %v7139, %v9483
        %v9639 = vsel %vm7935, %v7140, %v9485
        %v9640 = vsel %vm7935, %v7141, %v9487
        %v9641 = vsel %vm7935, %v7142, %v9489
        %v9642 = vsel %vm7935, %v7143, %v9491
        %v9643 = vsel %vm7935, %v7144, %v9493
        %v9644 = vsel %vm7935, %v7145, %v9495
        %v9645 = vsel %vm7935, %v7146, %v9497
        %v9646 = vsel %vm7935, %v7147, %v9499
        %v9647 = vsel %vm7935, %v7148, %v9501
        %v9648 = vsel %vm7935, %v7149, %v9503
        %v9649 = vsel %vm7935, %v7150, %v9505
        %v9650 = vsel %vm7935, %v7151, %v9507
        %v9651 = vsel %vm7935, %v7152, %v9509
        %v9652 = vsel %vm7935, %v7153, %v9511
        %v9653 = vsel %vm7935, %v7154, %v9513
        %v9654 = vsel %vm7935, %v7155, %v9515
        %v9655 = vsel %vm7935, %v7156, %v9517
        %v9656 = vsel %vm7935, %v7157, %v9519
        %v9657 = vsel %vm7935, %v7158, %v9521
        %v9658 = vsel %vm7935, %v7159, %v9523
        %v9659 = vsel %vm7935, %v7160, %v9525
        %v9660 = vsel %vm7935, %v7161, %v9527
        %v9661 = vsel %vm7935, %v7162, %v9529
        %v9662 = vsel %vm7935, %v7163, %v9531
        %v9663 = vsel %vm7935, %v7164, %v9533
        %v9664 = vsel %vm7935, %v7165, %v9535
        %v9665 = vsel %vm7935, %v7166, %v9537
        %vm9666 = vcmask 326656
        %v9667 = vsel %vm9666, %v9602, 0.0
        %v9668 = vsel %vm9666, %v9603, 0.0
        %v9669 = vsel %vm9666, %v9604, 0.0
        %v9670 = vsel %vm9666, %v9605, 0.0
        %v9671 = vsel %vm9666, %v9606, 0.0
        %v9672 = vsel %vm9666, %v9607, 0.0
        %v9673 = vsel %vm9666, %v9608, 0.0
        %v9674 = vsel %vm9666, %v9609, 0.0
        %v9675 = vsel %vm9666, %v9610, 0.0
        %v9676 = vsel %vm9666, %v9611, 0.0
        %v9677 = vsel %vm9666, %v9612, 0.0
        %v9678 = vsel %vm9666, %v9613, 0.0
        %v9679 = vsel %vm9666, %v9614, 0.0
        %v9680 = vsel %vm9666, %v9615, 0.0
        %v9681 = vsel %vm9666, %v9616, 0.0
        %v9682 = vsel %vm9666, %v9617, 0.0
        %v9683 = vsel %vm9666, %v9618, 0.0
        %v9684 = vsel %vm9666, %v9619, 0.0
        %v9685 = vsel %vm9666, %v9620, 0.0
        %v9686 = vsel %vm9666, %v9621, 0.0
        %v9687 = vsel %vm9666, %v9622, 0.0
        %v9688 = vsel %vm9666, %v9623, 0.0
        %v9689 = vsel %vm9666, %v9624, 0.0
        %v9690 = vsel %vm9666, %v9625, 0.0
        %v9691 = vsel %vm9666, %v9626, 0.0
        %v9692 = vsel %vm9666, %v9627, 0.0
        %v9693 = vsel %vm9666, %v9628, 0.0
        %v9694 = vsel %vm9666, %v9629, 0.0
        %v9695 = vsel %vm9666, %v9630, 0.0
        %v9696 = vsel %vm9666, %v9631, 0.0
        %v9697 = vsel %vm9666, %v9632, 0.0
        %v9698 = vsel %vm9666, %v9633, 0.0
        %v9699 = vsel %vm9666, %v9634, 0.0
        %v9700 = vsel %vm9666, %v9635, 0.0
        %v9701 = vsel %vm9666, %v9636, 0.0
        %v9702 = vsel %vm9666, %v9637, 0.0
        %v9703 = vsel %vm9666, %v9638, 0.0
        %v9704 = vsel %vm9666, %v9639, 0.0
        %v9705 = vsel %vm9666, %v9640, 0.0
        %v9706 = vsel %vm9666, %v9641, 0.0
        %v9707 = vsel %vm9666, %v9642, 0.0
        %v9708 = vsel %vm9666, %v9643, 0.0
        %v9709 = vsel %vm9666, %v9644, 0.0
        %v9710 = vsel %vm9666, %v9645, 0.0
        %v9711 = vsel %vm9666, %v9646, 0.0
        %v9712 = vsel %vm9666, %v9647, 0.0
        %v9713 = vsel %vm9666, %v9648, 0.0
        %v9714 = vsel %vm9666, %v9649, 0.0
        %v9715 = vsel %vm9666, %v9650, 0.0
        %v9716 = vsel %vm9666, %v9651, 0.0
        %v9717 = vsel %vm9666, %v9652, 0.0
        %v9718 = vsel %vm9666, %v9653, 0.0
        %v9719 = vsel %vm9666, %v9654, 0.0
        %v9720 = vsel %vm9666, %v9655, 0.0
        %v9721 = vsel %vm9666, %v9656, 0.0
        %v9722 = vsel %vm9666, %v9657, 0.0
        %v9723 = vsel %vm9666, %v9658, 0.0
        %v9724 = vsel %vm9666, %v9659, 0.0
        %v9725 = vsel %vm9666, %v9660, 0.0
        %v9726 = vsel %vm9666, %v9661, 0.0
        %v9727 = vsel %vm9666, %v9662, 0.0
        %v9728 = vsel %vm9666, %v9663, 0.0
        %v9729 = vsel %vm9666, %v9664, 0.0
        %v9730 = vsel %vm9666, %v9665, 0.0
        %v9731 = vpack.c.bf16 %v9667, %v9667
        %v9732 = vpack.c.bf16 %v9668, %v9668
        %v9733 = vpack.c.bf16 %v9669, %v9669
        %v9734 = vpack.c.bf16 %v9670, %v9670
        %v9735 = vpack.c.bf16 %v9671, %v9671
        %v9736 = vpack.c.bf16 %v9672, %v9672
        %v9737 = vpack.c.bf16 %v9673, %v9673
        %v9738 = vpack.c.bf16 %v9674, %v9674
        %v9739 = vpack.c.bf16 %v9675, %v9675
        %v9740 = vpack.c.bf16 %v9676, %v9676
        %v9741 = vpack.c.bf16 %v9677, %v9677
        %v9742 = vpack.c.bf16 %v9678, %v9678
        %v9743 = vpack.c.bf16 %v9679, %v9679
        %v9744 = vpack.c.bf16 %v9680, %v9680
        %v9745 = vpack.c.bf16 %v9681, %v9681
        %v9746 = vpack.c.bf16 %v9682, %v9682
        %v9747 = vpack.c.bf16 %v9683, %v9683
        %v9748 = vpack.c.bf16 %v9684, %v9684
        %v9749 = vpack.c.bf16 %v9685, %v9685
        %v9750 = vpack.c.bf16 %v9686, %v9686
        %v9751 = vpack.c.bf16 %v9687, %v9687
        %v9752 = vpack.c.bf16 %v9688, %v9688
        %v9753 = vpack.c.bf16 %v9689, %v9689
        %v9754 = vpack.c.bf16 %v9690, %v9690
        %v9755 = vpack.c.bf16 %v9691, %v9691
        %v9756 = vpack.c.bf16 %v9692, %v9692
        %v9757 = vpack.c.bf16 %v9693, %v9693
        %v9758 = vpack.c.bf16 %v9694, %v9694
        %v9759 = vpack.c.bf16 %v9695, %v9695
        %v9760 = vpack.c.bf16 %v9696, %v9696
        %v9761 = vpack.c.bf16 %v9697, %v9697
        %v9762 = vpack.c.bf16 %v9698, %v9698
        %v9763 = vpack.c.bf16 %v9699, %v9699
        %v9764 = vpack.c.bf16 %v9700, %v9700
        %v9765 = vpack.c.bf16 %v9701, %v9701
        %v9766 = vpack.c.bf16 %v9702, %v9702
        %v9767 = vpack.c.bf16 %v9703, %v9703
        %v9768 = vpack.c.bf16 %v9704, %v9704
        %v9769 = vpack.c.bf16 %v9705, %v9705
        %v9770 = vpack.c.bf16 %v9706, %v9706
        %v9771 = vpack.c.bf16 %v9707, %v9707
        %v9772 = vpack.c.bf16 %v9708, %v9708
        %v9773 = vpack.c.bf16 %v9709, %v9709
        %v9774 = vpack.c.bf16 %v9710, %v9710
        %v9775 = vpack.c.bf16 %v9711, %v9711
        %v9776 = vpack.c.bf16 %v9712, %v9712
        %v9777 = vpack.c.bf16 %v9713, %v9713
        %v9778 = vpack.c.bf16 %v9714, %v9714
        %v9779 = vpack.c.bf16 %v9715, %v9715
        %v9780 = vpack.c.bf16 %v9716, %v9716
        %v9781 = vpack.c.bf16 %v9717, %v9717
        %v9782 = vpack.c.bf16 %v9718, %v9718
        %v9783 = vpack.c.bf16 %v9719, %v9719
        %v9784 = vpack.c.bf16 %v9720, %v9720
        %v9785 = vpack.c.bf16 %v9721, %v9721
        %v9786 = vpack.c.bf16 %v9722, %v9722
        %v9787 = vpack.c.bf16 %v9723, %v9723
        %v9788 = vpack.c.bf16 %v9724, %v9724
        %v9789 = vpack.c.bf16 %v9725, %v9725
        %v9790 = vpack.c.bf16 %v9726, %v9726
        %v9791 = vpack.c.bf16 %v9727, %v9727
        %v9792 = vpack.c.bf16 %v9728, %v9728
        %v9793 = vpack.c.bf16 %v9729, %v9729
        %v9794 = vpack.c.bf16 %v9730, %v9730
        %9795 = vst [vmem:[#allocation2 + $0x8] sm:$0xf] %v9731
        %9796 = vst [vmem:[#allocation2 + $0x14] sm:$0xf] %v9732
        %9797 = vst [vmem:[#allocation2 + $0x20] sm:$0xf] %v9733
        %9798 = vst [vmem:[#allocation2 + $0x2c] sm:$0xf] %v9734
        %9799 = vst [vmem:[#allocation2 + $0x38] sm:$0xf] %v9735
        %9800 = vst [vmem:[#allocation2 + $0x44] sm:$0xf] %v9736
        %9801 = vst [vmem:[#allocation2 + $0x50] sm:$0xf] %v9737
        %9802 = vst [vmem:[#allocation2 + $0x5c] sm:$0xf] %v9738
        %9803 = vst [vmem:[#allocation2 + $0x68] sm:$0xf] %v9739
        %9804 = vst [vmem:[#allocation2 + $0x74] sm:$0xf] %v9740
        %9805 = vst [vmem:[#allocation2 + $0x80] sm:$0xf] %v9741
        %9806 = vst [vmem:[#allocation2 + $0x8c] sm:$0xf] %v9742
        %9807 = vst [vmem:[#allocation2 + $0x98] sm:$0xf] %v9743
        %9808 = vst [vmem:[#allocation2 + $0xa4] sm:$0xf] %v9744
        %9809 = vst [vmem:[#allocation2 + $0xb0] sm:$0xf] %v9745
        %9810 = vst [vmem:[#allocation2 + $0xbc] sm:$0xf] %v9746
        %9811 = vst [vmem:[#allocation2 + $0xc8] sm:$0xf] %v9747
        %9812 = vst [vmem:[#allocation2 + $0xd4] sm:$0xf] %v9748
        %9813 = vst [vmem:[#allocation2 + $0xe0] sm:$0xf] %v9749
        %9814 = vst [vmem:[#allocation2 + $0xec] sm:$0xf] %v9750
        %9815 = vst [vmem:[#allocation2 + $0xf8] sm:$0xf] %v9751
        %9816 = vst [vmem:[#allocation2 + $0x104] sm:$0xf] %v9752
        %9817 = vst [vmem:[#allocation2 + $0x110] sm:$0xf] %v9753
        %9818 = vst [vmem:[#allocation2 + $0x11c] sm:$0xf] %v9754
        %9819 = vst [vmem:[#allocation2 + $0x128] sm:$0xf] %v9755
        %9820 = vst [vmem:[#allocation2 + $0x134] sm:$0xf] %v9756
        %9821 = vst [vmem:[#allocation2 + $0x140] sm:$0xf] %v9757
        %9822 = vst [vmem:[#allocation2 + $0x14c] sm:$0xf] %v9758
        %9823 = vst [vmem:[#allocation2 + $0x158] sm:$0xf] %v9759
        %9824 = vst [vmem:[#allocation2 + $0x164] sm:$0xf] %v9760
        %9825 = vst [vmem:[#allocation2 + $0x170] sm:$0xf] %v9761
        %9826 = vst [vmem:[#allocation2 + $0x17c] sm:$0xf] %v9762
        %9827 = vst [vmem:[#allocation2 + $0x188] sm:$0xf] %v9763
        %9828 = vst [vmem:[#allocation2 + $0x194] sm:$0xf] %v9764
        %9829 = vst [vmem:[#allocation2 + $0x1a0] sm:$0xf] %v9765
        %9830 = vst [vmem:[#allocation2 + $0x1ac] sm:$0xf] %v9766
        %9831 = vst [vmem:[#allocation2 + $0x1b8] sm:$0xf] %v9767
        %9832 = vst [vmem:[#allocation2 + $0x1c4] sm:$0xf] %v9768
        %9833 = vst [vmem:[#allocation2 + $0x1d0] sm:$0xf] %v9769
        %9834 = vst [vmem:[#allocation2 + $0x1dc] sm:$0xf] %v9770
        %9835 = vst [vmem:[#allocation2 + $0x1e8] sm:$0xf] %v9771
        %9836 = vst [vmem:[#allocation2 + $0x1f4] sm:$0xf] %v9772
        %9837 = vst [vmem:[#allocation2 + $0x200] sm:$0xf] %v9773
        %9838 = vst [vmem:[#allocation2 + $0x20c] sm:$0xf] %v9774
        %9839 = vst [vmem:[#allocation2 + $0x218] sm:$0xf] %v9775
        %9840 = vst [vmem:[#allocation2 + $0x224] sm:$0xf] %v9776
        %9841 = vst [vmem:[#allocation2 + $0x230] sm:$0xf] %v9777
        %9842 = vst [vmem:[#allocation2 + $0x23c] sm:$0xf] %v9778
        %9843 = vst [vmem:[#allocation2 + $0x248] sm:$0xf] %v9779
        %9844 = vst [vmem:[#allocation2 + $0x254] sm:$0xf] %v9780
        %9845 = vst [vmem:[#allocation2 + $0x260] sm:$0xf] %v9781
        %9846 = vst [vmem:[#allocation2 + $0x26c] sm:$0xf] %v9782
        %9847 = vst [vmem:[#allocation2 + $0x278] sm:$0xf] %v9783
        %9848 = vst [vmem:[#allocation2 + $0x284] sm:$0xf] %v9784
        %9849 = vst [vmem:[#allocation2 + $0x290] sm:$0xf] %v9785
        %9850 = vst [vmem:[#allocation2 + $0x29c] sm:$0xf] %v9786
        %9851 = vst [vmem:[#allocation2 + $0x2a8] sm:$0xf] %v9787
        %9852 = vst [vmem:[#allocation2 + $0x2b4] sm:$0xf] %v9788
        %9853 = vst [vmem:[#allocation2 + $0x2c0] sm:$0xf] %v9789
        %9854 = vst [vmem:[#allocation2 + $0x2cc] sm:$0xf] %v9790
        %9855 = vst [vmem:[#allocation2 + $0x2d8] sm:$0xf] %v9791
        %9856 = vst [vmem:[#allocation2 + $0x2e4] sm:$0xf] %v9792
        %9857 = vst [vmem:[#allocation2 + $0x2f0] sm:$0xf] %v9793
        %9858 = vst [vmem:[#allocation2 + $0x2fc] sm:$0xf] %v9794
        %v9859 = vld [vmem:[#allocation2] sm:$0xff]
        %v9860 = vld [vmem:[#allocation2 + $0x8] sm:$0xf]
        %v9861 = vld [vmem:[#allocation2 + $0xc] sm:$0xff]
        %v9862 = vld [vmem:[#allocation2 + $0x14] sm:$0xf]
        %v9863 = vld [vmem:[#allocation2 + $0x18] sm:$0xff]
        %v9864 = vld [vmem:[#allocation2 + $0x20] sm:$0xf]
        %v9865 = vld [vmem:[#allocation2 + $0x24] sm:$0xff]
        %v9866 = vld [vmem:[#allocation2 + $0x2c] sm:$0xf]
        %v9867 = vld [vmem:[#allocation2 + $0x30] sm:$0xff]
        %v9868 = vld [vmem:[#allocation2 + $0x38] sm:$0xf]
        %v9869 = vld [vmem:[#allocation2 + $0x3c] sm:$0xff]
        %v9870 = vld [vmem:[#allocation2 + $0x44] sm:$0xf]
        %v9871 = vld [vmem:[#allocation2 + $0x48] sm:$0xff]
        %v9872 = vld [vmem:[#allocation2 + $0x50] sm:$0xf]
        %v9873 = vld [vmem:[#allocation2 + $0x54] sm:$0xff]
        %v9874 = vld [vmem:[#allocation2 + $0x5c] sm:$0xf]
        %v9875 = vld [vmem:[#allocation2 + $0x60] sm:$0xff]
        %v9876 = vld [vmem:[#allocation2 + $0x68] sm:$0xf]
        %v9877 = vld [vmem:[#allocation2 + $0x6c] sm:$0xff]
        %v9878 = vld [vmem:[#allocation2 + $0x74] sm:$0xf]
        %v9879 = vld [vmem:[#allocation2 + $0x78] sm:$0xff]
        %v9880 = vld [vmem:[#allocation2 + $0x80] sm:$0xf]
        %v9881 = vld [vmem:[#allocation2 + $0x84] sm:$0xff]
        %v9882 = vld [vmem:[#allocation2 + $0x8c] sm:$0xf]
        %v9883 = vld [vmem:[#allocation2 + $0x90] sm:$0xff]
        %v9884 = vld [vmem:[#allocation2 + $0x98] sm:$0xf]
        %v9885 = vld [vmem:[#allocation2 + $0x9c] sm:$0xff]
        %v9886 = vld [vmem:[#allocation2 + $0xa4] sm:$0xf]
        %v9887 = vld [vmem:[#allocation2 + $0xa8] sm:$0xff]
        %v9888 = vld [vmem:[#allocation2 + $0xb0] sm:$0xf]
        %v9889 = vld [vmem:[#allocation2 + $0xb4] sm:$0xff]
        %v9890 = vld [vmem:[#allocation2 + $0xbc] sm:$0xf]
        %v9891 = vld [vmem:[#allocation2 + $0xc0] sm:$0xff]
        %v9892 = vld [vmem:[#allocation2 + $0xc8] sm:$0xf]
        %v9893 = vld [vmem:[#allocation2 + $0xcc] sm:$0xff]
        %v9894 = vld [vmem:[#allocation2 + $0xd4] sm:$0xf]
        %v9895 = vld [vmem:[#allocation2 + $0xd8] sm:$0xff]
        %v9896 = vld [vmem:[#allocation2 + $0xe0] sm:$0xf]
        %v9897 = vld [vmem:[#allocation2 + $0xe4] sm:$0xff]
        %v9898 = vld [vmem:[#allocation2 + $0xec] sm:$0xf]
        %v9899 = vld [vmem:[#allocation2 + $0xf0] sm:$0xff]
        %v9900 = vld [vmem:[#allocation2 + $0xf8] sm:$0xf]
        %v9901 = vld [vmem:[#allocation2 + $0xfc] sm:$0xff]
        %v9902 = vld [vmem:[#allocation2 + $0x104] sm:$0xf]
        %v9903 = vld [vmem:[#allocation2 + $0x108] sm:$0xff]
        %v9904 = vld [vmem:[#allocation2 + $0x110] sm:$0xf]
        %v9905 = vld [vmem:[#allocation2 + $0x114] sm:$0xff]
        %v9906 = vld [vmem:[#allocation2 + $0x11c] sm:$0xf]
        %v9907 = vld [vmem:[#allocation2 + $0x120] sm:$0xff]
        %v9908 = vld [vmem:[#allocation2 + $0x128] sm:$0xf]
        %v9909 = vld [vmem:[#allocation2 + $0x12c] sm:$0xff]
        %v9910 = vld [vmem:[#allocation2 + $0x134] sm:$0xf]
        %v9911 = vld [vmem:[#allocation2 + $0x138] sm:$0xff]
        %v9912 = vld [vmem:[#allocation2 + $0x140] sm:$0xf]
        %v9913 = vld [vmem:[#allocation2 + $0x144] sm:$0xff]
        %v9914 = vld [vmem:[#allocation2 + $0x14c] sm:$0xf]
        %v9915 = vld [vmem:[#allocation2 + $0x150] sm:$0xff]
        %v9916 = vld [vmem:[#allocation2 + $0x158] sm:$0xf]
        %v9917 = vld [vmem:[#allocation2 + $0x15c] sm:$0xff]
        %v9918 = vld [vmem:[#allocation2 + $0x164] sm:$0xf]
        %v9919 = vld [vmem:[#allocation2 + $0x168] sm:$0xff]
        %v9920 = vld [vmem:[#allocation2 + $0x170] sm:$0xf]
        %v9921 = vld [vmem:[#allocation2 + $0x174] sm:$0xff]
        %v9922 = vld [vmem:[#allocation2 + $0x17c] sm:$0xf]
        %v9923 = vld [vmem:[#allocation2 + $0x180] sm:$0xff]
        %v9924 = vld [vmem:[#allocation2 + $0x188] sm:$0xf]
        %v9925 = vld [vmem:[#allocation2 + $0x18c] sm:$0xff]
        %v9926 = vld [vmem:[#allocation2 + $0x194] sm:$0xf]
        %v9927 = vld [vmem:[#allocation2 + $0x198] sm:$0xff]
        %v9928 = vld [vmem:[#allocation2 + $0x1a0] sm:$0xf]
        %v9929 = vld [vmem:[#allocation2 + $0x1a4] sm:$0xff]
        %v9930 = vld [vmem:[#allocation2 + $0x1ac] sm:$0xf]
        %v9931 = vld [vmem:[#allocation2 + $0x1b0] sm:$0xff]
        %v9932 = vld [vmem:[#allocation2 + $0x1b8] sm:$0xf]
        %v9933 = vld [vmem:[#allocation2 + $0x1bc] sm:$0xff]
        %v9934 = vld [vmem:[#allocation2 + $0x1c4] sm:$0xf]
        %v9935 = vld [vmem:[#allocation2 + $0x1c8] sm:$0xff]
        %v9936 = vld [vmem:[#allocation2 + $0x1d0] sm:$0xf]
        %v9937 = vld [vmem:[#allocation2 + $0x1d4] sm:$0xff]
        %v9938 = vld [vmem:[#allocation2 + $0x1dc] sm:$0xf]
        %v9939 = vld [vmem:[#allocation2 + $0x1e0] sm:$0xff]
        %v9940 = vld [vmem:[#allocation2 + $0x1e8] sm:$0xf]
        %v9941 = vld [vmem:[#allocation2 + $0x1ec] sm:$0xff]
        %v9942 = vld [vmem:[#allocation2 + $0x1f4] sm:$0xf]
        %v9943 = vld [vmem:[#allocation2 + $0x1f8] sm:$0xff]
        %v9944 = vld [vmem:[#allocation2 + $0x200] sm:$0xf]
        %v9945 = vld [vmem:[#allocation2 + $0x204] sm:$0xff]
        %v9946 = vld [vmem:[#allocation2 + $0x20c] sm:$0xf]
        %v9947 = vld [vmem:[#allocation2 + $0x210] sm:$0xff]
        %v9948 = vld [vmem:[#allocation2 + $0x218] sm:$0xf]
        %v9949 = vld [vmem:[#allocation2 + $0x21c] sm:$0xff]
        %v9950 = vld [vmem:[#allocation2 + $0x224] sm:$0xf]
        %v9951 = vld [vmem:[#allocation2 + $0x228] sm:$0xff]
        %v9952 = vld [vmem:[#allocation2 + $0x230] sm:$0xf]
        %v9953 = vld [vmem:[#allocation2 + $0x234] sm:$0xff]
        %v9954 = vld [vmem:[#allocation2 + $0x23c] sm:$0xf]
        %v9955 = vld [vmem:[#allocation2 + $0x240] sm:$0xff]
        %v9956 = vld [vmem:[#allocation2 + $0x248] sm:$0xf]
        %v9957 = vld [vmem:[#allocation2 + $0x24c] sm:$0xff]
        %v9958 = vld [vmem:[#allocation2 + $0x254] sm:$0xf]
        %v9959 = vld [vmem:[#allocation2 + $0x258] sm:$0xff]
        %v9960 = vld [vmem:[#allocation2 + $0x260] sm:$0xf]
        %v9961 = vld [vmem:[#allocation2 + $0x264] sm:$0xff]
        %v9962 = vld [vmem:[#allocation2 + $0x26c] sm:$0xf]
        %v9963 = vld [vmem:[#allocation2 + $0x270] sm:$0xff]
        %v9964 = vld [vmem:[#allocation2 + $0x278] sm:$0xf]
        %v9965 = vld [vmem:[#allocation2 + $0x27c] sm:$0xff]
        %v9966 = vld [vmem:[#allocation2 + $0x284] sm:$0xf]
        %v9967 = vld [vmem:[#allocation2 + $0x288] sm:$0xff]
        %v9968 = vld [vmem:[#allocation2 + $0x290] sm:$0xf]
        %v9969 = vld [vmem:[#allocation2 + $0x294] sm:$0xff]
        %v9970 = vld [vmem:[#allocation2 + $0x29c] sm:$0xf]
        %v9971 = vld [vmem:[#allocation2 + $0x2a0] sm:$0xff]
        %v9972 = vld [vmem:[#allocation2 + $0x2a8] sm:$0xf]
        %v9973 = vld [vmem:[#allocation2 + $0x2ac] sm:$0xff]
        %v9974 = vld [vmem:[#allocation2 + $0x2b4] sm:$0xf]
        %v9975 = vld [vmem:[#allocation2 + $0x2b8] sm:$0xff]
        %v9976 = vld [vmem:[#allocation2 + $0x2c0] sm:$0xf]
        %v9977 = vld [vmem:[#allocation2 + $0x2c4] sm:$0xff]
        %v9978 = vld [vmem:[#allocation2 + $0x2cc] sm:$0xf]
        %v9979 = vld [vmem:[#allocation2 + $0x2d0] sm:$0xff]
        %v9980 = vld [vmem:[#allocation2 + $0x2d8] sm:$0xf]
        %v9981 = vld [vmem:[#allocation2 + $0x2dc] sm:$0xff]
        %v9982 = vld [vmem:[#allocation2 + $0x2e4] sm:$0xf]
        %v9983 = vld [vmem:[#allocation2 + $0x2e8] sm:$0xff]
        %v9984 = vld [vmem:[#allocation2 + $0x2f0] sm:$0xf]
        %v9985 = vld [vmem:[#allocation2 + $0x2f4] sm:$0xff]
        %v9986 = vld [vmem:[#allocation2 + $0x2fc] sm:$0xf]
        %v9987 = vld [vmem:[%s2] sm:$0xf]
        %v9988 = vld [vmem:[%s2 + $0x4] sm:$0xf]
        %v9989 = vld [vmem:[%s2 + $0x8] sm:$0xf]
        %v9990 = vld [vmem:[%s2 + $0xc] sm:$0xf]
        %v9991 = vld [vmem:[%s2 + $0x10] sm:$0xf]
        %v9992 = vld [vmem:[%s2 + $0x14] sm:$0xf]
        %v9993 = vld [vmem:[%s2 + $0x18] sm:$0xf]
        %v9994 = vld [vmem:[%s2 + $0x1c] sm:$0xf]
        %v9995 = vld [vmem:[%s2 + $0x20] sm:$0xf]
        %v9996 = vld [vmem:[%s2 + $0x24] sm:$0xf]
        %v9997 = vld [vmem:[%s2 + $0x28] sm:$0xf]
        %v9998 = vld [vmem:[%s2 + $0x2c] sm:$0xf]
        %v9999 = vld [vmem:[%s2 + $0x30] sm:$0xf]
        %v10000 = vld [vmem:[%s2 + $0x34] sm:$0xf]
        %v10001 = vld [vmem:[%s2 + $0x38] sm:$0xf]
        %v10002 = vld [vmem:[%s2 + $0x3c] sm:$0xf]
        %v10003 = vld [vmem:[%s2 + $0x40] sm:$0xf]
        %v10004 = vld [vmem:[%s2 + $0x44] sm:$0xf]
        %v10005 = vld [vmem:[%s2 + $0x48] sm:$0xf]
        %v10006 = vld [vmem:[%s2 + $0x4c] sm:$0xf]
        %v10007 = vld [vmem:[%s2 + $0x50] sm:$0xf]
        %v10008 = vld [vmem:[%s2 + $0x54] sm:$0xf]
        %v10009 = vld [vmem:[%s2 + $0x58] sm:$0xf]
        %v10010 = vld [vmem:[%s2 + $0x5c] sm:$0xf]
        %v10011 = vld [vmem:[%s2 + $0x60] sm:$0xf]
        %v10012 = vld [vmem:[%s2 + $0x64] sm:$0xf]
        %v10013 = vld [vmem:[%s2 + $0x68] sm:$0xf]
        %v10014 = vld [vmem:[%s2 + $0x6c] sm:$0xf]
        %v10015 = vld [vmem:[%s2 + $0x70] sm:$0xf]
        %v10016 = vld [vmem:[%s2 + $0x74] sm:$0xf]
        %v10017 = vld [vmem:[%s2 + $0x78] sm:$0xf]
        %v10018 = vld [vmem:[%s2 + $0x7c] sm:$0xf]
        %v10019 = vld [vmem:[%s2 + $0x80] sm:$0xf]
        %v10020 = vld [vmem:[%s2 + $0x84] sm:$0xf]
        %v10021 = vld [vmem:[%s2 + $0x88] sm:$0xf]
        %v10022 = vld [vmem:[%s2 + $0x8c] sm:$0xf]
        %v10023 = vld [vmem:[%s2 + $0x90] sm:$0xf]
        %v10024 = vld [vmem:[%s2 + $0x94] sm:$0xf]
        %v10025 = vld [vmem:[%s2 + $0x98] sm:$0xf]
        %v10026 = vld [vmem:[%s2 + $0x9c] sm:$0xf]
        %v10027 = vld [vmem:[%s2 + $0xa0] sm:$0xf]
        %v10028 = vld [vmem:[%s2 + $0xa4] sm:$0xf]
        %v10029 = vld [vmem:[%s2 + $0xa8] sm:$0xf]
        %v10030 = vld [vmem:[%s2 + $0xac] sm:$0xf]
        %v10031 = vld [vmem:[%s2 + $0xb0] sm:$0xf]
        %v10032 = vld [vmem:[%s2 + $0xb4] sm:$0xf]
        %v10033 = vld [vmem:[%s2 + $0xb8] sm:$0xf]
        %v10034 = vld [vmem:[%s2 + $0xbc] sm:$0xf]
        %v10035 = vld [vmem:[%s3] sm:$0x1]
        %v10037 = vperm.slane %v10035, 0
        %v10167 = vunpack.c.l.b16 %v9859
        %v10168 = vunpack.c.h.b16 %v9859
        %v10169 = vunpack.c.l.b16 %v9860
        %v10170 = vunpack.c.l.b16 %v9861
        %v10171 = vunpack.c.h.b16 %v9861
        %v10172 = vunpack.c.l.b16 %v9862
        %v10173 = vunpack.c.l.b16 %v9863
        %v10174 = vunpack.c.h.b16 %v9863
        %v10175 = vunpack.c.l.b16 %v9864
        %v10176 = vunpack.c.l.b16 %v9865
        %v10177 = vunpack.c.h.b16 %v9865
        %v10178 = vunpack.c.l.b16 %v9866
        %v10179 = vunpack.c.l.b16 %v9867
        %v10180 = vunpack.c.h.b16 %v9867
        %v10181 = vunpack.c.l.b16 %v9868
        %v10182 = vunpack.c.l.b16 %v9869
        %v10183 = vunpack.c.h.b16 %v9869
        %v10184 = vunpack.c.l.b16 %v9870
        %v10185 = vunpack.c.l.b16 %v9871
        %v10186 = vunpack.c.h.b16 %v9871
        %v10187 = vunpack.c.l.b16 %v9872
        %v10188 = vunpack.c.l.b16 %v9873
        %v10189 = vunpack.c.h.b16 %v9873
        %v10190 = vunpack.c.l.b16 %v9874
        %v10191 = vunpack.c.l.b16 %v9875
        %v10192 = vunpack.c.h.b16 %v9875
        %v10193 = vunpack.c.l.b16 %v9876
        %v10194 = vunpack.c.l.b16 %v9877
        %v10195 = vunpack.c.h.b16 %v9877
        %v10196 = vunpack.c.l.b16 %v9878
        %v10197 = vunpack.c.l.b16 %v9879
        %v10198 = vunpack.c.h.b16 %v9879
        %v10199 = vunpack.c.l.b16 %v9880
        %v10200 = vunpack.c.l.b16 %v9881
        %v10201 = vunpack.c.h.b16 %v9881
        %v10202 = vunpack.c.l.b16 %v9882
        %v10203 = vunpack.c.l.b16 %v9883
        %v10204 = vunpack.c.h.b16 %v9883
        %v10205 = vunpack.c.l.b16 %v9884
        %v10206 = vunpack.c.l.b16 %v9885
        %v10207 = vunpack.c.h.b16 %v9885
        %v10208 = vunpack.c.l.b16 %v9886
        %v10209 = vunpack.c.l.b16 %v9887
        %v10210 = vunpack.c.h.b16 %v9887
        %v10211 = vunpack.c.l.b16 %v9888
        %v10212 = vunpack.c.l.b16 %v9889
        %v10213 = vunpack.c.h.b16 %v9889
        %v10214 = vunpack.c.l.b16 %v9890
        %v10215 = vunpack.c.l.b16 %v9891
        %v10216 = vunpack.c.h.b16 %v9891
        %v10217 = vunpack.c.l.b16 %v9892
        %v10218 = vunpack.c.l.b16 %v9893
        %v10219 = vunpack.c.h.b16 %v9893
        %v10220 = vunpack.c.l.b16 %v9894
        %v10221 = vunpack.c.l.b16 %v9895
        %v10222 = vunpack.c.h.b16 %v9895
        %v10223 = vunpack.c.l.b16 %v9896
        %v10224 = vunpack.c.l.b16 %v9897
        %v10225 = vunpack.c.h.b16 %v9897
        %v10226 = vunpack.c.l.b16 %v9898
        %v10227 = vunpack.c.l.b16 %v9899
        %v10228 = vunpack.c.h.b16 %v9899
        %v10229 = vunpack.c.l.b16 %v9900
        %v10230 = vunpack.c.l.b16 %v9901
        %v10231 = vunpack.c.h.b16 %v9901
        %v10232 = vunpack.c.l.b16 %v9902
        %v10233 = vunpack.c.l.b16 %v9903
        %v10234 = vunpack.c.h.b16 %v9903
        %v10235 = vunpack.c.l.b16 %v9904
        %v10236 = vunpack.c.l.b16 %v9905
        %v10237 = vunpack.c.h.b16 %v9905
        %v10238 = vunpack.c.l.b16 %v9906
        %v10239 = vunpack.c.l.b16 %v9907
        %v10240 = vunpack.c.h.b16 %v9907
        %v10241 = vunpack.c.l.b16 %v9908
        %v10242 = vunpack.c.l.b16 %v9909
        %v10243 = vunpack.c.h.b16 %v9909
        %v10244 = vunpack.c.l.b16 %v9910
        %v10245 = vunpack.c.l.b16 %v9911
        %v10246 = vunpack.c.h.b16 %v9911
        %v10247 = vunpack.c.l.b16 %v9912
        %v10248 = vunpack.c.l.b16 %v9913
        %v10249 = vunpack.c.h.b16 %v9913
        %v10250 = vunpack.c.l.b16 %v9914
        %v10251 = vunpack.c.l.b16 %v9915
        %v10252 = vunpack.c.h.b16 %v9915
        %v10253 = vunpack.c.l.b16 %v9916
        %v10254 = vunpack.c.l.b16 %v9917
        %v10255 = vunpack.c.h.b16 %v9917
        %v10256 = vunpack.c.l.b16 %v9918
        %v10257 = vunpack.c.l.b16 %v9919
        %v10258 = vunpack.c.h.b16 %v9919
        %v10259 = vunpack.c.l.b16 %v9920
        %v10260 = vunpack.c.l.b16 %v9921
        %v10261 = vunpack.c.h.b16 %v9921
        %v10262 = vunpack.c.l.b16 %v9922
        %v10263 = vunpack.c.l.b16 %v9923
        %v10264 = vunpack.c.h.b16 %v9923
        %v10265 = vunpack.c.l.b16 %v9924
        %v10266 = vunpack.c.l.b16 %v9925
        %v10267 = vunpack.c.h.b16 %v9925
        %v10268 = vunpack.c.l.b16 %v9926
        %v10269 = vunpack.c.l.b16 %v9927
        %v10270 = vunpack.c.h.b16 %v9927
        %v10271 = vunpack.c.l.b16 %v9928
        %v10272 = vunpack.c.l.b16 %v9929
        %v10273 = vunpack.c.h.b16 %v9929
        %v10274 = vunpack.c.l.b16 %v9930
        %v10275 = vunpack.c.l.b16 %v9931
        %v10276 = vunpack.c.h.b16 %v9931
        %v10277 = vunpack.c.l.b16 %v9932
        %v10278 = vunpack.c.l.b16 %v9933
        %v10279 = vunpack.c.h.b16 %v9933
        %v10280 = vunpack.c.l.b16 %v9934
        %v10281 = vunpack.c.l.b16 %v9935
        %v10282 = vunpack.c.h.b16 %v9935
        %v10283 = vunpack.c.l.b16 %v9936
        %v10284 = vunpack.c.l.b16 %v9937
        %v10285 = vunpack.c.h.b16 %v9937
        %v10286 = vunpack.c.l.b16 %v9938
        %v10287 = vunpack.c.l.b16 %v9939
        %v10288 = vunpack.c.h.b16 %v9939
        %v10289 = vunpack.c.l.b16 %v9940
        %v10290 = vunpack.c.l.b16 %v9941
        %v10291 = vunpack.c.h.b16 %v9941
        %v10292 = vunpack.c.l.b16 %v9942
        %v10293 = vunpack.c.l.b16 %v9943
        %v10294 = vunpack.c.h.b16 %v9943
        %v10295 = vunpack.c.l.b16 %v9944
        %v10296 = vunpack.c.l.b16 %v9945
        %v10297 = vunpack.c.h.b16 %v9945
        %v10298 = vunpack.c.l.b16 %v9946
        %v10299 = vunpack.c.l.b16 %v9947
        %v10300 = vunpack.c.h.b16 %v9947
        %v10301 = vunpack.c.l.b16 %v9948
        %v10302 = vunpack.c.l.b16 %v9949
        %v10303 = vunpack.c.h.b16 %v9949
        %v10304 = vunpack.c.l.b16 %v9950
        %v10305 = vunpack.c.l.b16 %v9951
        %v10306 = vunpack.c.h.b16 %v9951
        %v10307 = vunpack.c.l.b16 %v9952
        %v10308 = vunpack.c.l.b16 %v9953
        %v10309 = vunpack.c.h.b16 %v9953
        %v10310 = vunpack.c.l.b16 %v9954
        %v10311 = vunpack.c.l.b16 %v9955
        %v10312 = vunpack.c.h.b16 %v9955
        %v10313 = vunpack.c.l.b16 %v9956
        %v10314 = vunpack.c.l.b16 %v9957
        %v10315 = vunpack.c.h.b16 %v9957
        %v10316 = vunpack.c.l.b16 %v9958
        %v10317 = vunpack.c.l.b16 %v9959
        %v10318 = vunpack.c.h.b16 %v9959
        %v10319 = vunpack.c.l.b16 %v9960
        %v10320 = vunpack.c.l.b16 %v9961
        %v10321 = vunpack.c.h.b16 %v9961
        %v10322 = vunpack.c.l.b16 %v9962
        %v10323 = vunpack.c.l.b16 %v9963
        %v10324 = vunpack.c.h.b16 %v9963
        %v10325 = vunpack.c.l.b16 %v9964
        %v10326 = vunpack.c.l.b16 %v9965
        %v10327 = vunpack.c.h.b16 %v9965
        %v10328 = vunpack.c.l.b16 %v9966
        %v10329 = vunpack.c.l.b16 %v9967
        %v10330 = vunpack.c.h.b16 %v9967
        %v10331 = vunpack.c.l.b16 %v9968
        %v10332 = vunpack.c.l.b16 %v9969
        %v10333 = vunpack.c.h.b16 %v9969
        %v10334 = vunpack.c.l.b16 %v9970
        %v10335 = vunpack.c.l.b16 %v9971
        %v10336 = vunpack.c.h.b16 %v9971
        %v10337 = vunpack.c.l.b16 %v9972
        %v10338 = vunpack.c.l.b16 %v9973
        %v10339 = vunpack.c.h.b16 %v9973
        %v10340 = vunpack.c.l.b16 %v9974
        %v10341 = vunpack.c.l.b16 %v9975
        %v10342 = vunpack.c.h.b16 %v9975
        %v10343 = vunpack.c.l.b16 %v9976
        %v10344 = vunpack.c.l.b16 %v9977
        %v10345 = vunpack.c.h.b16 %v9977
        %v10346 = vunpack.c.l.b16 %v9978
        %v10347 = vunpack.c.l.b16 %v9979
        %v10348 = vunpack.c.h.b16 %v9979
        %v10349 = vunpack.c.l.b16 %v9980
        %v10350 = vunpack.c.l.b16 %v9981
        %v10351 = vunpack.c.h.b16 %v9981
        %v10352 = vunpack.c.l.b16 %v9982
        %v10353 = vunpack.c.l.b16 %v9983
        %v10354 = vunpack.c.h.b16 %v9983
        %v10355 = vunpack.c.l.b16 %v9984
        %v10356 = vunpack.c.l.b16 %v9985
        %v10357 = vunpack.c.h.b16 %v9985
        %v10358 = vunpack.c.l.b16 %v9986
        %v10359 = vpack.c.b16 %v10170, %v10167
        %v10360 = vpack.c.b16 %v10171, %v10168
        %v10361 = vpack.c.b16 %v10172, %v10169
        %v10362 = vpack.c.b16 %v10176, %v10173
        %v10363 = vpack.c.b16 %v10177, %v10174
        %v10364 = vpack.c.b16 %v10178, %v10175
        %v10365 = vpack.c.b16 %v10182, %v10179
        %v10366 = vpack.c.b16 %v10183, %v10180
        %v10367 = vpack.c.b16 %v10184, %v10181
        %v10368 = vpack.c.b16 %v10188, %v10185
        %v10369 = vpack.c.b16 %v10189, %v10186
        %v10370 = vpack.c.b16 %v10190, %v10187
        %v10371 = vpack.c.b16 %v10194, %v10191
        %v10372 = vpack.c.b16 %v10195, %v10192
        %v10373 = vpack.c.b16 %v10196, %v10193
        %v10374 = vpack.c.b16 %v10200, %v10197
        %v10375 = vpack.c.b16 %v10201, %v10198
        %v10376 = vpack.c.b16 %v10202, %v10199
        %v10377 = vpack.c.b16 %v10206, %v10203
        %v10378 = vpack.c.b16 %v10207, %v10204
        %v10379 = vpack.c.b16 %v10208, %v10205
        %v10380 = vpack.c.b16 %v10212, %v10209
        %v10381 = vpack.c.b16 %v10213, %v10210
        %v10382 = vpack.c.b16 %v10214, %v10211
        %v10383 = vpack.c.b16 %v10218, %v10215
        %v10384 = vpack.c.b16 %v10219, %v10216
        %v10385 = vpack.c.b16 %v10220, %v10217
        %v10386 = vpack.c.b16 %v10224, %v10221
        %v10387 = vpack.c.b16 %v10225, %v10222
        %v10388 = vpack.c.b16 %v10226, %v10223
        %v10389 = vpack.c.b16 %v10230, %v10227
        %v10390 = vpack.c.b16 %v10231, %v10228
        %v10391 = vpack.c.b16 %v10232, %v10229
        %v10392 = vpack.c.b16 %v10236, %v10233
        %v10393 = vpack.c.b16 %v10237, %v10234
        %v10394 = vpack.c.b16 %v10238, %v10235
        %v10395 = vpack.c.b16 %v10242, %v10239
        %v10396 = vpack.c.b16 %v10243, %v10240
        %v10397 = vpack.c.b16 %v10244, %v10241
        %v10398 = vpack.c.b16 %v10248, %v10245
        %v10399 = vpack.c.b16 %v10249, %v10246
        %v10400 = vpack.c.b16 %v10250, %v10247
        %v10401 = vpack.c.b16 %v10254, %v10251
        %v10402 = vpack.c.b16 %v10255, %v10252
        %v10403 = vpack.c.b16 %v10256, %v10253
        %v10404 = vpack.c.b16 %v10260, %v10257
        %v10405 = vpack.c.b16 %v10261, %v10258
        %v10406 = vpack.c.b16 %v10262, %v10259
        %v10407 = vpack.c.b16 %v10266, %v10263
        %v10408 = vpack.c.b16 %v10267, %v10264
        %v10409 = vpack.c.b16 %v10268, %v10265
        %v10410 = vpack.c.b16 %v10272, %v10269
        %v10411 = vpack.c.b16 %v10273, %v10270
        %v10412 = vpack.c.b16 %v10274, %v10271
        %v10413 = vpack.c.b16 %v10278, %v10275
        %v10414 = vpack.c.b16 %v10279, %v10276
        %v10415 = vpack.c.b16 %v10280, %v10277
        %v10416 = vpack.c.b16 %v10284, %v10281
        %v10417 = vpack.c.b16 %v10285, %v10282
        %v10418 = vpack.c.b16 %v10286, %v10283
        %v10419 = vpack.c.b16 %v10290, %v10287
        %v10420 = vpack.c.b16 %v10291, %v10288
        %v10421 = vpack.c.b16 %v10292, %v10289
        %v10422 = vpack.c.b16 %v10296, %v10293
        %v10423 = vpack.c.b16 %v10297, %v10294
        %v10424 = vpack.c.b16 %v10298, %v10295
        %v10425 = vpack.c.b16 %v10302, %v10299
        %v10426 = vpack.c.b16 %v10303, %v10300
        %v10427 = vpack.c.b16 %v10304, %v10301
        %v10428 = vpack.c.b16 %v10308, %v10305
        %v10429 = vpack.c.b16 %v10309, %v10306
        %v10430 = vpack.c.b16 %v10310, %v10307
        %v10431 = vpack.c.b16 %v10314, %v10311
        %v10432 = vpack.c.b16 %v10315, %v10312
        %v10433 = vpack.c.b16 %v10316, %v10313
        %v10434 = vpack.c.b16 %v10320, %v10317
        %v10435 = vpack.c.b16 %v10321, %v10318
        %v10436 = vpack.c.b16 %v10322, %v10319
        %v10437 = vpack.c.b16 %v10326, %v10323
        %v10438 = vpack.c.b16 %v10327, %v10324
        %v10439 = vpack.c.b16 %v10328, %v10325
        %v10440 = vpack.c.b16 %v10332, %v10329
        %v10441 = vpack.c.b16 %v10333, %v10330
        %v10442 = vpack.c.b16 %v10334, %v10331
        %v10443 = vpack.c.b16 %v10338, %v10335
        %v10444 = vpack.c.b16 %v10339, %v10336
        %v10445 = vpack.c.b16 %v10340, %v10337
        %v10446 = vpack.c.b16 %v10344, %v10341
        %v10447 = vpack.c.b16 %v10345, %v10342
        %v10448 = vpack.c.b16 %v10346, %v10343
        %v10449 = vpack.c.b16 %v10350, %v10347
        %v10450 = vpack.c.b16 %v10351, %v10348
        %v10451 = vpack.c.b16 %v10352, %v10349
        %v10452 = vpack.c.b16 %v10356, %v10353
        %v10453 = vpack.c.b16 %v10357, %v10354
        %v10454 = vpack.c.b16 %v10358, %v10355
        %v10599 = vunpack.c.l.b16 %v9987
        %v10600 = vunpack.c.l.b16 %v9988
        %v10601 = vunpack.c.l.b16 %v9989
        %v10602 = vunpack.c.l.b16 %v9990
        %v10603 = vunpack.c.l.b16 %v9991
        %v10604 = vunpack.c.l.b16 %v9992
        %v10605 = vunpack.c.l.b16 %v9993
        %v10606 = vunpack.c.l.b16 %v9994
        %v10607 = vunpack.c.l.b16 %v9995
        %v10608 = vunpack.c.l.b16 %v9996
        %v10609 = vunpack.c.l.b16 %v9997
        %v10610 = vunpack.c.l.b16 %v9998
        %v10611 = vunpack.c.l.b16 %v9999
        %v10612 = vunpack.c.l.b16 %v10000
        %v10613 = vunpack.c.l.b16 %v10001
        %v10614 = vunpack.c.l.b16 %v10002
        %v10615 = vunpack.c.l.b16 %v10003
        %v10616 = vunpack.c.l.b16 %v10004
        %v10617 = vunpack.c.l.b16 %v10005
        %v10618 = vunpack.c.l.b16 %v10006
        %v10619 = vunpack.c.l.b16 %v10007
        %v10620 = vunpack.c.l.b16 %v10008
        %v10621 = vunpack.c.l.b16 %v10009
        %v10622 = vunpack.c.l.b16 %v10010
        %v10623 = vunpack.c.l.b16 %v10011
        %v10624 = vunpack.c.l.b16 %v10012
        %v10625 = vunpack.c.l.b16 %v10013
        %v10626 = vunpack.c.l.b16 %v10014
        %v10627 = vunpack.c.l.b16 %v10015
        %v10628 = vunpack.c.l.b16 %v10016
        %v10629 = vunpack.c.l.b16 %v10017
        %v10630 = vunpack.c.l.b16 %v10018
        %v10631 = vunpack.c.l.b16 %v10019
        %v10632 = vunpack.c.l.b16 %v10020
        %v10633 = vunpack.c.l.b16 %v10021
        %v10634 = vunpack.c.l.b16 %v10022
        %v10635 = vunpack.c.l.b16 %v10023
        %v10636 = vunpack.c.l.b16 %v10024
        %v10637 = vunpack.c.l.b16 %v10025
        %v10638 = vunpack.c.l.b16 %v10026
        %v10639 = vunpack.c.l.b16 %v10027
        %v10640 = vunpack.c.l.b16 %v10028
        %v10641 = vunpack.c.l.b16 %v10029
        %v10642 = vunpack.c.l.b16 %v10030
        %v10643 = vunpack.c.l.b16 %v10031
        %v10644 = vunpack.c.l.b16 %v10032
        %v10645 = vunpack.c.l.b16 %v10033
        %v10646 = vunpack.c.l.b16 %v10034
        %v10647 = vpack.c.b16 %v10600, %v10599
        %v10648 = vpack.c.b16 %v10602, %v10601
        %v10649 = vpack.c.b16 %v10604, %v10603
        %v10650 = vpack.c.b16 %v10606, %v10605
        %v10651 = vpack.c.b16 %v10608, %v10607
        %v10652 = vpack.c.b16 %v10610, %v10609
        %v10653 = vpack.c.b16 %v10612, %v10611
        %v10654 = vpack.c.b16 %v10614, %v10613
        %v10655 = vpack.c.b16 %v10616, %v10615
        %v10656 = vpack.c.b16 %v10618, %v10617
        %v10657 = vpack.c.b16 %v10620, %v10619
        %v10658 = vpack.c.b16 %v10622, %v10621
        %v10659 = vpack.c.b16 %v10624, %v10623
        %v10660 = vpack.c.b16 %v10626, %v10625
        %v10661 = vpack.c.b16 %v10628, %v10627
        %v10662 = vpack.c.b16 %v10630, %v10629
        %v10663 = vpack.c.b16 %v10632, %v10631
        %v10664 = vpack.c.b16 %v10634, %v10633
        %v10665 = vpack.c.b16 %v10636, %v10635
        %v10666 = vpack.c.b16 %v10638, %v10637
        %v10667 = vpack.c.b16 %v10640, %v10639
        %v10668 = vpack.c.b16 %v10642, %v10641
        %v10669 = vpack.c.b16 %v10644, %v10643
        %v10670 = vpack.c.b16 %v10646, %v10645
        %10695 = vmatpush.bf16.msra.mxu0 %v10654
        %10696 = vmatpush.bf16.msra.mxu0 %v10653
        %10697 = vmatpush.bf16.msra.mxu0 %v10652
        %10698 = vmatpush.bf16.msra.mxu0 %v10651
        %10699 = vmatpush.bf16.msra.mxu0 %v10650
        %10700 = vmatpush.bf16.msra.mxu0 %v10649
        %10701 = vmatpush.bf16.msra.mxu0 %v10648
        %10702 = vmatpush.bf16.msra.mxu0 %v10647
        %10703 = vmatmul.bf16.gmra.mxu0 %v10359
        %v10704 = vpop.f32.mrf.mxu0
        %v10705 = vadd.f32 %v10037, %v10704
        %v10706 = vpop.f32.mrf.mxu0
        %v10707 = vadd.f32 %v10037, %v10706
        %10708 = vmatmul.bf16.gmra.mxu0 %v10362
        %v10709 = vpop.f32.mrf.mxu0
        %v10710 = vadd.f32 %v10037, %v10709
        %v10711 = vpop.f32.mrf.mxu0
        %v10712 = vadd.f32 %v10037, %v10711
        %10713 = vmatmul.bf16.gmra.mxu0 %v10365
        %v10714 = vpop.f32.mrf.mxu0
        %v10715 = vadd.f32 %v10037, %v10714
        %v10716 = vpop.f32.mrf.mxu0
        %v10717 = vadd.f32 %v10037, %v10716
        %10718 = vmatmul.bf16.gmra.mxu0 %v10368
        %v10719 = vpop.f32.mrf.mxu0
        %v10720 = vadd.f32 %v10037, %v10719
        %v10721 = vpop.f32.mrf.mxu0
        %v10722 = vadd.f32 %v10037, %v10721
        %10723 = vmatmul.bf16.gmra.mxu0 %v10371
        %v10724 = vpop.f32.mrf.mxu0
        %v10725 = vadd.f32 %v10037, %v10724
        %v10726 = vpop.f32.mrf.mxu0
        %v10727 = vadd.f32 %v10037, %v10726
        %10728 = vmatmul.bf16.gmra.mxu0 %v10374
        %v10729 = vpop.f32.mrf.mxu0
        %v10730 = vadd.f32 %v10037, %v10729
        %v10731 = vpop.f32.mrf.mxu0
        %v10732 = vadd.f32 %v10037, %v10731
        %10733 = vmatmul.bf16.gmra.mxu0 %v10377
        %v10734 = vpop.f32.mrf.mxu0
        %v10735 = vadd.f32 %v10037, %v10734
        %v10736 = vpop.f32.mrf.mxu0
        %v10737 = vadd.f32 %v10037, %v10736
        %10738 = vmatmul.bf16.gmra.mxu0 %v10380
        %v10739 = vpop.f32.mrf.mxu0
        %v10740 = vadd.f32 %v10037, %v10739
        %v10741 = vpop.f32.mrf.mxu0
        %v10742 = vadd.f32 %v10037, %v10741
        %10743 = vmatmul.bf16.gmra.mxu0 %v10383
        %v10744 = vpop.f32.mrf.mxu0
        %v10745 = vadd.f32 %v10037, %v10744
        %v10746 = vpop.f32.mrf.mxu0
        %v10747 = vadd.f32 %v10037, %v10746
        %10748 = vmatmul.bf16.gmra.mxu0 %v10386
        %v10749 = vpop.f32.mrf.mxu0
        %v10750 = vadd.f32 %v10037, %v10749
        %v10751 = vpop.f32.mrf.mxu0
        %v10752 = vadd.f32 %v10037, %v10751
        %10753 = vmatmul.bf16.gmra.mxu0 %v10389
        %v10754 = vpop.f32.mrf.mxu0
        %v10755 = vadd.f32 %v10037, %v10754
        %v10756 = vpop.f32.mrf.mxu0
        %v10757 = vadd.f32 %v10037, %v10756
        %10758 = vmatmul.bf16.gmra.mxu0 %v10392
        %v10759 = vpop.f32.mrf.mxu0
        %v10760 = vadd.f32 %v10037, %v10759
        %v10761 = vpop.f32.mrf.mxu0
        %v10762 = vadd.f32 %v10037, %v10761
        %10763 = vmatmul.bf16.gmra.mxu0 %v10395
        %v10764 = vpop.f32.mrf.mxu0
        %v10765 = vadd.f32 %v10037, %v10764
        %v10766 = vpop.f32.mrf.mxu0
        %v10767 = vadd.f32 %v10037, %v10766
        %10768 = vmatmul.bf16.gmra.mxu0 %v10398
        %v10769 = vpop.f32.mrf.mxu0
        %v10770 = vadd.f32 %v10037, %v10769
        %v10771 = vpop.f32.mrf.mxu0
        %v10772 = vadd.f32 %v10037, %v10771
        %10773 = vmatmul.bf16.gmra.mxu0 %v10401
        %v10774 = vpop.f32.mrf.mxu0
        %v10775 = vadd.f32 %v10037, %v10774
        %v10776 = vpop.f32.mrf.mxu0
        %v10777 = vadd.f32 %v10037, %v10776
        %10778 = vmatmul.bf16.gmra.mxu0 %v10404
        %v10779 = vpop.f32.mrf.mxu0
        %v10780 = vadd.f32 %v10037, %v10779
        %v10781 = vpop.f32.mrf.mxu0
        %v10782 = vadd.f32 %v10037, %v10781
        %10783 = vmatmul.bf16.gmra.mxu0 %v10407
        %v10784 = vpop.f32.mrf.mxu0
        %v10785 = vadd.f32 %v10037, %v10784
        %v10786 = vpop.f32.mrf.mxu0
        %v10787 = vadd.f32 %v10037, %v10786
        %10788 = vmatmul.bf16.gmra.mxu0 %v10410
        %v10789 = vpop.f32.mrf.mxu0
        %v10790 = vadd.f32 %v10037, %v10789
        %v10791 = vpop.f32.mrf.mxu0
        %v10792 = vadd.f32 %v10037, %v10791
        %10793 = vmatmul.bf16.gmra.mxu0 %v10413
        %v10794 = vpop.f32.mrf.mxu0
        %v10795 = vadd.f32 %v10037, %v10794
        %v10796 = vpop.f32.mrf.mxu0
        %v10797 = vadd.f32 %v10037, %v10796
        %10798 = vmatmul.bf16.gmra.mxu0 %v10416
        %v10799 = vpop.f32.mrf.mxu0
        %v10800 = vadd.f32 %v10037, %v10799
        %v10801 = vpop.f32.mrf.mxu0
        %v10802 = vadd.f32 %v10037, %v10801
        %10803 = vmatmul.bf16.gmra.mxu0 %v10419
        %v10804 = vpop.f32.mrf.mxu0
        %v10805 = vadd.f32 %v10037, %v10804
        %v10806 = vpop.f32.mrf.mxu0
        %v10807 = vadd.f32 %v10037, %v10806
        %10808 = vmatmul.bf16.gmra.mxu0 %v10422
        %v10809 = vpop.f32.mrf.mxu0
        %v10810 = vadd.f32 %v10037, %v10809
        %v10811 = vpop.f32.mrf.mxu0
        %v10812 = vadd.f32 %v10037, %v10811
        %10813 = vmatmul.bf16.gmra.mxu0 %v10425
        %v10814 = vpop.f32.mrf.mxu0
        %v10815 = vadd.f32 %v10037, %v10814
        %v10816 = vpop.f32.mrf.mxu0
        %v10817 = vadd.f32 %v10037, %v10816
        %10818 = vmatmul.bf16.gmra.mxu0 %v10428
        %v10819 = vpop.f32.mrf.mxu0
        %v10820 = vadd.f32 %v10037, %v10819
        %v10821 = vpop.f32.mrf.mxu0
        %v10822 = vadd.f32 %v10037, %v10821
        %10823 = vmatmul.bf16.gmra.mxu0 %v10431
        %v10824 = vpop.f32.mrf.mxu0
        %v10825 = vadd.f32 %v10037, %v10824
        %v10826 = vpop.f32.mrf.mxu0
        %v10827 = vadd.f32 %v10037, %v10826
        %10828 = vmatmul.bf16.gmra.mxu0 %v10434
        %v10829 = vpop.f32.mrf.mxu0
        %v10830 = vadd.f32 %v10037, %v10829
        %v10831 = vpop.f32.mrf.mxu0
        %v10832 = vadd.f32 %v10037, %v10831
        %10833 = vmatmul.bf16.gmra.mxu0 %v10437
        %v10834 = vpop.f32.mrf.mxu0
        %v10835 = vadd.f32 %v10037, %v10834
        %v10836 = vpop.f32.mrf.mxu0
        %v10837 = vadd.f32 %v10037, %v10836
        %10838 = vmatmul.bf16.gmra.mxu0 %v10440
        %v10839 = vpop.f32.mrf.mxu0
        %v10840 = vadd.f32 %v10037, %v10839
        %v10841 = vpop.f32.mrf.mxu0
        %v10842 = vadd.f32 %v10037, %v10841
        %10843 = vmatmul.bf16.gmra.mxu0 %v10443
        %v10844 = vpop.f32.mrf.mxu0
        %v10845 = vadd.f32 %v10037, %v10844
        %v10846 = vpop.f32.mrf.mxu0
        %v10847 = vadd.f32 %v10037, %v10846
        %10848 = vmatmul.bf16.gmra.mxu0 %v10446
        %v10849 = vpop.f32.mrf.mxu0
        %v10850 = vadd.f32 %v10037, %v10849
        %v10851 = vpop.f32.mrf.mxu0
        %v10852 = vadd.f32 %v10037, %v10851
        %10853 = vmatmul.bf16.gmra.mxu0 %v10449
        %v10854 = vpop.f32.mrf.mxu0
        %v10855 = vadd.f32 %v10037, %v10854
        %v10856 = vpop.f32.mrf.mxu0
        %v10857 = vadd.f32 %v10037, %v10856
        %10858 = vmatmul.bf16.gmra.mxu0 %v10452
        %v10859 = vpop.f32.mrf.mxu0
        %v10860 = vadd.f32 %v10037, %v10859
        %v10861 = vpop.f32.mrf.mxu0
        %v10862 = vadd.f32 %v10037, %v10861
        %10863 = vdwg.mxu0
        %10864 = vmatpush.bf16.msra.mxu0 %v10662
        %10865 = vmatpush.bf16.msra.mxu0 %v10661
        %10866 = vmatpush.bf16.msra.mxu0 %v10660
        %10867 = vmatpush.bf16.msra.mxu0 %v10659
        %10868 = vmatpush.bf16.msra.mxu0 %v10658
        %10869 = vmatpush.bf16.msra.mxu0 %v10657
        %10870 = vmatpush.bf16.msra.mxu0 %v10656
        %10871 = vmatpush.bf16.msra.mxu0 %v10655
        %10872 = vmatmul.bf16.gmra.mxu0 %v10360
        %v10873 = vpop.f32.mrf.mxu0
        %v10874 = vadd.f32 %v10705, %v10873
        %v10875 = vpop.f32.mrf.mxu0
        %v10876 = vadd.f32 %v10707, %v10875
        %10877 = vmatmul.bf16.gmra.mxu0 %v10363
        %v10878 = vpop.f32.mrf.mxu0
        %v10879 = vadd.f32 %v10710, %v10878
        %v10880 = vpop.f32.mrf.mxu0
        %v10881 = vadd.f32 %v10712, %v10880
        %10882 = vmatmul.bf16.gmra.mxu0 %v10366
        %v10883 = vpop.f32.mrf.mxu0
        %v10884 = vadd.f32 %v10715, %v10883
        %v10885 = vpop.f32.mrf.mxu0
        %v10886 = vadd.f32 %v10717, %v10885
        %10887 = vmatmul.bf16.gmra.mxu0 %v10369
        %v10888 = vpop.f32.mrf.mxu0
        %v10889 = vadd.f32 %v10720, %v10888
        %v10890 = vpop.f32.mrf.mxu0
        %v10891 = vadd.f32 %v10722, %v10890
        %10892 = vmatmul.bf16.gmra.mxu0 %v10372
        %v10893 = vpop.f32.mrf.mxu0
        %v10894 = vadd.f32 %v10725, %v10893
        %v10895 = vpop.f32.mrf.mxu0
        %v10896 = vadd.f32 %v10727, %v10895
        %10897 = vmatmul.bf16.gmra.mxu0 %v10375
        %v10898 = vpop.f32.mrf.mxu0
        %v10899 = vadd.f32 %v10730, %v10898
        %v10900 = vpop.f32.mrf.mxu0
        %v10901 = vadd.f32 %v10732, %v10900
        %10902 = vmatmul.bf16.gmra.mxu0 %v10378
        %v10903 = vpop.f32.mrf.mxu0
        %v10904 = vadd.f32 %v10735, %v10903
        %v10905 = vpop.f32.mrf.mxu0
        %v10906 = vadd.f32 %v10737, %v10905
        %10907 = vmatmul.bf16.gmra.mxu0 %v10381
        %v10908 = vpop.f32.mrf.mxu0
        %v10909 = vadd.f32 %v10740, %v10908
        %v10910 = vpop.f32.mrf.mxu0
        %v10911 = vadd.f32 %v10742, %v10910
        %10912 = vmatmul.bf16.gmra.mxu0 %v10384
        %v10913 = vpop.f32.mrf.mxu0
        %v10914 = vadd.f32 %v10745, %v10913
        %v10915 = vpop.f32.mrf.mxu0
        %v10916 = vadd.f32 %v10747, %v10915
        %10917 = vmatmul.bf16.gmra.mxu0 %v10387
        %v10918 = vpop.f32.mrf.mxu0
        %v10919 = vadd.f32 %v10750, %v10918
        %v10920 = vpop.f32.mrf.mxu0
        %v10921 = vadd.f32 %v10752, %v10920
        %10922 = vmatmul.bf16.gmra.mxu0 %v10390
        %v10923 = vpop.f32.mrf.mxu0
        %v10924 = vadd.f32 %v10755, %v10923
        %v10925 = vpop.f32.mrf.mxu0
        %v10926 = vadd.f32 %v10757, %v10925
        %10927 = vmatmul.bf16.gmra.mxu0 %v10393
        %v10928 = vpop.f32.mrf.mxu0
        %v10929 = vadd.f32 %v10760, %v10928
        %v10930 = vpop.f32.mrf.mxu0
        %v10931 = vadd.f32 %v10762, %v10930
        %10932 = vmatmul.bf16.gmra.mxu0 %v10396
        %v10933 = vpop.f32.mrf.mxu0
        %v10934 = vadd.f32 %v10765, %v10933
        %v10935 = vpop.f32.mrf.mxu0
        %v10936 = vadd.f32 %v10767, %v10935
        %10937 = vmatmul.bf16.gmra.mxu0 %v10399
        %v10938 = vpop.f32.mrf.mxu0
        %v10939 = vadd.f32 %v10770, %v10938
        %v10940 = vpop.f32.mrf.mxu0
        %v10941 = vadd.f32 %v10772, %v10940
        %10942 = vmatmul.bf16.gmra.mxu0 %v10402
        %v10943 = vpop.f32.mrf.mxu0
        %v10944 = vadd.f32 %v10775, %v10943
        %v10945 = vpop.f32.mrf.mxu0
        %v10946 = vadd.f32 %v10777, %v10945
        %10947 = vmatmul.bf16.gmra.mxu0 %v10405
        %v10948 = vpop.f32.mrf.mxu0
        %v10949 = vadd.f32 %v10780, %v10948
        %v10950 = vpop.f32.mrf.mxu0
        %v10951 = vadd.f32 %v10782, %v10950
        %10952 = vmatmul.bf16.gmra.mxu0 %v10408
        %v10953 = vpop.f32.mrf.mxu0
        %v10954 = vadd.f32 %v10785, %v10953
        %v10955 = vpop.f32.mrf.mxu0
        %v10956 = vadd.f32 %v10787, %v10955
        %10957 = vmatmul.bf16.gmra.mxu0 %v10411
        %v10958 = vpop.f32.mrf.mxu0
        %v10959 = vadd.f32 %v10790, %v10958
        %v10960 = vpop.f32.mrf.mxu0
        %v10961 = vadd.f32 %v10792, %v10960
        %10962 = vmatmul.bf16.gmra.mxu0 %v10414
        %v10963 = vpop.f32.mrf.mxu0
        %v10964 = vadd.f32 %v10795, %v10963
        %v10965 = vpop.f32.mrf.mxu0
        %v10966 = vadd.f32 %v10797, %v10965
        %10967 = vmatmul.bf16.gmra.mxu0 %v10417
        %v10968 = vpop.f32.mrf.mxu0
        %v10969 = vadd.f32 %v10800, %v10968
        %v10970 = vpop.f32.mrf.mxu0
        %v10971 = vadd.f32 %v10802, %v10970
        %10972 = vmatmul.bf16.gmra.mxu0 %v10420
        %v10973 = vpop.f32.mrf.mxu0
        %v10974 = vadd.f32 %v10805, %v10973
        %v10975 = vpop.f32.mrf.mxu0
        %v10976 = vadd.f32 %v10807, %v10975
        %10977 = vmatmul.bf16.gmra.mxu0 %v10423
        %v10978 = vpop.f32.mrf.mxu0
        %v10979 = vadd.f32 %v10810, %v10978
        %v10980 = vpop.f32.mrf.mxu0
        %v10981 = vadd.f32 %v10812, %v10980
        %10982 = vmatmul.bf16.gmra.mxu0 %v10426
        %v10983 = vpop.f32.mrf.mxu0
        %v10984 = vadd.f32 %v10815, %v10983
        %v10985 = vpop.f32.mrf.mxu0
        %v10986 = vadd.f32 %v10817, %v10985
        %10987 = vmatmul.bf16.gmra.mxu0 %v10429
        %v10988 = vpop.f32.mrf.mxu0
        %v10989 = vadd.f32 %v10820, %v10988
        %v10990 = vpop.f32.mrf.mxu0
        %v10991 = vadd.f32 %v10822, %v10990
        %10992 = vmatmul.bf16.gmra.mxu0 %v10432
        %v10993 = vpop.f32.mrf.mxu0
        %v10994 = vadd.f32 %v10825, %v10993
        %v10995 = vpop.f32.mrf.mxu0
        %v10996 = vadd.f32 %v10827, %v10995
        %10997 = vmatmul.bf16.gmra.mxu0 %v10435
        %v10998 = vpop.f32.mrf.mxu0
        %v10999 = vadd.f32 %v10830, %v10998
        %v11000 = vpop.f32.mrf.mxu0
        %v11001 = vadd.f32 %v10832, %v11000
        %11002 = vmatmul.bf16.gmra.mxu0 %v10438
        %v11003 = vpop.f32.mrf.mxu0
        %v11004 = vadd.f32 %v10835, %v11003
        %v11005 = vpop.f32.mrf.mxu0
        %v11006 = vadd.f32 %v10837, %v11005
        %11007 = vmatmul.bf16.gmra.mxu0 %v10441
        %v11008 = vpop.f32.mrf.mxu0
        %v11009 = vadd.f32 %v10840, %v11008
        %v11010 = vpop.f32.mrf.mxu0
        %v11011 = vadd.f32 %v10842, %v11010
        %11012 = vmatmul.bf16.gmra.mxu0 %v10444
        %v11013 = vpop.f32.mrf.mxu0
        %v11014 = vadd.f32 %v10845, %v11013
        %v11015 = vpop.f32.mrf.mxu0
        %v11016 = vadd.f32 %v10847, %v11015
        %11017 = vmatmul.bf16.gmra.mxu0 %v10447
        %v11018 = vpop.f32.mrf.mxu0
        %v11019 = vadd.f32 %v10850, %v11018
        %v11020 = vpop.f32.mrf.mxu0
        %v11021 = vadd.f32 %v10852, %v11020
        %11022 = vmatmul.bf16.gmra.mxu0 %v10450
        %v11023 = vpop.f32.mrf.mxu0
        %v11024 = vadd.f32 %v10855, %v11023
        %v11025 = vpop.f32.mrf.mxu0
        %v11026 = vadd.f32 %v10857, %v11025
        %11027 = vmatmul.bf16.gmra.mxu0 %v10453
        %v11028 = vpop.f32.mrf.mxu0
        %v11029 = vadd.f32 %v10860, %v11028
        %v11030 = vpop.f32.mrf.mxu0
        %v11031 = vadd.f32 %v10862, %v11030
        %11032 = vdwg.mxu0
        %11033 = vmatpush.bf16.msra.mxu0 %v10670
        %11034 = vmatpush.bf16.msra.mxu0 %v10669
        %11035 = vmatpush.bf16.msra.mxu0 %v10668
        %11036 = vmatpush.bf16.msra.mxu0 %v10667
        %11037 = vmatpush.bf16.msra.mxu0 %v10666
        %11038 = vmatpush.bf16.msra.mxu0 %v10665
        %11039 = vmatpush.bf16.msra.mxu0 %v10664
        %11040 = vmatpush.bf16.msra.mxu0 %v10663
        %11041 = vmatmul.bf16.gmra.mxu0 %v10361
        %v11042 = vpop.f32.mrf.mxu0
        %v11043 = vadd.f32 %v10874, %v11042
        %v11044 = vpop.f32.mrf.mxu0
        %v11045 = vadd.f32 %v10876, %v11044
        %11046 = vmatmul.bf16.gmra.mxu0 %v10364
        %v11047 = vpop.f32.mrf.mxu0
        %v11048 = vadd.f32 %v10879, %v11047
        %v11049 = vpop.f32.mrf.mxu0
        %v11050 = vadd.f32 %v10881, %v11049
        %11051 = vmatmul.bf16.gmra.mxu0 %v10367
        %v11052 = vpop.f32.mrf.mxu0
        %v11053 = vadd.f32 %v10884, %v11052
        %v11054 = vpop.f32.mrf.mxu0
        %v11055 = vadd.f32 %v10886, %v11054
        %11056 = vmatmul.bf16.gmra.mxu0 %v10370
        %v11057 = vpop.f32.mrf.mxu0
        %v11058 = vadd.f32 %v10889, %v11057
        %v11059 = vpop.f32.mrf.mxu0
        %v11060 = vadd.f32 %v10891, %v11059
        %11061 = vmatmul.bf16.gmra.mxu0 %v10373
        %v11062 = vpop.f32.mrf.mxu0
        %v11063 = vadd.f32 %v10894, %v11062
        %v11064 = vpop.f32.mrf.mxu0
        %v11065 = vadd.f32 %v10896, %v11064
        %11066 = vmatmul.bf16.gmra.mxu0 %v10376
        %v11067 = vpop.f32.mrf.mxu0
        %v11068 = vadd.f32 %v10899, %v11067
        %v11069 = vpop.f32.mrf.mxu0
        %v11070 = vadd.f32 %v10901, %v11069
        %11071 = vmatmul.bf16.gmra.mxu0 %v10379
        %v11072 = vpop.f32.mrf.mxu0
        %v11073 = vadd.f32 %v10904, %v11072
        %v11074 = vpop.f32.mrf.mxu0
        %v11075 = vadd.f32 %v10906, %v11074
        %11076 = vmatmul.bf16.gmra.mxu0 %v10382
        %v11077 = vpop.f32.mrf.mxu0
        %v11078 = vadd.f32 %v10909, %v11077
        %v11079 = vpop.f32.mrf.mxu0
        %v11080 = vadd.f32 %v10911, %v11079
        %11081 = vmatmul.bf16.gmra.mxu0 %v10385
        %v11082 = vpop.f32.mrf.mxu0
        %v11083 = vadd.f32 %v10914, %v11082
        %v11084 = vpop.f32.mrf.mxu0
        %v11085 = vadd.f32 %v10916, %v11084
        %11086 = vmatmul.bf16.gmra.mxu0 %v10388
        %v11087 = vpop.f32.mrf.mxu0
        %v11088 = vadd.f32 %v10919, %v11087
        %v11089 = vpop.f32.mrf.mxu0
        %v11090 = vadd.f32 %v10921, %v11089
        %11091 = vmatmul.bf16.gmra.mxu0 %v10391
        %v11092 = vpop.f32.mrf.mxu0
        %v11093 = vadd.f32 %v10924, %v11092
        %v11094 = vpop.f32.mrf.mxu0
        %v11095 = vadd.f32 %v10926, %v11094
        %11096 = vmatmul.bf16.gmra.mxu0 %v10394
        %v11097 = vpop.f32.mrf.mxu0
        %v11098 = vadd.f32 %v10929, %v11097
        %v11099 = vpop.f32.mrf.mxu0
        %v11100 = vadd.f32 %v10931, %v11099
        %11101 = vmatmul.bf16.gmra.mxu0 %v10397
        %v11102 = vpop.f32.mrf.mxu0
        %v11103 = vadd.f32 %v10934, %v11102
        %v11104 = vpop.f32.mrf.mxu0
        %v11105 = vadd.f32 %v10936, %v11104
        %11106 = vmatmul.bf16.gmra.mxu0 %v10400
        %v11107 = vpop.f32.mrf.mxu0
        %v11108 = vadd.f32 %v10939, %v11107
        %v11109 = vpop.f32.mrf.mxu0
        %v11110 = vadd.f32 %v10941, %v11109
        %11111 = vmatmul.bf16.gmra.mxu0 %v10403
        %v11112 = vpop.f32.mrf.mxu0
        %v11113 = vadd.f32 %v10944, %v11112
        %v11114 = vpop.f32.mrf.mxu0
        %v11115 = vadd.f32 %v10946, %v11114
        %11116 = vmatmul.bf16.gmra.mxu0 %v10406
        %v11117 = vpop.f32.mrf.mxu0
        %v11118 = vadd.f32 %v10949, %v11117
        %v11119 = vpop.f32.mrf.mxu0
        %v11120 = vadd.f32 %v10951, %v11119
        %11121 = vmatmul.bf16.gmra.mxu0 %v10409
        %v11122 = vpop.f32.mrf.mxu0
        %v11123 = vadd.f32 %v10954, %v11122
        %v11124 = vpop.f32.mrf.mxu0
        %v11125 = vadd.f32 %v10956, %v11124
        %11126 = vmatmul.bf16.gmra.mxu0 %v10412
        %v11127 = vpop.f32.mrf.mxu0
        %v11128 = vadd.f32 %v10959, %v11127
        %v11129 = vpop.f32.mrf.mxu0
        %v11130 = vadd.f32 %v10961, %v11129
        %11131 = vmatmul.bf16.gmra.mxu0 %v10415
        %v11132 = vpop.f32.mrf.mxu0
        %v11133 = vadd.f32 %v10964, %v11132
        %v11134 = vpop.f32.mrf.mxu0
        %v11135 = vadd.f32 %v10966, %v11134
        %11136 = vmatmul.bf16.gmra.mxu0 %v10418
        %v11137 = vpop.f32.mrf.mxu0
        %v11138 = vadd.f32 %v10969, %v11137
        %v11139 = vpop.f32.mrf.mxu0
        %v11140 = vadd.f32 %v10971, %v11139
        %11141 = vmatmul.bf16.gmra.mxu0 %v10421
        %v11142 = vpop.f32.mrf.mxu0
        %v11143 = vadd.f32 %v10974, %v11142
        %v11144 = vpop.f32.mrf.mxu0
        %v11145 = vadd.f32 %v10976, %v11144
        %11146 = vmatmul.bf16.gmra.mxu0 %v10424
        %v11147 = vpop.f32.mrf.mxu0
        %v11148 = vadd.f32 %v10979, %v11147
        %v11149 = vpop.f32.mrf.mxu0
        %v11150 = vadd.f32 %v10981, %v11149
        %11151 = vmatmul.bf16.gmra.mxu0 %v10427
        %v11152 = vpop.f32.mrf.mxu0
        %v11153 = vadd.f32 %v10984, %v11152
        %v11154 = vpop.f32.mrf.mxu0
        %v11155 = vadd.f32 %v10986, %v11154
        %11156 = vmatmul.bf16.gmra.mxu0 %v10430
        %v11157 = vpop.f32.mrf.mxu0
        %v11158 = vadd.f32 %v10989, %v11157
        %v11159 = vpop.f32.mrf.mxu0
        %v11160 = vadd.f32 %v10991, %v11159
        %11161 = vmatmul.bf16.gmra.mxu0 %v10433
        %v11162 = vpop.f32.mrf.mxu0
        %v11163 = vadd.f32 %v10994, %v11162
        %v11164 = vpop.f32.mrf.mxu0
        %v11165 = vadd.f32 %v10996, %v11164
        %11166 = vmatmul.bf16.gmra.mxu0 %v10436
        %v11167 = vpop.f32.mrf.mxu0
        %v11168 = vadd.f32 %v10999, %v11167
        %v11169 = vpop.f32.mrf.mxu0
        %v11170 = vadd.f32 %v11001, %v11169
        %11171 = vmatmul.bf16.gmra.mxu0 %v10439
        %v11172 = vpop.f32.mrf.mxu0
        %v11173 = vadd.f32 %v11004, %v11172
        %v11174 = vpop.f32.mrf.mxu0
        %v11175 = vadd.f32 %v11006, %v11174
        %11176 = vmatmul.bf16.gmra.mxu0 %v10442
        %v11177 = vpop.f32.mrf.mxu0
        %v11178 = vadd.f32 %v11009, %v11177
        %v11179 = vpop.f32.mrf.mxu0
        %v11180 = vadd.f32 %v11011, %v11179
        %11181 = vmatmul.bf16.gmra.mxu0 %v10445
        %v11182 = vpop.f32.mrf.mxu0
        %v11183 = vadd.f32 %v11014, %v11182
        %v11184 = vpop.f32.mrf.mxu0
        %v11185 = vadd.f32 %v11016, %v11184
        %11186 = vmatmul.bf16.gmra.mxu0 %v10448
        %v11187 = vpop.f32.mrf.mxu0
        %v11188 = vadd.f32 %v11019, %v11187
        %v11189 = vpop.f32.mrf.mxu0
        %v11190 = vadd.f32 %v11021, %v11189
        %11191 = vmatmul.bf16.gmra.mxu0 %v10451
        %v11192 = vpop.f32.mrf.mxu0
        %v11193 = vadd.f32 %v11024, %v11192
        %v11194 = vpop.f32.mrf.mxu0
        %v11195 = vadd.f32 %v11026, %v11194
        %11196 = vmatmul.bf16.gmra.mxu0 %v10454
        %v11197 = vpop.f32.mrf.mxu0
        %v11198 = vadd.f32 %v11029, %v11197
        %v11199 = vpop.f32.mrf.mxu0
        %v11200 = vadd.f32 %v11031, %v11199
        %11201 = vdwg.mxu0
        %v11202 = vmax.f32 %v11043, 0.0
        %v11203 = vmax.f32 %v11045, 0.0
        %v11204 = vmax.f32 %v11048, 0.0
        %v11205 = vmax.f32 %v11050, 0.0
        %v11206 = vmax.f32 %v11053, 0.0
        %v11207 = vmax.f32 %v11055, 0.0
        %v11208 = vmax.f32 %v11058, 0.0
        %v11209 = vmax.f32 %v11060, 0.0
        %v11210 = vmax.f32 %v11063, 0.0
        %v11211 = vmax.f32 %v11065, 0.0
        %v11212 = vmax.f32 %v11068, 0.0
        %v11213 = vmax.f32 %v11070, 0.0
        %v11214 = vmax.f32 %v11073, 0.0
        %v11215 = vmax.f32 %v11075, 0.0
        %v11216 = vmax.f32 %v11078, 0.0
        %v11217 = vmax.f32 %v11080, 0.0
        %v11218 = vmax.f32 %v11083, 0.0
        %v11219 = vmax.f32 %v11085, 0.0
        %v11220 = vmax.f32 %v11088, 0.0
        %v11221 = vmax.f32 %v11090, 0.0
        %v11222 = vmax.f32 %v11093, 0.0
        %v11223 = vmax.f32 %v11095, 0.0
        %v11224 = vmax.f32 %v11098, 0.0
        %v11225 = vmax.f32 %v11100, 0.0
        %v11226 = vmax.f32 %v11103, 0.0
        %v11227 = vmax.f32 %v11105, 0.0
        %v11228 = vmax.f32 %v11108, 0.0
        %v11229 = vmax.f32 %v11110, 0.0
        %v11230 = vmax.f32 %v11113, 0.0
        %v11231 = vmax.f32 %v11115, 0.0
        %v11232 = vmax.f32 %v11118, 0.0
        %v11233 = vmax.f32 %v11120, 0.0
        %v11234 = vmax.f32 %v11123, 0.0
        %v11235 = vmax.f32 %v11125, 0.0
        %v11236 = vmax.f32 %v11128, 0.0
        %v11237 = vmax.f32 %v11130, 0.0
        %v11238 = vmax.f32 %v11133, 0.0
        %v11239 = vmax.f32 %v11135, 0.0
        %v11240 = vmax.f32 %v11138, 0.0
        %v11241 = vmax.f32 %v11140, 0.0
        %v11242 = vmax.f32 %v11143, 0.0
        %v11243 = vmax.f32 %v11145, 0.0
        %v11244 = vmax.f32 %v11148, 0.0
        %v11245 = vmax.f32 %v11150, 0.0
        %v11246 = vmax.f32 %v11153, 0.0
        %v11247 = vmax.f32 %v11155, 0.0
        %v11248 = vmax.f32 %v11158, 0.0
        %v11249 = vmax.f32 %v11160, 0.0
        %v11250 = vmax.f32 %v11163, 0.0
        %v11251 = vmax.f32 %v11165, 0.0
        %v11252 = vmax.f32 %v11168, 0.0
        %v11253 = vmax.f32 %v11170, 0.0
        %v11254 = vmax.f32 %v11173, 0.0
        %v11255 = vmax.f32 %v11175, 0.0
        %v11256 = vmax.f32 %v11178, 0.0
        %v11257 = vmax.f32 %v11180, 0.0
        %v11258 = vmax.f32 %v11183, 0.0
        %v11259 = vmax.f32 %v11185, 0.0
        %v11260 = vmax.f32 %v11188, 0.0
        %v11261 = vmax.f32 %v11190, 0.0
        %v11262 = vmax.f32 %v11193, 0.0
        %v11263 = vmax.f32 %v11195, 0.0
        %v11264 = vmax.f32 %v11198, 0.0
        %v11265 = vmax.f32 %v11200, 0.0
        %11266 = vst [vmem:[%s191] sm:$0xff] %v11202
        %11267 = vst [vmem:[%s191 + $0x8] sm:$0xff] %v11203
        %11268 = vst [vmem:[%s191 + $0x10] sm:$0xff] %v11204
        %11269 = vst [vmem:[%s191 + $0x18] sm:$0xff] %v11205
        %11270 = vst [vmem:[%s191 + $0x20] sm:$0xff] %v11206
        %11271 = vst [vmem:[%s191 + $0x28] sm:$0xff] %v11207
        %11272 = vst [vmem:[%s191 + $0x30] sm:$0xff] %v11208
        %11273 = vst [vmem:[%s191 + $0x38] sm:$0xff] %v11209
        %11274 = vst [vmem:[%s191 + $0x40] sm:$0xff] %v11210
        %11275 = vst [vmem:[%s191 + $0x48] sm:$0xff] %v11211
        %11276 = vst [vmem:[%s191 + $0x50] sm:$0xff] %v11212
        %11277 = vst [vmem:[%s191 + $0x58] sm:$0xff] %v11213
        %11278 = vst [vmem:[%s191 + $0x60] sm:$0xff] %v11214
        %11279 = vst [vmem:[%s191 + $0x68] sm:$0xff] %v11215
        %11280 = vst [vmem:[%s191 + $0x70] sm:$0xff] %v11216
        %11281 = vst [vmem:[%s191 + $0x78] sm:$0xff] %v11217
        %11282 = vst [vmem:[%s191 + $0x80] sm:$0xff] %v11218
        %11283 = vst [vmem:[%s191 + $0x88] sm:$0xff] %v11219
        %11284 = vst [vmem:[%s191 + $0x90] sm:$0xff] %v11220
        %11285 = vst [vmem:[%s191 + $0x98] sm:$0xff] %v11221
        %11286 = vst [vmem:[%s191 + $0xa0] sm:$0xff] %v11222
        %11287 = vst [vmem:[%s191 + $0xa8] sm:$0xff] %v11223
        %11288 = vst [vmem:[%s191 + $0xb0] sm:$0xff] %v11224
        %11289 = vst [vmem:[%s191 + $0xb8] sm:$0xff] %v11225
        %11290 = vst [vmem:[%s191 + $0xc0] sm:$0xff] %v11226
        %11291 = vst [vmem:[%s191 + $0xc8] sm:$0xff] %v11227
        %11292 = vst [vmem:[%s191 + $0xd0] sm:$0xff] %v11228
        %11293 = vst [vmem:[%s191 + $0xd8] sm:$0xff] %v11229
        %11294 = vst [vmem:[%s191 + $0xe0] sm:$0xff] %v11230
        %11295 = vst [vmem:[%s191 + $0xe8] sm:$0xff] %v11231
        %11296 = vst [vmem:[%s191 + $0xf0] sm:$0xff] %v11232
        %11297 = vst [vmem:[%s191 + $0xf8] sm:$0xff] %v11233
        %11298 = vst [vmem:[%s191 + $0x100] sm:$0xff] %v11234
        %11299 = vst [vmem:[%s191 + $0x108] sm:$0xff] %v11235
        %11300 = vst [vmem:[%s191 + $0x110] sm:$0xff] %v11236
        %11301 = vst [vmem:[%s191 + $0x118] sm:$0xff] %v11237
        %11302 = vst [vmem:[%s191 + $0x120] sm:$0xff] %v11238
        %11303 = vst [vmem:[%s191 + $0x128] sm:$0xff] %v11239
        %11304 = vst [vmem:[%s191 + $0x130] sm:$0xff] %v11240
        %11305 = vst [vmem:[%s191 + $0x138] sm:$0xff] %v11241
        %11306 = vst [vmem:[%s191 + $0x140] sm:$0xff] %v11242
        %11307 = vst [vmem:[%s191 + $0x148] sm:$0xff] %v11243
        %11308 = vst [vmem:[%s191 + $0x150] sm:$0xff] %v11244
        %11309 = vst [vmem:[%s191 + $0x158] sm:$0xff] %v11245
        %11310 = vst [vmem:[%s191 + $0x160] sm:$0xff] %v11246
        %11311 = vst [vmem:[%s191 + $0x168] sm:$0xff] %v11247
        %11312 = vst [vmem:[%s191 + $0x170] sm:$0xff] %v11248
        %11313 = vst [vmem:[%s191 + $0x178] sm:$0xff] %v11249
        %11314 = vst [vmem:[%s191 + $0x180] sm:$0xff] %v11250
        %11315 = vst [vmem:[%s191 + $0x188] sm:$0xff] %v11251
        %11316 = vst [vmem:[%s191 + $0x190] sm:$0xff] %v11252
        %11317 = vst [vmem:[%s191 + $0x198] sm:$0xff] %v11253
        %11318 = vst [vmem:[%s191 + $0x1a0] sm:$0xff] %v11254
        %11319 = vst [vmem:[%s191 + $0x1a8] sm:$0xff] %v11255
        %11320 = vst [vmem:[%s191 + $0x1b0] sm:$0xff] %v11256
        %11321 = vst [vmem:[%s191 + $0x1b8] sm:$0xff] %v11257
        %11322 = vst [vmem:[%s191 + $0x1c0] sm:$0xff] %v11258
        %11323 = vst [vmem:[%s191 + $0x1c8] sm:$0xff] %v11259
        %11324 = vst [vmem:[%s191 + $0x1d0] sm:$0xff] %v11260
        %11325 = vst [vmem:[%s191 + $0x1d8] sm:$0xff] %v11261
        %11326 = vst [vmem:[%s191 + $0x1e0] sm:$0xff] %v11262
        %11327 = vst [vmem:[%s191 + $0x1e8] sm:$0xff] %v11263
        %11328 = vst [vmem:[%s191 + $0x1f0] sm:$0xff] %v11264
        %11329 = vst [vmem:[%s191 + $0x1f8] sm:$0xff] %v11265
        %s11330 = sand.u32 %s115, 1
        %s11331 = scalar_lea.sflag [#allocation4], %s11330
        %s11332 = sand.u32 %s115, 1
        %s11333 = smul.addr %s11332, 512
        %s11334 = scalar_lea.vmem [#allocation3], %s11333
        // Predicated region
        $region37: #{tpu_custom_call.1} parent=35 // pred_check
          %p11335 = pneg %p125
        $region38: #{tpu_custom_call.1} parent=35 // pred_check_branch
          %11337 = sbr.rel (%p11335) target = $region40
        $region39: #{tpu_custom_call.1} parent=35 // pred_region
          %s11338 = smul.u32 64, %s18
          %11340 = vsyncadd %s11331, 0
          %s11341 = smul.addr %s11338, 8
          %s11342 = scalar_lea.hbm %s4, %s11341
          %s11343 = sshll.u32 %s11334, 4
          %s11344 = int_to_ptr.vmem [resolvable:$true] %s11343
          %s11345 = sshll.u32 %s11342, 4
          %s11346 = int_to_ptr.hbm [resolvable:$true] %s11345
          %11351 = dma.vmem_to_hbm [thread:$0]  %s11344, 8192, %s11346, %s11331, 128, 128, 8
        $region40: #{tpu_custom_call.1} parent=35 // pred_fallthru
          _
      $region36: #{tpu_custom_call.1} parent=5 // pred_fallthru
        _
      %p11352 = scmp.le.s32.totalorder 2, %s13
      // Predicated region
      $region41: #{tpu_custom_call.1} parent=5 // pred_check
        %p11353 = pneg %p11352
      $region42: #{tpu_custom_call.1} parent=5 // pred_check_branch
        %11355 = sbr.rel (%p11353) target = $region44
      $region43: #{tpu_custom_call.1} parent=5 // pred_region
        %s11356 = ssub.s32 %s13, 2
        // Predicated region
        $region45: #{tpu_custom_call.1} parent=43 // pred_check
          %p11357 = pneg %p131
        $region46: #{tpu_custom_call.1} parent=43 // pred_check_branch
          %11359 = sbr.rel (%p11357) target = $region48
        $region47: #{tpu_custom_call.1} parent=43 // pred_region
          %s11360 = sand.u32 %s116, 1
          %s11361 = scalar_lea.sflag [#allocation4], %s11360
          %s11362 = sand.u32 %s116, 1
          %s11363 = smul.addr %s11362, 512
          %s11364 = scalar_lea.vmem [#allocation3], %s11363
          %11366 = dma.done %s11361, 8192
        $region48: #{tpu_custom_call.1} parent=43 // pred_fallthru
          _
      $region44: #{tpu_custom_call.1} parent=5 // pred_fallthru
        _
    $region6: #{tpu_custom_call.1} parent=1 // loop_footer
      %s17 = sadd.s32 1, %s13
    $region7: #{tpu_custom_call.1} parent=1 // loop_footer_branch
      %12 = sbr.rel target = $region3
    $region8: #{tpu_custom_call.1} parent=1 // loop_exit
      _
    %11367 = vsyncpa [#allocation4], 1
    %s11368 = scalar_lea.sflag [#allocation4], 1
    %11369 = vsyncpa %s11368, 1

</llo_original>
